<compile_context>
chip_gen: v7x
topology: tpu7x:2x2x1
jax: 0.10.0
libtpu: 0.0.40
codegen_flags: <defaults>
</compile_context>

<pallas_src>
import jax
import jax.numpy as jnp
from jax.experimental import pallas as pl
from jax.experimental.pallas import tpu as pltpu


# Packed widths used by the fused kernel.
NF = 896       # backbone feature width: 800 -> 896 (lane multiple)
HH = 448       # per-head hidden-1 width: 400 -> 448 (2 heads -> "H1" = 896)
H2 = 256       # per-head hidden-2 width: 200 -> 256
OUT = 128      # packed [tran(3) | rot(4) | pad] -> one full lane
SUBLANE = 8


def _round_up(x, m):
    return ((x + m - 1) // m) * m


def _pick_tk(fp, max_tk=2048):
    """Largest multiple of 128 (<= max_tk) that divides fp.

    max_tk is capped so the double-buffered (tk, NF) bf16 wb tile plus the
    resident head weights stay well under v7x's 64 MiB physical VMEM even if
    feat_in grows (2 * 2048 * 896 * 2B ~= 7 MiB).
    """
    tk = min(fp, max_tk)
    while fp % tk != 0:
        tk -= 128
    return tk


# ----------------------------------------------------------------------------
# Fused kernel: backbone matmul (K-tiled) -> two head MLPs -> losses.
# ----------------------------------------------------------------------------
def _motion_kernel(meta_i_ref, meta_f_ref,
                   x_ref, wb_ref, bb_ref,
                   w1_ref, b1_ref, w2_ref, b2_ref, w3_ref, b3_ref,
                   labels_ref,
                   pose_ref, loss_ref,
                   *acc_scratch):

    def finalize(acc):
        n_valid = meta_i_ref[0]        # valid batch rows
        inv_3n = meta_f_ref[0]         # 1 / (3 * n_valid)
        inv_4n = meta_f_ref[1]         # 1 / (4 * n_valid)
        s_tran = meta_f_ref[2]         # uncertainty log-vars
        s_rot = meta_f_ref[3]
        w_tran = meta_f_ref[4]         # exp(-s_tran)
        w_rot = meta_f_ref[5]          # exp(-s_rot)

        # Heads: stacked compact weights (index 0 = translation, 1 = rotation);
        # two narrow matmuls per layer instead of a wide block-diagonal one.
        f = jnp.maximum(acc, 0.0).astype(jnp.bfloat16)                   # (Bp, NF)
        h1t = jnp.maximum(
            jnp.dot(f, w1_ref[0], preferred_element_type=jnp.float32)
            + b1_ref[0], 0.0).astype(jnp.bfloat16)                       # (Bp, HH)
        h1r = jnp.maximum(
            jnp.dot(f, w1_ref[1], preferred_element_type=jnp.float32)
            + b1_ref[1], 0.0).astype(jnp.bfloat16)
        h2t = jnp.maximum(
            jnp.dot(h1t, w2_ref[0], preferred_element_type=jnp.float32)
            + b2_ref[0], 0.0).astype(jnp.bfloat16)                       # (Bp, H2)
        h2r = jnp.maximum(
            jnp.dot(h1r, w2_ref[1], preferred_element_type=jnp.float32)
            + b2_ref[1], 0.0).astype(jnp.bfloat16)
        out = (jnp.dot(h2t, w3_ref[0], preferred_element_type=jnp.float32)
               + jnp.dot(h2r, w3_ref[1], preferred_element_type=jnp.float32)
               + b3_ref[...])                                            # (Bp, OUT)

        bp, nl = out.shape
        lane = jax.lax.broadcasted_iota(jnp.int32, (bp, nl), 1)
        row = jax.lax.broadcasted_iota(jnp.int32, (bp, nl), 0)
        valid = row < n_valid
        tran_lane = lane < 3
        rot_lane = (lane >= 3) & (lane < 7)
        zero = jnp.zeros_like(out)

        # rotation / torch.norm(rotation): a single Frobenius norm over the
        # whole (B, 4) rotation block (matches the reference literally; NOT a
        # per-sample quaternion normalization). No epsilon, same as torch.
        rot_sq = jnp.sum(jnp.where(rot_lane & valid, out * out, zero),
                         keepdims=True)                                  # (1, 1)
        inv_norm = jax.lax.rsqrt(rot_sq)                                 # EUP slot
        pose = jnp.where(rot_lane, out * inv_norm, out)
        pose_ref[...] = pose

        # L1 / L2 losses: means over the valid batch rows only (reciprocal
        # multiplies, reciprocals precomputed outside the kernel).
        diff = labels_ref[...] - pose
        loss_tran = jnp.sum(jnp.where(tran_lane & valid, jnp.abs(diff), zero),
                            keepdims=True) * inv_3n                      # (1, 1)
        loss_rot = jnp.sum(jnp.where(rot_lane & valid, diff * diff, zero),
                           keepdims=True) * inv_4n                       # (1, 1)
        loss_sum = w_tran * loss_tran + s_tran + w_rot * loss_rot + s_rot

        out_lane = jax.lax.broadcasted_iota(jnp.int32, (1, nl), 1)
        loss_ref[...] = jnp.where(out_lane == 0, loss_tran,
                        jnp.where(out_lane == 1, loss_rot,
                        jnp.where(out_lane == 2, loss_sum, 0.0)))

    if not acc_scratch:
        # Single K step: keep the accumulator as a local value (no scratch,
        # no VMEM round-trip). Backbone bias folded into the init.
        acc = (jnp.dot(x_ref[...], wb_ref[...],
                       preferred_element_type=jnp.float32) + bb_ref[...])
        finalize(acc)
    else:
        acc_ref, = acc_scratch
        k = pl.program_id(0)

        @pl.when(k == 0)
        def _():
            # Fold the backbone bias into the accumulator init (fetched once).
            acc_ref[...] = jnp.broadcast_to(bb_ref[...], acc_ref.shape)

        acc_ref[...] += jnp.dot(x_ref[...], wb_ref[...],
                                preferred_element_type=jnp.float32)

        @pl.when(k == pl.num_programs(0) - 1)
        def _():
            finalize(acc_ref[...])


def _motion_net_pallas(x_pad, labels, meta_i, meta_f, params):
    bp, fp = x_pad.shape
    tk = _pick_tk(fp)
    n_k = fp // tk

    # Accumulator scratch only when the reduction is split over multiple steps.
    scratch = [pltpu.VMEM((bp, NF), jnp.float32)] if n_k > 1 else []

    grid_spec = pltpu.PrefetchScalarGridSpec(
        num_scalar_prefetch=2,
        grid=(n_k,),
        in_specs=[
            pl.BlockSpec((bp, tk), lambda k, *_: (0, k)),         # x (bf16)
            pl.BlockSpec((tk, NF), lambda k, *_: (k, 0)),         # wb (bf16)
            pl.BlockSpec((1, NF), lambda k, *_: (0, 0)),          # bb (f32)
            # TODO(synk): these constant-index weight blocks are still
            # double-buffered by default; pipeline_mode=pl.Buffered(1) would
            # reclaim ~2 MiB VMEM but is unnecessary at this footprint.
            pl.BlockSpec((2, NF, HH), lambda k, *_: (0, 0, 0)),   # w1 stacked
            pl.BlockSpec((2, 1, HH), lambda k, *_: (0, 0, 0)),    # b1 stacked
            pl.BlockSpec((2, HH, H2), lambda k, *_: (0, 0, 0)),   # w2 stacked
            pl.BlockSpec((2, 1, H2), lambda k, *_: (0, 0, 0)),    # b2 stacked
            pl.BlockSpec((2, H2, OUT), lambda k, *_: (0, 0, 0)),  # w3 stacked
            pl.BlockSpec((1, OUT), lambda k, *_: (0, 0)),         # b3 packed
            pl.BlockSpec((bp, OUT), lambda k, *_: (0, 0)),        # packed labels
        ],
        out_specs=(
            pl.BlockSpec((bp, OUT), lambda k, *_: (0, 0)),
            pl.BlockSpec((1, OUT), lambda k, *_: (0, 0)),
        ),
        scratch_shapes=scratch,
    )

    return pl.pallas_call(
        _motion_kernel,
        out_shape=(
            jax.ShapeDtypeStruct((bp, OUT), jnp.float32),   # [tran(3)|rot(4)|pad]
            jax.ShapeDtypeStruct((1, OUT), jnp.float32),    # [l_tran,l_rot,l_sum|pad]
        ),
        grid_spec=grid_spec,
        compiler_params=pltpu.CompilerParams(
            dimension_semantics=("arbitrary",),
            vmem_limit_bytes=32 << 20,
        ),
    )(meta_i, meta_f, x_pad,
      params["wb"], params["bb"],
      params["w1"], params["b1"], params["w2"], params["b2"],
      params["w3"], params["b3"],
      labels)


# ----------------------------------------------------------------------------
# Parameter construction (PyTorch-Linear-style uniform init) + kernel packing.
# ----------------------------------------------------------------------------
def _linear_init(key, fan_in, fan_out):
    kw, kb = jax.random.split(key)
    bound = 1.0 / jnp.sqrt(float(fan_in))
    w = jax.random.uniform(kw, (fan_in, fan_out), jnp.float32, -bound, bound)
    b = jax.random.uniform(kb, (1, fan_out), jnp.float32, -bound, bound)
    return w, b


def make_params(key, feat_in):
    keys = jax.random.split(key, 8)
    p = {}
    p["wb"], p["bb"] = _linear_init(keys[0], feat_in, 800)
    p["w1t"], p["b1t"] = _linear_init(keys[1], 800, 400)
    p["w2t"], p["b2t"] = _linear_init(keys[2], 400, 200)
    p["w3t"], p["b3t"] = _linear_init(keys[3], 200, 3)
    p["w1r"], p["b1r"] = _linear_init(keys[4], 800, 400)
    p["w2r"], p["b2r"] = _linear_init(keys[5], 400, 200)
    p["w3r"], p["b3r"] = _linear_init(keys[6], 200, 4)
    p["logvar"] = jnp.zeros((1, 2), jnp.float32)   # UncertaintyLoss(2) log-vars
    return p


def pack_params(p, feat_in):
    """Pad / stack the raw params into the kernel's compact bf16 layout."""
    fp = _round_up(feat_in, 128)

    wb = jnp.zeros((fp, NF), jnp.float32).at[:feat_in, :800].set(p["wb"])
    bb = jnp.zeros((1, NF), jnp.float32).at[:, :800].set(p["bb"])

    # Heads stacked along a leading axis: 0 = translation, 1 = rotation.
    w1 = jnp.zeros((2, NF, HH), jnp.float32)
    w1 = w1.at[0, :800, :400].set(p["w1t"]).at[1, :800, :400].set(p["w1r"])
    b1 = jnp.zeros((2, 1, HH), jnp.float32)
    b1 = b1.at[0, :, :400].set(p["b1t"]).at[1, :, :400].set(p["b1r"])

    w2 = jnp.zeros((2, HH, H2), jnp.float32)
    w2 = w2.at[0, :400, :200].set(p["w2t"]).at[1, :400, :200].set(p["w2r"])
    b2 = jnp.zeros((2, 1, H2), jnp.float32)
    b2 = b2.at[0, :, :200].set(p["b2t"]).at[1, :, :200].set(p["b2r"])

    # Final layer outputs packed lane-dense: [tran(0:3) | rot(3:7) | pad].
    w3 = jnp.zeros((2, H2, OUT), jnp.float32)
    w3 = w3.at[0, :200, 0:3].set(p["w3t"]).at[1, :200, 3:7].set(p["w3r"])
    b3 = jnp.zeros((1, OUT), jnp.float32)
    b3 = b3.at[:, 0:3].set(p["b3t"]).at[:, 3:7].set(p["b3r"])

    return {
        "wb": wb.astype(jnp.bfloat16), "bb": bb,
        "w1": w1.astype(jnp.bfloat16), "b1": b1,
        "w2": w2.astype(jnp.bfloat16), "b2": b2,
        "w3": w3.astype(jnp.bfloat16), "b3": b3,
        "logvar": p["logvar"],
    }


# ----------------------------------------------------------------------------
# MotionNet forward
# ----------------------------------------------------------------------------
def motion_net_forward(x, tran_labels, rot_labels, packed_params):
    B = x.shape[0]
    x_flat = x.reshape(B, -1).astype(jnp.float32)
    F = x_flat.shape[1]
    fp = packed_params["wb"].shape[0]
    bp = max(SUBLANE, _round_up(B, SUBLANE))

    # Pad batch to the sublane tile and feature dim to the packed width.
    x_pad = jnp.zeros((bp, fp), jnp.bfloat16)
    x_pad = x_pad.at[:B, :F].set(x_flat.astype(jnp.bfloat16))

    # Pack labels lane-dense: [tran(0:3) | rot(3:7) | zeros].
    labels = jnp.zeros((bp, OUT), jnp.float32)
    labels = labels.at[:B, 0:3].set(tran_labels.astype(jnp.float32))
    labels = labels.at[:B, 3:7].set(rot_labels.astype(jnp.float32))

    # Scalars via SMEM scalar prefetch: valid-row count, loss reciprocals and
    # the uncertainty-loss terms.
    s = packed_params["logvar"].reshape(-1).astype(jnp.float32)          # (2,)
    meta_i = jnp.array([B], jnp.int32)
    meta_f = jnp.concatenate([
        jnp.array([1.0 / (3.0 * B), 1.0 / (4.0 * B)], jnp.float32),
        s,
        jnp.exp(-s),
    ])

    # TODO(synk): for production batch sizes (bp > 128) add a leading
    # "parallel" batch-tile grid axis (keeps weights VMEM-resident across
    # batch tiles and uses both v7x TensorCores); the batch-mean losses would
    # then need a cross-tile reduction.
    pose, loss_vec = _motion_net_pallas(x_pad, labels, meta_i, meta_f,
                                        packed_params)

    translation = pose[:B, 0:3]
    rotation = pose[:B, 3:7]
    loss = {
        "tran": loss_vec[0, 0],
        "rot": loss_vec[0, 1],
        "sum": loss_vec[0, 2],
    }
    return loss, translation, rotation


if __name__ == "__main__":
    key = jax.random.PRNGKey(0)
    kx, kt, kr, kp = jax.random.split(key, 4)

    # x: [B, n_scans, C, H, W]  (small shapes)
    B, n_scans, C, H, W = 2, 2, 4, 16, 16
    x = jax.random.normal(kx, (B, n_scans, C, H, W), jnp.float32)
    tran_labels = jax.random.normal(kt, (B, 3), jnp.float32)
    rot_q = jax.random.normal(kr, (B, 4), jnp.float32)
    rot_labels = rot_q / jnp.linalg.norm(rot_q, axis=-1, keepdims=True)

    feat_in = n_scans * C * H * W
    raw_params = make_params(kp, feat_in)
    packed = pack_params(raw_params, feat_in)

    loss, translation, rotation = motion_net_forward(
        x, tran_labels, rot_labels, packed)
    jax.block_until_ready((loss, translation, rotation))
    print("KERNEL_OK")
</pallas_src>

<mosaic_0001>
module attributes {stable_mosaic.version = 11 : i64} {
  func.func @_motion_kernel(%arg0: i32, %arg1: memref<1xi32, #tpu.memory_space<smem>>, %arg2: memref<6xf32, #tpu.memory_space<smem>>, %arg3: memref<8x2048xbf16, #tpu.memory_space<vmem>>, %arg4: memref<2048x896xbf16, #tpu.memory_space<vmem>>, %arg5: memref<1x896xf32, #tpu.memory_space<vmem>>, %arg6: memref<2x896x448xbf16, #tpu.memory_space<vmem>>, %arg7: memref<2x1x448xf32, #tpu.memory_space<vmem>>, %arg8: memref<2x448x256xbf16, #tpu.memory_space<vmem>>, %arg9: memref<2x1x256xf32, #tpu.memory_space<vmem>>, %arg10: memref<2x256x128xbf16, #tpu.memory_space<vmem>>, %arg11: memref<1x128xf32, #tpu.memory_space<vmem>>, %arg12: memref<8x128xf32, #tpu.memory_space<vmem>>, %arg13: memref<8x128xf32, #tpu.memory_space<vmem>>, %arg14: memref<1x128xf32, #tpu.memory_space<vmem>>) attributes {dimension_semantics = [#tpu.dimension_semantics<arbitrary>], iteration_bounds = array<i64: 1>, scalar_prefetch = 2 : i64, scratch_operands = 0 : i64, tpu.core_type = #tpu.core_type<tc>, window_params = [{transform_indices = @transform_0, window_bounds = array<i64: 8, 2048>}, {transform_indices = @transform_1, window_bounds = array<i64: 2048, 896>}, {pipeline_mode = #tpu.pipeline_mode<synchronous>, transform_indices = @transform_2, window_bounds = array<i64: 1, 896>}, {pipeline_mode = #tpu.pipeline_mode<synchronous>, transform_indices = @transform_3, window_bounds = array<i64: 2, 896, 448>}, {pipeline_mode = #tpu.pipeline_mode<synchronous>, transform_indices = @transform_4, window_bounds = array<i64: 2, 1, 448>}, {pipeline_mode = #tpu.pipeline_mode<synchronous>, transform_indices = @transform_5, window_bounds = array<i64: 2, 448, 256>}, {pipeline_mode = #tpu.pipeline_mode<synchronous>, transform_indices = @transform_6, window_bounds = array<i64: 2, 1, 256>}, {pipeline_mode = #tpu.pipeline_mode<synchronous>, transform_indices = @transform_7, window_bounds = array<i64: 2, 256, 128>}, {pipeline_mode = #tpu.pipeline_mode<synchronous>, transform_indices = @transform_8, window_bounds = array<i64: 1, 128>}, {pipeline_mode = #tpu.pipeline_mode<synchronous>, transform_indices = @transform_9, window_bounds = array<i64: 8, 128>}, {pipeline_mode = #tpu.pipeline_mode<synchronous>, transform_indices = @transform_10, window_bounds = array<i64: 8, 128>}, {pipeline_mode = #tpu.pipeline_mode<synchronous>, transform_indices = @transform_11, window_bounds = array<i64: 1, 128>}]} {
    %c0 = arith.constant 0 : index
    %c0_0 = arith.constant 0 : index
    %0 = vector.load %arg3[%c0, %c0_0] : memref<8x2048xbf16, #tpu.memory_space<vmem>>, vector<8x2048xbf16>
    %c0_1 = arith.constant 0 : index
    %c0_2 = arith.constant 0 : index
    %1 = vector.load %arg4[%c0_1, %c0_2] : memref<2048x896xbf16, #tpu.memory_space<vmem>>, vector<2048x896xbf16>
    %cst = arith.constant dense<0.000000e+00> : vector<8x896xf32>
    %2 = tpu.matmul %0, %1, %cst {dimension_numbers = #tpu.dot_dimension_numbers<[1], [0], [0], [1], [0, 0, 1, 1], [], []>} : vector<8x2048xbf16>, vector<2048x896xbf16>, vector<8x896xf32> -> vector<8x896xf32>
    %c0_3 = arith.constant 0 : index
    %c0_4 = arith.constant 0 : index
    %3 = vector.load %arg5[%c0_3, %c0_4] : memref<1x896xf32, #tpu.memory_space<vmem>>, vector<1x896xf32>
    %4 = vector.broadcast %3 : vector<1x896xf32> to vector<8x896xf32>
    %5 = arith.addf %2, %4 : vector<8x896xf32>
    %c0_5 = arith.constant 0 : index
    %6 = memref.load %arg1[%c0_5] : memref<1xi32, #tpu.memory_space<smem>>
    %c0_6 = arith.constant 0 : index
    %7 = memref.load %arg2[%c0_6] : memref<6xf32, #tpu.memory_space<smem>>
    %c1 = arith.constant 1 : index
    %8 = memref.load %arg2[%c1] : memref<6xf32, #tpu.memory_space<smem>>
    %c2 = arith.constant 2 : index
    %9 = memref.load %arg2[%c2] : memref<6xf32, #tpu.memory_space<smem>>
    %c3 = arith.constant 3 : index
    %10 = memref.load %arg2[%c3] : memref<6xf32, #tpu.memory_space<smem>>
    %c4 = arith.constant 4 : index
    %11 = memref.load %arg2[%c4] : memref<6xf32, #tpu.memory_space<smem>>
    %c5 = arith.constant 5 : index
    %12 = memref.load %arg2[%c5] : memref<6xf32, #tpu.memory_space<smem>>
    %cst_7 = arith.constant 0.000000e+00 : f32
    %13 = vector.broadcast %cst_7 : f32 to vector<8x896xf32>
    %14 = arith.maximumf %5, %13 : vector<8x896xf32>
    %15 = arith.truncf %14 : vector<8x896xf32> to vector<8x896xbf16>
    %c0_8 = arith.constant 0 : index
    %c0_9 = arith.constant 0 : index
    %c0_10 = arith.constant 0 : index
    %16 = vector.load %arg6[%c0_8, %c0_9, %c0_10] : memref<2x896x448xbf16, #tpu.memory_space<vmem>>, vector<1x896x448xbf16>
    %17 = vector.shape_cast %16 : vector<1x896x448xbf16> to vector<896x448xbf16>
    %cst_11 = arith.constant dense<0.000000e+00> : vector<8x448xf32>
    %18 = tpu.matmul %15, %17, %cst_11 {dimension_numbers = #tpu.dot_dimension_numbers<[1], [0], [0], [1], [0, 0, 1, 1], [], []>} : vector<8x896xbf16>, vector<896x448xbf16>, vector<8x448xf32> -> vector<8x448xf32>
    %c0_12 = arith.constant 0 : index
    %c0_13 = arith.constant 0 : index
    %c0_14 = arith.constant 0 : index
    %19 = vector.load %arg7[%c0_12, %c0_13, %c0_14] : memref<2x1x448xf32, #tpu.memory_space<vmem>>, vector<1x1x448xf32>
    %20 = vector.shape_cast %19 : vector<1x1x448xf32> to vector<1x448xf32>
    %21 = vector.broadcast %20 : vector<1x448xf32> to vector<8x448xf32>
    %22 = arith.addf %18, %21 : vector<8x448xf32>
    %cst_15 = arith.constant 0.000000e+00 : f32
    %23 = vector.broadcast %cst_15 : f32 to vector<8x448xf32>
    %24 = arith.maximumf %22, %23 : vector<8x448xf32>
    %25 = arith.truncf %24 : vector<8x448xf32> to vector<8x448xbf16>
    %c1_16 = arith.constant 1 : index
    %c0_17 = arith.constant 0 : index
    %c0_18 = arith.constant 0 : index
    %26 = vector.load %arg6[%c1_16, %c0_17, %c0_18] : memref<2x896x448xbf16, #tpu.memory_space<vmem>>, vector<1x896x448xbf16>
    %27 = vector.shape_cast %26 : vector<1x896x448xbf16> to vector<896x448xbf16>
    %cst_19 = arith.constant dense<0.000000e+00> : vector<8x448xf32>
    %28 = tpu.matmul %15, %27, %cst_19 {dimension_numbers = #tpu.dot_dimension_numbers<[1], [0], [0], [1], [0, 0, 1, 1], [], []>} : vector<8x896xbf16>, vector<896x448xbf16>, vector<8x448xf32> -> vector<8x448xf32>
    %c1_20 = arith.constant 1 : index
    %c0_21 = arith.constant 0 : index
    %c0_22 = arith.constant 0 : index
    %29 = vector.load %arg7[%c1_20, %c0_21, %c0_22] : memref<2x1x448xf32, #tpu.memory_space<vmem>>, vector<1x1x448xf32>
    %30 = vector.shape_cast %29 : vector<1x1x448xf32> to vector<1x448xf32>
    %31 = vector.broadcast %30 : vector<1x448xf32> to vector<8x448xf32>
    %32 = arith.addf %28, %31 : vector<8x448xf32>
    %cst_23 = arith.constant 0.000000e+00 : f32
    %33 = vector.broadcast %cst_23 : f32 to vector<8x448xf32>
    %34 = arith.maximumf %32, %33 : vector<8x448xf32>
    %35 = arith.truncf %34 : vector<8x448xf32> to vector<8x448xbf16>
    %c0_24 = arith.constant 0 : index
    %c0_25 = arith.constant 0 : index
    %c0_26 = arith.constant 0 : index
    %36 = vector.load %arg8[%c0_24, %c0_25, %c0_26] : memref<2x448x256xbf16, #tpu.memory_space<vmem>>, vector<1x448x256xbf16>
    %37 = vector.shape_cast %36 : vector<1x448x256xbf16> to vector<448x256xbf16>
    %cst_27 = arith.constant dense<0.000000e+00> : vector<8x256xf32>
    %38 = tpu.matmul %25, %37, %cst_27 {dimension_numbers = #tpu.dot_dimension_numbers<[1], [0], [0], [1], [0, 0, 1, 1], [], []>} : vector<8x448xbf16>, vector<448x256xbf16>, vector<8x256xf32> -> vector<8x256xf32>
    %c0_28 = arith.constant 0 : index
    %c0_29 = arith.constant 0 : index
    %c0_30 = arith.constant 0 : index
    %39 = vector.load %arg9[%c0_28, %c0_29, %c0_30] : memref<2x1x256xf32, #tpu.memory_space<vmem>>, vector<1x1x256xf32>
    %40 = vector.shape_cast %39 : vector<1x1x256xf32> to vector<1x256xf32>
    %41 = vector.broadcast %40 : vector<1x256xf32> to vector<8x256xf32>
    %42 = arith.addf %38, %41 : vector<8x256xf32>
    %cst_31 = arith.constant 0.000000e+00 : f32
    %43 = vector.broadcast %cst_31 : f32 to vector<8x256xf32>
    %44 = arith.maximumf %42, %43 : vector<8x256xf32>
    %45 = arith.truncf %44 : vector<8x256xf32> to vector<8x256xbf16>
    %c1_32 = arith.constant 1 : index
    %c0_33 = arith.constant 0 : index
    %c0_34 = arith.constant 0 : index
    %46 = vector.load %arg8[%c1_32, %c0_33, %c0_34] : memref<2x448x256xbf16, #tpu.memory_space<vmem>>, vector<1x448x256xbf16>
    %47 = vector.shape_cast %46 : vector<1x448x256xbf16> to vector<448x256xbf16>
    %cst_35 = arith.constant dense<0.000000e+00> : vector<8x256xf32>
    %48 = tpu.matmul %35, %47, %cst_35 {dimension_numbers = #tpu.dot_dimension_numbers<[1], [0], [0], [1], [0, 0, 1, 1], [], []>} : vector<8x448xbf16>, vector<448x256xbf16>, vector<8x256xf32> -> vector<8x256xf32>
    %c1_36 = arith.constant 1 : index
    %c0_37 = arith.constant 0 : index
    %c0_38 = arith.constant 0 : index
    %49 = vector.load %arg9[%c1_36, %c0_37, %c0_38] : memref<2x1x256xf32, #tpu.memory_space<vmem>>, vector<1x1x256xf32>
    %50 = vector.shape_cast %49 : vector<1x1x256xf32> to vector<1x256xf32>
    %51 = vector.broadcast %50 : vector<1x256xf32> to vector<8x256xf32>
    %52 = arith.addf %48, %51 : vector<8x256xf32>
    %cst_39 = arith.constant 0.000000e+00 : f32
    %53 = vector.broadcast %cst_39 : f32 to vector<8x256xf32>
    %54 = arith.maximumf %52, %53 : vector<8x256xf32>
    %55 = arith.truncf %54 : vector<8x256xf32> to vector<8x256xbf16>
    %c0_40 = arith.constant 0 : index
    %c0_41 = arith.constant 0 : index
    %c0_42 = arith.constant 0 : index
    %56 = vector.load %arg10[%c0_40, %c0_41, %c0_42] : memref<2x256x128xbf16, #tpu.memory_space<vmem>>, vector<1x256x128xbf16>
    %57 = vector.shape_cast %56 : vector<1x256x128xbf16> to vector<256x128xbf16>
    %cst_43 = arith.constant dense<0.000000e+00> : vector<8x128xf32>
    %58 = tpu.matmul %45, %57, %cst_43 {dimension_numbers = #tpu.dot_dimension_numbers<[1], [0], [0], [1], [0, 0, 1, 1], [], []>} : vector<8x256xbf16>, vector<256x128xbf16>, vector<8x128xf32> -> vector<8x128xf32>
    %c1_44 = arith.constant 1 : index
    %c0_45 = arith.constant 0 : index
    %c0_46 = arith.constant 0 : index
    %59 = vector.load %arg10[%c1_44, %c0_45, %c0_46] : memref<2x256x128xbf16, #tpu.memory_space<vmem>>, vector<1x256x128xbf16>
    %60 = vector.shape_cast %59 : vector<1x256x128xbf16> to vector<256x128xbf16>
    %cst_47 = arith.constant dense<0.000000e+00> : vector<8x128xf32>
    %61 = tpu.matmul %55, %60, %cst_47 {dimension_numbers = #tpu.dot_dimension_numbers<[1], [0], [0], [1], [0, 0, 1, 1], [], []>} : vector<8x256xbf16>, vector<256x128xbf16>, vector<8x128xf32> -> vector<8x128xf32>
    %62 = arith.addf %58, %61 : vector<8x128xf32>
    %c0_48 = arith.constant 0 : index
    %c0_49 = arith.constant 0 : index
    %63 = vector.load %arg11[%c0_48, %c0_49] : memref<1x128xf32, #tpu.memory_space<vmem>>, vector<1x128xf32>
    %64 = vector.broadcast %63 : vector<1x128xf32> to vector<8x128xf32>
    %65 = arith.addf %62, %64 : vector<8x128xf32>
    %66 = tpu.iota {dimensions = array<i32: 1>} : vector<8x128xi32>
    %67 = tpu.iota {dimensions = array<i32: 0>} : vector<8x128xi32>
    %68 = vector.broadcast %6 : i32 to vector<8x128xi32>
    %69 = arith.cmpi slt, %67, %68 : vector<8x128xi32>
    %c3_i32 = arith.constant 3 : i32
    %70 = vector.broadcast %c3_i32 : i32 to vector<8x128xi32>
    %71 = arith.cmpi slt, %66, %70 : vector<8x128xi32>
    %c3_i32_50 = arith.constant 3 : i32
    %72 = vector.broadcast %c3_i32_50 : i32 to vector<8x128xi32>
    %73 = arith.cmpi sge, %66, %72 : vector<8x128xi32>
    %c7_i32 = arith.constant 7 : i32
    %74 = vector.broadcast %c7_i32 : i32 to vector<8x128xi32>
    %75 = arith.cmpi slt, %66, %74 : vector<8x128xi32>
    %76 = arith.andi %73, %75 : vector<8x128xi1>
    %cst_51 = arith.constant 0.000000e+00 : f32
    %77 = vector.broadcast %cst_51 : f32 to vector<8x128xf32>
    %78 = arith.andi %76, %69 : vector<8x128xi1>
    %79 = arith.mulf %65, %65 : vector<8x128xf32>
    %80 = arith.select %78, %79, %77 : vector<8x128xi1>, vector<8x128xf32>
    %81 = vector.shape_cast %80 : vector<8x128xf32> to vector<1x8x128xf32>
    %cst_52 = arith.constant dense<0.000000e+00> : vector<1xf32>
    %82 = vector.multi_reduction <add>, %81, %cst_52 [1, 2] : vector<1x8x128xf32> to vector<1xf32>
    %83 = vector.shape_cast %82 : vector<1xf32> to vector<1x1x1xf32>
    %84 = vector.extract %83[0, 0, 0] : f32 from vector<1x1x1xf32>
    %85 = vector.broadcast %84 : f32 to vector<1x1xf32>
    %86 = math.rsqrt %85 : vector<1x1xf32>
    %87 = vector.broadcast %86 : vector<1x1xf32> to vector<8x128xf32>
    %88 = arith.mulf %65, %87 : vector<8x128xf32>
    %89 = arith.select %76, %88, %65 : vector<8x128xi1>, vector<8x128xf32>
    %c0_53 = arith.constant 0 : index
    %c0_54 = arith.constant 0 : index
    %90 = vector.load %arg13[%c0_53, %c0_54] : memref<8x128xf32, #tpu.memory_space<vmem>>, vector<8x128xf32>
    tpu.vector_store %arg13[%c0_53, %c0_54], %89 {strides = array<i32>} : memref<8x128xf32, #tpu.memory_space<vmem>>, vector<8x128xf32>,
    %c0_55 = arith.constant 0 : index
    %c0_56 = arith.constant 0 : index
    %91 = vector.load %arg12[%c0_55, %c0_56] : memref<8x128xf32, #tpu.memory_space<vmem>>, vector<8x128xf32>
    %92 = arith.subf %91, %89 : vector<8x128xf32>
    %93 = arith.andi %71, %69 : vector<8x128xi1>
    %94 = math.absf %92 : vector<8x128xf32>
    %95 = arith.select %93, %94, %77 : vector<8x128xi1>, vector<8x128xf32>
    %96 = vector.shape_cast %95 : vector<8x128xf32> to vector<1x8x128xf32>
    %cst_57 = arith.constant dense<0.000000e+00> : vector<1xf32>
    %97 = vector.multi_reduction <add>, %96, %cst_57 [1, 2] : vector<1x8x128xf32> to vector<1xf32>
    %98 = vector.shape_cast %97 : vector<1xf32> to vector<1x1x1xf32>
    %99 = vector.extract %98[0, 0, 0] : f32 from vector<1x1x1xf32>
    %100 = vector.broadcast %99 : f32 to vector<1x1xf32>
    %101 = vector.broadcast %7 : f32 to vector<1x1xf32>
    %102 = arith.mulf %100, %101 : vector<1x1xf32>
    %103 = arith.andi %76, %69 : vector<8x128xi1>
    %104 = arith.mulf %92, %92 : vector<8x128xf32>
    %105 = arith.select %103, %104, %77 : vector<8x128xi1>, vector<8x128xf32>
    %106 = vector.shape_cast %105 : vector<8x128xf32> to vector<1x8x128xf32>
    %cst_58 = arith.constant dense<0.000000e+00> : vector<1xf32>
    %107 = vector.multi_reduction <add>, %106, %cst_58 [1, 2] : vector<1x8x128xf32> to vector<1xf32>
    %108 = vector.shape_cast %107 : vector<1xf32> to vector<1x1x1xf32>
    %109 = vector.extract %108[0, 0, 0] : f32 from vector<1x1x1xf32>
    %110 = vector.broadcast %109 : f32 to vector<1x1xf32>
    %111 = vector.broadcast %8 : f32 to vector<1x1xf32>
    %112 = arith.mulf %110, %111 : vector<1x1xf32>
    %113 = vector.broadcast %11 : f32 to vector<1x1xf32>
    %114 = arith.mulf %113, %102 : vector<1x1xf32>
    %115 = vector.broadcast %9 : f32 to vector<1x1xf32>
    %116 = arith.addf %114, %115 : vector<1x1xf32>
    %117 = vector.broadcast %12 : f32 to vector<1x1xf32>
    %118 = arith.mulf %117, %112 : vector<1x1xf32>
    %119 = arith.addf %116, %118 : vector<1x1xf32>
    %120 = vector.broadcast %10 : f32 to vector<1x1xf32>
    %121 = arith.addf %119, %120 : vector<1x1xf32>
    %122 = tpu.iota {dimensions = array<i32: 1>} : vector<1x128xi32>
    %c0_i32 = arith.constant 0 : i32
    %123 = vector.broadcast %c0_i32 : i32 to vector<1x128xi32>
    %124 = arith.cmpi eq, %122, %123 : vector<1x128xi32>
    %c1_i32 = arith.constant 1 : i32
    %125 = vector.broadcast %c1_i32 : i32 to vector<1x128xi32>
    %126 = arith.cmpi eq, %122, %125 : vector<1x128xi32>
    %c2_i32 = arith.constant 2 : i32
    %127 = vector.broadcast %c2_i32 : i32 to vector<1x128xi32>
    %128 = arith.cmpi eq, %122, %127 : vector<1x128xi32>
    %cst_59 = arith.constant 0.000000e+00 : f32
    %129 = vector.shape_cast %121 : vector<1x1xf32> to vector<1x1xf32>
    %130 = vector.broadcast %129 : vector<1x1xf32> to vector<1x128xf32>
    %131 = vector.broadcast %cst_59 : f32 to vector<1x128xf32>
    %132 = arith.select %128, %130, %131 : vector<1x128xi1>, vector<1x128xf32>
    %133 = vector.shape_cast %112 : vector<1x1xf32> to vector<1x1xf32>
    %134 = vector.broadcast %133 : vector<1x1xf32> to vector<1x128xf32>
    %135 = arith.select %126, %134, %132 : vector<1x128xi1>, vector<1x128xf32>
    %136 = vector.shape_cast %102 : vector<1x1xf32> to vector<1x1xf32>
    %137 = vector.broadcast %136 : vector<1x1xf32> to vector<1x128xf32>
    %138 = arith.select %124, %137, %135 : vector<1x128xi1>, vector<1x128xf32>
    %c0_60 = arith.constant 0 : index
    %c0_61 = arith.constant 0 : index
    %139 = vector.load %arg14[%c0_60, %c0_61] : memref<1x128xf32, #tpu.memory_space<vmem>>, vector<1x128xf32>
    tpu.vector_store %arg14[%c0_60, %c0_61], %138 {strides = array<i32>} : memref<1x128xf32, #tpu.memory_space<vmem>>, vector<1x128xf32>,
    return
  }
  func.func @transform_0(%arg0: i32, %arg1: memref<1xi32, #tpu.memory_space<smem>>, %arg2: memref<6xf32, #tpu.memory_space<smem>>) -> (i32, i32) {
    %c0_i32 = arith.constant 0 : i32
    %c0_i32_0 = arith.constant 0 : i32
    return %c0_i32, %arg0 : i32, i32
  }
  func.func @transform_1(%arg0: i32, %arg1: memref<1xi32, #tpu.memory_space<smem>>, %arg2: memref<6xf32, #tpu.memory_space<smem>>) -> (i32, i32) {
    %c0_i32 = arith.constant 0 : i32
    %c0_i32_0 = arith.constant 0 : i32
    return %arg0, %c0_i32 : i32, i32
  }
  func.func @transform_2(%arg0: i32, %arg1: memref<1xi32, #tpu.memory_space<smem>>, %arg2: memref<6xf32, #tpu.memory_space<smem>>) -> (i32, i32) {
    %c0_i32 = arith.constant 0 : i32
    %c0_i32_0 = arith.constant 0 : i32
    %c0_i32_1 = arith.constant 0 : i32
    return %c0_i32, %c0_i32_0 : i32, i32
  }
  func.func @transform_3(%arg0: i32, %arg1: memref<1xi32, #tpu.memory_space<smem>>, %arg2: memref<6xf32, #tpu.memory_space<smem>>) -> (i32, i32, i32) {
    %c0_i32 = arith.constant 0 : i32
    %c0_i32_0 = arith.constant 0 : i32
    %c0_i32_1 = arith.constant 0 : i32
    %c0_i32_2 = arith.constant 0 : i32
    return %c0_i32, %c0_i32_0, %c0_i32_1 : i32, i32, i32
  }
  func.func @transform_4(%arg0: i32, %arg1: memref<1xi32, #tpu.memory_space<smem>>, %arg2: memref<6xf32, #tpu.memory_space<smem>>) -> (i32, i32, i32) {
    %c0_i32 = arith.constant 0 : i32
    %c0_i32_0 = arith.constant 0 : i32
    %c0_i32_1 = arith.constant 0 : i32
    %c0_i32_2 = arith.constant 0 : i32
    return %c0_i32, %c0_i32_0, %c0_i32_1 : i32, i32, i32
  }
  func.func @transform_5(%arg0: i32, %arg1: memref<1xi32, #tpu.memory_space<smem>>, %arg2: memref<6xf32, #tpu.memory_space<smem>>) -> (i32, i32, i32) {
    %c0_i32 = arith.constant 0 : i32
    %c0_i32_0 = arith.constant 0 : i32
    %c0_i32_1 = arith.constant 0 : i32
    %c0_i32_2 = arith.constant 0 : i32
    return %c0_i32, %c0_i32_0, %c0_i32_1 : i32, i32, i32
  }
  func.func @transform_6(%arg0: i32, %arg1: memref<1xi32, #tpu.memory_space<smem>>, %arg2: memref<6xf32, #tpu.memory_space<smem>>) -> (i32, i32, i32) {
    %c0_i32 = arith.constant 0 : i32
    %c0_i32_0 = arith.constant 0 : i32
    %c0_i32_1 = arith.constant 0 : i32
    %c0_i32_2 = arith.constant 0 : i32
    return %c0_i32, %c0_i32_0, %c0_i32_1 : i32, i32, i32
  }
  func.func @transform_7(%arg0: i32, %arg1: memref<1xi32, #tpu.memory_space<smem>>, %arg2: memref<6xf32, #tpu.memory_space<smem>>) -> (i32, i32, i32) {
    %c0_i32 = arith.constant 0 : i32
    %c0_i32_0 = arith.constant 0 : i32
    %c0_i32_1 = arith.constant 0 : i32
    %c0_i32_2 = arith.constant 0 : i32
    return %c0_i32, %c0_i32_0, %c0_i32_1 : i32, i32, i32
  }
  func.func @transform_8(%arg0: i32, %arg1: memref<1xi32, #tpu.memory_space<smem>>, %arg2: memref<6xf32, #tpu.memory_space<smem>>) -> (i32, i32) {
    %c0_i32 = arith.constant 0 : i32
    %c0_i32_0 = arith.constant 0 : i32
    %c0_i32_1 = arith.constant 0 : i32
    return %c0_i32, %c0_i32_0 : i32, i32
  }
  func.func @transform_9(%arg0: i32, %arg1: memref<1xi32, #tpu.memory_space<smem>>, %arg2: memref<6xf32, #tpu.memory_space<smem>>) -> (i32, i32) {
    %c0_i32 = arith.constant 0 : i32
    %c0_i32_0 = arith.constant 0 : i32
    %c0_i32_1 = arith.constant 0 : i32
    return %c0_i32, %c0_i32_0 : i32, i32
  }
  func.func @transform_10(%arg0: i32, %arg1: memref<1xi32, #tpu.memory_space<smem>>, %arg2: memref<6xf32, #tpu.memory_space<smem>>) -> (i32, i32) {
    %c0_i32 = arith.constant 0 : i32
    %c0_i32_0 = arith.constant 0 : i32
    %c0_i32_1 = arith.constant 0 : i32
    return %c0_i32, %c0_i32_0 : i32, i32
  }
  func.func @transform_11(%arg0: i32, %arg1: memref<1xi32, #tpu.memory_space<smem>>, %arg2: memref<6xf32, #tpu.memory_space<smem>>) -> (i32, i32) {
    %c0_i32 = arith.constant 0 : i32
    %c0_i32_0 = arith.constant 0 : i32
    %c0_i32_1 = arith.constant 0 : i32
    return %c0_i32, %c0_i32_0 : i32, i32
  }
}

</mosaic_0001>

<llo_original>
// kernel: tpu_custom_call.1
$region0: #{tpu_custom_call.1}
  #allocation0 [shape = 'u32[]', space=smem, size = 0x4, offset = 0x4, fixed_abs, tag = 'smem constant byte address 0x4 - core index']
  #allocation1 [shape = 'u32[144,128]{1,0:T(1,128)}', space=vmem, size = 0x12000, scoped, tag = 'internal scratch']
  #allocation2 [shape = 's32[1]{0}', space=sflag, size = 0x4, scoped, tag = 'scoped memory for tpu_custom_call.1']
  #allocation3 [shape = 's32[1]{0:T(128)S(6)}', space=smem, size = 0x200, scoped, tag = 'prefetched SMEM operand 0']
  #allocation4 [shape = 'u8[512]{0}', space=smem, size = 0x200, scoped, tag = 'prefetched SMEM operand 1']
  %s0 = inlined_call_operand.<no memory space> [shape: s32[1], index: 0, kind: input, shape index: {}]
  %s1 = inlined_call_operand.vmem [shape: f32[6], index: 1, kind: input, shape index: {}]
  %s2 = inlined_call_operand.vmem [shape: bf16[8,2048], index: 2, kind: input, shape index: {}]
  %s3 = inlined_call_operand.hbm [shape: bf16[2048,896], index: 3, kind: input, shape index: {}]
  %s4 = inlined_call_operand.vmem [shape: f32[1,896], index: 4, kind: input, shape index: {}]
  %s5 = inlined_call_operand.vmem [shape: bf16[2,896,448], index: 5, kind: input, shape index: {}]
  %s6 = inlined_call_operand.vmem [shape: f32[2,1,448], index: 6, kind: input, shape index: {}]
  %s7 = inlined_call_operand.vmem [shape: bf16[2,448,256], index: 7, kind: input, shape index: {}]
  %s8 = inlined_call_operand.vmem [shape: f32[2,1,256], index: 8, kind: input, shape index: {}]
  %s9 = inlined_call_operand.vmem [shape: bf16[2,256,128], index: 9, kind: input, shape index: {}]
  %s10 = inlined_call_operand.vmem [shape: f32[1,128], index: 10, kind: input, shape index: {}]
  %s11 = inlined_call_operand.vmem [shape: f32[8,128], index: 11, kind: input, shape index: {}]
  %s12 = inlined_call_operand.hbm [shape: f32[8,128], index: 12, kind: output, shape index: {0}]
  %s13 = inlined_call_operand.hbm [shape: f32[1,128], index: 13, kind: output, shape index: {1}]
  %14 = xla_tuple %s12, %s13
  %s15 = sld [smem:[#allocation0]]
  $region62: #{tpu_custom_call.1} parent=0
    _
  %s17 = ssub.s32 1, %s15
  %s18 = scalar_select 0, %s17, %s15
  %19 = sst [smem:[#allocation3]] %s0
  %s20 = sshll.u32 %s1, 4
  %s21 = int_to_ptr.vmem [resolvable:$true] %s20
  %23 = dma.vmem_to_smem %s21, 16, [#allocation4], [#allocation2]
  %24 = dma.done [#allocation2], 16
  %25 = sfence
  $region1: #{tpu_custom_call.1} parent=0
    #allocation5 [shape = 'u8[3670016]{0}', space=vmem, size = 0x380000, scoped, tag = 'input window, operand 3, single buffered']
    #allocation6 [shape = 's32[1]{0}', space=sflag, size = 0x4, scoped, tag = 'scoped memory for tpu_custom_call.1']
    #allocation7 [shape = 's32[1]{0}', space=sflag, size = 0x4, scoped, tag = 'scoped memory for tpu_custom_call.1']
    #allocation8 [shape = 'u8[4096]{0}', space=vmem, size = 0x1000, scoped, tag = 'output window, operand 0, single buffered']
    #allocation9 [shape = 'u8[512]{0}', space=vmem, size = 0x400, scoped, tag = 'output window, operand 1, single buffered']
    #allocation10 [shape = 's32[1]{0}', space=sflag, size = 0x4, scoped, tag = 'scoped memory for tpu_custom_call.1']
    %26 = vsyncpa [#allocation6], 0
    %27 = vsyncpa [#allocation7], 0
    %28 = vsyncpa [#allocation10], 0
    // Predicated region
    $region2: #{tpu_custom_call.1} parent=1 // pred_check
      _
    $region3: #{tpu_custom_call.1} parent=1 // pred_check_branch
      %30 = sbr.rel (0) target = $region5
    $region4: #{tpu_custom_call.1} parent=1 // pred_region
      _
    $region5: #{tpu_custom_call.1} parent=1 // pred_fallthru
      _
    // Predicated region
    $region6: #{tpu_custom_call.1} parent=1 // pred_check
      _
    $region7: #{tpu_custom_call.1} parent=1 // pred_check_branch
      %32 = sbr.rel (0) target = $region9
    $region8: #{tpu_custom_call.1} parent=1 // pred_region
      %s34 = ssub.s32 114688, 114688
      %35 = vsyncadd [#allocation6], %s34
      %s36 = sshll.u32 [#allocation5], 4
      %s37 = int_to_ptr.vmem [resolvable:$true] %s36
      %42 = dma.hbm_to_vmem [thread:$0]  %s3, 114688, %s37, [#allocation6], 448, 448, 28
    $region9: #{tpu_custom_call.1} parent=1 // pred_fallthru
      _
    // Predicated region
    $region10: #{tpu_custom_call.1} parent=1 // pred_check
      _
    $region11: #{tpu_custom_call.1} parent=1 // pred_check_branch
      %44 = sbr.rel (0) target = $region13
    $region12: #{tpu_custom_call.1} parent=1 // pred_region
      _
    $region13: #{tpu_custom_call.1} parent=1 // pred_fallthru
      _
    // Predicated region
    $region14: #{tpu_custom_call.1} parent=1 // pred_check
      _
    $region15: #{tpu_custom_call.1} parent=1 // pred_check_branch
      %46 = sbr.rel (0) target = $region17
    $region16: #{tpu_custom_call.1} parent=1 // pred_region
      _
    $region17: #{tpu_custom_call.1} parent=1 // pred_fallthru
      _
    // Predicated region
    $region18: #{tpu_custom_call.1} parent=1 // pred_check
      _
    $region19: #{tpu_custom_call.1} parent=1 // pred_check_branch
      %48 = sbr.rel (0) target = $region21
    $region20: #{tpu_custom_call.1} parent=1 // pred_region
      _
    $region21: #{tpu_custom_call.1} parent=1 // pred_fallthru
      _
    // Predicated region
    $region22: #{tpu_custom_call.1} parent=1 // pred_check
      _
    $region23: #{tpu_custom_call.1} parent=1 // pred_check_branch
      %50 = sbr.rel (0) target = $region25
    $region24: #{tpu_custom_call.1} parent=1 // pred_region
      _
    $region25: #{tpu_custom_call.1} parent=1 // pred_fallthru
      _
    // Predicated region
    $region26: #{tpu_custom_call.1} parent=1 // pred_check
      _
    $region27: #{tpu_custom_call.1} parent=1 // pred_check_branch
      %52 = sbr.rel (0) target = $region29
    $region28: #{tpu_custom_call.1} parent=1 // pred_region
      _
    $region29: #{tpu_custom_call.1} parent=1 // pred_fallthru
      _
    // Predicated region
    $region30: #{tpu_custom_call.1} parent=1 // pred_check
      _
    $region31: #{tpu_custom_call.1} parent=1 // pred_check_branch
      %54 = sbr.rel (0) target = $region33
    $region32: #{tpu_custom_call.1} parent=1 // pred_region
      _
    $region33: #{tpu_custom_call.1} parent=1 // pred_fallthru
      _
    // Predicated region
    $region34: #{tpu_custom_call.1} parent=1 // pred_check
      _
    $region35: #{tpu_custom_call.1} parent=1 // pred_check_branch
      %56 = sbr.rel (0) target = $region37
    $region36: #{tpu_custom_call.1} parent=1 // pred_region
      _
    $region37: #{tpu_custom_call.1} parent=1 // pred_fallthru
      _
    // Predicated region
    $region38: #{tpu_custom_call.1} parent=1 // pred_check
      _
    $region39: #{tpu_custom_call.1} parent=1 // pred_check_branch
      %58 = sbr.rel (0) target = $region41
    $region40: #{tpu_custom_call.1} parent=1 // pred_region
      _
    $region41: #{tpu_custom_call.1} parent=1 // pred_fallthru
      _
    // Predicated region
    $region42: #{tpu_custom_call.1} parent=1 // pred_check
      _
    $region43: #{tpu_custom_call.1} parent=1 // pred_check_branch
      %60 = sbr.rel (0) target = $region45
    $region44: #{tpu_custom_call.1} parent=1 // pred_region
      %61 = dma.done [#allocation6], 114688
    $region45: #{tpu_custom_call.1} parent=1 // pred_fallthru
      _
    %v63 = vld [vmem:[%s2] sm:$0xff]
    %v64 = vld [vmem:[%s2 + $0x8] sm:$0xff]
    %v65 = vld [vmem:[%s2 + $0x10] sm:$0xff]
    %v66 = vld [vmem:[%s2 + $0x18] sm:$0xff]
    %v67 = vld [vmem:[%s2 + $0x20] sm:$0xff]
    %v68 = vld [vmem:[%s2 + $0x28] sm:$0xff]
    %v69 = vld [vmem:[%s2 + $0x30] sm:$0xff]
    %v70 = vld [vmem:[%s2 + $0x38] sm:$0xff]
    %v71 = vld [vmem:[#allocation5] sm:$0xff]
    %v72 = vld [vmem:[#allocation5 + $0x8] sm:$0xff]
    %v73 = vld [vmem:[#allocation5 + $0x10] sm:$0xff]
    %v74 = vld [vmem:[#allocation5 + $0x18] sm:$0xf]
    %v75 = vld [vmem:[#allocation5 + $0x1c] sm:$0xff]
    %v76 = vld [vmem:[#allocation5 + $0x24] sm:$0xff]
    %v77 = vld [vmem:[#allocation5 + $0x2c] sm:$0xff]
    %v78 = vld [vmem:[#allocation5 + $0x34] sm:$0xf]
    %v79 = vld [vmem:[#allocation5 + $0x38] sm:$0xff]
    %v80 = vld [vmem:[#allocation5 + $0x40] sm:$0xff]
    %v81 = vld [vmem:[#allocation5 + $0x48] sm:$0xff]
    %v82 = vld [vmem:[#allocation5 + $0x50] sm:$0xf]
    %v83 = vld [vmem:[#allocation5 + $0x54] sm:$0xff]
    %v84 = vld [vmem:[#allocation5 + $0x5c] sm:$0xff]
    %v85 = vld [vmem:[#allocation5 + $0x64] sm:$0xff]
    %v86 = vld [vmem:[#allocation5 + $0x6c] sm:$0xf]
    %v87 = vld [vmem:[#allocation5 + $0x70] sm:$0xff]
    %v88 = vld [vmem:[#allocation5 + $0x78] sm:$0xff]
    %v89 = vld [vmem:[#allocation5 + $0x80] sm:$0xff]
    %v90 = vld [vmem:[#allocation5 + $0x88] sm:$0xf]
    %v91 = vld [vmem:[#allocation5 + $0x8c] sm:$0xff]
    %v92 = vld [vmem:[#allocation5 + $0x94] sm:$0xff]
    %v93 = vld [vmem:[#allocation5 + $0x9c] sm:$0xff]
    %v94 = vld [vmem:[#allocation5 + $0xa4] sm:$0xf]
    %v95 = vld [vmem:[#allocation5 + $0xa8] sm:$0xff]
    %v96 = vld [vmem:[#allocation5 + $0xb0] sm:$0xff]
    %v97 = vld [vmem:[#allocation5 + $0xb8] sm:$0xff]
    %v98 = vld [vmem:[#allocation5 + $0xc0] sm:$0xf]
    %v99 = vld [vmem:[#allocation5 + $0xc4] sm:$0xff]
    %v100 = vld [vmem:[#allocation5 + $0xcc] sm:$0xff]
    %v101 = vld [vmem:[#allocation5 + $0xd4] sm:$0xff]
    %v102 = vld [vmem:[#allocation5 + $0xdc] sm:$0xf]
    %v103 = vld [vmem:[#allocation5 + $0xe0] sm:$0xff]
    %v104 = vld [vmem:[#allocation5 + $0xe8] sm:$0xff]
    %v105 = vld [vmem:[#allocation5 + $0xf0] sm:$0xff]
    %v106 = vld [vmem:[#allocation5 + $0xf8] sm:$0xf]
    %v107 = vld [vmem:[#allocation5 + $0xfc] sm:$0xff]
    %v108 = vld [vmem:[#allocation5 + $0x104] sm:$0xff]
    %v109 = vld [vmem:[#allocation5 + $0x10c] sm:$0xff]
    %v110 = vld [vmem:[#allocation5 + $0x114] sm:$0xf]
    %v111 = vld [vmem:[#allocation5 + $0x118] sm:$0xff]
    %v112 = vld [vmem:[#allocation5 + $0x120] sm:$0xff]
    %v113 = vld [vmem:[#allocation5 + $0x128] sm:$0xff]
    %v114 = vld [vmem:[#allocation5 + $0x130] sm:$0xf]
    %v115 = vld [vmem:[#allocation5 + $0x134] sm:$0xff]
    %v116 = vld [vmem:[#allocation5 + $0x13c] sm:$0xff]
    %v117 = vld [vmem:[#allocation5 + $0x144] sm:$0xff]
    %v118 = vld [vmem:[#allocation5 + $0x14c] sm:$0xf]
    %v119 = vld [vmem:[#allocation5 + $0x150] sm:$0xff]
    %v120 = vld [vmem:[#allocation5 + $0x158] sm:$0xff]
    %v121 = vld [vmem:[#allocation5 + $0x160] sm:$0xff]
    %v122 = vld [vmem:[#allocation5 + $0x168] sm:$0xf]
    %v123 = vld [vmem:[#allocation5 + $0x16c] sm:$0xff]
    %v124 = vld [vmem:[#allocation5 + $0x174] sm:$0xff]
    %v125 = vld [vmem:[#allocation5 + $0x17c] sm:$0xff]
    %v126 = vld [vmem:[#allocation5 + $0x184] sm:$0xf]
    %v127 = vld [vmem:[#allocation5 + $0x188] sm:$0xff]
    %v128 = vld [vmem:[#allocation5 + $0x190] sm:$0xff]
    %v129 = vld [vmem:[#allocation5 + $0x198] sm:$0xff]
    %v130 = vld [vmem:[#allocation5 + $0x1a0] sm:$0xf]
    %v131 = vld [vmem:[#allocation5 + $0x1a4] sm:$0xff]
    %v132 = vld [vmem:[#allocation5 + $0x1ac] sm:$0xff]
    %v133 = vld [vmem:[#allocation5 + $0x1b4] sm:$0xff]
    %v134 = vld [vmem:[#allocation5 + $0x1bc] sm:$0xf]
    %v135 = vld [vmem:[#allocation5 + $0x1c0] sm:$0xff]
    %v136 = vld [vmem:[#allocation5 + $0x1c8] sm:$0xff]
    %v137 = vld [vmem:[#allocation5 + $0x1d0] sm:$0xff]
    %v138 = vld [vmem:[#allocation5 + $0x1d8] sm:$0xf]
    %v139 = vld [vmem:[#allocation5 + $0x1dc] sm:$0xff]
    %v140 = vld [vmem:[#allocation5 + $0x1e4] sm:$0xff]
    %v141 = vld [vmem:[#allocation5 + $0x1ec] sm:$0xff]
    %v142 = vld [vmem:[#allocation5 + $0x1f4] sm:$0xf]
    %v143 = vld [vmem:[#allocation5 + $0x1f8] sm:$0xff]
    %v144 = vld [vmem:[#allocation5 + $0x200] sm:$0xff]
    %v145 = vld [vmem:[#allocation5 + $0x208] sm:$0xff]
    %v146 = vld [vmem:[#allocation5 + $0x210] sm:$0xf]
    %v147 = vld [vmem:[#allocation5 + $0x214] sm:$0xff]
    %v148 = vld [vmem:[#allocation5 + $0x21c] sm:$0xff]
    %v149 = vld [vmem:[#allocation5 + $0x224] sm:$0xff]
    %v150 = vld [vmem:[#allocation5 + $0x22c] sm:$0xf]
    %v151 = vld [vmem:[#allocation5 + $0x230] sm:$0xff]
    %v152 = vld [vmem:[#allocation5 + $0x238] sm:$0xff]
    %v153 = vld [vmem:[#allocation5 + $0x240] sm:$0xff]
    %v154 = vld [vmem:[#allocation5 + $0x248] sm:$0xf]
    %v155 = vld [vmem:[#allocation5 + $0x24c] sm:$0xff]
    %v156 = vld [vmem:[#allocation5 + $0x254] sm:$0xff]
    %v157 = vld [vmem:[#allocation5 + $0x25c] sm:$0xff]
    %v158 = vld [vmem:[#allocation5 + $0x264] sm:$0xf]
    %v159 = vld [vmem:[#allocation5 + $0x268] sm:$0xff]
    %v160 = vld [vmem:[#allocation5 + $0x270] sm:$0xff]
    %v161 = vld [vmem:[#allocation5 + $0x278] sm:$0xff]
    %v162 = vld [vmem:[#allocation5 + $0x280] sm:$0xf]
    %v163 = vld [vmem:[#allocation5 + $0x284] sm:$0xff]
    %v164 = vld [vmem:[#allocation5 + $0x28c] sm:$0xff]
    %v165 = vld [vmem:[#allocation5 + $0x294] sm:$0xff]
    %v166 = vld [vmem:[#allocation5 + $0x29c] sm:$0xf]
    %v167 = vld [vmem:[#allocation5 + $0x2a0] sm:$0xff]
    %v168 = vld [vmem:[#allocation5 + $0x2a8] sm:$0xff]
    %v169 = vld [vmem:[#allocation5 + $0x2b0] sm:$0xff]
    %v170 = vld [vmem:[#allocation5 + $0x2b8] sm:$0xf]
    %v171 = vld [vmem:[#allocation5 + $0x2bc] sm:$0xff]
    %v172 = vld [vmem:[#allocation5 + $0x2c4] sm:$0xff]
    %v173 = vld [vmem:[#allocation5 + $0x2cc] sm:$0xff]
    %v174 = vld [vmem:[#allocation5 + $0x2d4] sm:$0xf]
    %v175 = vld [vmem:[#allocation5 + $0x2d8] sm:$0xff]
    %v176 = vld [vmem:[#allocation5 + $0x2e0] sm:$0xff]
    %v177 = vld [vmem:[#allocation5 + $0x2e8] sm:$0xff]
    %v178 = vld [vmem:[#allocation5 + $0x2f0] sm:$0xf]
    %v179 = vld [vmem:[#allocation5 + $0x2f4] sm:$0xff]
    %v180 = vld [vmem:[#allocation5 + $0x2fc] sm:$0xff]
    %v181 = vld [vmem:[#allocation5 + $0x304] sm:$0xff]
    %v182 = vld [vmem:[#allocation5 + $0x30c] sm:$0xf]
    %v183 = vld [vmem:[#allocation5 + $0x310] sm:$0xff]
    %v184 = vld [vmem:[#allocation5 + $0x318] sm:$0xff]
    %v185 = vld [vmem:[#allocation5 + $0x320] sm:$0xff]
    %v186 = vld [vmem:[#allocation5 + $0x328] sm:$0xf]
    %v187 = vld [vmem:[#allocation5 + $0x32c] sm:$0xff]
    %v188 = vld [vmem:[#allocation5 + $0x334] sm:$0xff]
    %v189 = vld [vmem:[#allocation5 + $0x33c] sm:$0xff]
    %v190 = vld [vmem:[#allocation5 + $0x344] sm:$0xf]
    %v191 = vld [vmem:[#allocation5 + $0x348] sm:$0xff]
    %v192 = vld [vmem:[#allocation5 + $0x350] sm:$0xff]
    %v193 = vld [vmem:[#allocation5 + $0x358] sm:$0xff]
    %v194 = vld [vmem:[#allocation5 + $0x360] sm:$0xf]
    %v195 = vld [vmem:[#allocation5 + $0x364] sm:$0xff]
    %v196 = vld [vmem:[#allocation5 + $0x36c] sm:$0xff]
    %v197 = vld [vmem:[#allocation5 + $0x374] sm:$0xff]
    %v198 = vld [vmem:[#allocation5 + $0x37c] sm:$0xf]
    %v199 = vld [vmem:[#allocation5 + $0x380] sm:$0xff]
    %v200 = vld [vmem:[#allocation5 + $0x388] sm:$0xff]
    %v201 = vld [vmem:[#allocation5 + $0x390] sm:$0xff]
    %v202 = vld [vmem:[#allocation5 + $0x398] sm:$0xf]
    %v203 = vld [vmem:[#allocation5 + $0x39c] sm:$0xff]
    %v204 = vld [vmem:[#allocation5 + $0x3a4] sm:$0xff]
    %v205 = vld [vmem:[#allocation5 + $0x3ac] sm:$0xff]
    %v206 = vld [vmem:[#allocation5 + $0x3b4] sm:$0xf]
    %v207 = vld [vmem:[#allocation5 + $0x3b8] sm:$0xff]
    %v208 = vld [vmem:[#allocation5 + $0x3c0] sm:$0xff]
    %v209 = vld [vmem:[#allocation5 + $0x3c8] sm:$0xff]
    %v210 = vld [vmem:[#allocation5 + $0x3d0] sm:$0xf]
    %v211 = vld [vmem:[#allocation5 + $0x3d4] sm:$0xff]
    %v212 = vld [vmem:[#allocation5 + $0x3dc] sm:$0xff]
    %v213 = vld [vmem:[#allocation5 + $0x3e4] sm:$0xff]
    %v214 = vld [vmem:[#allocation5 + $0x3ec] sm:$0xf]
    %v215 = vld [vmem:[#allocation5 + $0x3f0] sm:$0xff]
    %v216 = vld [vmem:[#allocation5 + $0x3f8] sm:$0xff]
    %v217 = vld [vmem:[#allocation5 + $0x400] sm:$0xff]
    %v218 = vld [vmem:[#allocation5 + $0x408] sm:$0xf]
    %v219 = vld [vmem:[#allocation5 + $0x40c] sm:$0xff]
    %v220 = vld [vmem:[#allocation5 + $0x414] sm:$0xff]
    %v221 = vld [vmem:[#allocation5 + $0x41c] sm:$0xff]
    %v222 = vld [vmem:[#allocation5 + $0x424] sm:$0xf]
    %v223 = vld [vmem:[#allocation5 + $0x428] sm:$0xff]
    %v224 = vld [vmem:[#allocation5 + $0x430] sm:$0xff]
    %v225 = vld [vmem:[#allocation5 + $0x438] sm:$0xff]
    %v226 = vld [vmem:[#allocation5 + $0x440] sm:$0xf]
    %v227 = vld [vmem:[#allocation5 + $0x444] sm:$0xff]
    %v228 = vld [vmem:[#allocation5 + $0x44c] sm:$0xff]
    %v229 = vld [vmem:[#allocation5 + $0x454] sm:$0xff]
    %v230 = vld [vmem:[#allocation5 + $0x45c] sm:$0xf]
    %v231 = vld [vmem:[#allocation5 + $0x460] sm:$0xff]
    %v232 = vld [vmem:[#allocation5 + $0x468] sm:$0xff]
    %v233 = vld [vmem:[#allocation5 + $0x470] sm:$0xff]
    %v234 = vld [vmem:[#allocation5 + $0x478] sm:$0xf]
    %v235 = vld [vmem:[#allocation5 + $0x47c] sm:$0xff]
    %v236 = vld [vmem:[#allocation5 + $0x484] sm:$0xff]
    %v237 = vld [vmem:[#allocation5 + $0x48c] sm:$0xff]
    %v238 = vld [vmem:[#allocation5 + $0x494] sm:$0xf]
    %v239 = vld [vmem:[#allocation5 + $0x498] sm:$0xff]
    %v240 = vld [vmem:[#allocation5 + $0x4a0] sm:$0xff]
    %v241 = vld [vmem:[#allocation5 + $0x4a8] sm:$0xff]
    %v242 = vld [vmem:[#allocation5 + $0x4b0] sm:$0xf]
    %v243 = vld [vmem:[#allocation5 + $0x4b4] sm:$0xff]
    %v244 = vld [vmem:[#allocation5 + $0x4bc] sm:$0xff]
    %v245 = vld [vmem:[#allocation5 + $0x4c4] sm:$0xff]
    %v246 = vld [vmem:[#allocation5 + $0x4cc] sm:$0xf]
    %v247 = vld [vmem:[#allocation5 + $0x4d0] sm:$0xff]
    %v248 = vld [vmem:[#allocation5 + $0x4d8] sm:$0xff]
    %v249 = vld [vmem:[#allocation5 + $0x4e0] sm:$0xff]
    %v250 = vld [vmem:[#allocation5 + $0x4e8] sm:$0xf]
    %v251 = vld [vmem:[#allocation5 + $0x4ec] sm:$0xff]
    %v252 = vld [vmem:[#allocation5 + $0x4f4] sm:$0xff]
    %v253 = vld [vmem:[#allocation5 + $0x4fc] sm:$0xff]
    %v254 = vld [vmem:[#allocation5 + $0x504] sm:$0xf]
    %v255 = vld [vmem:[#allocation5 + $0x508] sm:$0xff]
    %v256 = vld [vmem:[#allocation5 + $0x510] sm:$0xff]
    %v257 = vld [vmem:[#allocation5 + $0x518] sm:$0xff]
    %v258 = vld [vmem:[#allocation5 + $0x520] sm:$0xf]
    %v259 = vld [vmem:[#allocation5 + $0x524] sm:$0xff]
    %v260 = vld [vmem:[#allocation5 + $0x52c] sm:$0xff]
    %v261 = vld [vmem:[#allocation5 + $0x534] sm:$0xff]
    %v262 = vld [vmem:[#allocation5 + $0x53c] sm:$0xf]
    %v263 = vld [vmem:[#allocation5 + $0x540] sm:$0xff]
    %v264 = vld [vmem:[#allocation5 + $0x548] sm:$0xff]
    %v265 = vld [vmem:[#allocation5 + $0x550] sm:$0xff]
    %v266 = vld [vmem:[#allocation5 + $0x558] sm:$0xf]
    %v267 = vld [vmem:[#allocation5 + $0x55c] sm:$0xff]
    %v268 = vld [vmem:[#allocation5 + $0x564] sm:$0xff]
    %v269 = vld [vmem:[#allocation5 + $0x56c] sm:$0xff]
    %v270 = vld [vmem:[#allocation5 + $0x574] sm:$0xf]
    %v271 = vld [vmem:[#allocation5 + $0x578] sm:$0xff]
    %v272 = vld [vmem:[#allocation5 + $0x580] sm:$0xff]
    %v273 = vld [vmem:[#allocation5 + $0x588] sm:$0xff]
    %v274 = vld [vmem:[#allocation5 + $0x590] sm:$0xf]
    %v275 = vld [vmem:[#allocation5 + $0x594] sm:$0xff]
    %v276 = vld [vmem:[#allocation5 + $0x59c] sm:$0xff]
    %v277 = vld [vmem:[#allocation5 + $0x5a4] sm:$0xff]
    %v278 = vld [vmem:[#allocation5 + $0x5ac] sm:$0xf]
    %v279 = vld [vmem:[#allocation5 + $0x5b0] sm:$0xff]
    %v280 = vld [vmem:[#allocation5 + $0x5b8] sm:$0xff]
    %v281 = vld [vmem:[#allocation5 + $0x5c0] sm:$0xff]
    %v282 = vld [vmem:[#allocation5 + $0x5c8] sm:$0xf]
    %v283 = vld [vmem:[#allocation5 + $0x5cc] sm:$0xff]
    %v284 = vld [vmem:[#allocation5 + $0x5d4] sm:$0xff]
    %v285 = vld [vmem:[#allocation5 + $0x5dc] sm:$0xff]
    %v286 = vld [vmem:[#allocation5 + $0x5e4] sm:$0xf]
    %v287 = vld [vmem:[#allocation5 + $0x5e8] sm:$0xff]
    %v288 = vld [vmem:[#allocation5 + $0x5f0] sm:$0xff]
    %v289 = vld [vmem:[#allocation5 + $0x5f8] sm:$0xff]
    %v290 = vld [vmem:[#allocation5 + $0x600] sm:$0xf]
    %v291 = vld [vmem:[#allocation5 + $0x604] sm:$0xff]
    %v292 = vld [vmem:[#allocation5 + $0x60c] sm:$0xff]
    %v293 = vld [vmem:[#allocation5 + $0x614] sm:$0xff]
    %v294 = vld [vmem:[#allocation5 + $0x61c] sm:$0xf]
    %v295 = vld [vmem:[#allocation5 + $0x620] sm:$0xff]
    %v296 = vld [vmem:[#allocation5 + $0x628] sm:$0xff]
    %v297 = vld [vmem:[#allocation5 + $0x630] sm:$0xff]
    %v298 = vld [vmem:[#allocation5 + $0x638] sm:$0xf]
    %v299 = vld [vmem:[#allocation5 + $0x63c] sm:$0xff]
    %v300 = vld [vmem:[#allocation5 + $0x644] sm:$0xff]
    %v301 = vld [vmem:[#allocation5 + $0x64c] sm:$0xff]
    %v302 = vld [vmem:[#allocation5 + $0x654] sm:$0xf]
    %v303 = vld [vmem:[#allocation5 + $0x658] sm:$0xff]
    %v304 = vld [vmem:[#allocation5 + $0x660] sm:$0xff]
    %v305 = vld [vmem:[#allocation5 + $0x668] sm:$0xff]
    %v306 = vld [vmem:[#allocation5 + $0x670] sm:$0xf]
    %v307 = vld [vmem:[#allocation5 + $0x674] sm:$0xff]
    %v308 = vld [vmem:[#allocation5 + $0x67c] sm:$0xff]
    %v309 = vld [vmem:[#allocation5 + $0x684] sm:$0xff]
    %v310 = vld [vmem:[#allocation5 + $0x68c] sm:$0xf]
    %v311 = vld [vmem:[#allocation5 + $0x690] sm:$0xff]
    %v312 = vld [vmem:[#allocation5 + $0x698] sm:$0xff]
    %v313 = vld [vmem:[#allocation5 + $0x6a0] sm:$0xff]
    %v314 = vld [vmem:[#allocation5 + $0x6a8] sm:$0xf]
    %v315 = vld [vmem:[#allocation5 + $0x6ac] sm:$0xff]
    %v316 = vld [vmem:[#allocation5 + $0x6b4] sm:$0xff]
    %v317 = vld [vmem:[#allocation5 + $0x6bc] sm:$0xff]
    %v318 = vld [vmem:[#allocation5 + $0x6c4] sm:$0xf]
    %v319 = vld [vmem:[#allocation5 + $0x6c8] sm:$0xff]
    %v320 = vld [vmem:[#allocation5 + $0x6d0] sm:$0xff]
    %v321 = vld [vmem:[#allocation5 + $0x6d8] sm:$0xff]
    %v322 = vld [vmem:[#allocation5 + $0x6e0] sm:$0xf]
    %v323 = vld [vmem:[#allocation5 + $0x6e4] sm:$0xff]
    %v324 = vld [vmem:[#allocation5 + $0x6ec] sm:$0xff]
    %v325 = vld [vmem:[#allocation5 + $0x6f4] sm:$0xff]
    %v326 = vld [vmem:[#allocation5 + $0x6fc] sm:$0xf]
    %v327 = vld [vmem:[#allocation5 + $0x700] sm:$0xff]
    %v328 = vld [vmem:[#allocation5 + $0x708] sm:$0xff]
    %v329 = vld [vmem:[#allocation5 + $0x710] sm:$0xff]
    %v330 = vld [vmem:[#allocation5 + $0x718] sm:$0xf]
    %v331 = vld [vmem:[#allocation5 + $0x71c] sm:$0xff]
    %v332 = vld [vmem:[#allocation5 + $0x724] sm:$0xff]
    %v333 = vld [vmem:[#allocation5 + $0x72c] sm:$0xff]
    %v334 = vld [vmem:[#allocation5 + $0x734] sm:$0xf]
    %v335 = vld [vmem:[#allocation5 + $0x738] sm:$0xff]
    %v336 = vld [vmem:[#allocation5 + $0x740] sm:$0xff]
    %v337 = vld [vmem:[#allocation5 + $0x748] sm:$0xff]
    %v338 = vld [vmem:[#allocation5 + $0x750] sm:$0xf]
    %v339 = vld [vmem:[#allocation5 + $0x754] sm:$0xff]
    %v340 = vld [vmem:[#allocation5 + $0x75c] sm:$0xff]
    %v341 = vld [vmem:[#allocation5 + $0x764] sm:$0xff]
    %v342 = vld [vmem:[#allocation5 + $0x76c] sm:$0xf]
    %v343 = vld [vmem:[#allocation5 + $0x770] sm:$0xff]
    %v344 = vld [vmem:[#allocation5 + $0x778] sm:$0xff]
    %v345 = vld [vmem:[#allocation5 + $0x780] sm:$0xff]
    %v346 = vld [vmem:[#allocation5 + $0x788] sm:$0xf]
    %v347 = vld [vmem:[#allocation5 + $0x78c] sm:$0xff]
    %v348 = vld [vmem:[#allocation5 + $0x794] sm:$0xff]
    %v349 = vld [vmem:[#allocation5 + $0x79c] sm:$0xff]
    %v350 = vld [vmem:[#allocation5 + $0x7a4] sm:$0xf]
    %v351 = vld [vmem:[#allocation5 + $0x7a8] sm:$0xff]
    %v352 = vld [vmem:[#allocation5 + $0x7b0] sm:$0xff]
    %v353 = vld [vmem:[#allocation5 + $0x7b8] sm:$0xff]
    %v354 = vld [vmem:[#allocation5 + $0x7c0] sm:$0xf]
    %v355 = vld [vmem:[#allocation5 + $0x7c4] sm:$0xff]
    %v356 = vld [vmem:[#allocation5 + $0x7cc] sm:$0xff]
    %v357 = vld [vmem:[#allocation5 + $0x7d4] sm:$0xff]
    %v358 = vld [vmem:[#allocation5 + $0x7dc] sm:$0xf]
    %v359 = vld [vmem:[#allocation5 + $0x7e0] sm:$0xff]
    %v360 = vld [vmem:[#allocation5 + $0x7e8] sm:$0xff]
    %v361 = vld [vmem:[#allocation5 + $0x7f0] sm:$0xff]
    %v362 = vld [vmem:[#allocation5 + $0x7f8] sm:$0xf]
    %v363 = vld [vmem:[#allocation5 + $0x7fc] sm:$0xff]
    %v364 = vld [vmem:[#allocation5 + $0x804] sm:$0xff]
    %v365 = vld [vmem:[#allocation5 + $0x80c] sm:$0xff]
    %v366 = vld [vmem:[#allocation5 + $0x814] sm:$0xf]
    %v367 = vld [vmem:[#allocation5 + $0x818] sm:$0xff]
    %v368 = vld [vmem:[#allocation5 + $0x820] sm:$0xff]
    %v369 = vld [vmem:[#allocation5 + $0x828] sm:$0xff]
    %v370 = vld [vmem:[#allocation5 + $0x830] sm:$0xf]
    %v371 = vld [vmem:[#allocation5 + $0x834] sm:$0xff]
    %v372 = vld [vmem:[#allocation5 + $0x83c] sm:$0xff]
    %v373 = vld [vmem:[#allocation5 + $0x844] sm:$0xff]
    %v374 = vld [vmem:[#allocation5 + $0x84c] sm:$0xf]
    %v375 = vld [vmem:[#allocation5 + $0x850] sm:$0xff]
    %v376 = vld [vmem:[#allocation5 + $0x858] sm:$0xff]
    %v377 = vld [vmem:[#allocation5 + $0x860] sm:$0xff]
    %v378 = vld [vmem:[#allocation5 + $0x868] sm:$0xf]
    %v379 = vld [vmem:[#allocation5 + $0x86c] sm:$0xff]
    %v380 = vld [vmem:[#allocation5 + $0x874] sm:$0xff]
    %v381 = vld [vmem:[#allocation5 + $0x87c] sm:$0xff]
    %v382 = vld [vmem:[#allocation5 + $0x884] sm:$0xf]
    %v383 = vld [vmem:[#allocation5 + $0x888] sm:$0xff]
    %v384 = vld [vmem:[#allocation5 + $0x890] sm:$0xff]
    %v385 = vld [vmem:[#allocation5 + $0x898] sm:$0xff]
    %v386 = vld [vmem:[#allocation5 + $0x8a0] sm:$0xf]
    %v387 = vld [vmem:[#allocation5 + $0x8a4] sm:$0xff]
    %v388 = vld [vmem:[#allocation5 + $0x8ac] sm:$0xff]
    %v389 = vld [vmem:[#allocation5 + $0x8b4] sm:$0xff]
    %v390 = vld [vmem:[#allocation5 + $0x8bc] sm:$0xf]
    %v391 = vld [vmem:[#allocation5 + $0x8c0] sm:$0xff]
    %v392 = vld [vmem:[#allocation5 + $0x8c8] sm:$0xff]
    %v393 = vld [vmem:[#allocation5 + $0x8d0] sm:$0xff]
    %v394 = vld [vmem:[#allocation5 + $0x8d8] sm:$0xf]
    %v395 = vld [vmem:[#allocation5 + $0x8dc] sm:$0xff]
    %v396 = vld [vmem:[#allocation5 + $0x8e4] sm:$0xff]
    %v397 = vld [vmem:[#allocation5 + $0x8ec] sm:$0xff]
    %v398 = vld [vmem:[#allocation5 + $0x8f4] sm:$0xf]
    %v399 = vld [vmem:[#allocation5 + $0x8f8] sm:$0xff]
    %v400 = vld [vmem:[#allocation5 + $0x900] sm:$0xff]
    %v401 = vld [vmem:[#allocation5 + $0x908] sm:$0xff]
    %v402 = vld [vmem:[#allocation5 + $0x910] sm:$0xf]
    %v403 = vld [vmem:[#allocation5 + $0x914] sm:$0xff]
    %v404 = vld [vmem:[#allocation5 + $0x91c] sm:$0xff]
    %v405 = vld [vmem:[#allocation5 + $0x924] sm:$0xff]
    %v406 = vld [vmem:[#allocation5 + $0x92c] sm:$0xf]
    %v407 = vld [vmem:[#allocation5 + $0x930] sm:$0xff]
    %v408 = vld [vmem:[#allocation5 + $0x938] sm:$0xff]
    %v409 = vld [vmem:[#allocation5 + $0x940] sm:$0xff]
    %v410 = vld [vmem:[#allocation5 + $0x948] sm:$0xf]
    %v411 = vld [vmem:[#allocation5 + $0x94c] sm:$0xff]
    %v412 = vld [vmem:[#allocation5 + $0x954] sm:$0xff]
    %v413 = vld [vmem:[#allocation5 + $0x95c] sm:$0xff]
    %v414 = vld [vmem:[#allocation5 + $0x964] sm:$0xf]
    %v415 = vld [vmem:[#allocation5 + $0x968] sm:$0xff]
    %v416 = vld [vmem:[#allocation5 + $0x970] sm:$0xff]
    %v417 = vld [vmem:[#allocation5 + $0x978] sm:$0xff]
    %v418 = vld [vmem:[#allocation5 + $0x980] sm:$0xf]
    %v419 = vld [vmem:[#allocation5 + $0x984] sm:$0xff]
    %v420 = vld [vmem:[#allocation5 + $0x98c] sm:$0xff]
    %v421 = vld [vmem:[#allocation5 + $0x994] sm:$0xff]
    %v422 = vld [vmem:[#allocation5 + $0x99c] sm:$0xf]
    %v423 = vld [vmem:[#allocation5 + $0x9a0] sm:$0xff]
    %v424 = vld [vmem:[#allocation5 + $0x9a8] sm:$0xff]
    %v425 = vld [vmem:[#allocation5 + $0x9b0] sm:$0xff]
    %v426 = vld [vmem:[#allocation5 + $0x9b8] sm:$0xf]
    %v427 = vld [vmem:[#allocation5 + $0x9bc] sm:$0xff]
    %v428 = vld [vmem:[#allocation5 + $0x9c4] sm:$0xff]
    %v429 = vld [vmem:[#allocation5 + $0x9cc] sm:$0xff]
    %v430 = vld [vmem:[#allocation5 + $0x9d4] sm:$0xf]
    %v431 = vld [vmem:[#allocation5 + $0x9d8] sm:$0xff]
    %v432 = vld [vmem:[#allocation5 + $0x9e0] sm:$0xff]
    %v433 = vld [vmem:[#allocation5 + $0x9e8] sm:$0xff]
    %v434 = vld [vmem:[#allocation5 + $0x9f0] sm:$0xf]
    %v435 = vld [vmem:[#allocation5 + $0x9f4] sm:$0xff]
    %v436 = vld [vmem:[#allocation5 + $0x9fc] sm:$0xff]
    %v437 = vld [vmem:[#allocation5 + $0xa04] sm:$0xff]
    %v438 = vld [vmem:[#allocation5 + $0xa0c] sm:$0xf]
    %v439 = vld [vmem:[#allocation5 + $0xa10] sm:$0xff]
    %v440 = vld [vmem:[#allocation5 + $0xa18] sm:$0xff]
    %v441 = vld [vmem:[#allocation5 + $0xa20] sm:$0xff]
    %v442 = vld [vmem:[#allocation5 + $0xa28] sm:$0xf]
    %v443 = vld [vmem:[#allocation5 + $0xa2c] sm:$0xff]
    %v444 = vld [vmem:[#allocation5 + $0xa34] sm:$0xff]
    %v445 = vld [vmem:[#allocation5 + $0xa3c] sm:$0xff]
    %v446 = vld [vmem:[#allocation5 + $0xa44] sm:$0xf]
    %v447 = vld [vmem:[#allocation5 + $0xa48] sm:$0xff]
    %v448 = vld [vmem:[#allocation5 + $0xa50] sm:$0xff]
    %v449 = vld [vmem:[#allocation5 + $0xa58] sm:$0xff]
    %v450 = vld [vmem:[#allocation5 + $0xa60] sm:$0xf]
    %v451 = vld [vmem:[#allocation5 + $0xa64] sm:$0xff]
    %v452 = vld [vmem:[#allocation5 + $0xa6c] sm:$0xff]
    %v453 = vld [vmem:[#allocation5 + $0xa74] sm:$0xff]
    %v454 = vld [vmem:[#allocation5 + $0xa7c] sm:$0xf]
    %v455 = vld [vmem:[#allocation5 + $0xa80] sm:$0xff]
    %v456 = vld [vmem:[#allocation5 + $0xa88] sm:$0xff]
    %v457 = vld [vmem:[#allocation5 + $0xa90] sm:$0xff]
    %v458 = vld [vmem:[#allocation5 + $0xa98] sm:$0xf]
    %v459 = vld [vmem:[#allocation5 + $0xa9c] sm:$0xff]
    %v460 = vld [vmem:[#allocation5 + $0xaa4] sm:$0xff]
    %v461 = vld [vmem:[#allocation5 + $0xaac] sm:$0xff]
    %v462 = vld [vmem:[#allocation5 + $0xab4] sm:$0xf]
    %v463 = vld [vmem:[#allocation5 + $0xab8] sm:$0xff]
    %v464 = vld [vmem:[#allocation5 + $0xac0] sm:$0xff]
    %v465 = vld [vmem:[#allocation5 + $0xac8] sm:$0xff]
    %v466 = vld [vmem:[#allocation5 + $0xad0] sm:$0xf]
    %v467 = vld [vmem:[#allocation5 + $0xad4] sm:$0xff]
    %v468 = vld [vmem:[#allocation5 + $0xadc] sm:$0xff]
    %v469 = vld [vmem:[#allocation5 + $0xae4] sm:$0xff]
    %v470 = vld [vmem:[#allocation5 + $0xaec] sm:$0xf]
    %v471 = vld [vmem:[#allocation5 + $0xaf0] sm:$0xff]
    %v472 = vld [vmem:[#allocation5 + $0xaf8] sm:$0xff]
    %v473 = vld [vmem:[#allocation5 + $0xb00] sm:$0xff]
    %v474 = vld [vmem:[#allocation5 + $0xb08] sm:$0xf]
    %v475 = vld [vmem:[#allocation5 + $0xb0c] sm:$0xff]
    %v476 = vld [vmem:[#allocation5 + $0xb14] sm:$0xff]
    %v477 = vld [vmem:[#allocation5 + $0xb1c] sm:$0xff]
    %v478 = vld [vmem:[#allocation5 + $0xb24] sm:$0xf]
    %v479 = vld [vmem:[#allocation5 + $0xb28] sm:$0xff]
    %v480 = vld [vmem:[#allocation5 + $0xb30] sm:$0xff]
    %v481 = vld [vmem:[#allocation5 + $0xb38] sm:$0xff]
    %v482 = vld [vmem:[#allocation5 + $0xb40] sm:$0xf]
    %v483 = vld [vmem:[#allocation5 + $0xb44] sm:$0xff]
    %v484 = vld [vmem:[#allocation5 + $0xb4c] sm:$0xff]
    %v485 = vld [vmem:[#allocation5 + $0xb54] sm:$0xff]
    %v486 = vld [vmem:[#allocation5 + $0xb5c] sm:$0xf]
    %v487 = vld [vmem:[#allocation5 + $0xb60] sm:$0xff]
    %v488 = vld [vmem:[#allocation5 + $0xb68] sm:$0xff]
    %v489 = vld [vmem:[#allocation5 + $0xb70] sm:$0xff]
    %v490 = vld [vmem:[#allocation5 + $0xb78] sm:$0xf]
    %v491 = vld [vmem:[#allocation5 + $0xb7c] sm:$0xff]
    %v492 = vld [vmem:[#allocation5 + $0xb84] sm:$0xff]
    %v493 = vld [vmem:[#allocation5 + $0xb8c] sm:$0xff]
    %v494 = vld [vmem:[#allocation5 + $0xb94] sm:$0xf]
    %v495 = vld [vmem:[#allocation5 + $0xb98] sm:$0xff]
    %v496 = vld [vmem:[#allocation5 + $0xba0] sm:$0xff]
    %v497 = vld [vmem:[#allocation5 + $0xba8] sm:$0xff]
    %v498 = vld [vmem:[#allocation5 + $0xbb0] sm:$0xf]
    %v499 = vld [vmem:[#allocation5 + $0xbb4] sm:$0xff]
    %v500 = vld [vmem:[#allocation5 + $0xbbc] sm:$0xff]
    %v501 = vld [vmem:[#allocation5 + $0xbc4] sm:$0xff]
    %v502 = vld [vmem:[#allocation5 + $0xbcc] sm:$0xf]
    %v503 = vld [vmem:[#allocation5 + $0xbd0] sm:$0xff]
    %v504 = vld [vmem:[#allocation5 + $0xbd8] sm:$0xff]
    %v505 = vld [vmem:[#allocation5 + $0xbe0] sm:$0xff]
    %v506 = vld [vmem:[#allocation5 + $0xbe8] sm:$0xf]
    %v507 = vld [vmem:[#allocation5 + $0xbec] sm:$0xff]
    %v508 = vld [vmem:[#allocation5 + $0xbf4] sm:$0xff]
    %v509 = vld [vmem:[#allocation5 + $0xbfc] sm:$0xff]
    %v510 = vld [vmem:[#allocation5 + $0xc04] sm:$0xf]
    %v511 = vld [vmem:[#allocation5 + $0xc08] sm:$0xff]
    %v512 = vld [vmem:[#allocation5 + $0xc10] sm:$0xff]
    %v513 = vld [vmem:[#allocation5 + $0xc18] sm:$0xff]
    %v514 = vld [vmem:[#allocation5 + $0xc20] sm:$0xf]
    %v515 = vld [vmem:[#allocation5 + $0xc24] sm:$0xff]
    %v516 = vld [vmem:[#allocation5 + $0xc2c] sm:$0xff]
    %v517 = vld [vmem:[#allocation5 + $0xc34] sm:$0xff]
    %v518 = vld [vmem:[#allocation5 + $0xc3c] sm:$0xf]
    %v519 = vld [vmem:[#allocation5 + $0xc40] sm:$0xff]
    %v520 = vld [vmem:[#allocation5 + $0xc48] sm:$0xff]
    %v521 = vld [vmem:[#allocation5 + $0xc50] sm:$0xff]
    %v522 = vld [vmem:[#allocation5 + $0xc58] sm:$0xf]
    %v523 = vld [vmem:[#allocation5 + $0xc5c] sm:$0xff]
    %v524 = vld [vmem:[#allocation5 + $0xc64] sm:$0xff]
    %v525 = vld [vmem:[#allocation5 + $0xc6c] sm:$0xff]
    %v526 = vld [vmem:[#allocation5 + $0xc74] sm:$0xf]
    %v527 = vld [vmem:[#allocation5 + $0xc78] sm:$0xff]
    %v528 = vld [vmem:[#allocation5 + $0xc80] sm:$0xff]
    %v529 = vld [vmem:[#allocation5 + $0xc88] sm:$0xff]
    %v530 = vld [vmem:[#allocation5 + $0xc90] sm:$0xf]
    %v531 = vld [vmem:[#allocation5 + $0xc94] sm:$0xff]
    %v532 = vld [vmem:[#allocation5 + $0xc9c] sm:$0xff]
    %v533 = vld [vmem:[#allocation5 + $0xca4] sm:$0xff]
    %v534 = vld [vmem:[#allocation5 + $0xcac] sm:$0xf]
    %v535 = vld [vmem:[#allocation5 + $0xcb0] sm:$0xff]
    %v536 = vld [vmem:[#allocation5 + $0xcb8] sm:$0xff]
    %v537 = vld [vmem:[#allocation5 + $0xcc0] sm:$0xff]
    %v538 = vld [vmem:[#allocation5 + $0xcc8] sm:$0xf]
    %v539 = vld [vmem:[#allocation5 + $0xccc] sm:$0xff]
    %v540 = vld [vmem:[#allocation5 + $0xcd4] sm:$0xff]
    %v541 = vld [vmem:[#allocation5 + $0xcdc] sm:$0xff]
    %v542 = vld [vmem:[#allocation5 + $0xce4] sm:$0xf]
    %v543 = vld [vmem:[#allocation5 + $0xce8] sm:$0xff]
    %v544 = vld [vmem:[#allocation5 + $0xcf0] sm:$0xff]
    %v545 = vld [vmem:[#allocation5 + $0xcf8] sm:$0xff]
    %v546 = vld [vmem:[#allocation5 + $0xd00] sm:$0xf]
    %v547 = vld [vmem:[#allocation5 + $0xd04] sm:$0xff]
    %v548 = vld [vmem:[#allocation5 + $0xd0c] sm:$0xff]
    %v549 = vld [vmem:[#allocation5 + $0xd14] sm:$0xff]
    %v550 = vld [vmem:[#allocation5 + $0xd1c] sm:$0xf]
    %v551 = vld [vmem:[#allocation5 + $0xd20] sm:$0xff]
    %v552 = vld [vmem:[#allocation5 + $0xd28] sm:$0xff]
    %v553 = vld [vmem:[#allocation5 + $0xd30] sm:$0xff]
    %v554 = vld [vmem:[#allocation5 + $0xd38] sm:$0xf]
    %v555 = vld [vmem:[#allocation5 + $0xd3c] sm:$0xff]
    %v556 = vld [vmem:[#allocation5 + $0xd44] sm:$0xff]
    %v557 = vld [vmem:[#allocation5 + $0xd4c] sm:$0xff]
    %v558 = vld [vmem:[#allocation5 + $0xd54] sm:$0xf]
    %v559 = vld [vmem:[#allocation5 + $0xd58] sm:$0xff]
    %v560 = vld [vmem:[#allocation5 + $0xd60] sm:$0xff]
    %v561 = vld [vmem:[#allocation5 + $0xd68] sm:$0xff]
    %v562 = vld [vmem:[#allocation5 + $0xd70] sm:$0xf]
    %v563 = vld [vmem:[#allocation5 + $0xd74] sm:$0xff]
    %v564 = vld [vmem:[#allocation5 + $0xd7c] sm:$0xff]
    %v565 = vld [vmem:[#allocation5 + $0xd84] sm:$0xff]
    %v566 = vld [vmem:[#allocation5 + $0xd8c] sm:$0xf]
    %v567 = vld [vmem:[#allocation5 + $0xd90] sm:$0xff]
    %v568 = vld [vmem:[#allocation5 + $0xd98] sm:$0xff]
    %v569 = vld [vmem:[#allocation5 + $0xda0] sm:$0xff]
    %v570 = vld [vmem:[#allocation5 + $0xda8] sm:$0xf]
    %v571 = vld [vmem:[#allocation5 + $0xdac] sm:$0xff]
    %v572 = vld [vmem:[#allocation5 + $0xdb4] sm:$0xff]
    %v573 = vld [vmem:[#allocation5 + $0xdbc] sm:$0xff]
    %v574 = vld [vmem:[#allocation5 + $0xdc4] sm:$0xf]
    %v575 = vld [vmem:[#allocation5 + $0xdc8] sm:$0xff]
    %v576 = vld [vmem:[#allocation5 + $0xdd0] sm:$0xff]
    %v577 = vld [vmem:[#allocation5 + $0xdd8] sm:$0xff]
    %v578 = vld [vmem:[#allocation5 + $0xde0] sm:$0xf]
    %v579 = vld [vmem:[#allocation5 + $0xde4] sm:$0xff]
    %v580 = vld [vmem:[#allocation5 + $0xdec] sm:$0xff]
    %v581 = vld [vmem:[#allocation5 + $0xdf4] sm:$0xff]
    %v582 = vld [vmem:[#allocation5 + $0xdfc] sm:$0xf]
    %v583 = vld [vmem:[#allocation5 + $0xe00] sm:$0xff]
    %v584 = vld [vmem:[#allocation5 + $0xe08] sm:$0xff]
    %v585 = vld [vmem:[#allocation5 + $0xe10] sm:$0xff]
    %v586 = vld [vmem:[#allocation5 + $0xe18] sm:$0xf]
    %v587 = vld [vmem:[#allocation5 + $0xe1c] sm:$0xff]
    %v588 = vld [vmem:[#allocation5 + $0xe24] sm:$0xff]
    %v589 = vld [vmem:[#allocation5 + $0xe2c] sm:$0xff]
    %v590 = vld [vmem:[#allocation5 + $0xe34] sm:$0xf]
    %v591 = vld [vmem:[#allocation5 + $0xe38] sm:$0xff]
    %v592 = vld [vmem:[#allocation5 + $0xe40] sm:$0xff]
    %v593 = vld [vmem:[#allocation5 + $0xe48] sm:$0xff]
    %v594 = vld [vmem:[#allocation5 + $0xe50] sm:$0xf]
    %v595 = vld [vmem:[#allocation5 + $0xe54] sm:$0xff]
    %v596 = vld [vmem:[#allocation5 + $0xe5c] sm:$0xff]
    %v597 = vld [vmem:[#allocation5 + $0xe64] sm:$0xff]
    %v598 = vld [vmem:[#allocation5 + $0xe6c] sm:$0xf]
    %v599 = vld [vmem:[#allocation5 + $0xe70] sm:$0xff]
    %v600 = vld [vmem:[#allocation5 + $0xe78] sm:$0xff]
    %v601 = vld [vmem:[#allocation5 + $0xe80] sm:$0xff]
    %v602 = vld [vmem:[#allocation5 + $0xe88] sm:$0xf]
    %v603 = vld [vmem:[#allocation5 + $0xe8c] sm:$0xff]
    %v604 = vld [vmem:[#allocation5 + $0xe94] sm:$0xff]
    %v605 = vld [vmem:[#allocation5 + $0xe9c] sm:$0xff]
    %v606 = vld [vmem:[#allocation5 + $0xea4] sm:$0xf]
    %v607 = vld [vmem:[#allocation5 + $0xea8] sm:$0xff]
    %v608 = vld [vmem:[#allocation5 + $0xeb0] sm:$0xff]
    %v609 = vld [vmem:[#allocation5 + $0xeb8] sm:$0xff]
    %v610 = vld [vmem:[#allocation5 + $0xec0] sm:$0xf]
    %v611 = vld [vmem:[#allocation5 + $0xec4] sm:$0xff]
    %v612 = vld [vmem:[#allocation5 + $0xecc] sm:$0xff]
    %v613 = vld [vmem:[#allocation5 + $0xed4] sm:$0xff]
    %v614 = vld [vmem:[#allocation5 + $0xedc] sm:$0xf]
    %v615 = vld [vmem:[#allocation5 + $0xee0] sm:$0xff]
    %v616 = vld [vmem:[#allocation5 + $0xee8] sm:$0xff]
    %v617 = vld [vmem:[#allocation5 + $0xef0] sm:$0xff]
    %v618 = vld [vmem:[#allocation5 + $0xef8] sm:$0xf]
    %v619 = vld [vmem:[#allocation5 + $0xefc] sm:$0xff]
    %v620 = vld [vmem:[#allocation5 + $0xf04] sm:$0xff]
    %v621 = vld [vmem:[#allocation5 + $0xf0c] sm:$0xff]
    %v622 = vld [vmem:[#allocation5 + $0xf14] sm:$0xf]
    %v623 = vld [vmem:[#allocation5 + $0xf18] sm:$0xff]
    %v624 = vld [vmem:[#allocation5 + $0xf20] sm:$0xff]
    %v625 = vld [vmem:[#allocation5 + $0xf28] sm:$0xff]
    %v626 = vld [vmem:[#allocation5 + $0xf30] sm:$0xf]
    %v627 = vld [vmem:[#allocation5 + $0xf34] sm:$0xff]
    %v628 = vld [vmem:[#allocation5 + $0xf3c] sm:$0xff]
    %v629 = vld [vmem:[#allocation5 + $0xf44] sm:$0xff]
    %v630 = vld [vmem:[#allocation5 + $0xf4c] sm:$0xf]
    %v631 = vld [vmem:[#allocation5 + $0xf50] sm:$0xff]
    %v632 = vld [vmem:[#allocation5 + $0xf58] sm:$0xff]
    %v633 = vld [vmem:[#allocation5 + $0xf60] sm:$0xff]
    %v634 = vld [vmem:[#allocation5 + $0xf68] sm:$0xf]
    %v635 = vld [vmem:[#allocation5 + $0xf6c] sm:$0xff]
    %v636 = vld [vmem:[#allocation5 + $0xf74] sm:$0xff]
    %v637 = vld [vmem:[#allocation5 + $0xf7c] sm:$0xff]
    %v638 = vld [vmem:[#allocation5 + $0xf84] sm:$0xf]
    %v639 = vld [vmem:[#allocation5 + $0xf88] sm:$0xff]
    %v640 = vld [vmem:[#allocation5 + $0xf90] sm:$0xff]
    %v641 = vld [vmem:[#allocation5 + $0xf98] sm:$0xff]
    %v642 = vld [vmem:[#allocation5 + $0xfa0] sm:$0xf]
    %v643 = vld [vmem:[#allocation5 + $0xfa4] sm:$0xff]
    %v644 = vld [vmem:[#allocation5 + $0xfac] sm:$0xff]
    %v645 = vld [vmem:[#allocation5 + $0xfb4] sm:$0xff]
    %v646 = vld [vmem:[#allocation5 + $0xfbc] sm:$0xf]
    %v647 = vld [vmem:[#allocation5 + $0xfc0] sm:$0xff]
    %v648 = vld [vmem:[#allocation5 + $0xfc8] sm:$0xff]
    %v649 = vld [vmem:[#allocation5 + $0xfd0] sm:$0xff]
    %v650 = vld [vmem:[#allocation5 + $0xfd8] sm:$0xf]
    %v651 = vld [vmem:[#allocation5 + $0xfdc] sm:$0xff]
    %v652 = vld [vmem:[#allocation5 + $0xfe4] sm:$0xff]
    %v653 = vld [vmem:[#allocation5 + $0xfec] sm:$0xff]
    %v654 = vld [vmem:[#allocation5 + $0xff4] sm:$0xf]
    %v655 = vld [vmem:[#allocation5 + $0xff8] sm:$0xff]
    %v656 = vld [vmem:[#allocation5 + $0x1000] sm:$0xff]
    %v657 = vld [vmem:[#allocation5 + $0x1008] sm:$0xff]
    %v658 = vld [vmem:[#allocation5 + $0x1010] sm:$0xf]
    %v659 = vld [vmem:[#allocation5 + $0x1014] sm:$0xff]
    %v660 = vld [vmem:[#allocation5 + $0x101c] sm:$0xff]
    %v661 = vld [vmem:[#allocation5 + $0x1024] sm:$0xff]
    %v662 = vld [vmem:[#allocation5 + $0x102c] sm:$0xf]
    %v663 = vld [vmem:[#allocation5 + $0x1030] sm:$0xff]
    %v664 = vld [vmem:[#allocation5 + $0x1038] sm:$0xff]
    %v665 = vld [vmem:[#allocation5 + $0x1040] sm:$0xff]
    %v666 = vld [vmem:[#allocation5 + $0x1048] sm:$0xf]
    %v667 = vld [vmem:[#allocation5 + $0x104c] sm:$0xff]
    %v668 = vld [vmem:[#allocation5 + $0x1054] sm:$0xff]
    %v669 = vld [vmem:[#allocation5 + $0x105c] sm:$0xff]
    %v670 = vld [vmem:[#allocation5 + $0x1064] sm:$0xf]
    %v671 = vld [vmem:[#allocation5 + $0x1068] sm:$0xff]
    %v672 = vld [vmem:[#allocation5 + $0x1070] sm:$0xff]
    %v673 = vld [vmem:[#allocation5 + $0x1078] sm:$0xff]
    %v674 = vld [vmem:[#allocation5 + $0x1080] sm:$0xf]
    %v675 = vld [vmem:[#allocation5 + $0x1084] sm:$0xff]
    %v676 = vld [vmem:[#allocation5 + $0x108c] sm:$0xff]
    %v677 = vld [vmem:[#allocation5 + $0x1094] sm:$0xff]
    %v678 = vld [vmem:[#allocation5 + $0x109c] sm:$0xf]
    %v679 = vld [vmem:[#allocation5 + $0x10a0] sm:$0xff]
    %v680 = vld [vmem:[#allocation5 + $0x10a8] sm:$0xff]
    %v681 = vld [vmem:[#allocation5 + $0x10b0] sm:$0xff]
    %v682 = vld [vmem:[#allocation5 + $0x10b8] sm:$0xf]
    %v683 = vld [vmem:[#allocation5 + $0x10bc] sm:$0xff]
    %v684 = vld [vmem:[#allocation5 + $0x10c4] sm:$0xff]
    %v685 = vld [vmem:[#allocation5 + $0x10cc] sm:$0xff]
    %v686 = vld [vmem:[#allocation5 + $0x10d4] sm:$0xf]
    %v687 = vld [vmem:[#allocation5 + $0x10d8] sm:$0xff]
    %v688 = vld [vmem:[#allocation5 + $0x10e0] sm:$0xff]
    %v689 = vld [vmem:[#allocation5 + $0x10e8] sm:$0xff]
    %v690 = vld [vmem:[#allocation5 + $0x10f0] sm:$0xf]
    %v691 = vld [vmem:[#allocation5 + $0x10f4] sm:$0xff]
    %v692 = vld [vmem:[#allocation5 + $0x10fc] sm:$0xff]
    %v693 = vld [vmem:[#allocation5 + $0x1104] sm:$0xff]
    %v694 = vld [vmem:[#allocation5 + $0x110c] sm:$0xf]
    %v695 = vld [vmem:[#allocation5 + $0x1110] sm:$0xff]
    %v696 = vld [vmem:[#allocation5 + $0x1118] sm:$0xff]
    %v697 = vld [vmem:[#allocation5 + $0x1120] sm:$0xff]
    %v698 = vld [vmem:[#allocation5 + $0x1128] sm:$0xf]
    %v699 = vld [vmem:[#allocation5 + $0x112c] sm:$0xff]
    %v700 = vld [vmem:[#allocation5 + $0x1134] sm:$0xff]
    %v701 = vld [vmem:[#allocation5 + $0x113c] sm:$0xff]
    %v702 = vld [vmem:[#allocation5 + $0x1144] sm:$0xf]
    %v703 = vld [vmem:[#allocation5 + $0x1148] sm:$0xff]
    %v704 = vld [vmem:[#allocation5 + $0x1150] sm:$0xff]
    %v705 = vld [vmem:[#allocation5 + $0x1158] sm:$0xff]
    %v706 = vld [vmem:[#allocation5 + $0x1160] sm:$0xf]
    %v707 = vld [vmem:[#allocation5 + $0x1164] sm:$0xff]
    %v708 = vld [vmem:[#allocation5 + $0x116c] sm:$0xff]
    %v709 = vld [vmem:[#allocation5 + $0x1174] sm:$0xff]
    %v710 = vld [vmem:[#allocation5 + $0x117c] sm:$0xf]
    %v711 = vld [vmem:[#allocation5 + $0x1180] sm:$0xff]
    %v712 = vld [vmem:[#allocation5 + $0x1188] sm:$0xff]
    %v713 = vld [vmem:[#allocation5 + $0x1190] sm:$0xff]
    %v714 = vld [vmem:[#allocation5 + $0x1198] sm:$0xf]
    %v715 = vld [vmem:[#allocation5 + $0x119c] sm:$0xff]
    %v716 = vld [vmem:[#allocation5 + $0x11a4] sm:$0xff]
    %v717 = vld [vmem:[#allocation5 + $0x11ac] sm:$0xff]
    %v718 = vld [vmem:[#allocation5 + $0x11b4] sm:$0xf]
    %v719 = vld [vmem:[#allocation5 + $0x11b8] sm:$0xff]
    %v720 = vld [vmem:[#allocation5 + $0x11c0] sm:$0xff]
    %v721 = vld [vmem:[#allocation5 + $0x11c8] sm:$0xff]
    %v722 = vld [vmem:[#allocation5 + $0x11d0] sm:$0xf]
    %v723 = vld [vmem:[#allocation5 + $0x11d4] sm:$0xff]
    %v724 = vld [vmem:[#allocation5 + $0x11dc] sm:$0xff]
    %v725 = vld [vmem:[#allocation5 + $0x11e4] sm:$0xff]
    %v726 = vld [vmem:[#allocation5 + $0x11ec] sm:$0xf]
    %v727 = vld [vmem:[#allocation5 + $0x11f0] sm:$0xff]
    %v728 = vld [vmem:[#allocation5 + $0x11f8] sm:$0xff]
    %v729 = vld [vmem:[#allocation5 + $0x1200] sm:$0xff]
    %v730 = vld [vmem:[#allocation5 + $0x1208] sm:$0xf]
    %v731 = vld [vmem:[#allocation5 + $0x120c] sm:$0xff]
    %v732 = vld [vmem:[#allocation5 + $0x1214] sm:$0xff]
    %v733 = vld [vmem:[#allocation5 + $0x121c] sm:$0xff]
    %v734 = vld [vmem:[#allocation5 + $0x1224] sm:$0xf]
    %v735 = vld [vmem:[#allocation5 + $0x1228] sm:$0xff]
    %v736 = vld [vmem:[#allocation5 + $0x1230] sm:$0xff]
    %v737 = vld [vmem:[#allocation5 + $0x1238] sm:$0xff]
    %v738 = vld [vmem:[#allocation5 + $0x1240] sm:$0xf]
    %v739 = vld [vmem:[#allocation5 + $0x1244] sm:$0xff]
    %v740 = vld [vmem:[#allocation5 + $0x124c] sm:$0xff]
    %v741 = vld [vmem:[#allocation5 + $0x1254] sm:$0xff]
    %v742 = vld [vmem:[#allocation5 + $0x125c] sm:$0xf]
    %v743 = vld [vmem:[#allocation5 + $0x1260] sm:$0xff]
    %v744 = vld [vmem:[#allocation5 + $0x1268] sm:$0xff]
    %v745 = vld [vmem:[#allocation5 + $0x1270] sm:$0xff]
    %v746 = vld [vmem:[#allocation5 + $0x1278] sm:$0xf]
    %v747 = vld [vmem:[#allocation5 + $0x127c] sm:$0xff]
    %v748 = vld [vmem:[#allocation5 + $0x1284] sm:$0xff]
    %v749 = vld [vmem:[#allocation5 + $0x128c] sm:$0xff]
    %v750 = vld [vmem:[#allocation5 + $0x1294] sm:$0xf]
    %v751 = vld [vmem:[#allocation5 + $0x1298] sm:$0xff]
    %v752 = vld [vmem:[#allocation5 + $0x12a0] sm:$0xff]
    %v753 = vld [vmem:[#allocation5 + $0x12a8] sm:$0xff]
    %v754 = vld [vmem:[#allocation5 + $0x12b0] sm:$0xf]
    %v755 = vld [vmem:[#allocation5 + $0x12b4] sm:$0xff]
    %v756 = vld [vmem:[#allocation5 + $0x12bc] sm:$0xff]
    %v757 = vld [vmem:[#allocation5 + $0x12c4] sm:$0xff]
    %v758 = vld [vmem:[#allocation5 + $0x12cc] sm:$0xf]
    %v759 = vld [vmem:[#allocation5 + $0x12d0] sm:$0xff]
    %v760 = vld [vmem:[#allocation5 + $0x12d8] sm:$0xff]
    %v761 = vld [vmem:[#allocation5 + $0x12e0] sm:$0xff]
    %v762 = vld [vmem:[#allocation5 + $0x12e8] sm:$0xf]
    %v763 = vld [vmem:[#allocation5 + $0x12ec] sm:$0xff]
    %v764 = vld [vmem:[#allocation5 + $0x12f4] sm:$0xff]
    %v765 = vld [vmem:[#allocation5 + $0x12fc] sm:$0xff]
    %v766 = vld [vmem:[#allocation5 + $0x1304] sm:$0xf]
    %v767 = vld [vmem:[#allocation5 + $0x1308] sm:$0xff]
    %v768 = vld [vmem:[#allocation5 + $0x1310] sm:$0xff]
    %v769 = vld [vmem:[#allocation5 + $0x1318] sm:$0xff]
    %v770 = vld [vmem:[#allocation5 + $0x1320] sm:$0xf]
    %v771 = vld [vmem:[#allocation5 + $0x1324] sm:$0xff]
    %v772 = vld [vmem:[#allocation5 + $0x132c] sm:$0xff]
    %v773 = vld [vmem:[#allocation5 + $0x1334] sm:$0xff]
    %v774 = vld [vmem:[#allocation5 + $0x133c] sm:$0xf]
    %v775 = vld [vmem:[#allocation5 + $0x1340] sm:$0xff]
    %v776 = vld [vmem:[#allocation5 + $0x1348] sm:$0xff]
    %v777 = vld [vmem:[#allocation5 + $0x1350] sm:$0xff]
    %v778 = vld [vmem:[#allocation5 + $0x1358] sm:$0xf]
    %v779 = vld [vmem:[#allocation5 + $0x135c] sm:$0xff]
    %v780 = vld [vmem:[#allocation5 + $0x1364] sm:$0xff]
    %v781 = vld [vmem:[#allocation5 + $0x136c] sm:$0xff]
    %v782 = vld [vmem:[#allocation5 + $0x1374] sm:$0xf]
    %v783 = vld [vmem:[#allocation5 + $0x1378] sm:$0xff]
    %v784 = vld [vmem:[#allocation5 + $0x1380] sm:$0xff]
    %v785 = vld [vmem:[#allocation5 + $0x1388] sm:$0xff]
    %v786 = vld [vmem:[#allocation5 + $0x1390] sm:$0xf]
    %v787 = vld [vmem:[#allocation5 + $0x1394] sm:$0xff]
    %v788 = vld [vmem:[#allocation5 + $0x139c] sm:$0xff]
    %v789 = vld [vmem:[#allocation5 + $0x13a4] sm:$0xff]
    %v790 = vld [vmem:[#allocation5 + $0x13ac] sm:$0xf]
    %v791 = vld [vmem:[#allocation5 + $0x13b0] sm:$0xff]
    %v792 = vld [vmem:[#allocation5 + $0x13b8] sm:$0xff]
    %v793 = vld [vmem:[#allocation5 + $0x13c0] sm:$0xff]
    %v794 = vld [vmem:[#allocation5 + $0x13c8] sm:$0xf]
    %v795 = vld [vmem:[#allocation5 + $0x13cc] sm:$0xff]
    %v796 = vld [vmem:[#allocation5 + $0x13d4] sm:$0xff]
    %v797 = vld [vmem:[#allocation5 + $0x13dc] sm:$0xff]
    %v798 = vld [vmem:[#allocation5 + $0x13e4] sm:$0xf]
    %v799 = vld [vmem:[#allocation5 + $0x13e8] sm:$0xff]
    %v800 = vld [vmem:[#allocation5 + $0x13f0] sm:$0xff]
    %v801 = vld [vmem:[#allocation5 + $0x13f8] sm:$0xff]
    %v802 = vld [vmem:[#allocation5 + $0x1400] sm:$0xf]
    %v803 = vld [vmem:[#allocation5 + $0x1404] sm:$0xff]
    %v804 = vld [vmem:[#allocation5 + $0x140c] sm:$0xff]
    %v805 = vld [vmem:[#allocation5 + $0x1414] sm:$0xff]
    %v806 = vld [vmem:[#allocation5 + $0x141c] sm:$0xf]
    %v807 = vld [vmem:[#allocation5 + $0x1420] sm:$0xff]
    %v808 = vld [vmem:[#allocation5 + $0x1428] sm:$0xff]
    %v809 = vld [vmem:[#allocation5 + $0x1430] sm:$0xff]
    %v810 = vld [vmem:[#allocation5 + $0x1438] sm:$0xf]
    %v811 = vld [vmem:[#allocation5 + $0x143c] sm:$0xff]
    %v812 = vld [vmem:[#allocation5 + $0x1444] sm:$0xff]
    %v813 = vld [vmem:[#allocation5 + $0x144c] sm:$0xff]
    %v814 = vld [vmem:[#allocation5 + $0x1454] sm:$0xf]
    %v815 = vld [vmem:[#allocation5 + $0x1458] sm:$0xff]
    %v816 = vld [vmem:[#allocation5 + $0x1460] sm:$0xff]
    %v817 = vld [vmem:[#allocation5 + $0x1468] sm:$0xff]
    %v818 = vld [vmem:[#allocation5 + $0x1470] sm:$0xf]
    %v819 = vld [vmem:[#allocation5 + $0x1474] sm:$0xff]
    %v820 = vld [vmem:[#allocation5 + $0x147c] sm:$0xff]
    %v821 = vld [vmem:[#allocation5 + $0x1484] sm:$0xff]
    %v822 = vld [vmem:[#allocation5 + $0x148c] sm:$0xf]
    %v823 = vld [vmem:[#allocation5 + $0x1490] sm:$0xff]
    %v824 = vld [vmem:[#allocation5 + $0x1498] sm:$0xff]
    %v825 = vld [vmem:[#allocation5 + $0x14a0] sm:$0xff]
    %v826 = vld [vmem:[#allocation5 + $0x14a8] sm:$0xf]
    %v827 = vld [vmem:[#allocation5 + $0x14ac] sm:$0xff]
    %v828 = vld [vmem:[#allocation5 + $0x14b4] sm:$0xff]
    %v829 = vld [vmem:[#allocation5 + $0x14bc] sm:$0xff]
    %v830 = vld [vmem:[#allocation5 + $0x14c4] sm:$0xf]
    %v831 = vld [vmem:[#allocation5 + $0x14c8] sm:$0xff]
    %v832 = vld [vmem:[#allocation5 + $0x14d0] sm:$0xff]
    %v833 = vld [vmem:[#allocation5 + $0x14d8] sm:$0xff]
    %v834 = vld [vmem:[#allocation5 + $0x14e0] sm:$0xf]
    %v835 = vld [vmem:[#allocation5 + $0x14e4] sm:$0xff]
    %v836 = vld [vmem:[#allocation5 + $0x14ec] sm:$0xff]
    %v837 = vld [vmem:[#allocation5 + $0x14f4] sm:$0xff]
    %v838 = vld [vmem:[#allocation5 + $0x14fc] sm:$0xf]
    %v839 = vld [vmem:[#allocation5 + $0x1500] sm:$0xff]
    %v840 = vld [vmem:[#allocation5 + $0x1508] sm:$0xff]
    %v841 = vld [vmem:[#allocation5 + $0x1510] sm:$0xff]
    %v842 = vld [vmem:[#allocation5 + $0x1518] sm:$0xf]
    %v843 = vld [vmem:[#allocation5 + $0x151c] sm:$0xff]
    %v844 = vld [vmem:[#allocation5 + $0x1524] sm:$0xff]
    %v845 = vld [vmem:[#allocation5 + $0x152c] sm:$0xff]
    %v846 = vld [vmem:[#allocation5 + $0x1534] sm:$0xf]
    %v847 = vld [vmem:[#allocation5 + $0x1538] sm:$0xff]
    %v848 = vld [vmem:[#allocation5 + $0x1540] sm:$0xff]
    %v849 = vld [vmem:[#allocation5 + $0x1548] sm:$0xff]
    %v850 = vld [vmem:[#allocation5 + $0x1550] sm:$0xf]
    %v851 = vld [vmem:[#allocation5 + $0x1554] sm:$0xff]
    %v852 = vld [vmem:[#allocation5 + $0x155c] sm:$0xff]
    %v853 = vld [vmem:[#allocation5 + $0x1564] sm:$0xff]
    %v854 = vld [vmem:[#allocation5 + $0x156c] sm:$0xf]
    %v855 = vld [vmem:[#allocation5 + $0x1570] sm:$0xff]
    %v856 = vld [vmem:[#allocation5 + $0x1578] sm:$0xff]
    %v857 = vld [vmem:[#allocation5 + $0x1580] sm:$0xff]
    %v858 = vld [vmem:[#allocation5 + $0x1588] sm:$0xf]
    %v859 = vld [vmem:[#allocation5 + $0x158c] sm:$0xff]
    %v860 = vld [vmem:[#allocation5 + $0x1594] sm:$0xff]
    %v861 = vld [vmem:[#allocation5 + $0x159c] sm:$0xff]
    %v862 = vld [vmem:[#allocation5 + $0x15a4] sm:$0xf]
    %v863 = vld [vmem:[#allocation5 + $0x15a8] sm:$0xff]
    %v864 = vld [vmem:[#allocation5 + $0x15b0] sm:$0xff]
    %v865 = vld [vmem:[#allocation5 + $0x15b8] sm:$0xff]
    %v866 = vld [vmem:[#allocation5 + $0x15c0] sm:$0xf]
    %v867 = vld [vmem:[#allocation5 + $0x15c4] sm:$0xff]
    %v868 = vld [vmem:[#allocation5 + $0x15cc] sm:$0xff]
    %v869 = vld [vmem:[#allocation5 + $0x15d4] sm:$0xff]
    %v870 = vld [vmem:[#allocation5 + $0x15dc] sm:$0xf]
    %v871 = vld [vmem:[#allocation5 + $0x15e0] sm:$0xff]
    %v872 = vld [vmem:[#allocation5 + $0x15e8] sm:$0xff]
    %v873 = vld [vmem:[#allocation5 + $0x15f0] sm:$0xff]
    %v874 = vld [vmem:[#allocation5 + $0x15f8] sm:$0xf]
    %v875 = vld [vmem:[#allocation5 + $0x15fc] sm:$0xff]
    %v876 = vld [vmem:[#allocation5 + $0x1604] sm:$0xff]
    %v877 = vld [vmem:[#allocation5 + $0x160c] sm:$0xff]
    %v878 = vld [vmem:[#allocation5 + $0x1614] sm:$0xf]
    %v879 = vld [vmem:[#allocation5 + $0x1618] sm:$0xff]
    %v880 = vld [vmem:[#allocation5 + $0x1620] sm:$0xff]
    %v881 = vld [vmem:[#allocation5 + $0x1628] sm:$0xff]
    %v882 = vld [vmem:[#allocation5 + $0x1630] sm:$0xf]
    %v883 = vld [vmem:[#allocation5 + $0x1634] sm:$0xff]
    %v884 = vld [vmem:[#allocation5 + $0x163c] sm:$0xff]
    %v885 = vld [vmem:[#allocation5 + $0x1644] sm:$0xff]
    %v886 = vld [vmem:[#allocation5 + $0x164c] sm:$0xf]
    %v887 = vld [vmem:[#allocation5 + $0x1650] sm:$0xff]
    %v888 = vld [vmem:[#allocation5 + $0x1658] sm:$0xff]
    %v889 = vld [vmem:[#allocation5 + $0x1660] sm:$0xff]
    %v890 = vld [vmem:[#allocation5 + $0x1668] sm:$0xf]
    %v891 = vld [vmem:[#allocation5 + $0x166c] sm:$0xff]
    %v892 = vld [vmem:[#allocation5 + $0x1674] sm:$0xff]
    %v893 = vld [vmem:[#allocation5 + $0x167c] sm:$0xff]
    %v894 = vld [vmem:[#allocation5 + $0x1684] sm:$0xf]
    %v895 = vld [vmem:[#allocation5 + $0x1688] sm:$0xff]
    %v896 = vld [vmem:[#allocation5 + $0x1690] sm:$0xff]
    %v897 = vld [vmem:[#allocation5 + $0x1698] sm:$0xff]
    %v898 = vld [vmem:[#allocation5 + $0x16a0] sm:$0xf]
    %v899 = vld [vmem:[#allocation5 + $0x16a4] sm:$0xff]
    %v900 = vld [vmem:[#allocation5 + $0x16ac] sm:$0xff]
    %v901 = vld [vmem:[#allocation5 + $0x16b4] sm:$0xff]
    %v902 = vld [vmem:[#allocation5 + $0x16bc] sm:$0xf]
    %v903 = vld [vmem:[#allocation5 + $0x16c0] sm:$0xff]
    %v904 = vld [vmem:[#allocation5 + $0x16c8] sm:$0xff]
    %v905 = vld [vmem:[#allocation5 + $0x16d0] sm:$0xff]
    %v906 = vld [vmem:[#allocation5 + $0x16d8] sm:$0xf]
    %v907 = vld [vmem:[#allocation5 + $0x16dc] sm:$0xff]
    %v908 = vld [vmem:[#allocation5 + $0x16e4] sm:$0xff]
    %v909 = vld [vmem:[#allocation5 + $0x16ec] sm:$0xff]
    %v910 = vld [vmem:[#allocation5 + $0x16f4] sm:$0xf]
    %v911 = vld [vmem:[#allocation5 + $0x16f8] sm:$0xff]
    %v912 = vld [vmem:[#allocation5 + $0x1700] sm:$0xff]
    %v913 = vld [vmem:[#allocation5 + $0x1708] sm:$0xff]
    %v914 = vld [vmem:[#allocation5 + $0x1710] sm:$0xf]
    %v915 = vld [vmem:[#allocation5 + $0x1714] sm:$0xff]
    %v916 = vld [vmem:[#allocation5 + $0x171c] sm:$0xff]
    %v917 = vld [vmem:[#allocation5 + $0x1724] sm:$0xff]
    %v918 = vld [vmem:[#allocation5 + $0x172c] sm:$0xf]
    %v919 = vld [vmem:[#allocation5 + $0x1730] sm:$0xff]
    %v920 = vld [vmem:[#allocation5 + $0x1738] sm:$0xff]
    %v921 = vld [vmem:[#allocation5 + $0x1740] sm:$0xff]
    %v922 = vld [vmem:[#allocation5 + $0x1748] sm:$0xf]
    %v923 = vld [vmem:[#allocation5 + $0x174c] sm:$0xff]
    %v924 = vld [vmem:[#allocation5 + $0x1754] sm:$0xff]
    %v925 = vld [vmem:[#allocation5 + $0x175c] sm:$0xff]
    %v926 = vld [vmem:[#allocation5 + $0x1764] sm:$0xf]
    %v927 = vld [vmem:[#allocation5 + $0x1768] sm:$0xff]
    %v928 = vld [vmem:[#allocation5 + $0x1770] sm:$0xff]
    %v929 = vld [vmem:[#allocation5 + $0x1778] sm:$0xff]
    %v930 = vld [vmem:[#allocation5 + $0x1780] sm:$0xf]
    %v931 = vld [vmem:[#allocation5 + $0x1784] sm:$0xff]
    %v932 = vld [vmem:[#allocation5 + $0x178c] sm:$0xff]
    %v933 = vld [vmem:[#allocation5 + $0x1794] sm:$0xff]
    %v934 = vld [vmem:[#allocation5 + $0x179c] sm:$0xf]
    %v935 = vld [vmem:[#allocation5 + $0x17a0] sm:$0xff]
    %v936 = vld [vmem:[#allocation5 + $0x17a8] sm:$0xff]
    %v937 = vld [vmem:[#allocation5 + $0x17b0] sm:$0xff]
    %v938 = vld [vmem:[#allocation5 + $0x17b8] sm:$0xf]
    %v939 = vld [vmem:[#allocation5 + $0x17bc] sm:$0xff]
    %v940 = vld [vmem:[#allocation5 + $0x17c4] sm:$0xff]
    %v941 = vld [vmem:[#allocation5 + $0x17cc] sm:$0xff]
    %v942 = vld [vmem:[#allocation5 + $0x17d4] sm:$0xf]
    %v943 = vld [vmem:[#allocation5 + $0x17d8] sm:$0xff]
    %v944 = vld [vmem:[#allocation5 + $0x17e0] sm:$0xff]
    %v945 = vld [vmem:[#allocation5 + $0x17e8] sm:$0xff]
    %v946 = vld [vmem:[#allocation5 + $0x17f0] sm:$0xf]
    %v947 = vld [vmem:[#allocation5 + $0x17f4] sm:$0xff]
    %v948 = vld [vmem:[#allocation5 + $0x17fc] sm:$0xff]
    %v949 = vld [vmem:[#allocation5 + $0x1804] sm:$0xff]
    %v950 = vld [vmem:[#allocation5 + $0x180c] sm:$0xf]
    %v951 = vld [vmem:[#allocation5 + $0x1810] sm:$0xff]
    %v952 = vld [vmem:[#allocation5 + $0x1818] sm:$0xff]
    %v953 = vld [vmem:[#allocation5 + $0x1820] sm:$0xff]
    %v954 = vld [vmem:[#allocation5 + $0x1828] sm:$0xf]
    %v955 = vld [vmem:[#allocation5 + $0x182c] sm:$0xff]
    %v956 = vld [vmem:[#allocation5 + $0x1834] sm:$0xff]
    %v957 = vld [vmem:[#allocation5 + $0x183c] sm:$0xff]
    %v958 = vld [vmem:[#allocation5 + $0x1844] sm:$0xf]
    %v959 = vld [vmem:[#allocation5 + $0x1848] sm:$0xff]
    %v960 = vld [vmem:[#allocation5 + $0x1850] sm:$0xff]
    %v961 = vld [vmem:[#allocation5 + $0x1858] sm:$0xff]
    %v962 = vld [vmem:[#allocation5 + $0x1860] sm:$0xf]
    %v963 = vld [vmem:[#allocation5 + $0x1864] sm:$0xff]
    %v964 = vld [vmem:[#allocation5 + $0x186c] sm:$0xff]
    %v965 = vld [vmem:[#allocation5 + $0x1874] sm:$0xff]
    %v966 = vld [vmem:[#allocation5 + $0x187c] sm:$0xf]
    %v967 = vld [vmem:[#allocation5 + $0x1880] sm:$0xff]
    %v968 = vld [vmem:[#allocation5 + $0x1888] sm:$0xff]
    %v969 = vld [vmem:[#allocation5 + $0x1890] sm:$0xff]
    %v970 = vld [vmem:[#allocation5 + $0x1898] sm:$0xf]
    %v971 = vld [vmem:[#allocation5 + $0x189c] sm:$0xff]
    %v972 = vld [vmem:[#allocation5 + $0x18a4] sm:$0xff]
    %v973 = vld [vmem:[#allocation5 + $0x18ac] sm:$0xff]
    %v974 = vld [vmem:[#allocation5 + $0x18b4] sm:$0xf]
    %v975 = vld [vmem:[#allocation5 + $0x18b8] sm:$0xff]
    %v976 = vld [vmem:[#allocation5 + $0x18c0] sm:$0xff]
    %v977 = vld [vmem:[#allocation5 + $0x18c8] sm:$0xff]
    %v978 = vld [vmem:[#allocation5 + $0x18d0] sm:$0xf]
    %v979 = vld [vmem:[#allocation5 + $0x18d4] sm:$0xff]
    %v980 = vld [vmem:[#allocation5 + $0x18dc] sm:$0xff]
    %v981 = vld [vmem:[#allocation5 + $0x18e4] sm:$0xff]
    %v982 = vld [vmem:[#allocation5 + $0x18ec] sm:$0xf]
    %v983 = vld [vmem:[#allocation5 + $0x18f0] sm:$0xff]
    %v984 = vld [vmem:[#allocation5 + $0x18f8] sm:$0xff]
    %v985 = vld [vmem:[#allocation5 + $0x1900] sm:$0xff]
    %v986 = vld [vmem:[#allocation5 + $0x1908] sm:$0xf]
    %v987 = vld [vmem:[#allocation5 + $0x190c] sm:$0xff]
    %v988 = vld [vmem:[#allocation5 + $0x1914] sm:$0xff]
    %v989 = vld [vmem:[#allocation5 + $0x191c] sm:$0xff]
    %v990 = vld [vmem:[#allocation5 + $0x1924] sm:$0xf]
    %v991 = vld [vmem:[#allocation5 + $0x1928] sm:$0xff]
    %v992 = vld [vmem:[#allocation5 + $0x1930] sm:$0xff]
    %v993 = vld [vmem:[#allocation5 + $0x1938] sm:$0xff]
    %v994 = vld [vmem:[#allocation5 + $0x1940] sm:$0xf]
    %v995 = vld [vmem:[#allocation5 + $0x1944] sm:$0xff]
    %v996 = vld [vmem:[#allocation5 + $0x194c] sm:$0xff]
    %v997 = vld [vmem:[#allocation5 + $0x1954] sm:$0xff]
    %v998 = vld [vmem:[#allocation5 + $0x195c] sm:$0xf]
    %v999 = vld [vmem:[#allocation5 + $0x1960] sm:$0xff]
    %v1000 = vld [vmem:[#allocation5 + $0x1968] sm:$0xff]
    %v1001 = vld [vmem:[#allocation5 + $0x1970] sm:$0xff]
    %v1002 = vld [vmem:[#allocation5 + $0x1978] sm:$0xf]
    %v1003 = vld [vmem:[#allocation5 + $0x197c] sm:$0xff]
    %v1004 = vld [vmem:[#allocation5 + $0x1984] sm:$0xff]
    %v1005 = vld [vmem:[#allocation5 + $0x198c] sm:$0xff]
    %v1006 = vld [vmem:[#allocation5 + $0x1994] sm:$0xf]
    %v1007 = vld [vmem:[#allocation5 + $0x1998] sm:$0xff]
    %v1008 = vld [vmem:[#allocation5 + $0x19a0] sm:$0xff]
    %v1009 = vld [vmem:[#allocation5 + $0x19a8] sm:$0xff]
    %v1010 = vld [vmem:[#allocation5 + $0x19b0] sm:$0xf]
    %v1011 = vld [vmem:[#allocation5 + $0x19b4] sm:$0xff]
    %v1012 = vld [vmem:[#allocation5 + $0x19bc] sm:$0xff]
    %v1013 = vld [vmem:[#allocation5 + $0x19c4] sm:$0xff]
    %v1014 = vld [vmem:[#allocation5 + $0x19cc] sm:$0xf]
    %v1015 = vld [vmem:[#allocation5 + $0x19d0] sm:$0xff]
    %v1016 = vld [vmem:[#allocation5 + $0x19d8] sm:$0xff]
    %v1017 = vld [vmem:[#allocation5 + $0x19e0] sm:$0xff]
    %v1018 = vld [vmem:[#allocation5 + $0x19e8] sm:$0xf]
    %v1019 = vld [vmem:[#allocation5 + $0x19ec] sm:$0xff]
    %v1020 = vld [vmem:[#allocation5 + $0x19f4] sm:$0xff]
    %v1021 = vld [vmem:[#allocation5 + $0x19fc] sm:$0xff]
    %v1022 = vld [vmem:[#allocation5 + $0x1a04] sm:$0xf]
    %v1023 = vld [vmem:[#allocation5 + $0x1a08] sm:$0xff]
    %v1024 = vld [vmem:[#allocation5 + $0x1a10] sm:$0xff]
    %v1025 = vld [vmem:[#allocation5 + $0x1a18] sm:$0xff]
    %v1026 = vld [vmem:[#allocation5 + $0x1a20] sm:$0xf]
    %v1027 = vld [vmem:[#allocation5 + $0x1a24] sm:$0xff]
    %v1028 = vld [vmem:[#allocation5 + $0x1a2c] sm:$0xff]
    %v1029 = vld [vmem:[#allocation5 + $0x1a34] sm:$0xff]
    %v1030 = vld [vmem:[#allocation5 + $0x1a3c] sm:$0xf]
    %v1031 = vld [vmem:[#allocation5 + $0x1a40] sm:$0xff]
    %v1032 = vld [vmem:[#allocation5 + $0x1a48] sm:$0xff]
    %v1033 = vld [vmem:[#allocation5 + $0x1a50] sm:$0xff]
    %v1034 = vld [vmem:[#allocation5 + $0x1a58] sm:$0xf]
    %v1035 = vld [vmem:[#allocation5 + $0x1a5c] sm:$0xff]
    %v1036 = vld [vmem:[#allocation5 + $0x1a64] sm:$0xff]
    %v1037 = vld [vmem:[#allocation5 + $0x1a6c] sm:$0xff]
    %v1038 = vld [vmem:[#allocation5 + $0x1a74] sm:$0xf]
    %v1039 = vld [vmem:[#allocation5 + $0x1a78] sm:$0xff]
    %v1040 = vld [vmem:[#allocation5 + $0x1a80] sm:$0xff]
    %v1041 = vld [vmem:[#allocation5 + $0x1a88] sm:$0xff]
    %v1042 = vld [vmem:[#allocation5 + $0x1a90] sm:$0xf]
    %v1043 = vld [vmem:[#allocation5 + $0x1a94] sm:$0xff]
    %v1044 = vld [vmem:[#allocation5 + $0x1a9c] sm:$0xff]
    %v1045 = vld [vmem:[#allocation5 + $0x1aa4] sm:$0xff]
    %v1046 = vld [vmem:[#allocation5 + $0x1aac] sm:$0xf]
    %v1047 = vld [vmem:[#allocation5 + $0x1ab0] sm:$0xff]
    %v1048 = vld [vmem:[#allocation5 + $0x1ab8] sm:$0xff]
    %v1049 = vld [vmem:[#allocation5 + $0x1ac0] sm:$0xff]
    %v1050 = vld [vmem:[#allocation5 + $0x1ac8] sm:$0xf]
    %v1051 = vld [vmem:[#allocation5 + $0x1acc] sm:$0xff]
    %v1052 = vld [vmem:[#allocation5 + $0x1ad4] sm:$0xff]
    %v1053 = vld [vmem:[#allocation5 + $0x1adc] sm:$0xff]
    %v1054 = vld [vmem:[#allocation5 + $0x1ae4] sm:$0xf]
    %v1055 = vld [vmem:[#allocation5 + $0x1ae8] sm:$0xff]
    %v1056 = vld [vmem:[#allocation5 + $0x1af0] sm:$0xff]
    %v1057 = vld [vmem:[#allocation5 + $0x1af8] sm:$0xff]
    %v1058 = vld [vmem:[#allocation5 + $0x1b00] sm:$0xf]
    %v1059 = vld [vmem:[#allocation5 + $0x1b04] sm:$0xff]
    %v1060 = vld [vmem:[#allocation5 + $0x1b0c] sm:$0xff]
    %v1061 = vld [vmem:[#allocation5 + $0x1b14] sm:$0xff]
    %v1062 = vld [vmem:[#allocation5 + $0x1b1c] sm:$0xf]
    %v1063 = vld [vmem:[#allocation5 + $0x1b20] sm:$0xff]
    %v1064 = vld [vmem:[#allocation5 + $0x1b28] sm:$0xff]
    %v1065 = vld [vmem:[#allocation5 + $0x1b30] sm:$0xff]
    %v1066 = vld [vmem:[#allocation5 + $0x1b38] sm:$0xf]
    %v1067 = vld [vmem:[#allocation5 + $0x1b3c] sm:$0xff]
    %v1068 = vld [vmem:[#allocation5 + $0x1b44] sm:$0xff]
    %v1069 = vld [vmem:[#allocation5 + $0x1b4c] sm:$0xff]
    %v1070 = vld [vmem:[#allocation5 + $0x1b54] sm:$0xf]
    %v1071 = vld [vmem:[#allocation5 + $0x1b58] sm:$0xff]
    %v1072 = vld [vmem:[#allocation5 + $0x1b60] sm:$0xff]
    %v1073 = vld [vmem:[#allocation5 + $0x1b68] sm:$0xff]
    %v1074 = vld [vmem:[#allocation5 + $0x1b70] sm:$0xf]
    %v1075 = vld [vmem:[#allocation5 + $0x1b74] sm:$0xff]
    %v1076 = vld [vmem:[#allocation5 + $0x1b7c] sm:$0xff]
    %v1077 = vld [vmem:[#allocation5 + $0x1b84] sm:$0xff]
    %v1078 = vld [vmem:[#allocation5 + $0x1b8c] sm:$0xf]
    %v1079 = vld [vmem:[#allocation5 + $0x1b90] sm:$0xff]
    %v1080 = vld [vmem:[#allocation5 + $0x1b98] sm:$0xff]
    %v1081 = vld [vmem:[#allocation5 + $0x1ba0] sm:$0xff]
    %v1082 = vld [vmem:[#allocation5 + $0x1ba8] sm:$0xf]
    %v1083 = vld [vmem:[#allocation5 + $0x1bac] sm:$0xff]
    %v1084 = vld [vmem:[#allocation5 + $0x1bb4] sm:$0xff]
    %v1085 = vld [vmem:[#allocation5 + $0x1bbc] sm:$0xff]
    %v1086 = vld [vmem:[#allocation5 + $0x1bc4] sm:$0xf]
    %v1087 = vld [vmem:[#allocation5 + $0x1bc8] sm:$0xff]
    %v1088 = vld [vmem:[#allocation5 + $0x1bd0] sm:$0xff]
    %v1089 = vld [vmem:[#allocation5 + $0x1bd8] sm:$0xff]
    %v1090 = vld [vmem:[#allocation5 + $0x1be0] sm:$0xf]
    %v1091 = vld [vmem:[#allocation5 + $0x1be4] sm:$0xff]
    %v1092 = vld [vmem:[#allocation5 + $0x1bec] sm:$0xff]
    %v1093 = vld [vmem:[#allocation5 + $0x1bf4] sm:$0xff]
    %v1094 = vld [vmem:[#allocation5 + $0x1bfc] sm:$0xf]
    %v1095 = vld [vmem:[%s4] sm:$0xff]
    %v1097 = vlaneseq
    %v1098 = vshrl.u32 %v1097, 7
    %v1099 = vsub.s32 0, %v1098
    %v1100 = vrot.slane %v1095, %v1099
    %v1101 = vlaneseq
    %v1102 = vshrl.u32 %v1101, 7
    %v1103 = vsub.s32 1, %v1102
    %v1104 = vrot.slane %v1095, %v1103
    %v1105 = vlaneseq
    %v1106 = vshrl.u32 %v1105, 7
    %v1107 = vsub.s32 2, %v1106
    %v1108 = vrot.slane %v1095, %v1107
    %v1109 = vlaneseq
    %v1110 = vshrl.u32 %v1109, 7
    %v1111 = vsub.s32 3, %v1110
    %v1112 = vrot.slane %v1095, %v1111
    %v1113 = vlaneseq
    %v1114 = vshrl.u32 %v1113, 7
    %v1115 = vsub.s32 4, %v1114
    %v1116 = vrot.slane %v1095, %v1115
    %v1117 = vlaneseq
    %v1118 = vshrl.u32 %v1117, 7
    %v1119 = vsub.s32 5, %v1118
    %v1120 = vrot.slane %v1095, %v1119
    %v1121 = vlaneseq
    %v1122 = vshrl.u32 %v1121, 7
    %v1123 = vsub.s32 6, %v1122
    %v1124 = vrot.slane %v1095, %v1123
    %v1140 = vunpack.c.l.b16 %v63
    %v1141 = vunpack.c.h.b16 %v63
    %v1142 = vunpack.c.l.b16 %v64
    %v1143 = vunpack.c.h.b16 %v64
    %v1144 = vunpack.c.l.b16 %v65
    %v1145 = vunpack.c.h.b16 %v65
    %v1146 = vunpack.c.l.b16 %v66
    %v1147 = vunpack.c.h.b16 %v66
    %v1148 = vunpack.c.l.b16 %v67
    %v1149 = vunpack.c.h.b16 %v67
    %v1150 = vunpack.c.l.b16 %v68
    %v1151 = vunpack.c.h.b16 %v68
    %v1152 = vunpack.c.l.b16 %v69
    %v1153 = vunpack.c.h.b16 %v69
    %v1154 = vunpack.c.l.b16 %v70
    %v1155 = vunpack.c.h.b16 %v70
    %v1156 = vpack.c.b16 %v1140, %v1140
    %v1157 = vpack.c.b16 %v1141, %v1141
    %v1158 = vpack.c.b16 %v1142, %v1142
    %v1159 = vpack.c.b16 %v1143, %v1143
    %v1160 = vpack.c.b16 %v1144, %v1144
    %v1161 = vpack.c.b16 %v1145, %v1145
    %v1162 = vpack.c.b16 %v1146, %v1146
    %v1163 = vpack.c.b16 %v1147, %v1147
    %v1164 = vpack.c.b16 %v1148, %v1148
    %v1165 = vpack.c.b16 %v1149, %v1149
    %v1166 = vpack.c.b16 %v1150, %v1150
    %v1167 = vpack.c.b16 %v1151, %v1151
    %v1168 = vpack.c.b16 %v1152, %v1152
    %v1169 = vpack.c.b16 %v1153, %v1153
    %v1170 = vpack.c.b16 %v1154, %v1154
    %v1171 = vpack.c.b16 %v1155, %v1155
    %v2212 = vunpack.c.l.b16 %v71
    %v2213 = vunpack.c.h.b16 %v71
    %v2214 = vunpack.c.l.b16 %v72
    %v2215 = vunpack.c.h.b16 %v72
    %v2216 = vunpack.c.l.b16 %v73
    %v2217 = vunpack.c.h.b16 %v73
    %v2218 = vunpack.c.l.b16 %v74
    %v2219 = vunpack.c.l.b16 %v75
    %v2220 = vunpack.c.h.b16 %v75
    %v2221 = vunpack.c.l.b16 %v76
    %v2222 = vunpack.c.h.b16 %v76
    %v2223 = vunpack.c.l.b16 %v77
    %v2224 = vunpack.c.h.b16 %v77
    %v2225 = vunpack.c.l.b16 %v78
    %v2226 = vunpack.c.l.b16 %v79
    %v2227 = vunpack.c.h.b16 %v79
    %v2228 = vunpack.c.l.b16 %v80
    %v2229 = vunpack.c.h.b16 %v80
    %v2230 = vunpack.c.l.b16 %v81
    %v2231 = vunpack.c.h.b16 %v81
    %v2232 = vunpack.c.l.b16 %v82
    %v2233 = vunpack.c.l.b16 %v83
    %v2234 = vunpack.c.h.b16 %v83
    %v2235 = vunpack.c.l.b16 %v84
    %v2236 = vunpack.c.h.b16 %v84
    %v2237 = vunpack.c.l.b16 %v85
    %v2238 = vunpack.c.h.b16 %v85
    %v2239 = vunpack.c.l.b16 %v86
    %v2240 = vunpack.c.l.b16 %v87
    %v2241 = vunpack.c.h.b16 %v87
    %v2242 = vunpack.c.l.b16 %v88
    %v2243 = vunpack.c.h.b16 %v88
    %v2244 = vunpack.c.l.b16 %v89
    %v2245 = vunpack.c.h.b16 %v89
    %v2246 = vunpack.c.l.b16 %v90
    %v2247 = vunpack.c.l.b16 %v91
    %v2248 = vunpack.c.h.b16 %v91
    %v2249 = vunpack.c.l.b16 %v92
    %v2250 = vunpack.c.h.b16 %v92
    %v2251 = vunpack.c.l.b16 %v93
    %v2252 = vunpack.c.h.b16 %v93
    %v2253 = vunpack.c.l.b16 %v94
    %v2254 = vunpack.c.l.b16 %v95
    %v2255 = vunpack.c.h.b16 %v95
    %v2256 = vunpack.c.l.b16 %v96
    %v2257 = vunpack.c.h.b16 %v96
    %v2258 = vunpack.c.l.b16 %v97
    %v2259 = vunpack.c.h.b16 %v97
    %v2260 = vunpack.c.l.b16 %v98
    %v2261 = vunpack.c.l.b16 %v99
    %v2262 = vunpack.c.h.b16 %v99
    %v2263 = vunpack.c.l.b16 %v100
    %v2264 = vunpack.c.h.b16 %v100
    %v2265 = vunpack.c.l.b16 %v101
    %v2266 = vunpack.c.h.b16 %v101
    %v2267 = vunpack.c.l.b16 %v102
    %v2268 = vunpack.c.l.b16 %v103
    %v2269 = vunpack.c.h.b16 %v103
    %v2270 = vunpack.c.l.b16 %v104
    %v2271 = vunpack.c.h.b16 %v104
    %v2272 = vunpack.c.l.b16 %v105
    %v2273 = vunpack.c.h.b16 %v105
    %v2274 = vunpack.c.l.b16 %v106
    %v2275 = vunpack.c.l.b16 %v107
    %v2276 = vunpack.c.h.b16 %v107
    %v2277 = vunpack.c.l.b16 %v108
    %v2278 = vunpack.c.h.b16 %v108
    %v2279 = vunpack.c.l.b16 %v109
    %v2280 = vunpack.c.h.b16 %v109
    %v2281 = vunpack.c.l.b16 %v110
    %v2282 = vunpack.c.l.b16 %v111
    %v2283 = vunpack.c.h.b16 %v111
    %v2284 = vunpack.c.l.b16 %v112
    %v2285 = vunpack.c.h.b16 %v112
    %v2286 = vunpack.c.l.b16 %v113
    %v2287 = vunpack.c.h.b16 %v113
    %v2288 = vunpack.c.l.b16 %v114
    %v2289 = vunpack.c.l.b16 %v115
    %v2290 = vunpack.c.h.b16 %v115
    %v2291 = vunpack.c.l.b16 %v116
    %v2292 = vunpack.c.h.b16 %v116
    %v2293 = vunpack.c.l.b16 %v117
    %v2294 = vunpack.c.h.b16 %v117
    %v2295 = vunpack.c.l.b16 %v118
    %v2296 = vunpack.c.l.b16 %v119
    %v2297 = vunpack.c.h.b16 %v119
    %v2298 = vunpack.c.l.b16 %v120
    %v2299 = vunpack.c.h.b16 %v120
    %v2300 = vunpack.c.l.b16 %v121
    %v2301 = vunpack.c.h.b16 %v121
    %v2302 = vunpack.c.l.b16 %v122
    %v2303 = vunpack.c.l.b16 %v123
    %v2304 = vunpack.c.h.b16 %v123
    %v2305 = vunpack.c.l.b16 %v124
    %v2306 = vunpack.c.h.b16 %v124
    %v2307 = vunpack.c.l.b16 %v125
    %v2308 = vunpack.c.h.b16 %v125
    %v2309 = vunpack.c.l.b16 %v126
    %v2310 = vunpack.c.l.b16 %v127
    %v2311 = vunpack.c.h.b16 %v127
    %v2312 = vunpack.c.l.b16 %v128
    %v2313 = vunpack.c.h.b16 %v128
    %v2314 = vunpack.c.l.b16 %v129
    %v2315 = vunpack.c.h.b16 %v129
    %v2316 = vunpack.c.l.b16 %v130
    %v2317 = vunpack.c.l.b16 %v131
    %v2318 = vunpack.c.h.b16 %v131
    %v2319 = vunpack.c.l.b16 %v132
    %v2320 = vunpack.c.h.b16 %v132
    %v2321 = vunpack.c.l.b16 %v133
    %v2322 = vunpack.c.h.b16 %v133
    %v2323 = vunpack.c.l.b16 %v134
    %v2324 = vunpack.c.l.b16 %v135
    %v2325 = vunpack.c.h.b16 %v135
    %v2326 = vunpack.c.l.b16 %v136
    %v2327 = vunpack.c.h.b16 %v136
    %v2328 = vunpack.c.l.b16 %v137
    %v2329 = vunpack.c.h.b16 %v137
    %v2330 = vunpack.c.l.b16 %v138
    %v2331 = vunpack.c.l.b16 %v139
    %v2332 = vunpack.c.h.b16 %v139
    %v2333 = vunpack.c.l.b16 %v140
    %v2334 = vunpack.c.h.b16 %v140
    %v2335 = vunpack.c.l.b16 %v141
    %v2336 = vunpack.c.h.b16 %v141
    %v2337 = vunpack.c.l.b16 %v142
    %v2338 = vunpack.c.l.b16 %v143
    %v2339 = vunpack.c.h.b16 %v143
    %v2340 = vunpack.c.l.b16 %v144
    %v2341 = vunpack.c.h.b16 %v144
    %v2342 = vunpack.c.l.b16 %v145
    %v2343 = vunpack.c.h.b16 %v145
    %v2344 = vunpack.c.l.b16 %v146
    %v2345 = vunpack.c.l.b16 %v147
    %v2346 = vunpack.c.h.b16 %v147
    %v2347 = vunpack.c.l.b16 %v148
    %v2348 = vunpack.c.h.b16 %v148
    %v2349 = vunpack.c.l.b16 %v149
    %v2350 = vunpack.c.h.b16 %v149
    %v2351 = vunpack.c.l.b16 %v150
    %v2352 = vunpack.c.l.b16 %v151
    %v2353 = vunpack.c.h.b16 %v151
    %v2354 = vunpack.c.l.b16 %v152
    %v2355 = vunpack.c.h.b16 %v152
    %v2356 = vunpack.c.l.b16 %v153
    %v2357 = vunpack.c.h.b16 %v153
    %v2358 = vunpack.c.l.b16 %v154
    %v2359 = vunpack.c.l.b16 %v155
    %v2360 = vunpack.c.h.b16 %v155
    %v2361 = vunpack.c.l.b16 %v156
    %v2362 = vunpack.c.h.b16 %v156
    %v2363 = vunpack.c.l.b16 %v157
    %v2364 = vunpack.c.h.b16 %v157
    %v2365 = vunpack.c.l.b16 %v158
    %v2366 = vunpack.c.l.b16 %v159
    %v2367 = vunpack.c.h.b16 %v159
    %v2368 = vunpack.c.l.b16 %v160
    %v2369 = vunpack.c.h.b16 %v160
    %v2370 = vunpack.c.l.b16 %v161
    %v2371 = vunpack.c.h.b16 %v161
    %v2372 = vunpack.c.l.b16 %v162
    %v2373 = vunpack.c.l.b16 %v163
    %v2374 = vunpack.c.h.b16 %v163
    %v2375 = vunpack.c.l.b16 %v164
    %v2376 = vunpack.c.h.b16 %v164
    %v2377 = vunpack.c.l.b16 %v165
    %v2378 = vunpack.c.h.b16 %v165
    %v2379 = vunpack.c.l.b16 %v166
    %v2380 = vunpack.c.l.b16 %v167
    %v2381 = vunpack.c.h.b16 %v167
    %v2382 = vunpack.c.l.b16 %v168
    %v2383 = vunpack.c.h.b16 %v168
    %v2384 = vunpack.c.l.b16 %v169
    %v2385 = vunpack.c.h.b16 %v169
    %v2386 = vunpack.c.l.b16 %v170
    %v2387 = vunpack.c.l.b16 %v171
    %v2388 = vunpack.c.h.b16 %v171
    %v2389 = vunpack.c.l.b16 %v172
    %v2390 = vunpack.c.h.b16 %v172
    %v2391 = vunpack.c.l.b16 %v173
    %v2392 = vunpack.c.h.b16 %v173
    %v2393 = vunpack.c.l.b16 %v174
    %v2394 = vunpack.c.l.b16 %v175
    %v2395 = vunpack.c.h.b16 %v175
    %v2396 = vunpack.c.l.b16 %v176
    %v2397 = vunpack.c.h.b16 %v176
    %v2398 = vunpack.c.l.b16 %v177
    %v2399 = vunpack.c.h.b16 %v177
    %v2400 = vunpack.c.l.b16 %v178
    %v2401 = vunpack.c.l.b16 %v179
    %v2402 = vunpack.c.h.b16 %v179
    %v2403 = vunpack.c.l.b16 %v180
    %v2404 = vunpack.c.h.b16 %v180
    %v2405 = vunpack.c.l.b16 %v181
    %v2406 = vunpack.c.h.b16 %v181
    %v2407 = vunpack.c.l.b16 %v182
    %v2408 = vunpack.c.l.b16 %v183
    %v2409 = vunpack.c.h.b16 %v183
    %v2410 = vunpack.c.l.b16 %v184
    %v2411 = vunpack.c.h.b16 %v184
    %v2412 = vunpack.c.l.b16 %v185
    %v2413 = vunpack.c.h.b16 %v185
    %v2414 = vunpack.c.l.b16 %v186
    %v2415 = vunpack.c.l.b16 %v187
    %v2416 = vunpack.c.h.b16 %v187
    %v2417 = vunpack.c.l.b16 %v188
    %v2418 = vunpack.c.h.b16 %v188
    %v2419 = vunpack.c.l.b16 %v189
    %v2420 = vunpack.c.h.b16 %v189
    %v2421 = vunpack.c.l.b16 %v190
    %v2422 = vunpack.c.l.b16 %v191
    %v2423 = vunpack.c.h.b16 %v191
    %v2424 = vunpack.c.l.b16 %v192
    %v2425 = vunpack.c.h.b16 %v192
    %v2426 = vunpack.c.l.b16 %v193
    %v2427 = vunpack.c.h.b16 %v193
    %v2428 = vunpack.c.l.b16 %v194
    %v2429 = vunpack.c.l.b16 %v195
    %v2430 = vunpack.c.h.b16 %v195
    %v2431 = vunpack.c.l.b16 %v196
    %v2432 = vunpack.c.h.b16 %v196
    %v2433 = vunpack.c.l.b16 %v197
    %v2434 = vunpack.c.h.b16 %v197
    %v2435 = vunpack.c.l.b16 %v198
    %v2436 = vunpack.c.l.b16 %v199
    %v2437 = vunpack.c.h.b16 %v199
    %v2438 = vunpack.c.l.b16 %v200
    %v2439 = vunpack.c.h.b16 %v200
    %v2440 = vunpack.c.l.b16 %v201
    %v2441 = vunpack.c.h.b16 %v201
    %v2442 = vunpack.c.l.b16 %v202
    %v2443 = vunpack.c.l.b16 %v203
    %v2444 = vunpack.c.h.b16 %v203
    %v2445 = vunpack.c.l.b16 %v204
    %v2446 = vunpack.c.h.b16 %v204
    %v2447 = vunpack.c.l.b16 %v205
    %v2448 = vunpack.c.h.b16 %v205
    %v2449 = vunpack.c.l.b16 %v206
    %v2450 = vunpack.c.l.b16 %v207
    %v2451 = vunpack.c.h.b16 %v207
    %v2452 = vunpack.c.l.b16 %v208
    %v2453 = vunpack.c.h.b16 %v208
    %v2454 = vunpack.c.l.b16 %v209
    %v2455 = vunpack.c.h.b16 %v209
    %v2456 = vunpack.c.l.b16 %v210
    %v2457 = vunpack.c.l.b16 %v211
    %v2458 = vunpack.c.h.b16 %v211
    %v2459 = vunpack.c.l.b16 %v212
    %v2460 = vunpack.c.h.b16 %v212
    %v2461 = vunpack.c.l.b16 %v213
    %v2462 = vunpack.c.h.b16 %v213
    %v2463 = vunpack.c.l.b16 %v214
    %v2464 = vunpack.c.l.b16 %v215
    %v2465 = vunpack.c.h.b16 %v215
    %v2466 = vunpack.c.l.b16 %v216
    %v2467 = vunpack.c.h.b16 %v216
    %v2468 = vunpack.c.l.b16 %v217
    %v2469 = vunpack.c.h.b16 %v217
    %v2470 = vunpack.c.l.b16 %v218
    %v2471 = vunpack.c.l.b16 %v219
    %v2472 = vunpack.c.h.b16 %v219
    %v2473 = vunpack.c.l.b16 %v220
    %v2474 = vunpack.c.h.b16 %v220
    %v2475 = vunpack.c.l.b16 %v221
    %v2476 = vunpack.c.h.b16 %v221
    %v2477 = vunpack.c.l.b16 %v222
    %v2478 = vunpack.c.l.b16 %v223
    %v2479 = vunpack.c.h.b16 %v223
    %v2480 = vunpack.c.l.b16 %v224
    %v2481 = vunpack.c.h.b16 %v224
    %v2482 = vunpack.c.l.b16 %v225
    %v2483 = vunpack.c.h.b16 %v225
    %v2484 = vunpack.c.l.b16 %v226
    %v2485 = vunpack.c.l.b16 %v227
    %v2486 = vunpack.c.h.b16 %v227
    %v2487 = vunpack.c.l.b16 %v228
    %v2488 = vunpack.c.h.b16 %v228
    %v2489 = vunpack.c.l.b16 %v229
    %v2490 = vunpack.c.h.b16 %v229
    %v2491 = vunpack.c.l.b16 %v230
    %v2492 = vunpack.c.l.b16 %v231
    %v2493 = vunpack.c.h.b16 %v231
    %v2494 = vunpack.c.l.b16 %v232
    %v2495 = vunpack.c.h.b16 %v232
    %v2496 = vunpack.c.l.b16 %v233
    %v2497 = vunpack.c.h.b16 %v233
    %v2498 = vunpack.c.l.b16 %v234
    %v2499 = vunpack.c.l.b16 %v235
    %v2500 = vunpack.c.h.b16 %v235
    %v2501 = vunpack.c.l.b16 %v236
    %v2502 = vunpack.c.h.b16 %v236
    %v2503 = vunpack.c.l.b16 %v237
    %v2504 = vunpack.c.h.b16 %v237
    %v2505 = vunpack.c.l.b16 %v238
    %v2506 = vunpack.c.l.b16 %v239
    %v2507 = vunpack.c.h.b16 %v239
    %v2508 = vunpack.c.l.b16 %v240
    %v2509 = vunpack.c.h.b16 %v240
    %v2510 = vunpack.c.l.b16 %v241
    %v2511 = vunpack.c.h.b16 %v241
    %v2512 = vunpack.c.l.b16 %v242
    %v2513 = vunpack.c.l.b16 %v243
    %v2514 = vunpack.c.h.b16 %v243
    %v2515 = vunpack.c.l.b16 %v244
    %v2516 = vunpack.c.h.b16 %v244
    %v2517 = vunpack.c.l.b16 %v245
    %v2518 = vunpack.c.h.b16 %v245
    %v2519 = vunpack.c.l.b16 %v246
    %v2520 = vunpack.c.l.b16 %v247
    %v2521 = vunpack.c.h.b16 %v247
    %v2522 = vunpack.c.l.b16 %v248
    %v2523 = vunpack.c.h.b16 %v248
    %v2524 = vunpack.c.l.b16 %v249
    %v2525 = vunpack.c.h.b16 %v249
    %v2526 = vunpack.c.l.b16 %v250
    %v2527 = vunpack.c.l.b16 %v251
    %v2528 = vunpack.c.h.b16 %v251
    %v2529 = vunpack.c.l.b16 %v252
    %v2530 = vunpack.c.h.b16 %v252
    %v2531 = vunpack.c.l.b16 %v253
    %v2532 = vunpack.c.h.b16 %v253
    %v2533 = vunpack.c.l.b16 %v254
    %v2534 = vunpack.c.l.b16 %v255
    %v2535 = vunpack.c.h.b16 %v255
    %v2536 = vunpack.c.l.b16 %v256
    %v2537 = vunpack.c.h.b16 %v256
    %v2538 = vunpack.c.l.b16 %v257
    %v2539 = vunpack.c.h.b16 %v257
    %v2540 = vunpack.c.l.b16 %v258
    %v2541 = vunpack.c.l.b16 %v259
    %v2542 = vunpack.c.h.b16 %v259
    %v2543 = vunpack.c.l.b16 %v260
    %v2544 = vunpack.c.h.b16 %v260
    %v2545 = vunpack.c.l.b16 %v261
    %v2546 = vunpack.c.h.b16 %v261
    %v2547 = vunpack.c.l.b16 %v262
    %v2548 = vunpack.c.l.b16 %v263
    %v2549 = vunpack.c.h.b16 %v263
    %v2550 = vunpack.c.l.b16 %v264
    %v2551 = vunpack.c.h.b16 %v264
    %v2552 = vunpack.c.l.b16 %v265
    %v2553 = vunpack.c.h.b16 %v265
    %v2554 = vunpack.c.l.b16 %v266
    %v2555 = vunpack.c.l.b16 %v267
    %v2556 = vunpack.c.h.b16 %v267
    %v2557 = vunpack.c.l.b16 %v268
    %v2558 = vunpack.c.h.b16 %v268
    %v2559 = vunpack.c.l.b16 %v269
    %v2560 = vunpack.c.h.b16 %v269
    %v2561 = vunpack.c.l.b16 %v270
    %v2562 = vunpack.c.l.b16 %v271
    %v2563 = vunpack.c.h.b16 %v271
    %v2564 = vunpack.c.l.b16 %v272
    %v2565 = vunpack.c.h.b16 %v272
    %v2566 = vunpack.c.l.b16 %v273
    %v2567 = vunpack.c.h.b16 %v273
    %v2568 = vunpack.c.l.b16 %v274
    %v2569 = vunpack.c.l.b16 %v275
    %v2570 = vunpack.c.h.b16 %v275
    %v2571 = vunpack.c.l.b16 %v276
    %v2572 = vunpack.c.h.b16 %v276
    %v2573 = vunpack.c.l.b16 %v277
    %v2574 = vunpack.c.h.b16 %v277
    %v2575 = vunpack.c.l.b16 %v278
    %v2576 = vunpack.c.l.b16 %v279
    %v2577 = vunpack.c.h.b16 %v279
    %v2578 = vunpack.c.l.b16 %v280
    %v2579 = vunpack.c.h.b16 %v280
    %v2580 = vunpack.c.l.b16 %v281
    %v2581 = vunpack.c.h.b16 %v281
    %v2582 = vunpack.c.l.b16 %v282
    %v2583 = vunpack.c.l.b16 %v283
    %v2584 = vunpack.c.h.b16 %v283
    %v2585 = vunpack.c.l.b16 %v284
    %v2586 = vunpack.c.h.b16 %v284
    %v2587 = vunpack.c.l.b16 %v285
    %v2588 = vunpack.c.h.b16 %v285
    %v2589 = vunpack.c.l.b16 %v286
    %v2590 = vunpack.c.l.b16 %v287
    %v2591 = vunpack.c.h.b16 %v287
    %v2592 = vunpack.c.l.b16 %v288
    %v2593 = vunpack.c.h.b16 %v288
    %v2594 = vunpack.c.l.b16 %v289
    %v2595 = vunpack.c.h.b16 %v289
    %v2596 = vunpack.c.l.b16 %v290
    %v2597 = vunpack.c.l.b16 %v291
    %v2598 = vunpack.c.h.b16 %v291
    %v2599 = vunpack.c.l.b16 %v292
    %v2600 = vunpack.c.h.b16 %v292
    %v2601 = vunpack.c.l.b16 %v293
    %v2602 = vunpack.c.h.b16 %v293
    %v2603 = vunpack.c.l.b16 %v294
    %v2604 = vunpack.c.l.b16 %v295
    %v2605 = vunpack.c.h.b16 %v295
    %v2606 = vunpack.c.l.b16 %v296
    %v2607 = vunpack.c.h.b16 %v296
    %v2608 = vunpack.c.l.b16 %v297
    %v2609 = vunpack.c.h.b16 %v297
    %v2610 = vunpack.c.l.b16 %v298
    %v2611 = vunpack.c.l.b16 %v299
    %v2612 = vunpack.c.h.b16 %v299
    %v2613 = vunpack.c.l.b16 %v300
    %v2614 = vunpack.c.h.b16 %v300
    %v2615 = vunpack.c.l.b16 %v301
    %v2616 = vunpack.c.h.b16 %v301
    %v2617 = vunpack.c.l.b16 %v302
    %v2618 = vunpack.c.l.b16 %v303
    %v2619 = vunpack.c.h.b16 %v303
    %v2620 = vunpack.c.l.b16 %v304
    %v2621 = vunpack.c.h.b16 %v304
    %v2622 = vunpack.c.l.b16 %v305
    %v2623 = vunpack.c.h.b16 %v305
    %v2624 = vunpack.c.l.b16 %v306
    %v2625 = vunpack.c.l.b16 %v307
    %v2626 = vunpack.c.h.b16 %v307
    %v2627 = vunpack.c.l.b16 %v308
    %v2628 = vunpack.c.h.b16 %v308
    %v2629 = vunpack.c.l.b16 %v309
    %v2630 = vunpack.c.h.b16 %v309
    %v2631 = vunpack.c.l.b16 %v310
    %v2632 = vunpack.c.l.b16 %v311
    %v2633 = vunpack.c.h.b16 %v311
    %v2634 = vunpack.c.l.b16 %v312
    %v2635 = vunpack.c.h.b16 %v312
    %v2636 = vunpack.c.l.b16 %v313
    %v2637 = vunpack.c.h.b16 %v313
    %v2638 = vunpack.c.l.b16 %v314
    %v2639 = vunpack.c.l.b16 %v315
    %v2640 = vunpack.c.h.b16 %v315
    %v2641 = vunpack.c.l.b16 %v316
    %v2642 = vunpack.c.h.b16 %v316
    %v2643 = vunpack.c.l.b16 %v317
    %v2644 = vunpack.c.h.b16 %v317
    %v2645 = vunpack.c.l.b16 %v318
    %v2646 = vunpack.c.l.b16 %v319
    %v2647 = vunpack.c.h.b16 %v319
    %v2648 = vunpack.c.l.b16 %v320
    %v2649 = vunpack.c.h.b16 %v320
    %v2650 = vunpack.c.l.b16 %v321
    %v2651 = vunpack.c.h.b16 %v321
    %v2652 = vunpack.c.l.b16 %v322
    %v2653 = vunpack.c.l.b16 %v323
    %v2654 = vunpack.c.h.b16 %v323
    %v2655 = vunpack.c.l.b16 %v324
    %v2656 = vunpack.c.h.b16 %v324
    %v2657 = vunpack.c.l.b16 %v325
    %v2658 = vunpack.c.h.b16 %v325
    %v2659 = vunpack.c.l.b16 %v326
    %v2660 = vunpack.c.l.b16 %v327
    %v2661 = vunpack.c.h.b16 %v327
    %v2662 = vunpack.c.l.b16 %v328
    %v2663 = vunpack.c.h.b16 %v328
    %v2664 = vunpack.c.l.b16 %v329
    %v2665 = vunpack.c.h.b16 %v329
    %v2666 = vunpack.c.l.b16 %v330
    %v2667 = vunpack.c.l.b16 %v331
    %v2668 = vunpack.c.h.b16 %v331
    %v2669 = vunpack.c.l.b16 %v332
    %v2670 = vunpack.c.h.b16 %v332
    %v2671 = vunpack.c.l.b16 %v333
    %v2672 = vunpack.c.h.b16 %v333
    %v2673 = vunpack.c.l.b16 %v334
    %v2674 = vunpack.c.l.b16 %v335
    %v2675 = vunpack.c.h.b16 %v335
    %v2676 = vunpack.c.l.b16 %v336
    %v2677 = vunpack.c.h.b16 %v336
    %v2678 = vunpack.c.l.b16 %v337
    %v2679 = vunpack.c.h.b16 %v337
    %v2680 = vunpack.c.l.b16 %v338
    %v2681 = vunpack.c.l.b16 %v339
    %v2682 = vunpack.c.h.b16 %v339
    %v2683 = vunpack.c.l.b16 %v340
    %v2684 = vunpack.c.h.b16 %v340
    %v2685 = vunpack.c.l.b16 %v341
    %v2686 = vunpack.c.h.b16 %v341
    %v2687 = vunpack.c.l.b16 %v342
    %v2688 = vunpack.c.l.b16 %v343
    %v2689 = vunpack.c.h.b16 %v343
    %v2690 = vunpack.c.l.b16 %v344
    %v2691 = vunpack.c.h.b16 %v344
    %v2692 = vunpack.c.l.b16 %v345
    %v2693 = vunpack.c.h.b16 %v345
    %v2694 = vunpack.c.l.b16 %v346
    %v2695 = vunpack.c.l.b16 %v347
    %v2696 = vunpack.c.h.b16 %v347
    %v2697 = vunpack.c.l.b16 %v348
    %v2698 = vunpack.c.h.b16 %v348
    %v2699 = vunpack.c.l.b16 %v349
    %v2700 = vunpack.c.h.b16 %v349
    %v2701 = vunpack.c.l.b16 %v350
    %v2702 = vunpack.c.l.b16 %v351
    %v2703 = vunpack.c.h.b16 %v351
    %v2704 = vunpack.c.l.b16 %v352
    %v2705 = vunpack.c.h.b16 %v352
    %v2706 = vunpack.c.l.b16 %v353
    %v2707 = vunpack.c.h.b16 %v353
    %v2708 = vunpack.c.l.b16 %v354
    %v2709 = vunpack.c.l.b16 %v355
    %v2710 = vunpack.c.h.b16 %v355
    %v2711 = vunpack.c.l.b16 %v356
    %v2712 = vunpack.c.h.b16 %v356
    %v2713 = vunpack.c.l.b16 %v357
    %v2714 = vunpack.c.h.b16 %v357
    %v2715 = vunpack.c.l.b16 %v358
    %v2716 = vunpack.c.l.b16 %v359
    %v2717 = vunpack.c.h.b16 %v359
    %v2718 = vunpack.c.l.b16 %v360
    %v2719 = vunpack.c.h.b16 %v360
    %v2720 = vunpack.c.l.b16 %v361
    %v2721 = vunpack.c.h.b16 %v361
    %v2722 = vunpack.c.l.b16 %v362
    %v2723 = vunpack.c.l.b16 %v363
    %v2724 = vunpack.c.h.b16 %v363
    %v2725 = vunpack.c.l.b16 %v364
    %v2726 = vunpack.c.h.b16 %v364
    %v2727 = vunpack.c.l.b16 %v365
    %v2728 = vunpack.c.h.b16 %v365
    %v2729 = vunpack.c.l.b16 %v366
    %v2730 = vunpack.c.l.b16 %v367
    %v2731 = vunpack.c.h.b16 %v367
    %v2732 = vunpack.c.l.b16 %v368
    %v2733 = vunpack.c.h.b16 %v368
    %v2734 = vunpack.c.l.b16 %v369
    %v2735 = vunpack.c.h.b16 %v369
    %v2736 = vunpack.c.l.b16 %v370
    %v2737 = vunpack.c.l.b16 %v371
    %v2738 = vunpack.c.h.b16 %v371
    %v2739 = vunpack.c.l.b16 %v372
    %v2740 = vunpack.c.h.b16 %v372
    %v2741 = vunpack.c.l.b16 %v373
    %v2742 = vunpack.c.h.b16 %v373
    %v2743 = vunpack.c.l.b16 %v374
    %v2744 = vunpack.c.l.b16 %v375
    %v2745 = vunpack.c.h.b16 %v375
    %v2746 = vunpack.c.l.b16 %v376
    %v2747 = vunpack.c.h.b16 %v376
    %v2748 = vunpack.c.l.b16 %v377
    %v2749 = vunpack.c.h.b16 %v377
    %v2750 = vunpack.c.l.b16 %v378
    %v2751 = vunpack.c.l.b16 %v379
    %v2752 = vunpack.c.h.b16 %v379
    %v2753 = vunpack.c.l.b16 %v380
    %v2754 = vunpack.c.h.b16 %v380
    %v2755 = vunpack.c.l.b16 %v381
    %v2756 = vunpack.c.h.b16 %v381
    %v2757 = vunpack.c.l.b16 %v382
    %v2758 = vunpack.c.l.b16 %v383
    %v2759 = vunpack.c.h.b16 %v383
    %v2760 = vunpack.c.l.b16 %v384
    %v2761 = vunpack.c.h.b16 %v384
    %v2762 = vunpack.c.l.b16 %v385
    %v2763 = vunpack.c.h.b16 %v385
    %v2764 = vunpack.c.l.b16 %v386
    %v2765 = vunpack.c.l.b16 %v387
    %v2766 = vunpack.c.h.b16 %v387
    %v2767 = vunpack.c.l.b16 %v388
    %v2768 = vunpack.c.h.b16 %v388
    %v2769 = vunpack.c.l.b16 %v389
    %v2770 = vunpack.c.h.b16 %v389
    %v2771 = vunpack.c.l.b16 %v390
    %v2772 = vunpack.c.l.b16 %v391
    %v2773 = vunpack.c.h.b16 %v391
    %v2774 = vunpack.c.l.b16 %v392
    %v2775 = vunpack.c.h.b16 %v392
    %v2776 = vunpack.c.l.b16 %v393
    %v2777 = vunpack.c.h.b16 %v393
    %v2778 = vunpack.c.l.b16 %v394
    %v2779 = vunpack.c.l.b16 %v395
    %v2780 = vunpack.c.h.b16 %v395
    %v2781 = vunpack.c.l.b16 %v396
    %v2782 = vunpack.c.h.b16 %v396
    %v2783 = vunpack.c.l.b16 %v397
    %v2784 = vunpack.c.h.b16 %v397
    %v2785 = vunpack.c.l.b16 %v398
    %v2786 = vunpack.c.l.b16 %v399
    %v2787 = vunpack.c.h.b16 %v399
    %v2788 = vunpack.c.l.b16 %v400
    %v2789 = vunpack.c.h.b16 %v400
    %v2790 = vunpack.c.l.b16 %v401
    %v2791 = vunpack.c.h.b16 %v401
    %v2792 = vunpack.c.l.b16 %v402
    %v2793 = vunpack.c.l.b16 %v403
    %v2794 = vunpack.c.h.b16 %v403
    %v2795 = vunpack.c.l.b16 %v404
    %v2796 = vunpack.c.h.b16 %v404
    %v2797 = vunpack.c.l.b16 %v405
    %v2798 = vunpack.c.h.b16 %v405
    %v2799 = vunpack.c.l.b16 %v406
    %v2800 = vunpack.c.l.b16 %v407
    %v2801 = vunpack.c.h.b16 %v407
    %v2802 = vunpack.c.l.b16 %v408
    %v2803 = vunpack.c.h.b16 %v408
    %v2804 = vunpack.c.l.b16 %v409
    %v2805 = vunpack.c.h.b16 %v409
    %v2806 = vunpack.c.l.b16 %v410
    %v2807 = vunpack.c.l.b16 %v411
    %v2808 = vunpack.c.h.b16 %v411
    %v2809 = vunpack.c.l.b16 %v412
    %v2810 = vunpack.c.h.b16 %v412
    %v2811 = vunpack.c.l.b16 %v413
    %v2812 = vunpack.c.h.b16 %v413
    %v2813 = vunpack.c.l.b16 %v414
    %v2814 = vunpack.c.l.b16 %v415
    %v2815 = vunpack.c.h.b16 %v415
    %v2816 = vunpack.c.l.b16 %v416
    %v2817 = vunpack.c.h.b16 %v416
    %v2818 = vunpack.c.l.b16 %v417
    %v2819 = vunpack.c.h.b16 %v417
    %v2820 = vunpack.c.l.b16 %v418
    %v2821 = vunpack.c.l.b16 %v419
    %v2822 = vunpack.c.h.b16 %v419
    %v2823 = vunpack.c.l.b16 %v420
    %v2824 = vunpack.c.h.b16 %v420
    %v2825 = vunpack.c.l.b16 %v421
    %v2826 = vunpack.c.h.b16 %v421
    %v2827 = vunpack.c.l.b16 %v422
    %v2828 = vunpack.c.l.b16 %v423
    %v2829 = vunpack.c.h.b16 %v423
    %v2830 = vunpack.c.l.b16 %v424
    %v2831 = vunpack.c.h.b16 %v424
    %v2832 = vunpack.c.l.b16 %v425
    %v2833 = vunpack.c.h.b16 %v425
    %v2834 = vunpack.c.l.b16 %v426
    %v2835 = vunpack.c.l.b16 %v427
    %v2836 = vunpack.c.h.b16 %v427
    %v2837 = vunpack.c.l.b16 %v428
    %v2838 = vunpack.c.h.b16 %v428
    %v2839 = vunpack.c.l.b16 %v429
    %v2840 = vunpack.c.h.b16 %v429
    %v2841 = vunpack.c.l.b16 %v430
    %v2842 = vunpack.c.l.b16 %v431
    %v2843 = vunpack.c.h.b16 %v431
    %v2844 = vunpack.c.l.b16 %v432
    %v2845 = vunpack.c.h.b16 %v432
    %v2846 = vunpack.c.l.b16 %v433
    %v2847 = vunpack.c.h.b16 %v433
    %v2848 = vunpack.c.l.b16 %v434
    %v2849 = vunpack.c.l.b16 %v435
    %v2850 = vunpack.c.h.b16 %v435
    %v2851 = vunpack.c.l.b16 %v436
    %v2852 = vunpack.c.h.b16 %v436
    %v2853 = vunpack.c.l.b16 %v437
    %v2854 = vunpack.c.h.b16 %v437
    %v2855 = vunpack.c.l.b16 %v438
    %v2856 = vunpack.c.l.b16 %v439
    %v2857 = vunpack.c.h.b16 %v439
    %v2858 = vunpack.c.l.b16 %v440
    %v2859 = vunpack.c.h.b16 %v440
    %v2860 = vunpack.c.l.b16 %v441
    %v2861 = vunpack.c.h.b16 %v441
    %v2862 = vunpack.c.l.b16 %v442
    %v2863 = vunpack.c.l.b16 %v443
    %v2864 = vunpack.c.h.b16 %v443
    %v2865 = vunpack.c.l.b16 %v444
    %v2866 = vunpack.c.h.b16 %v444
    %v2867 = vunpack.c.l.b16 %v445
    %v2868 = vunpack.c.h.b16 %v445
    %v2869 = vunpack.c.l.b16 %v446
    %v2870 = vunpack.c.l.b16 %v447
    %v2871 = vunpack.c.h.b16 %v447
    %v2872 = vunpack.c.l.b16 %v448
    %v2873 = vunpack.c.h.b16 %v448
    %v2874 = vunpack.c.l.b16 %v449
    %v2875 = vunpack.c.h.b16 %v449
    %v2876 = vunpack.c.l.b16 %v450
    %v2877 = vunpack.c.l.b16 %v451
    %v2878 = vunpack.c.h.b16 %v451
    %v2879 = vunpack.c.l.b16 %v452
    %v2880 = vunpack.c.h.b16 %v452
    %v2881 = vunpack.c.l.b16 %v453
    %v2882 = vunpack.c.h.b16 %v453
    %v2883 = vunpack.c.l.b16 %v454
    %v2884 = vunpack.c.l.b16 %v455
    %v2885 = vunpack.c.h.b16 %v455
    %v2886 = vunpack.c.l.b16 %v456
    %v2887 = vunpack.c.h.b16 %v456
    %v2888 = vunpack.c.l.b16 %v457
    %v2889 = vunpack.c.h.b16 %v457
    %v2890 = vunpack.c.l.b16 %v458
    %v2891 = vunpack.c.l.b16 %v459
    %v2892 = vunpack.c.h.b16 %v459
    %v2893 = vunpack.c.l.b16 %v460
    %v2894 = vunpack.c.h.b16 %v460
    %v2895 = vunpack.c.l.b16 %v461
    %v2896 = vunpack.c.h.b16 %v461
    %v2897 = vunpack.c.l.b16 %v462
    %v2898 = vunpack.c.l.b16 %v463
    %v2899 = vunpack.c.h.b16 %v463
    %v2900 = vunpack.c.l.b16 %v464
    %v2901 = vunpack.c.h.b16 %v464
    %v2902 = vunpack.c.l.b16 %v465
    %v2903 = vunpack.c.h.b16 %v465
    %v2904 = vunpack.c.l.b16 %v466
    %v2905 = vunpack.c.l.b16 %v467
    %v2906 = vunpack.c.h.b16 %v467
    %v2907 = vunpack.c.l.b16 %v468
    %v2908 = vunpack.c.h.b16 %v468
    %v2909 = vunpack.c.l.b16 %v469
    %v2910 = vunpack.c.h.b16 %v469
    %v2911 = vunpack.c.l.b16 %v470
    %v2912 = vunpack.c.l.b16 %v471
    %v2913 = vunpack.c.h.b16 %v471
    %v2914 = vunpack.c.l.b16 %v472
    %v2915 = vunpack.c.h.b16 %v472
    %v2916 = vunpack.c.l.b16 %v473
    %v2917 = vunpack.c.h.b16 %v473
    %v2918 = vunpack.c.l.b16 %v474
    %v2919 = vunpack.c.l.b16 %v475
    %v2920 = vunpack.c.h.b16 %v475
    %v2921 = vunpack.c.l.b16 %v476
    %v2922 = vunpack.c.h.b16 %v476
    %v2923 = vunpack.c.l.b16 %v477
    %v2924 = vunpack.c.h.b16 %v477
    %v2925 = vunpack.c.l.b16 %v478
    %v2926 = vunpack.c.l.b16 %v479
    %v2927 = vunpack.c.h.b16 %v479
    %v2928 = vunpack.c.l.b16 %v480
    %v2929 = vunpack.c.h.b16 %v480
    %v2930 = vunpack.c.l.b16 %v481
    %v2931 = vunpack.c.h.b16 %v481
    %v2932 = vunpack.c.l.b16 %v482
    %v2933 = vunpack.c.l.b16 %v483
    %v2934 = vunpack.c.h.b16 %v483
    %v2935 = vunpack.c.l.b16 %v484
    %v2936 = vunpack.c.h.b16 %v484
    %v2937 = vunpack.c.l.b16 %v485
    %v2938 = vunpack.c.h.b16 %v485
    %v2939 = vunpack.c.l.b16 %v486
    %v2940 = vunpack.c.l.b16 %v487
    %v2941 = vunpack.c.h.b16 %v487
    %v2942 = vunpack.c.l.b16 %v488
    %v2943 = vunpack.c.h.b16 %v488
    %v2944 = vunpack.c.l.b16 %v489
    %v2945 = vunpack.c.h.b16 %v489
    %v2946 = vunpack.c.l.b16 %v490
    %v2947 = vunpack.c.l.b16 %v491
    %v2948 = vunpack.c.h.b16 %v491
    %v2949 = vunpack.c.l.b16 %v492
    %v2950 = vunpack.c.h.b16 %v492
    %v2951 = vunpack.c.l.b16 %v493
    %v2952 = vunpack.c.h.b16 %v493
    %v2953 = vunpack.c.l.b16 %v494
    %v2954 = vunpack.c.l.b16 %v495
    %v2955 = vunpack.c.h.b16 %v495
    %v2956 = vunpack.c.l.b16 %v496
    %v2957 = vunpack.c.h.b16 %v496
    %v2958 = vunpack.c.l.b16 %v497
    %v2959 = vunpack.c.h.b16 %v497
    %v2960 = vunpack.c.l.b16 %v498
    %v2961 = vunpack.c.l.b16 %v499
    %v2962 = vunpack.c.h.b16 %v499
    %v2963 = vunpack.c.l.b16 %v500
    %v2964 = vunpack.c.h.b16 %v500
    %v2965 = vunpack.c.l.b16 %v501
    %v2966 = vunpack.c.h.b16 %v501
    %v2967 = vunpack.c.l.b16 %v502
    %v2968 = vunpack.c.l.b16 %v503
    %v2969 = vunpack.c.h.b16 %v503
    %v2970 = vunpack.c.l.b16 %v504
    %v2971 = vunpack.c.h.b16 %v504
    %v2972 = vunpack.c.l.b16 %v505
    %v2973 = vunpack.c.h.b16 %v505
    %v2974 = vunpack.c.l.b16 %v506
    %v2975 = vunpack.c.l.b16 %v507
    %v2976 = vunpack.c.h.b16 %v507
    %v2977 = vunpack.c.l.b16 %v508
    %v2978 = vunpack.c.h.b16 %v508
    %v2979 = vunpack.c.l.b16 %v509
    %v2980 = vunpack.c.h.b16 %v509
    %v2981 = vunpack.c.l.b16 %v510
    %v2982 = vunpack.c.l.b16 %v511
    %v2983 = vunpack.c.h.b16 %v511
    %v2984 = vunpack.c.l.b16 %v512
    %v2985 = vunpack.c.h.b16 %v512
    %v2986 = vunpack.c.l.b16 %v513
    %v2987 = vunpack.c.h.b16 %v513
    %v2988 = vunpack.c.l.b16 %v514
    %v2989 = vunpack.c.l.b16 %v515
    %v2990 = vunpack.c.h.b16 %v515
    %v2991 = vunpack.c.l.b16 %v516
    %v2992 = vunpack.c.h.b16 %v516
    %v2993 = vunpack.c.l.b16 %v517
    %v2994 = vunpack.c.h.b16 %v517
    %v2995 = vunpack.c.l.b16 %v518
    %v2996 = vunpack.c.l.b16 %v519
    %v2997 = vunpack.c.h.b16 %v519
    %v2998 = vunpack.c.l.b16 %v520
    %v2999 = vunpack.c.h.b16 %v520
    %v3000 = vunpack.c.l.b16 %v521
    %v3001 = vunpack.c.h.b16 %v521
    %v3002 = vunpack.c.l.b16 %v522
    %v3003 = vunpack.c.l.b16 %v523
    %v3004 = vunpack.c.h.b16 %v523
    %v3005 = vunpack.c.l.b16 %v524
    %v3006 = vunpack.c.h.b16 %v524
    %v3007 = vunpack.c.l.b16 %v525
    %v3008 = vunpack.c.h.b16 %v525
    %v3009 = vunpack.c.l.b16 %v526
    %v3010 = vunpack.c.l.b16 %v527
    %v3011 = vunpack.c.h.b16 %v527
    %v3012 = vunpack.c.l.b16 %v528
    %v3013 = vunpack.c.h.b16 %v528
    %v3014 = vunpack.c.l.b16 %v529
    %v3015 = vunpack.c.h.b16 %v529
    %v3016 = vunpack.c.l.b16 %v530
    %v3017 = vunpack.c.l.b16 %v531
    %v3018 = vunpack.c.h.b16 %v531
    %v3019 = vunpack.c.l.b16 %v532
    %v3020 = vunpack.c.h.b16 %v532
    %v3021 = vunpack.c.l.b16 %v533
    %v3022 = vunpack.c.h.b16 %v533
    %v3023 = vunpack.c.l.b16 %v534
    %v3024 = vunpack.c.l.b16 %v535
    %v3025 = vunpack.c.h.b16 %v535
    %v3026 = vunpack.c.l.b16 %v536
    %v3027 = vunpack.c.h.b16 %v536
    %v3028 = vunpack.c.l.b16 %v537
    %v3029 = vunpack.c.h.b16 %v537
    %v3030 = vunpack.c.l.b16 %v538
    %v3031 = vunpack.c.l.b16 %v539
    %v3032 = vunpack.c.h.b16 %v539
    %v3033 = vunpack.c.l.b16 %v540
    %v3034 = vunpack.c.h.b16 %v540
    %v3035 = vunpack.c.l.b16 %v541
    %v3036 = vunpack.c.h.b16 %v541
    %v3037 = vunpack.c.l.b16 %v542
    %v3038 = vunpack.c.l.b16 %v543
    %v3039 = vunpack.c.h.b16 %v543
    %v3040 = vunpack.c.l.b16 %v544
    %v3041 = vunpack.c.h.b16 %v544
    %v3042 = vunpack.c.l.b16 %v545
    %v3043 = vunpack.c.h.b16 %v545
    %v3044 = vunpack.c.l.b16 %v546
    %v3045 = vunpack.c.l.b16 %v547
    %v3046 = vunpack.c.h.b16 %v547
    %v3047 = vunpack.c.l.b16 %v548
    %v3048 = vunpack.c.h.b16 %v548
    %v3049 = vunpack.c.l.b16 %v549
    %v3050 = vunpack.c.h.b16 %v549
    %v3051 = vunpack.c.l.b16 %v550
    %v3052 = vunpack.c.l.b16 %v551
    %v3053 = vunpack.c.h.b16 %v551
    %v3054 = vunpack.c.l.b16 %v552
    %v3055 = vunpack.c.h.b16 %v552
    %v3056 = vunpack.c.l.b16 %v553
    %v3057 = vunpack.c.h.b16 %v553
    %v3058 = vunpack.c.l.b16 %v554
    %v3059 = vunpack.c.l.b16 %v555
    %v3060 = vunpack.c.h.b16 %v555
    %v3061 = vunpack.c.l.b16 %v556
    %v3062 = vunpack.c.h.b16 %v556
    %v3063 = vunpack.c.l.b16 %v557
    %v3064 = vunpack.c.h.b16 %v557
    %v3065 = vunpack.c.l.b16 %v558
    %v3066 = vunpack.c.l.b16 %v559
    %v3067 = vunpack.c.h.b16 %v559
    %v3068 = vunpack.c.l.b16 %v560
    %v3069 = vunpack.c.h.b16 %v560
    %v3070 = vunpack.c.l.b16 %v561
    %v3071 = vunpack.c.h.b16 %v561
    %v3072 = vunpack.c.l.b16 %v562
    %v3073 = vunpack.c.l.b16 %v563
    %v3074 = vunpack.c.h.b16 %v563
    %v3075 = vunpack.c.l.b16 %v564
    %v3076 = vunpack.c.h.b16 %v564
    %v3077 = vunpack.c.l.b16 %v565
    %v3078 = vunpack.c.h.b16 %v565
    %v3079 = vunpack.c.l.b16 %v566
    %v3080 = vunpack.c.l.b16 %v567
    %v3081 = vunpack.c.h.b16 %v567
    %v3082 = vunpack.c.l.b16 %v568
    %v3083 = vunpack.c.h.b16 %v568
    %v3084 = vunpack.c.l.b16 %v569
    %v3085 = vunpack.c.h.b16 %v569
    %v3086 = vunpack.c.l.b16 %v570
    %v3087 = vunpack.c.l.b16 %v571
    %v3088 = vunpack.c.h.b16 %v571
    %v3089 = vunpack.c.l.b16 %v572
    %v3090 = vunpack.c.h.b16 %v572
    %v3091 = vunpack.c.l.b16 %v573
    %v3092 = vunpack.c.h.b16 %v573
    %v3093 = vunpack.c.l.b16 %v574
    %v3094 = vunpack.c.l.b16 %v575
    %v3095 = vunpack.c.h.b16 %v575
    %v3096 = vunpack.c.l.b16 %v576
    %v3097 = vunpack.c.h.b16 %v576
    %v3098 = vunpack.c.l.b16 %v577
    %v3099 = vunpack.c.h.b16 %v577
    %v3100 = vunpack.c.l.b16 %v578
    %v3101 = vunpack.c.l.b16 %v579
    %v3102 = vunpack.c.h.b16 %v579
    %v3103 = vunpack.c.l.b16 %v580
    %v3104 = vunpack.c.h.b16 %v580
    %v3105 = vunpack.c.l.b16 %v581
    %v3106 = vunpack.c.h.b16 %v581
    %v3107 = vunpack.c.l.b16 %v582
    %v3108 = vunpack.c.l.b16 %v583
    %v3109 = vunpack.c.h.b16 %v583
    %v3110 = vunpack.c.l.b16 %v584
    %v3111 = vunpack.c.h.b16 %v584
    %v3112 = vunpack.c.l.b16 %v585
    %v3113 = vunpack.c.h.b16 %v585
    %v3114 = vunpack.c.l.b16 %v586
    %v3115 = vunpack.c.l.b16 %v587
    %v3116 = vunpack.c.h.b16 %v587
    %v3117 = vunpack.c.l.b16 %v588
    %v3118 = vunpack.c.h.b16 %v588
    %v3119 = vunpack.c.l.b16 %v589
    %v3120 = vunpack.c.h.b16 %v589
    %v3121 = vunpack.c.l.b16 %v590
    %v3122 = vunpack.c.l.b16 %v591
    %v3123 = vunpack.c.h.b16 %v591
    %v3124 = vunpack.c.l.b16 %v592
    %v3125 = vunpack.c.h.b16 %v592
    %v3126 = vunpack.c.l.b16 %v593
    %v3127 = vunpack.c.h.b16 %v593
    %v3128 = vunpack.c.l.b16 %v594
    %v3129 = vunpack.c.l.b16 %v595
    %v3130 = vunpack.c.h.b16 %v595
    %v3131 = vunpack.c.l.b16 %v596
    %v3132 = vunpack.c.h.b16 %v596
    %v3133 = vunpack.c.l.b16 %v597
    %v3134 = vunpack.c.h.b16 %v597
    %v3135 = vunpack.c.l.b16 %v598
    %v3136 = vunpack.c.l.b16 %v599
    %v3137 = vunpack.c.h.b16 %v599
    %v3138 = vunpack.c.l.b16 %v600
    %v3139 = vunpack.c.h.b16 %v600
    %v3140 = vunpack.c.l.b16 %v601
    %v3141 = vunpack.c.h.b16 %v601
    %v3142 = vunpack.c.l.b16 %v602
    %v3143 = vunpack.c.l.b16 %v603
    %v3144 = vunpack.c.h.b16 %v603
    %v3145 = vunpack.c.l.b16 %v604
    %v3146 = vunpack.c.h.b16 %v604
    %v3147 = vunpack.c.l.b16 %v605
    %v3148 = vunpack.c.h.b16 %v605
    %v3149 = vunpack.c.l.b16 %v606
    %v3150 = vunpack.c.l.b16 %v607
    %v3151 = vunpack.c.h.b16 %v607
    %v3152 = vunpack.c.l.b16 %v608
    %v3153 = vunpack.c.h.b16 %v608
    %v3154 = vunpack.c.l.b16 %v609
    %v3155 = vunpack.c.h.b16 %v609
    %v3156 = vunpack.c.l.b16 %v610
    %v3157 = vunpack.c.l.b16 %v611
    %v3158 = vunpack.c.h.b16 %v611
    %v3159 = vunpack.c.l.b16 %v612
    %v3160 = vunpack.c.h.b16 %v612
    %v3161 = vunpack.c.l.b16 %v613
    %v3162 = vunpack.c.h.b16 %v613
    %v3163 = vunpack.c.l.b16 %v614
    %v3164 = vunpack.c.l.b16 %v615
    %v3165 = vunpack.c.h.b16 %v615
    %v3166 = vunpack.c.l.b16 %v616
    %v3167 = vunpack.c.h.b16 %v616
    %v3168 = vunpack.c.l.b16 %v617
    %v3169 = vunpack.c.h.b16 %v617
    %v3170 = vunpack.c.l.b16 %v618
    %v3171 = vunpack.c.l.b16 %v619
    %v3172 = vunpack.c.h.b16 %v619
    %v3173 = vunpack.c.l.b16 %v620
    %v3174 = vunpack.c.h.b16 %v620
    %v3175 = vunpack.c.l.b16 %v621
    %v3176 = vunpack.c.h.b16 %v621
    %v3177 = vunpack.c.l.b16 %v622
    %v3178 = vunpack.c.l.b16 %v623
    %v3179 = vunpack.c.h.b16 %v623
    %v3180 = vunpack.c.l.b16 %v624
    %v3181 = vunpack.c.h.b16 %v624
    %v3182 = vunpack.c.l.b16 %v625
    %v3183 = vunpack.c.h.b16 %v625
    %v3184 = vunpack.c.l.b16 %v626
    %v3185 = vunpack.c.l.b16 %v627
    %v3186 = vunpack.c.h.b16 %v627
    %v3187 = vunpack.c.l.b16 %v628
    %v3188 = vunpack.c.h.b16 %v628
    %v3189 = vunpack.c.l.b16 %v629
    %v3190 = vunpack.c.h.b16 %v629
    %v3191 = vunpack.c.l.b16 %v630
    %v3192 = vunpack.c.l.b16 %v631
    %v3193 = vunpack.c.h.b16 %v631
    %v3194 = vunpack.c.l.b16 %v632
    %v3195 = vunpack.c.h.b16 %v632
    %v3196 = vunpack.c.l.b16 %v633
    %v3197 = vunpack.c.h.b16 %v633
    %v3198 = vunpack.c.l.b16 %v634
    %v3199 = vunpack.c.l.b16 %v635
    %v3200 = vunpack.c.h.b16 %v635
    %v3201 = vunpack.c.l.b16 %v636
    %v3202 = vunpack.c.h.b16 %v636
    %v3203 = vunpack.c.l.b16 %v637
    %v3204 = vunpack.c.h.b16 %v637
    %v3205 = vunpack.c.l.b16 %v638
    %v3206 = vunpack.c.l.b16 %v639
    %v3207 = vunpack.c.h.b16 %v639
    %v3208 = vunpack.c.l.b16 %v640
    %v3209 = vunpack.c.h.b16 %v640
    %v3210 = vunpack.c.l.b16 %v641
    %v3211 = vunpack.c.h.b16 %v641
    %v3212 = vunpack.c.l.b16 %v642
    %v3213 = vunpack.c.l.b16 %v643
    %v3214 = vunpack.c.h.b16 %v643
    %v3215 = vunpack.c.l.b16 %v644
    %v3216 = vunpack.c.h.b16 %v644
    %v3217 = vunpack.c.l.b16 %v645
    %v3218 = vunpack.c.h.b16 %v645
    %v3219 = vunpack.c.l.b16 %v646
    %v3220 = vunpack.c.l.b16 %v647
    %v3221 = vunpack.c.h.b16 %v647
    %v3222 = vunpack.c.l.b16 %v648
    %v3223 = vunpack.c.h.b16 %v648
    %v3224 = vunpack.c.l.b16 %v649
    %v3225 = vunpack.c.h.b16 %v649
    %v3226 = vunpack.c.l.b16 %v650
    %v3227 = vunpack.c.l.b16 %v651
    %v3228 = vunpack.c.h.b16 %v651
    %v3229 = vunpack.c.l.b16 %v652
    %v3230 = vunpack.c.h.b16 %v652
    %v3231 = vunpack.c.l.b16 %v653
    %v3232 = vunpack.c.h.b16 %v653
    %v3233 = vunpack.c.l.b16 %v654
    %v3234 = vunpack.c.l.b16 %v655
    %v3235 = vunpack.c.h.b16 %v655
    %v3236 = vunpack.c.l.b16 %v656
    %v3237 = vunpack.c.h.b16 %v656
    %v3238 = vunpack.c.l.b16 %v657
    %v3239 = vunpack.c.h.b16 %v657
    %v3240 = vunpack.c.l.b16 %v658
    %v3241 = vunpack.c.l.b16 %v659
    %v3242 = vunpack.c.h.b16 %v659
    %v3243 = vunpack.c.l.b16 %v660
    %v3244 = vunpack.c.h.b16 %v660
    %v3245 = vunpack.c.l.b16 %v661
    %v3246 = vunpack.c.h.b16 %v661
    %v3247 = vunpack.c.l.b16 %v662
    %v3248 = vunpack.c.l.b16 %v663
    %v3249 = vunpack.c.h.b16 %v663
    %v3250 = vunpack.c.l.b16 %v664
    %v3251 = vunpack.c.h.b16 %v664
    %v3252 = vunpack.c.l.b16 %v665
    %v3253 = vunpack.c.h.b16 %v665
    %v3254 = vunpack.c.l.b16 %v666
    %v3255 = vunpack.c.l.b16 %v667
    %v3256 = vunpack.c.h.b16 %v667
    %v3257 = vunpack.c.l.b16 %v668
    %v3258 = vunpack.c.h.b16 %v668
    %v3259 = vunpack.c.l.b16 %v669
    %v3260 = vunpack.c.h.b16 %v669
    %v3261 = vunpack.c.l.b16 %v670
    %v3262 = vunpack.c.l.b16 %v671
    %v3263 = vunpack.c.h.b16 %v671
    %v3264 = vunpack.c.l.b16 %v672
    %v3265 = vunpack.c.h.b16 %v672
    %v3266 = vunpack.c.l.b16 %v673
    %v3267 = vunpack.c.h.b16 %v673
    %v3268 = vunpack.c.l.b16 %v674
    %v3269 = vunpack.c.l.b16 %v675
    %v3270 = vunpack.c.h.b16 %v675
    %v3271 = vunpack.c.l.b16 %v676
    %v3272 = vunpack.c.h.b16 %v676
    %v3273 = vunpack.c.l.b16 %v677
    %v3274 = vunpack.c.h.b16 %v677
    %v3275 = vunpack.c.l.b16 %v678
    %v3276 = vunpack.c.l.b16 %v679
    %v3277 = vunpack.c.h.b16 %v679
    %v3278 = vunpack.c.l.b16 %v680
    %v3279 = vunpack.c.h.b16 %v680
    %v3280 = vunpack.c.l.b16 %v681
    %v3281 = vunpack.c.h.b16 %v681
    %v3282 = vunpack.c.l.b16 %v682
    %v3283 = vunpack.c.l.b16 %v683
    %v3284 = vunpack.c.h.b16 %v683
    %v3285 = vunpack.c.l.b16 %v684
    %v3286 = vunpack.c.h.b16 %v684
    %v3287 = vunpack.c.l.b16 %v685
    %v3288 = vunpack.c.h.b16 %v685
    %v3289 = vunpack.c.l.b16 %v686
    %v3290 = vunpack.c.l.b16 %v687
    %v3291 = vunpack.c.h.b16 %v687
    %v3292 = vunpack.c.l.b16 %v688
    %v3293 = vunpack.c.h.b16 %v688
    %v3294 = vunpack.c.l.b16 %v689
    %v3295 = vunpack.c.h.b16 %v689
    %v3296 = vunpack.c.l.b16 %v690
    %v3297 = vunpack.c.l.b16 %v691
    %v3298 = vunpack.c.h.b16 %v691
    %v3299 = vunpack.c.l.b16 %v692
    %v3300 = vunpack.c.h.b16 %v692
    %v3301 = vunpack.c.l.b16 %v693
    %v3302 = vunpack.c.h.b16 %v693
    %v3303 = vunpack.c.l.b16 %v694
    %v3304 = vunpack.c.l.b16 %v695
    %v3305 = vunpack.c.h.b16 %v695
    %v3306 = vunpack.c.l.b16 %v696
    %v3307 = vunpack.c.h.b16 %v696
    %v3308 = vunpack.c.l.b16 %v697
    %v3309 = vunpack.c.h.b16 %v697
    %v3310 = vunpack.c.l.b16 %v698
    %v3311 = vunpack.c.l.b16 %v699
    %v3312 = vunpack.c.h.b16 %v699
    %v3313 = vunpack.c.l.b16 %v700
    %v3314 = vunpack.c.h.b16 %v700
    %v3315 = vunpack.c.l.b16 %v701
    %v3316 = vunpack.c.h.b16 %v701
    %v3317 = vunpack.c.l.b16 %v702
    %v3318 = vunpack.c.l.b16 %v703
    %v3319 = vunpack.c.h.b16 %v703
    %v3320 = vunpack.c.l.b16 %v704
    %v3321 = vunpack.c.h.b16 %v704
    %v3322 = vunpack.c.l.b16 %v705
    %v3323 = vunpack.c.h.b16 %v705
    %v3324 = vunpack.c.l.b16 %v706
    %v3325 = vunpack.c.l.b16 %v707
    %v3326 = vunpack.c.h.b16 %v707
    %v3327 = vunpack.c.l.b16 %v708
    %v3328 = vunpack.c.h.b16 %v708
    %v3329 = vunpack.c.l.b16 %v709
    %v3330 = vunpack.c.h.b16 %v709
    %v3331 = vunpack.c.l.b16 %v710
    %v3332 = vunpack.c.l.b16 %v711
    %v3333 = vunpack.c.h.b16 %v711
    %v3334 = vunpack.c.l.b16 %v712
    %v3335 = vunpack.c.h.b16 %v712
    %v3336 = vunpack.c.l.b16 %v713
    %v3337 = vunpack.c.h.b16 %v713
    %v3338 = vunpack.c.l.b16 %v714
    %v3339 = vunpack.c.l.b16 %v715
    %v3340 = vunpack.c.h.b16 %v715
    %v3341 = vunpack.c.l.b16 %v716
    %v3342 = vunpack.c.h.b16 %v716
    %v3343 = vunpack.c.l.b16 %v717
    %v3344 = vunpack.c.h.b16 %v717
    %v3345 = vunpack.c.l.b16 %v718
    %v3346 = vunpack.c.l.b16 %v719
    %v3347 = vunpack.c.h.b16 %v719
    %v3348 = vunpack.c.l.b16 %v720
    %v3349 = vunpack.c.h.b16 %v720
    %v3350 = vunpack.c.l.b16 %v721
    %v3351 = vunpack.c.h.b16 %v721
    %v3352 = vunpack.c.l.b16 %v722
    %v3353 = vunpack.c.l.b16 %v723
    %v3354 = vunpack.c.h.b16 %v723
    %v3355 = vunpack.c.l.b16 %v724
    %v3356 = vunpack.c.h.b16 %v724
    %v3357 = vunpack.c.l.b16 %v725
    %v3358 = vunpack.c.h.b16 %v725
    %v3359 = vunpack.c.l.b16 %v726
    %v3360 = vunpack.c.l.b16 %v727
    %v3361 = vunpack.c.h.b16 %v727
    %v3362 = vunpack.c.l.b16 %v728
    %v3363 = vunpack.c.h.b16 %v728
    %v3364 = vunpack.c.l.b16 %v729
    %v3365 = vunpack.c.h.b16 %v729
    %v3366 = vunpack.c.l.b16 %v730
    %v3367 = vunpack.c.l.b16 %v731
    %v3368 = vunpack.c.h.b16 %v731
    %v3369 = vunpack.c.l.b16 %v732
    %v3370 = vunpack.c.h.b16 %v732
    %v3371 = vunpack.c.l.b16 %v733
    %v3372 = vunpack.c.h.b16 %v733
    %v3373 = vunpack.c.l.b16 %v734
    %v3374 = vunpack.c.l.b16 %v735
    %v3375 = vunpack.c.h.b16 %v735
    %v3376 = vunpack.c.l.b16 %v736
    %v3377 = vunpack.c.h.b16 %v736
    %v3378 = vunpack.c.l.b16 %v737
    %v3379 = vunpack.c.h.b16 %v737
    %v3380 = vunpack.c.l.b16 %v738
    %v3381 = vunpack.c.l.b16 %v739
    %v3382 = vunpack.c.h.b16 %v739
    %v3383 = vunpack.c.l.b16 %v740
    %v3384 = vunpack.c.h.b16 %v740
    %v3385 = vunpack.c.l.b16 %v741
    %v3386 = vunpack.c.h.b16 %v741
    %v3387 = vunpack.c.l.b16 %v742
    %v3388 = vunpack.c.l.b16 %v743
    %v3389 = vunpack.c.h.b16 %v743
    %v3390 = vunpack.c.l.b16 %v744
    %v3391 = vunpack.c.h.b16 %v744
    %v3392 = vunpack.c.l.b16 %v745
    %v3393 = vunpack.c.h.b16 %v745
    %v3394 = vunpack.c.l.b16 %v746
    %v3395 = vunpack.c.l.b16 %v747
    %v3396 = vunpack.c.h.b16 %v747
    %v3397 = vunpack.c.l.b16 %v748
    %v3398 = vunpack.c.h.b16 %v748
    %v3399 = vunpack.c.l.b16 %v749
    %v3400 = vunpack.c.h.b16 %v749
    %v3401 = vunpack.c.l.b16 %v750
    %v3402 = vunpack.c.l.b16 %v751
    %v3403 = vunpack.c.h.b16 %v751
    %v3404 = vunpack.c.l.b16 %v752
    %v3405 = vunpack.c.h.b16 %v752
    %v3406 = vunpack.c.l.b16 %v753
    %v3407 = vunpack.c.h.b16 %v753
    %v3408 = vunpack.c.l.b16 %v754
    %v3409 = vunpack.c.l.b16 %v755
    %v3410 = vunpack.c.h.b16 %v755
    %v3411 = vunpack.c.l.b16 %v756
    %v3412 = vunpack.c.h.b16 %v756
    %v3413 = vunpack.c.l.b16 %v757
    %v3414 = vunpack.c.h.b16 %v757
    %v3415 = vunpack.c.l.b16 %v758
    %v3416 = vunpack.c.l.b16 %v759
    %v3417 = vunpack.c.h.b16 %v759
    %v3418 = vunpack.c.l.b16 %v760
    %v3419 = vunpack.c.h.b16 %v760
    %v3420 = vunpack.c.l.b16 %v761
    %v3421 = vunpack.c.h.b16 %v761
    %v3422 = vunpack.c.l.b16 %v762
    %v3423 = vunpack.c.l.b16 %v763
    %v3424 = vunpack.c.h.b16 %v763
    %v3425 = vunpack.c.l.b16 %v764
    %v3426 = vunpack.c.h.b16 %v764
    %v3427 = vunpack.c.l.b16 %v765
    %v3428 = vunpack.c.h.b16 %v765
    %v3429 = vunpack.c.l.b16 %v766
    %v3430 = vunpack.c.l.b16 %v767
    %v3431 = vunpack.c.h.b16 %v767
    %v3432 = vunpack.c.l.b16 %v768
    %v3433 = vunpack.c.h.b16 %v768
    %v3434 = vunpack.c.l.b16 %v769
    %v3435 = vunpack.c.h.b16 %v769
    %v3436 = vunpack.c.l.b16 %v770
    %v3437 = vunpack.c.l.b16 %v771
    %v3438 = vunpack.c.h.b16 %v771
    %v3439 = vunpack.c.l.b16 %v772
    %v3440 = vunpack.c.h.b16 %v772
    %v3441 = vunpack.c.l.b16 %v773
    %v3442 = vunpack.c.h.b16 %v773
    %v3443 = vunpack.c.l.b16 %v774
    %v3444 = vunpack.c.l.b16 %v775
    %v3445 = vunpack.c.h.b16 %v775
    %v3446 = vunpack.c.l.b16 %v776
    %v3447 = vunpack.c.h.b16 %v776
    %v3448 = vunpack.c.l.b16 %v777
    %v3449 = vunpack.c.h.b16 %v777
    %v3450 = vunpack.c.l.b16 %v778
    %v3451 = vunpack.c.l.b16 %v779
    %v3452 = vunpack.c.h.b16 %v779
    %v3453 = vunpack.c.l.b16 %v780
    %v3454 = vunpack.c.h.b16 %v780
    %v3455 = vunpack.c.l.b16 %v781
    %v3456 = vunpack.c.h.b16 %v781
    %v3457 = vunpack.c.l.b16 %v782
    %v3458 = vunpack.c.l.b16 %v783
    %v3459 = vunpack.c.h.b16 %v783
    %v3460 = vunpack.c.l.b16 %v784
    %v3461 = vunpack.c.h.b16 %v784
    %v3462 = vunpack.c.l.b16 %v785
    %v3463 = vunpack.c.h.b16 %v785
    %v3464 = vunpack.c.l.b16 %v786
    %v3465 = vunpack.c.l.b16 %v787
    %v3466 = vunpack.c.h.b16 %v787
    %v3467 = vunpack.c.l.b16 %v788
    %v3468 = vunpack.c.h.b16 %v788
    %v3469 = vunpack.c.l.b16 %v789
    %v3470 = vunpack.c.h.b16 %v789
    %v3471 = vunpack.c.l.b16 %v790
    %v3472 = vunpack.c.l.b16 %v791
    %v3473 = vunpack.c.h.b16 %v791
    %v3474 = vunpack.c.l.b16 %v792
    %v3475 = vunpack.c.h.b16 %v792
    %v3476 = vunpack.c.l.b16 %v793
    %v3477 = vunpack.c.h.b16 %v793
    %v3478 = vunpack.c.l.b16 %v794
    %v3479 = vunpack.c.l.b16 %v795
    %v3480 = vunpack.c.h.b16 %v795
    %v3481 = vunpack.c.l.b16 %v796
    %v3482 = vunpack.c.h.b16 %v796
    %v3483 = vunpack.c.l.b16 %v797
    %v3484 = vunpack.c.h.b16 %v797
    %v3485 = vunpack.c.l.b16 %v798
    %v3486 = vunpack.c.l.b16 %v799
    %v3487 = vunpack.c.h.b16 %v799
    %v3488 = vunpack.c.l.b16 %v800
    %v3489 = vunpack.c.h.b16 %v800
    %v3490 = vunpack.c.l.b16 %v801
    %v3491 = vunpack.c.h.b16 %v801
    %v3492 = vunpack.c.l.b16 %v802
    %v3493 = vunpack.c.l.b16 %v803
    %v3494 = vunpack.c.h.b16 %v803
    %v3495 = vunpack.c.l.b16 %v804
    %v3496 = vunpack.c.h.b16 %v804
    %v3497 = vunpack.c.l.b16 %v805
    %v3498 = vunpack.c.h.b16 %v805
    %v3499 = vunpack.c.l.b16 %v806
    %v3500 = vunpack.c.l.b16 %v807
    %v3501 = vunpack.c.h.b16 %v807
    %v3502 = vunpack.c.l.b16 %v808
    %v3503 = vunpack.c.h.b16 %v808
    %v3504 = vunpack.c.l.b16 %v809
    %v3505 = vunpack.c.h.b16 %v809
    %v3506 = vunpack.c.l.b16 %v810
    %v3507 = vunpack.c.l.b16 %v811
    %v3508 = vunpack.c.h.b16 %v811
    %v3509 = vunpack.c.l.b16 %v812
    %v3510 = vunpack.c.h.b16 %v812
    %v3511 = vunpack.c.l.b16 %v813
    %v3512 = vunpack.c.h.b16 %v813
    %v3513 = vunpack.c.l.b16 %v814
    %v3514 = vunpack.c.l.b16 %v815
    %v3515 = vunpack.c.h.b16 %v815
    %v3516 = vunpack.c.l.b16 %v816
    %v3517 = vunpack.c.h.b16 %v816
    %v3518 = vunpack.c.l.b16 %v817
    %v3519 = vunpack.c.h.b16 %v817
    %v3520 = vunpack.c.l.b16 %v818
    %v3521 = vunpack.c.l.b16 %v819
    %v3522 = vunpack.c.h.b16 %v819
    %v3523 = vunpack.c.l.b16 %v820
    %v3524 = vunpack.c.h.b16 %v820
    %v3525 = vunpack.c.l.b16 %v821
    %v3526 = vunpack.c.h.b16 %v821
    %v3527 = vunpack.c.l.b16 %v822
    %v3528 = vunpack.c.l.b16 %v823
    %v3529 = vunpack.c.h.b16 %v823
    %v3530 = vunpack.c.l.b16 %v824
    %v3531 = vunpack.c.h.b16 %v824
    %v3532 = vunpack.c.l.b16 %v825
    %v3533 = vunpack.c.h.b16 %v825
    %v3534 = vunpack.c.l.b16 %v826
    %v3535 = vunpack.c.l.b16 %v827
    %v3536 = vunpack.c.h.b16 %v827
    %v3537 = vunpack.c.l.b16 %v828
    %v3538 = vunpack.c.h.b16 %v828
    %v3539 = vunpack.c.l.b16 %v829
    %v3540 = vunpack.c.h.b16 %v829
    %v3541 = vunpack.c.l.b16 %v830
    %v3542 = vunpack.c.l.b16 %v831
    %v3543 = vunpack.c.h.b16 %v831
    %v3544 = vunpack.c.l.b16 %v832
    %v3545 = vunpack.c.h.b16 %v832
    %v3546 = vunpack.c.l.b16 %v833
    %v3547 = vunpack.c.h.b16 %v833
    %v3548 = vunpack.c.l.b16 %v834
    %v3549 = vunpack.c.l.b16 %v835
    %v3550 = vunpack.c.h.b16 %v835
    %v3551 = vunpack.c.l.b16 %v836
    %v3552 = vunpack.c.h.b16 %v836
    %v3553 = vunpack.c.l.b16 %v837
    %v3554 = vunpack.c.h.b16 %v837
    %v3555 = vunpack.c.l.b16 %v838
    %v3556 = vunpack.c.l.b16 %v839
    %v3557 = vunpack.c.h.b16 %v839
    %v3558 = vunpack.c.l.b16 %v840
    %v3559 = vunpack.c.h.b16 %v840
    %v3560 = vunpack.c.l.b16 %v841
    %v3561 = vunpack.c.h.b16 %v841
    %v3562 = vunpack.c.l.b16 %v842
    %v3563 = vunpack.c.l.b16 %v843
    %v3564 = vunpack.c.h.b16 %v843
    %v3565 = vunpack.c.l.b16 %v844
    %v3566 = vunpack.c.h.b16 %v844
    %v3567 = vunpack.c.l.b16 %v845
    %v3568 = vunpack.c.h.b16 %v845
    %v3569 = vunpack.c.l.b16 %v846
    %v3570 = vunpack.c.l.b16 %v847
    %v3571 = vunpack.c.h.b16 %v847
    %v3572 = vunpack.c.l.b16 %v848
    %v3573 = vunpack.c.h.b16 %v848
    %v3574 = vunpack.c.l.b16 %v849
    %v3575 = vunpack.c.h.b16 %v849
    %v3576 = vunpack.c.l.b16 %v850
    %v3577 = vunpack.c.l.b16 %v851
    %v3578 = vunpack.c.h.b16 %v851
    %v3579 = vunpack.c.l.b16 %v852
    %v3580 = vunpack.c.h.b16 %v852
    %v3581 = vunpack.c.l.b16 %v853
    %v3582 = vunpack.c.h.b16 %v853
    %v3583 = vunpack.c.l.b16 %v854
    %v3584 = vunpack.c.l.b16 %v855
    %v3585 = vunpack.c.h.b16 %v855
    %v3586 = vunpack.c.l.b16 %v856
    %v3587 = vunpack.c.h.b16 %v856
    %v3588 = vunpack.c.l.b16 %v857
    %v3589 = vunpack.c.h.b16 %v857
    %v3590 = vunpack.c.l.b16 %v858
    %v3591 = vunpack.c.l.b16 %v859
    %v3592 = vunpack.c.h.b16 %v859
    %v3593 = vunpack.c.l.b16 %v860
    %v3594 = vunpack.c.h.b16 %v860
    %v3595 = vunpack.c.l.b16 %v861
    %v3596 = vunpack.c.h.b16 %v861
    %v3597 = vunpack.c.l.b16 %v862
    %v3598 = vunpack.c.l.b16 %v863
    %v3599 = vunpack.c.h.b16 %v863
    %v3600 = vunpack.c.l.b16 %v864
    %v3601 = vunpack.c.h.b16 %v864
    %v3602 = vunpack.c.l.b16 %v865
    %v3603 = vunpack.c.h.b16 %v865
    %v3604 = vunpack.c.l.b16 %v866
    %v3605 = vunpack.c.l.b16 %v867
    %v3606 = vunpack.c.h.b16 %v867
    %v3607 = vunpack.c.l.b16 %v868
    %v3608 = vunpack.c.h.b16 %v868
    %v3609 = vunpack.c.l.b16 %v869
    %v3610 = vunpack.c.h.b16 %v869
    %v3611 = vunpack.c.l.b16 %v870
    %v3612 = vunpack.c.l.b16 %v871
    %v3613 = vunpack.c.h.b16 %v871
    %v3614 = vunpack.c.l.b16 %v872
    %v3615 = vunpack.c.h.b16 %v872
    %v3616 = vunpack.c.l.b16 %v873
    %v3617 = vunpack.c.h.b16 %v873
    %v3618 = vunpack.c.l.b16 %v874
    %v3619 = vunpack.c.l.b16 %v875
    %v3620 = vunpack.c.h.b16 %v875
    %v3621 = vunpack.c.l.b16 %v876
    %v3622 = vunpack.c.h.b16 %v876
    %v3623 = vunpack.c.l.b16 %v877
    %v3624 = vunpack.c.h.b16 %v877
    %v3625 = vunpack.c.l.b16 %v878
    %v3626 = vunpack.c.l.b16 %v879
    %v3627 = vunpack.c.h.b16 %v879
    %v3628 = vunpack.c.l.b16 %v880
    %v3629 = vunpack.c.h.b16 %v880
    %v3630 = vunpack.c.l.b16 %v881
    %v3631 = vunpack.c.h.b16 %v881
    %v3632 = vunpack.c.l.b16 %v882
    %v3633 = vunpack.c.l.b16 %v883
    %v3634 = vunpack.c.h.b16 %v883
    %v3635 = vunpack.c.l.b16 %v884
    %v3636 = vunpack.c.h.b16 %v884
    %v3637 = vunpack.c.l.b16 %v885
    %v3638 = vunpack.c.h.b16 %v885
    %v3639 = vunpack.c.l.b16 %v886
    %v3640 = vunpack.c.l.b16 %v887
    %v3641 = vunpack.c.h.b16 %v887
    %v3642 = vunpack.c.l.b16 %v888
    %v3643 = vunpack.c.h.b16 %v888
    %v3644 = vunpack.c.l.b16 %v889
    %v3645 = vunpack.c.h.b16 %v889
    %v3646 = vunpack.c.l.b16 %v890
    %v3647 = vunpack.c.l.b16 %v891
    %v3648 = vunpack.c.h.b16 %v891
    %v3649 = vunpack.c.l.b16 %v892
    %v3650 = vunpack.c.h.b16 %v892
    %v3651 = vunpack.c.l.b16 %v893
    %v3652 = vunpack.c.h.b16 %v893
    %v3653 = vunpack.c.l.b16 %v894
    %v3654 = vunpack.c.l.b16 %v895
    %v3655 = vunpack.c.h.b16 %v895
    %v3656 = vunpack.c.l.b16 %v896
    %v3657 = vunpack.c.h.b16 %v896
    %v3658 = vunpack.c.l.b16 %v897
    %v3659 = vunpack.c.h.b16 %v897
    %v3660 = vunpack.c.l.b16 %v898
    %v3661 = vunpack.c.l.b16 %v899
    %v3662 = vunpack.c.h.b16 %v899
    %v3663 = vunpack.c.l.b16 %v900
    %v3664 = vunpack.c.h.b16 %v900
    %v3665 = vunpack.c.l.b16 %v901
    %v3666 = vunpack.c.h.b16 %v901
    %v3667 = vunpack.c.l.b16 %v902
    %v3668 = vunpack.c.l.b16 %v903
    %v3669 = vunpack.c.h.b16 %v903
    %v3670 = vunpack.c.l.b16 %v904
    %v3671 = vunpack.c.h.b16 %v904
    %v3672 = vunpack.c.l.b16 %v905
    %v3673 = vunpack.c.h.b16 %v905
    %v3674 = vunpack.c.l.b16 %v906
    %v3675 = vunpack.c.l.b16 %v907
    %v3676 = vunpack.c.h.b16 %v907
    %v3677 = vunpack.c.l.b16 %v908
    %v3678 = vunpack.c.h.b16 %v908
    %v3679 = vunpack.c.l.b16 %v909
    %v3680 = vunpack.c.h.b16 %v909
    %v3681 = vunpack.c.l.b16 %v910
    %v3682 = vunpack.c.l.b16 %v911
    %v3683 = vunpack.c.h.b16 %v911
    %v3684 = vunpack.c.l.b16 %v912
    %v3685 = vunpack.c.h.b16 %v912
    %v3686 = vunpack.c.l.b16 %v913
    %v3687 = vunpack.c.h.b16 %v913
    %v3688 = vunpack.c.l.b16 %v914
    %v3689 = vunpack.c.l.b16 %v915
    %v3690 = vunpack.c.h.b16 %v915
    %v3691 = vunpack.c.l.b16 %v916
    %v3692 = vunpack.c.h.b16 %v916
    %v3693 = vunpack.c.l.b16 %v917
    %v3694 = vunpack.c.h.b16 %v917
    %v3695 = vunpack.c.l.b16 %v918
    %v3696 = vunpack.c.l.b16 %v919
    %v3697 = vunpack.c.h.b16 %v919
    %v3698 = vunpack.c.l.b16 %v920
    %v3699 = vunpack.c.h.b16 %v920
    %v3700 = vunpack.c.l.b16 %v921
    %v3701 = vunpack.c.h.b16 %v921
    %v3702 = vunpack.c.l.b16 %v922
    %v3703 = vunpack.c.l.b16 %v923
    %v3704 = vunpack.c.h.b16 %v923
    %v3705 = vunpack.c.l.b16 %v924
    %v3706 = vunpack.c.h.b16 %v924
    %v3707 = vunpack.c.l.b16 %v925
    %v3708 = vunpack.c.h.b16 %v925
    %v3709 = vunpack.c.l.b16 %v926
    %v3710 = vunpack.c.l.b16 %v927
    %v3711 = vunpack.c.h.b16 %v927
    %v3712 = vunpack.c.l.b16 %v928
    %v3713 = vunpack.c.h.b16 %v928
    %v3714 = vunpack.c.l.b16 %v929
    %v3715 = vunpack.c.h.b16 %v929
    %v3716 = vunpack.c.l.b16 %v930
    %v3717 = vunpack.c.l.b16 %v931
    %v3718 = vunpack.c.h.b16 %v931
    %v3719 = vunpack.c.l.b16 %v932
    %v3720 = vunpack.c.h.b16 %v932
    %v3721 = vunpack.c.l.b16 %v933
    %v3722 = vunpack.c.h.b16 %v933
    %v3723 = vunpack.c.l.b16 %v934
    %v3724 = vunpack.c.l.b16 %v935
    %v3725 = vunpack.c.h.b16 %v935
    %v3726 = vunpack.c.l.b16 %v936
    %v3727 = vunpack.c.h.b16 %v936
    %v3728 = vunpack.c.l.b16 %v937
    %v3729 = vunpack.c.h.b16 %v937
    %v3730 = vunpack.c.l.b16 %v938
    %v3731 = vunpack.c.l.b16 %v939
    %v3732 = vunpack.c.h.b16 %v939
    %v3733 = vunpack.c.l.b16 %v940
    %v3734 = vunpack.c.h.b16 %v940
    %v3735 = vunpack.c.l.b16 %v941
    %v3736 = vunpack.c.h.b16 %v941
    %v3737 = vunpack.c.l.b16 %v942
    %v3738 = vunpack.c.l.b16 %v943
    %v3739 = vunpack.c.h.b16 %v943
    %v3740 = vunpack.c.l.b16 %v944
    %v3741 = vunpack.c.h.b16 %v944
    %v3742 = vunpack.c.l.b16 %v945
    %v3743 = vunpack.c.h.b16 %v945
    %v3744 = vunpack.c.l.b16 %v946
    %v3745 = vunpack.c.l.b16 %v947
    %v3746 = vunpack.c.h.b16 %v947
    %v3747 = vunpack.c.l.b16 %v948
    %v3748 = vunpack.c.h.b16 %v948
    %v3749 = vunpack.c.l.b16 %v949
    %v3750 = vunpack.c.h.b16 %v949
    %v3751 = vunpack.c.l.b16 %v950
    %v3752 = vunpack.c.l.b16 %v951
    %v3753 = vunpack.c.h.b16 %v951
    %v3754 = vunpack.c.l.b16 %v952
    %v3755 = vunpack.c.h.b16 %v952
    %v3756 = vunpack.c.l.b16 %v953
    %v3757 = vunpack.c.h.b16 %v953
    %v3758 = vunpack.c.l.b16 %v954
    %v3759 = vunpack.c.l.b16 %v955
    %v3760 = vunpack.c.h.b16 %v955
    %v3761 = vunpack.c.l.b16 %v956
    %v3762 = vunpack.c.h.b16 %v956
    %v3763 = vunpack.c.l.b16 %v957
    %v3764 = vunpack.c.h.b16 %v957
    %v3765 = vunpack.c.l.b16 %v958
    %v3766 = vunpack.c.l.b16 %v959
    %v3767 = vunpack.c.h.b16 %v959
    %v3768 = vunpack.c.l.b16 %v960
    %v3769 = vunpack.c.h.b16 %v960
    %v3770 = vunpack.c.l.b16 %v961
    %v3771 = vunpack.c.h.b16 %v961
    %v3772 = vunpack.c.l.b16 %v962
    %v3773 = vunpack.c.l.b16 %v963
    %v3774 = vunpack.c.h.b16 %v963
    %v3775 = vunpack.c.l.b16 %v964
    %v3776 = vunpack.c.h.b16 %v964
    %v3777 = vunpack.c.l.b16 %v965
    %v3778 = vunpack.c.h.b16 %v965
    %v3779 = vunpack.c.l.b16 %v966
    %v3780 = vunpack.c.l.b16 %v967
    %v3781 = vunpack.c.h.b16 %v967
    %v3782 = vunpack.c.l.b16 %v968
    %v3783 = vunpack.c.h.b16 %v968
    %v3784 = vunpack.c.l.b16 %v969
    %v3785 = vunpack.c.h.b16 %v969
    %v3786 = vunpack.c.l.b16 %v970
    %v3787 = vunpack.c.l.b16 %v971
    %v3788 = vunpack.c.h.b16 %v971
    %v3789 = vunpack.c.l.b16 %v972
    %v3790 = vunpack.c.h.b16 %v972
    %v3791 = vunpack.c.l.b16 %v973
    %v3792 = vunpack.c.h.b16 %v973
    %v3793 = vunpack.c.l.b16 %v974
    %v3794 = vunpack.c.l.b16 %v975
    %v3795 = vunpack.c.h.b16 %v975
    %v3796 = vunpack.c.l.b16 %v976
    %v3797 = vunpack.c.h.b16 %v976
    %v3798 = vunpack.c.l.b16 %v977
    %v3799 = vunpack.c.h.b16 %v977
    %v3800 = vunpack.c.l.b16 %v978
    %v3801 = vunpack.c.l.b16 %v979
    %v3802 = vunpack.c.h.b16 %v979
    %v3803 = vunpack.c.l.b16 %v980
    %v3804 = vunpack.c.h.b16 %v980
    %v3805 = vunpack.c.l.b16 %v981
    %v3806 = vunpack.c.h.b16 %v981
    %v3807 = vunpack.c.l.b16 %v982
    %v3808 = vunpack.c.l.b16 %v983
    %v3809 = vunpack.c.h.b16 %v983
    %v3810 = vunpack.c.l.b16 %v984
    %v3811 = vunpack.c.h.b16 %v984
    %v3812 = vunpack.c.l.b16 %v985
    %v3813 = vunpack.c.h.b16 %v985
    %v3814 = vunpack.c.l.b16 %v986
    %v3815 = vunpack.c.l.b16 %v987
    %v3816 = vunpack.c.h.b16 %v987
    %v3817 = vunpack.c.l.b16 %v988
    %v3818 = vunpack.c.h.b16 %v988
    %v3819 = vunpack.c.l.b16 %v989
    %v3820 = vunpack.c.h.b16 %v989
    %v3821 = vunpack.c.l.b16 %v990
    %v3822 = vunpack.c.l.b16 %v991
    %v3823 = vunpack.c.h.b16 %v991
    %v3824 = vunpack.c.l.b16 %v992
    %v3825 = vunpack.c.h.b16 %v992
    %v3826 = vunpack.c.l.b16 %v993
    %v3827 = vunpack.c.h.b16 %v993
    %v3828 = vunpack.c.l.b16 %v994
    %v3829 = vunpack.c.l.b16 %v995
    %v3830 = vunpack.c.h.b16 %v995
    %v3831 = vunpack.c.l.b16 %v996
    %v3832 = vunpack.c.h.b16 %v996
    %v3833 = vunpack.c.l.b16 %v997
    %v3834 = vunpack.c.h.b16 %v997
    %v3835 = vunpack.c.l.b16 %v998
    %v3836 = vunpack.c.l.b16 %v999
    %v3837 = vunpack.c.h.b16 %v999
    %v3838 = vunpack.c.l.b16 %v1000
    %v3839 = vunpack.c.h.b16 %v1000
    %v3840 = vunpack.c.l.b16 %v1001
    %v3841 = vunpack.c.h.b16 %v1001
    %v3842 = vunpack.c.l.b16 %v1002
    %v3843 = vunpack.c.l.b16 %v1003
    %v3844 = vunpack.c.h.b16 %v1003
    %v3845 = vunpack.c.l.b16 %v1004
    %v3846 = vunpack.c.h.b16 %v1004
    %v3847 = vunpack.c.l.b16 %v1005
    %v3848 = vunpack.c.h.b16 %v1005
    %v3849 = vunpack.c.l.b16 %v1006
    %v3850 = vunpack.c.l.b16 %v1007
    %v3851 = vunpack.c.h.b16 %v1007
    %v3852 = vunpack.c.l.b16 %v1008
    %v3853 = vunpack.c.h.b16 %v1008
    %v3854 = vunpack.c.l.b16 %v1009
    %v3855 = vunpack.c.h.b16 %v1009
    %v3856 = vunpack.c.l.b16 %v1010
    %v3857 = vunpack.c.l.b16 %v1011
    %v3858 = vunpack.c.h.b16 %v1011
    %v3859 = vunpack.c.l.b16 %v1012
    %v3860 = vunpack.c.h.b16 %v1012
    %v3861 = vunpack.c.l.b16 %v1013
    %v3862 = vunpack.c.h.b16 %v1013
    %v3863 = vunpack.c.l.b16 %v1014
    %v3864 = vunpack.c.l.b16 %v1015
    %v3865 = vunpack.c.h.b16 %v1015
    %v3866 = vunpack.c.l.b16 %v1016
    %v3867 = vunpack.c.h.b16 %v1016
    %v3868 = vunpack.c.l.b16 %v1017
    %v3869 = vunpack.c.h.b16 %v1017
    %v3870 = vunpack.c.l.b16 %v1018
    %v3871 = vunpack.c.l.b16 %v1019
    %v3872 = vunpack.c.h.b16 %v1019
    %v3873 = vunpack.c.l.b16 %v1020
    %v3874 = vunpack.c.h.b16 %v1020
    %v3875 = vunpack.c.l.b16 %v1021
    %v3876 = vunpack.c.h.b16 %v1021
    %v3877 = vunpack.c.l.b16 %v1022
    %v3878 = vunpack.c.l.b16 %v1023
    %v3879 = vunpack.c.h.b16 %v1023
    %v3880 = vunpack.c.l.b16 %v1024
    %v3881 = vunpack.c.h.b16 %v1024
    %v3882 = vunpack.c.l.b16 %v1025
    %v3883 = vunpack.c.h.b16 %v1025
    %v3884 = vunpack.c.l.b16 %v1026
    %v3885 = vunpack.c.l.b16 %v1027
    %v3886 = vunpack.c.h.b16 %v1027
    %v3887 = vunpack.c.l.b16 %v1028
    %v3888 = vunpack.c.h.b16 %v1028
    %v3889 = vunpack.c.l.b16 %v1029
    %v3890 = vunpack.c.h.b16 %v1029
    %v3891 = vunpack.c.l.b16 %v1030
    %v3892 = vunpack.c.l.b16 %v1031
    %v3893 = vunpack.c.h.b16 %v1031
    %v3894 = vunpack.c.l.b16 %v1032
    %v3895 = vunpack.c.h.b16 %v1032
    %v3896 = vunpack.c.l.b16 %v1033
    %v3897 = vunpack.c.h.b16 %v1033
    %v3898 = vunpack.c.l.b16 %v1034
    %v3899 = vunpack.c.l.b16 %v1035
    %v3900 = vunpack.c.h.b16 %v1035
    %v3901 = vunpack.c.l.b16 %v1036
    %v3902 = vunpack.c.h.b16 %v1036
    %v3903 = vunpack.c.l.b16 %v1037
    %v3904 = vunpack.c.h.b16 %v1037
    %v3905 = vunpack.c.l.b16 %v1038
    %v3906 = vunpack.c.l.b16 %v1039
    %v3907 = vunpack.c.h.b16 %v1039
    %v3908 = vunpack.c.l.b16 %v1040
    %v3909 = vunpack.c.h.b16 %v1040
    %v3910 = vunpack.c.l.b16 %v1041
    %v3911 = vunpack.c.h.b16 %v1041
    %v3912 = vunpack.c.l.b16 %v1042
    %v3913 = vunpack.c.l.b16 %v1043
    %v3914 = vunpack.c.h.b16 %v1043
    %v3915 = vunpack.c.l.b16 %v1044
    %v3916 = vunpack.c.h.b16 %v1044
    %v3917 = vunpack.c.l.b16 %v1045
    %v3918 = vunpack.c.h.b16 %v1045
    %v3919 = vunpack.c.l.b16 %v1046
    %v3920 = vunpack.c.l.b16 %v1047
    %v3921 = vunpack.c.h.b16 %v1047
    %v3922 = vunpack.c.l.b16 %v1048
    %v3923 = vunpack.c.h.b16 %v1048
    %v3924 = vunpack.c.l.b16 %v1049
    %v3925 = vunpack.c.h.b16 %v1049
    %v3926 = vunpack.c.l.b16 %v1050
    %v3927 = vunpack.c.l.b16 %v1051
    %v3928 = vunpack.c.h.b16 %v1051
    %v3929 = vunpack.c.l.b16 %v1052
    %v3930 = vunpack.c.h.b16 %v1052
    %v3931 = vunpack.c.l.b16 %v1053
    %v3932 = vunpack.c.h.b16 %v1053
    %v3933 = vunpack.c.l.b16 %v1054
    %v3934 = vunpack.c.l.b16 %v1055
    %v3935 = vunpack.c.h.b16 %v1055
    %v3936 = vunpack.c.l.b16 %v1056
    %v3937 = vunpack.c.h.b16 %v1056
    %v3938 = vunpack.c.l.b16 %v1057
    %v3939 = vunpack.c.h.b16 %v1057
    %v3940 = vunpack.c.l.b16 %v1058
    %v3941 = vunpack.c.l.b16 %v1059
    %v3942 = vunpack.c.h.b16 %v1059
    %v3943 = vunpack.c.l.b16 %v1060
    %v3944 = vunpack.c.h.b16 %v1060
    %v3945 = vunpack.c.l.b16 %v1061
    %v3946 = vunpack.c.h.b16 %v1061
    %v3947 = vunpack.c.l.b16 %v1062
    %v3948 = vunpack.c.l.b16 %v1063
    %v3949 = vunpack.c.h.b16 %v1063
    %v3950 = vunpack.c.l.b16 %v1064
    %v3951 = vunpack.c.h.b16 %v1064
    %v3952 = vunpack.c.l.b16 %v1065
    %v3953 = vunpack.c.h.b16 %v1065
    %v3954 = vunpack.c.l.b16 %v1066
    %v3955 = vunpack.c.l.b16 %v1067
    %v3956 = vunpack.c.h.b16 %v1067
    %v3957 = vunpack.c.l.b16 %v1068
    %v3958 = vunpack.c.h.b16 %v1068
    %v3959 = vunpack.c.l.b16 %v1069
    %v3960 = vunpack.c.h.b16 %v1069
    %v3961 = vunpack.c.l.b16 %v1070
    %v3962 = vunpack.c.l.b16 %v1071
    %v3963 = vunpack.c.h.b16 %v1071
    %v3964 = vunpack.c.l.b16 %v1072
    %v3965 = vunpack.c.h.b16 %v1072
    %v3966 = vunpack.c.l.b16 %v1073
    %v3967 = vunpack.c.h.b16 %v1073
    %v3968 = vunpack.c.l.b16 %v1074
    %v3969 = vunpack.c.l.b16 %v1075
    %v3970 = vunpack.c.h.b16 %v1075
    %v3971 = vunpack.c.l.b16 %v1076
    %v3972 = vunpack.c.h.b16 %v1076
    %v3973 = vunpack.c.l.b16 %v1077
    %v3974 = vunpack.c.h.b16 %v1077
    %v3975 = vunpack.c.l.b16 %v1078
    %v3976 = vunpack.c.l.b16 %v1079
    %v3977 = vunpack.c.h.b16 %v1079
    %v3978 = vunpack.c.l.b16 %v1080
    %v3979 = vunpack.c.h.b16 %v1080
    %v3980 = vunpack.c.l.b16 %v1081
    %v3981 = vunpack.c.h.b16 %v1081
    %v3982 = vunpack.c.l.b16 %v1082
    %v3983 = vunpack.c.l.b16 %v1083
    %v3984 = vunpack.c.h.b16 %v1083
    %v3985 = vunpack.c.l.b16 %v1084
    %v3986 = vunpack.c.h.b16 %v1084
    %v3987 = vunpack.c.l.b16 %v1085
    %v3988 = vunpack.c.h.b16 %v1085
    %v3989 = vunpack.c.l.b16 %v1086
    %v3990 = vunpack.c.l.b16 %v1087
    %v3991 = vunpack.c.h.b16 %v1087
    %v3992 = vunpack.c.l.b16 %v1088
    %v3993 = vunpack.c.h.b16 %v1088
    %v3994 = vunpack.c.l.b16 %v1089
    %v3995 = vunpack.c.h.b16 %v1089
    %v3996 = vunpack.c.l.b16 %v1090
    %v3997 = vunpack.c.l.b16 %v1091
    %v3998 = vunpack.c.h.b16 %v1091
    %v3999 = vunpack.c.l.b16 %v1092
    %v4000 = vunpack.c.h.b16 %v1092
    %v4001 = vunpack.c.l.b16 %v1093
    %v4002 = vunpack.c.h.b16 %v1093
    %v4003 = vunpack.c.l.b16 %v1094
    %v4004 = vpack.c.b16 %v2219, %v2212
    %v4005 = vpack.c.b16 %v2220, %v2213
    %v4006 = vpack.c.b16 %v2221, %v2214
    %v4007 = vpack.c.b16 %v2222, %v2215
    %v4008 = vpack.c.b16 %v2223, %v2216
    %v4009 = vpack.c.b16 %v2224, %v2217
    %v4010 = vpack.c.b16 %v2225, %v2218
    %v4011 = vpack.c.b16 %v2233, %v2226
    %v4012 = vpack.c.b16 %v2234, %v2227
    %v4013 = vpack.c.b16 %v2235, %v2228
    %v4014 = vpack.c.b16 %v2236, %v2229
    %v4015 = vpack.c.b16 %v2237, %v2230
    %v4016 = vpack.c.b16 %v2238, %v2231
    %v4017 = vpack.c.b16 %v2239, %v2232
    %v4018 = vpack.c.b16 %v2247, %v2240
    %v4019 = vpack.c.b16 %v2248, %v2241
    %v4020 = vpack.c.b16 %v2249, %v2242
    %v4021 = vpack.c.b16 %v2250, %v2243
    %v4022 = vpack.c.b16 %v2251, %v2244
    %v4023 = vpack.c.b16 %v2252, %v2245
    %v4024 = vpack.c.b16 %v2253, %v2246
    %v4025 = vpack.c.b16 %v2261, %v2254
    %v4026 = vpack.c.b16 %v2262, %v2255
    %v4027 = vpack.c.b16 %v2263, %v2256
    %v4028 = vpack.c.b16 %v2264, %v2257
    %v4029 = vpack.c.b16 %v2265, %v2258
    %v4030 = vpack.c.b16 %v2266, %v2259
    %v4031 = vpack.c.b16 %v2267, %v2260
    %v4032 = vpack.c.b16 %v2275, %v2268
    %v4033 = vpack.c.b16 %v2276, %v2269
    %v4034 = vpack.c.b16 %v2277, %v2270
    %v4035 = vpack.c.b16 %v2278, %v2271
    %v4036 = vpack.c.b16 %v2279, %v2272
    %v4037 = vpack.c.b16 %v2280, %v2273
    %v4038 = vpack.c.b16 %v2281, %v2274
    %v4039 = vpack.c.b16 %v2289, %v2282
    %v4040 = vpack.c.b16 %v2290, %v2283
    %v4041 = vpack.c.b16 %v2291, %v2284
    %v4042 = vpack.c.b16 %v2292, %v2285
    %v4043 = vpack.c.b16 %v2293, %v2286
    %v4044 = vpack.c.b16 %v2294, %v2287
    %v4045 = vpack.c.b16 %v2295, %v2288
    %v4046 = vpack.c.b16 %v2303, %v2296
    %v4047 = vpack.c.b16 %v2304, %v2297
    %v4048 = vpack.c.b16 %v2305, %v2298
    %v4049 = vpack.c.b16 %v2306, %v2299
    %v4050 = vpack.c.b16 %v2307, %v2300
    %v4051 = vpack.c.b16 %v2308, %v2301
    %v4052 = vpack.c.b16 %v2309, %v2302
    %v4053 = vpack.c.b16 %v2317, %v2310
    %v4054 = vpack.c.b16 %v2318, %v2311
    %v4055 = vpack.c.b16 %v2319, %v2312
    %v4056 = vpack.c.b16 %v2320, %v2313
    %v4057 = vpack.c.b16 %v2321, %v2314
    %v4058 = vpack.c.b16 %v2322, %v2315
    %v4059 = vpack.c.b16 %v2323, %v2316
    %v4060 = vpack.c.b16 %v2331, %v2324
    %v4061 = vpack.c.b16 %v2332, %v2325
    %v4062 = vpack.c.b16 %v2333, %v2326
    %v4063 = vpack.c.b16 %v2334, %v2327
    %v4064 = vpack.c.b16 %v2335, %v2328
    %v4065 = vpack.c.b16 %v2336, %v2329
    %v4066 = vpack.c.b16 %v2337, %v2330
    %v4067 = vpack.c.b16 %v2345, %v2338
    %v4068 = vpack.c.b16 %v2346, %v2339
    %v4069 = vpack.c.b16 %v2347, %v2340
    %v4070 = vpack.c.b16 %v2348, %v2341
    %v4071 = vpack.c.b16 %v2349, %v2342
    %v4072 = vpack.c.b16 %v2350, %v2343
    %v4073 = vpack.c.b16 %v2351, %v2344
    %v4074 = vpack.c.b16 %v2359, %v2352
    %v4075 = vpack.c.b16 %v2360, %v2353
    %v4076 = vpack.c.b16 %v2361, %v2354
    %v4077 = vpack.c.b16 %v2362, %v2355
    %v4078 = vpack.c.b16 %v2363, %v2356
    %v4079 = vpack.c.b16 %v2364, %v2357
    %v4080 = vpack.c.b16 %v2365, %v2358
    %v4081 = vpack.c.b16 %v2373, %v2366
    %v4082 = vpack.c.b16 %v2374, %v2367
    %v4083 = vpack.c.b16 %v2375, %v2368
    %v4084 = vpack.c.b16 %v2376, %v2369
    %v4085 = vpack.c.b16 %v2377, %v2370
    %v4086 = vpack.c.b16 %v2378, %v2371
    %v4087 = vpack.c.b16 %v2379, %v2372
    %v4088 = vpack.c.b16 %v2387, %v2380
    %v4089 = vpack.c.b16 %v2388, %v2381
    %v4090 = vpack.c.b16 %v2389, %v2382
    %v4091 = vpack.c.b16 %v2390, %v2383
    %v4092 = vpack.c.b16 %v2391, %v2384
    %v4093 = vpack.c.b16 %v2392, %v2385
    %v4094 = vpack.c.b16 %v2393, %v2386
    %v4095 = vpack.c.b16 %v2401, %v2394
    %v4096 = vpack.c.b16 %v2402, %v2395
    %v4097 = vpack.c.b16 %v2403, %v2396
    %v4098 = vpack.c.b16 %v2404, %v2397
    %v4099 = vpack.c.b16 %v2405, %v2398
    %v4100 = vpack.c.b16 %v2406, %v2399
    %v4101 = vpack.c.b16 %v2407, %v2400
    %v4102 = vpack.c.b16 %v2415, %v2408
    %v4103 = vpack.c.b16 %v2416, %v2409
    %v4104 = vpack.c.b16 %v2417, %v2410
    %v4105 = vpack.c.b16 %v2418, %v2411
    %v4106 = vpack.c.b16 %v2419, %v2412
    %v4107 = vpack.c.b16 %v2420, %v2413
    %v4108 = vpack.c.b16 %v2421, %v2414
    %v4109 = vpack.c.b16 %v2429, %v2422
    %v4110 = vpack.c.b16 %v2430, %v2423
    %v4111 = vpack.c.b16 %v2431, %v2424
    %v4112 = vpack.c.b16 %v2432, %v2425
    %v4113 = vpack.c.b16 %v2433, %v2426
    %v4114 = vpack.c.b16 %v2434, %v2427
    %v4115 = vpack.c.b16 %v2435, %v2428
    %v4116 = vpack.c.b16 %v2443, %v2436
    %v4117 = vpack.c.b16 %v2444, %v2437
    %v4118 = vpack.c.b16 %v2445, %v2438
    %v4119 = vpack.c.b16 %v2446, %v2439
    %v4120 = vpack.c.b16 %v2447, %v2440
    %v4121 = vpack.c.b16 %v2448, %v2441
    %v4122 = vpack.c.b16 %v2449, %v2442
    %v4123 = vpack.c.b16 %v2457, %v2450
    %v4124 = vpack.c.b16 %v2458, %v2451
    %v4125 = vpack.c.b16 %v2459, %v2452
    %v4126 = vpack.c.b16 %v2460, %v2453
    %v4127 = vpack.c.b16 %v2461, %v2454
    %v4128 = vpack.c.b16 %v2462, %v2455
    %v4129 = vpack.c.b16 %v2463, %v2456
    %v4130 = vpack.c.b16 %v2471, %v2464
    %v4131 = vpack.c.b16 %v2472, %v2465
    %v4132 = vpack.c.b16 %v2473, %v2466
    %v4133 = vpack.c.b16 %v2474, %v2467
    %v4134 = vpack.c.b16 %v2475, %v2468
    %v4135 = vpack.c.b16 %v2476, %v2469
    %v4136 = vpack.c.b16 %v2477, %v2470
    %v4137 = vpack.c.b16 %v2485, %v2478
    %v4138 = vpack.c.b16 %v2486, %v2479
    %v4139 = vpack.c.b16 %v2487, %v2480
    %v4140 = vpack.c.b16 %v2488, %v2481
    %v4141 = vpack.c.b16 %v2489, %v2482
    %v4142 = vpack.c.b16 %v2490, %v2483
    %v4143 = vpack.c.b16 %v2491, %v2484
    %v4144 = vpack.c.b16 %v2499, %v2492
    %v4145 = vpack.c.b16 %v2500, %v2493
    %v4146 = vpack.c.b16 %v2501, %v2494
    %v4147 = vpack.c.b16 %v2502, %v2495
    %v4148 = vpack.c.b16 %v2503, %v2496
    %v4149 = vpack.c.b16 %v2504, %v2497
    %v4150 = vpack.c.b16 %v2505, %v2498
    %v4151 = vpack.c.b16 %v2513, %v2506
    %v4152 = vpack.c.b16 %v2514, %v2507
    %v4153 = vpack.c.b16 %v2515, %v2508
    %v4154 = vpack.c.b16 %v2516, %v2509
    %v4155 = vpack.c.b16 %v2517, %v2510
    %v4156 = vpack.c.b16 %v2518, %v2511
    %v4157 = vpack.c.b16 %v2519, %v2512
    %v4158 = vpack.c.b16 %v2527, %v2520
    %v4159 = vpack.c.b16 %v2528, %v2521
    %v4160 = vpack.c.b16 %v2529, %v2522
    %v4161 = vpack.c.b16 %v2530, %v2523
    %v4162 = vpack.c.b16 %v2531, %v2524
    %v4163 = vpack.c.b16 %v2532, %v2525
    %v4164 = vpack.c.b16 %v2533, %v2526
    %v4165 = vpack.c.b16 %v2541, %v2534
    %v4166 = vpack.c.b16 %v2542, %v2535
    %v4167 = vpack.c.b16 %v2543, %v2536
    %v4168 = vpack.c.b16 %v2544, %v2537
    %v4169 = vpack.c.b16 %v2545, %v2538
    %v4170 = vpack.c.b16 %v2546, %v2539
    %v4171 = vpack.c.b16 %v2547, %v2540
    %v4172 = vpack.c.b16 %v2555, %v2548
    %v4173 = vpack.c.b16 %v2556, %v2549
    %v4174 = vpack.c.b16 %v2557, %v2550
    %v4175 = vpack.c.b16 %v2558, %v2551
    %v4176 = vpack.c.b16 %v2559, %v2552
    %v4177 = vpack.c.b16 %v2560, %v2553
    %v4178 = vpack.c.b16 %v2561, %v2554
    %v4179 = vpack.c.b16 %v2569, %v2562
    %v4180 = vpack.c.b16 %v2570, %v2563
    %v4181 = vpack.c.b16 %v2571, %v2564
    %v4182 = vpack.c.b16 %v2572, %v2565
    %v4183 = vpack.c.b16 %v2573, %v2566
    %v4184 = vpack.c.b16 %v2574, %v2567
    %v4185 = vpack.c.b16 %v2575, %v2568
    %v4186 = vpack.c.b16 %v2583, %v2576
    %v4187 = vpack.c.b16 %v2584, %v2577
    %v4188 = vpack.c.b16 %v2585, %v2578
    %v4189 = vpack.c.b16 %v2586, %v2579
    %v4190 = vpack.c.b16 %v2587, %v2580
    %v4191 = vpack.c.b16 %v2588, %v2581
    %v4192 = vpack.c.b16 %v2589, %v2582
    %v4193 = vpack.c.b16 %v2597, %v2590
    %v4194 = vpack.c.b16 %v2598, %v2591
    %v4195 = vpack.c.b16 %v2599, %v2592
    %v4196 = vpack.c.b16 %v2600, %v2593
    %v4197 = vpack.c.b16 %v2601, %v2594
    %v4198 = vpack.c.b16 %v2602, %v2595
    %v4199 = vpack.c.b16 %v2603, %v2596
    %v4200 = vpack.c.b16 %v2611, %v2604
    %v4201 = vpack.c.b16 %v2612, %v2605
    %v4202 = vpack.c.b16 %v2613, %v2606
    %v4203 = vpack.c.b16 %v2614, %v2607
    %v4204 = vpack.c.b16 %v2615, %v2608
    %v4205 = vpack.c.b16 %v2616, %v2609
    %v4206 = vpack.c.b16 %v2617, %v2610
    %v4207 = vpack.c.b16 %v2625, %v2618
    %v4208 = vpack.c.b16 %v2626, %v2619
    %v4209 = vpack.c.b16 %v2627, %v2620
    %v4210 = vpack.c.b16 %v2628, %v2621
    %v4211 = vpack.c.b16 %v2629, %v2622
    %v4212 = vpack.c.b16 %v2630, %v2623
    %v4213 = vpack.c.b16 %v2631, %v2624
    %v4214 = vpack.c.b16 %v2639, %v2632
    %v4215 = vpack.c.b16 %v2640, %v2633
    %v4216 = vpack.c.b16 %v2641, %v2634
    %v4217 = vpack.c.b16 %v2642, %v2635
    %v4218 = vpack.c.b16 %v2643, %v2636
    %v4219 = vpack.c.b16 %v2644, %v2637
    %v4220 = vpack.c.b16 %v2645, %v2638
    %v4221 = vpack.c.b16 %v2653, %v2646
    %v4222 = vpack.c.b16 %v2654, %v2647
    %v4223 = vpack.c.b16 %v2655, %v2648
    %v4224 = vpack.c.b16 %v2656, %v2649
    %v4225 = vpack.c.b16 %v2657, %v2650
    %v4226 = vpack.c.b16 %v2658, %v2651
    %v4227 = vpack.c.b16 %v2659, %v2652
    %v4228 = vpack.c.b16 %v2667, %v2660
    %v4229 = vpack.c.b16 %v2668, %v2661
    %v4230 = vpack.c.b16 %v2669, %v2662
    %v4231 = vpack.c.b16 %v2670, %v2663
    %v4232 = vpack.c.b16 %v2671, %v2664
    %v4233 = vpack.c.b16 %v2672, %v2665
    %v4234 = vpack.c.b16 %v2673, %v2666
    %v4235 = vpack.c.b16 %v2681, %v2674
    %v4236 = vpack.c.b16 %v2682, %v2675
    %v4237 = vpack.c.b16 %v2683, %v2676
    %v4238 = vpack.c.b16 %v2684, %v2677
    %v4239 = vpack.c.b16 %v2685, %v2678
    %v4240 = vpack.c.b16 %v2686, %v2679
    %v4241 = vpack.c.b16 %v2687, %v2680
    %v4242 = vpack.c.b16 %v2695, %v2688
    %v4243 = vpack.c.b16 %v2696, %v2689
    %v4244 = vpack.c.b16 %v2697, %v2690
    %v4245 = vpack.c.b16 %v2698, %v2691
    %v4246 = vpack.c.b16 %v2699, %v2692
    %v4247 = vpack.c.b16 %v2700, %v2693
    %v4248 = vpack.c.b16 %v2701, %v2694
    %v4249 = vpack.c.b16 %v2709, %v2702
    %v4250 = vpack.c.b16 %v2710, %v2703
    %v4251 = vpack.c.b16 %v2711, %v2704
    %v4252 = vpack.c.b16 %v2712, %v2705
    %v4253 = vpack.c.b16 %v2713, %v2706
    %v4254 = vpack.c.b16 %v2714, %v2707
    %v4255 = vpack.c.b16 %v2715, %v2708
    %v4256 = vpack.c.b16 %v2723, %v2716
    %v4257 = vpack.c.b16 %v2724, %v2717
    %v4258 = vpack.c.b16 %v2725, %v2718
    %v4259 = vpack.c.b16 %v2726, %v2719
    %v4260 = vpack.c.b16 %v2727, %v2720
    %v4261 = vpack.c.b16 %v2728, %v2721
    %v4262 = vpack.c.b16 %v2729, %v2722
    %v4263 = vpack.c.b16 %v2737, %v2730
    %v4264 = vpack.c.b16 %v2738, %v2731
    %v4265 = vpack.c.b16 %v2739, %v2732
    %v4266 = vpack.c.b16 %v2740, %v2733
    %v4267 = vpack.c.b16 %v2741, %v2734
    %v4268 = vpack.c.b16 %v2742, %v2735
    %v4269 = vpack.c.b16 %v2743, %v2736
    %v4270 = vpack.c.b16 %v2751, %v2744
    %v4271 = vpack.c.b16 %v2752, %v2745
    %v4272 = vpack.c.b16 %v2753, %v2746
    %v4273 = vpack.c.b16 %v2754, %v2747
    %v4274 = vpack.c.b16 %v2755, %v2748
    %v4275 = vpack.c.b16 %v2756, %v2749
    %v4276 = vpack.c.b16 %v2757, %v2750
    %v4277 = vpack.c.b16 %v2765, %v2758
    %v4278 = vpack.c.b16 %v2766, %v2759
    %v4279 = vpack.c.b16 %v2767, %v2760
    %v4280 = vpack.c.b16 %v2768, %v2761
    %v4281 = vpack.c.b16 %v2769, %v2762
    %v4282 = vpack.c.b16 %v2770, %v2763
    %v4283 = vpack.c.b16 %v2771, %v2764
    %v4284 = vpack.c.b16 %v2779, %v2772
    %v4285 = vpack.c.b16 %v2780, %v2773
    %v4286 = vpack.c.b16 %v2781, %v2774
    %v4287 = vpack.c.b16 %v2782, %v2775
    %v4288 = vpack.c.b16 %v2783, %v2776
    %v4289 = vpack.c.b16 %v2784, %v2777
    %v4290 = vpack.c.b16 %v2785, %v2778
    %v4291 = vpack.c.b16 %v2793, %v2786
    %v4292 = vpack.c.b16 %v2794, %v2787
    %v4293 = vpack.c.b16 %v2795, %v2788
    %v4294 = vpack.c.b16 %v2796, %v2789
    %v4295 = vpack.c.b16 %v2797, %v2790
    %v4296 = vpack.c.b16 %v2798, %v2791
    %v4297 = vpack.c.b16 %v2799, %v2792
    %v4298 = vpack.c.b16 %v2807, %v2800
    %v4299 = vpack.c.b16 %v2808, %v2801
    %v4300 = vpack.c.b16 %v2809, %v2802
    %v4301 = vpack.c.b16 %v2810, %v2803
    %v4302 = vpack.c.b16 %v2811, %v2804
    %v4303 = vpack.c.b16 %v2812, %v2805
    %v4304 = vpack.c.b16 %v2813, %v2806
    %v4305 = vpack.c.b16 %v2821, %v2814
    %v4306 = vpack.c.b16 %v2822, %v2815
    %v4307 = vpack.c.b16 %v2823, %v2816
    %v4308 = vpack.c.b16 %v2824, %v2817
    %v4309 = vpack.c.b16 %v2825, %v2818
    %v4310 = vpack.c.b16 %v2826, %v2819
    %v4311 = vpack.c.b16 %v2827, %v2820
    %v4312 = vpack.c.b16 %v2835, %v2828
    %v4313 = vpack.c.b16 %v2836, %v2829
    %v4314 = vpack.c.b16 %v2837, %v2830
    %v4315 = vpack.c.b16 %v2838, %v2831
    %v4316 = vpack.c.b16 %v2839, %v2832
    %v4317 = vpack.c.b16 %v2840, %v2833
    %v4318 = vpack.c.b16 %v2841, %v2834
    %v4319 = vpack.c.b16 %v2849, %v2842
    %v4320 = vpack.c.b16 %v2850, %v2843
    %v4321 = vpack.c.b16 %v2851, %v2844
    %v4322 = vpack.c.b16 %v2852, %v2845
    %v4323 = vpack.c.b16 %v2853, %v2846
    %v4324 = vpack.c.b16 %v2854, %v2847
    %v4325 = vpack.c.b16 %v2855, %v2848
    %v4326 = vpack.c.b16 %v2863, %v2856
    %v4327 = vpack.c.b16 %v2864, %v2857
    %v4328 = vpack.c.b16 %v2865, %v2858
    %v4329 = vpack.c.b16 %v2866, %v2859
    %v4330 = vpack.c.b16 %v2867, %v2860
    %v4331 = vpack.c.b16 %v2868, %v2861
    %v4332 = vpack.c.b16 %v2869, %v2862
    %v4333 = vpack.c.b16 %v2877, %v2870
    %v4334 = vpack.c.b16 %v2878, %v2871
    %v4335 = vpack.c.b16 %v2879, %v2872
    %v4336 = vpack.c.b16 %v2880, %v2873
    %v4337 = vpack.c.b16 %v2881, %v2874
    %v4338 = vpack.c.b16 %v2882, %v2875
    %v4339 = vpack.c.b16 %v2883, %v2876
    %v4340 = vpack.c.b16 %v2891, %v2884
    %v4341 = vpack.c.b16 %v2892, %v2885
    %v4342 = vpack.c.b16 %v2893, %v2886
    %v4343 = vpack.c.b16 %v2894, %v2887
    %v4344 = vpack.c.b16 %v2895, %v2888
    %v4345 = vpack.c.b16 %v2896, %v2889
    %v4346 = vpack.c.b16 %v2897, %v2890
    %v4347 = vpack.c.b16 %v2905, %v2898
    %v4348 = vpack.c.b16 %v2906, %v2899
    %v4349 = vpack.c.b16 %v2907, %v2900
    %v4350 = vpack.c.b16 %v2908, %v2901
    %v4351 = vpack.c.b16 %v2909, %v2902
    %v4352 = vpack.c.b16 %v2910, %v2903
    %v4353 = vpack.c.b16 %v2911, %v2904
    %v4354 = vpack.c.b16 %v2919, %v2912
    %v4355 = vpack.c.b16 %v2920, %v2913
    %v4356 = vpack.c.b16 %v2921, %v2914
    %v4357 = vpack.c.b16 %v2922, %v2915
    %v4358 = vpack.c.b16 %v2923, %v2916
    %v4359 = vpack.c.b16 %v2924, %v2917
    %v4360 = vpack.c.b16 %v2925, %v2918
    %v4361 = vpack.c.b16 %v2933, %v2926
    %v4362 = vpack.c.b16 %v2934, %v2927
    %v4363 = vpack.c.b16 %v2935, %v2928
    %v4364 = vpack.c.b16 %v2936, %v2929
    %v4365 = vpack.c.b16 %v2937, %v2930
    %v4366 = vpack.c.b16 %v2938, %v2931
    %v4367 = vpack.c.b16 %v2939, %v2932
    %v4368 = vpack.c.b16 %v2947, %v2940
    %v4369 = vpack.c.b16 %v2948, %v2941
    %v4370 = vpack.c.b16 %v2949, %v2942
    %v4371 = vpack.c.b16 %v2950, %v2943
    %v4372 = vpack.c.b16 %v2951, %v2944
    %v4373 = vpack.c.b16 %v2952, %v2945
    %v4374 = vpack.c.b16 %v2953, %v2946
    %v4375 = vpack.c.b16 %v2961, %v2954
    %v4376 = vpack.c.b16 %v2962, %v2955
    %v4377 = vpack.c.b16 %v2963, %v2956
    %v4378 = vpack.c.b16 %v2964, %v2957
    %v4379 = vpack.c.b16 %v2965, %v2958
    %v4380 = vpack.c.b16 %v2966, %v2959
    %v4381 = vpack.c.b16 %v2967, %v2960
    %v4382 = vpack.c.b16 %v2975, %v2968
    %v4383 = vpack.c.b16 %v2976, %v2969
    %v4384 = vpack.c.b16 %v2977, %v2970
    %v4385 = vpack.c.b16 %v2978, %v2971
    %v4386 = vpack.c.b16 %v2979, %v2972
    %v4387 = vpack.c.b16 %v2980, %v2973
    %v4388 = vpack.c.b16 %v2981, %v2974
    %v4389 = vpack.c.b16 %v2989, %v2982
    %v4390 = vpack.c.b16 %v2990, %v2983
    %v4391 = vpack.c.b16 %v2991, %v2984
    %v4392 = vpack.c.b16 %v2992, %v2985
    %v4393 = vpack.c.b16 %v2993, %v2986
    %v4394 = vpack.c.b16 %v2994, %v2987
    %v4395 = vpack.c.b16 %v2995, %v2988
    %v4396 = vpack.c.b16 %v3003, %v2996
    %v4397 = vpack.c.b16 %v3004, %v2997
    %v4398 = vpack.c.b16 %v3005, %v2998
    %v4399 = vpack.c.b16 %v3006, %v2999
    %v4400 = vpack.c.b16 %v3007, %v3000
    %v4401 = vpack.c.b16 %v3008, %v3001
    %v4402 = vpack.c.b16 %v3009, %v3002
    %v4403 = vpack.c.b16 %v3017, %v3010
    %v4404 = vpack.c.b16 %v3018, %v3011
    %v4405 = vpack.c.b16 %v3019, %v3012
    %v4406 = vpack.c.b16 %v3020, %v3013
    %v4407 = vpack.c.b16 %v3021, %v3014
    %v4408 = vpack.c.b16 %v3022, %v3015
    %v4409 = vpack.c.b16 %v3023, %v3016
    %v4410 = vpack.c.b16 %v3031, %v3024
    %v4411 = vpack.c.b16 %v3032, %v3025
    %v4412 = vpack.c.b16 %v3033, %v3026
    %v4413 = vpack.c.b16 %v3034, %v3027
    %v4414 = vpack.c.b16 %v3035, %v3028
    %v4415 = vpack.c.b16 %v3036, %v3029
    %v4416 = vpack.c.b16 %v3037, %v3030
    %v4417 = vpack.c.b16 %v3045, %v3038
    %v4418 = vpack.c.b16 %v3046, %v3039
    %v4419 = vpack.c.b16 %v3047, %v3040
    %v4420 = vpack.c.b16 %v3048, %v3041
    %v4421 = vpack.c.b16 %v3049, %v3042
    %v4422 = vpack.c.b16 %v3050, %v3043
    %v4423 = vpack.c.b16 %v3051, %v3044
    %v4424 = vpack.c.b16 %v3059, %v3052
    %v4425 = vpack.c.b16 %v3060, %v3053
    %v4426 = vpack.c.b16 %v3061, %v3054
    %v4427 = vpack.c.b16 %v3062, %v3055
    %v4428 = vpack.c.b16 %v3063, %v3056
    %v4429 = vpack.c.b16 %v3064, %v3057
    %v4430 = vpack.c.b16 %v3065, %v3058
    %v4431 = vpack.c.b16 %v3073, %v3066
    %v4432 = vpack.c.b16 %v3074, %v3067
    %v4433 = vpack.c.b16 %v3075, %v3068
    %v4434 = vpack.c.b16 %v3076, %v3069
    %v4435 = vpack.c.b16 %v3077, %v3070
    %v4436 = vpack.c.b16 %v3078, %v3071
    %v4437 = vpack.c.b16 %v3079, %v3072
    %v4438 = vpack.c.b16 %v3087, %v3080
    %v4439 = vpack.c.b16 %v3088, %v3081
    %v4440 = vpack.c.b16 %v3089, %v3082
    %v4441 = vpack.c.b16 %v3090, %v3083
    %v4442 = vpack.c.b16 %v3091, %v3084
    %v4443 = vpack.c.b16 %v3092, %v3085
    %v4444 = vpack.c.b16 %v3093, %v3086
    %v4445 = vpack.c.b16 %v3101, %v3094
    %v4446 = vpack.c.b16 %v3102, %v3095
    %v4447 = vpack.c.b16 %v3103, %v3096
    %v4448 = vpack.c.b16 %v3104, %v3097
    %v4449 = vpack.c.b16 %v3105, %v3098
    %v4450 = vpack.c.b16 %v3106, %v3099
    %v4451 = vpack.c.b16 %v3107, %v3100
    %v4452 = vpack.c.b16 %v3115, %v3108
    %v4453 = vpack.c.b16 %v3116, %v3109
    %v4454 = vpack.c.b16 %v3117, %v3110
    %v4455 = vpack.c.b16 %v3118, %v3111
    %v4456 = vpack.c.b16 %v3119, %v3112
    %v4457 = vpack.c.b16 %v3120, %v3113
    %v4458 = vpack.c.b16 %v3121, %v3114
    %v4459 = vpack.c.b16 %v3129, %v3122
    %v4460 = vpack.c.b16 %v3130, %v3123
    %v4461 = vpack.c.b16 %v3131, %v3124
    %v4462 = vpack.c.b16 %v3132, %v3125
    %v4463 = vpack.c.b16 %v3133, %v3126
    %v4464 = vpack.c.b16 %v3134, %v3127
    %v4465 = vpack.c.b16 %v3135, %v3128
    %v4466 = vpack.c.b16 %v3143, %v3136
    %v4467 = vpack.c.b16 %v3144, %v3137
    %v4468 = vpack.c.b16 %v3145, %v3138
    %v4469 = vpack.c.b16 %v3146, %v3139
    %v4470 = vpack.c.b16 %v3147, %v3140
    %v4471 = vpack.c.b16 %v3148, %v3141
    %v4472 = vpack.c.b16 %v3149, %v3142
    %v4473 = vpack.c.b16 %v3157, %v3150
    %v4474 = vpack.c.b16 %v3158, %v3151
    %v4475 = vpack.c.b16 %v3159, %v3152
    %v4476 = vpack.c.b16 %v3160, %v3153
    %v4477 = vpack.c.b16 %v3161, %v3154
    %v4478 = vpack.c.b16 %v3162, %v3155
    %v4479 = vpack.c.b16 %v3163, %v3156
    %v4480 = vpack.c.b16 %v3171, %v3164
    %v4481 = vpack.c.b16 %v3172, %v3165
    %v4482 = vpack.c.b16 %v3173, %v3166
    %v4483 = vpack.c.b16 %v3174, %v3167
    %v4484 = vpack.c.b16 %v3175, %v3168
    %v4485 = vpack.c.b16 %v3176, %v3169
    %v4486 = vpack.c.b16 %v3177, %v3170
    %v4487 = vpack.c.b16 %v3185, %v3178
    %v4488 = vpack.c.b16 %v3186, %v3179
    %v4489 = vpack.c.b16 %v3187, %v3180
    %v4490 = vpack.c.b16 %v3188, %v3181
    %v4491 = vpack.c.b16 %v3189, %v3182
    %v4492 = vpack.c.b16 %v3190, %v3183
    %v4493 = vpack.c.b16 %v3191, %v3184
    %v4494 = vpack.c.b16 %v3199, %v3192
    %v4495 = vpack.c.b16 %v3200, %v3193
    %v4496 = vpack.c.b16 %v3201, %v3194
    %v4497 = vpack.c.b16 %v3202, %v3195
    %v4498 = vpack.c.b16 %v3203, %v3196
    %v4499 = vpack.c.b16 %v3204, %v3197
    %v4500 = vpack.c.b16 %v3205, %v3198
    %v4501 = vpack.c.b16 %v3213, %v3206
    %v4502 = vpack.c.b16 %v3214, %v3207
    %v4503 = vpack.c.b16 %v3215, %v3208
    %v4504 = vpack.c.b16 %v3216, %v3209
    %v4505 = vpack.c.b16 %v3217, %v3210
    %v4506 = vpack.c.b16 %v3218, %v3211
    %v4507 = vpack.c.b16 %v3219, %v3212
    %v4508 = vpack.c.b16 %v3227, %v3220
    %v4509 = vpack.c.b16 %v3228, %v3221
    %v4510 = vpack.c.b16 %v3229, %v3222
    %v4511 = vpack.c.b16 %v3230, %v3223
    %v4512 = vpack.c.b16 %v3231, %v3224
    %v4513 = vpack.c.b16 %v3232, %v3225
    %v4514 = vpack.c.b16 %v3233, %v3226
    %v4515 = vpack.c.b16 %v3241, %v3234
    %v4516 = vpack.c.b16 %v3242, %v3235
    %v4517 = vpack.c.b16 %v3243, %v3236
    %v4518 = vpack.c.b16 %v3244, %v3237
    %v4519 = vpack.c.b16 %v3245, %v3238
    %v4520 = vpack.c.b16 %v3246, %v3239
    %v4521 = vpack.c.b16 %v3247, %v3240
    %v4522 = vpack.c.b16 %v3255, %v3248
    %v4523 = vpack.c.b16 %v3256, %v3249
    %v4524 = vpack.c.b16 %v3257, %v3250
    %v4525 = vpack.c.b16 %v3258, %v3251
    %v4526 = vpack.c.b16 %v3259, %v3252
    %v4527 = vpack.c.b16 %v3260, %v3253
    %v4528 = vpack.c.b16 %v3261, %v3254
    %v4529 = vpack.c.b16 %v3269, %v3262
    %v4530 = vpack.c.b16 %v3270, %v3263
    %v4531 = vpack.c.b16 %v3271, %v3264
    %v4532 = vpack.c.b16 %v3272, %v3265
    %v4533 = vpack.c.b16 %v3273, %v3266
    %v4534 = vpack.c.b16 %v3274, %v3267
    %v4535 = vpack.c.b16 %v3275, %v3268
    %v4536 = vpack.c.b16 %v3283, %v3276
    %v4537 = vpack.c.b16 %v3284, %v3277
    %v4538 = vpack.c.b16 %v3285, %v3278
    %v4539 = vpack.c.b16 %v3286, %v3279
    %v4540 = vpack.c.b16 %v3287, %v3280
    %v4541 = vpack.c.b16 %v3288, %v3281
    %v4542 = vpack.c.b16 %v3289, %v3282
    %v4543 = vpack.c.b16 %v3297, %v3290
    %v4544 = vpack.c.b16 %v3298, %v3291
    %v4545 = vpack.c.b16 %v3299, %v3292
    %v4546 = vpack.c.b16 %v3300, %v3293
    %v4547 = vpack.c.b16 %v3301, %v3294
    %v4548 = vpack.c.b16 %v3302, %v3295
    %v4549 = vpack.c.b16 %v3303, %v3296
    %v4550 = vpack.c.b16 %v3311, %v3304
    %v4551 = vpack.c.b16 %v3312, %v3305
    %v4552 = vpack.c.b16 %v3313, %v3306
    %v4553 = vpack.c.b16 %v3314, %v3307
    %v4554 = vpack.c.b16 %v3315, %v3308
    %v4555 = vpack.c.b16 %v3316, %v3309
    %v4556 = vpack.c.b16 %v3317, %v3310
    %v4557 = vpack.c.b16 %v3325, %v3318
    %v4558 = vpack.c.b16 %v3326, %v3319
    %v4559 = vpack.c.b16 %v3327, %v3320
    %v4560 = vpack.c.b16 %v3328, %v3321
    %v4561 = vpack.c.b16 %v3329, %v3322
    %v4562 = vpack.c.b16 %v3330, %v3323
    %v4563 = vpack.c.b16 %v3331, %v3324
    %v4564 = vpack.c.b16 %v3339, %v3332
    %v4565 = vpack.c.b16 %v3340, %v3333
    %v4566 = vpack.c.b16 %v3341, %v3334
    %v4567 = vpack.c.b16 %v3342, %v3335
    %v4568 = vpack.c.b16 %v3343, %v3336
    %v4569 = vpack.c.b16 %v3344, %v3337
    %v4570 = vpack.c.b16 %v3345, %v3338
    %v4571 = vpack.c.b16 %v3353, %v3346
    %v4572 = vpack.c.b16 %v3354, %v3347
    %v4573 = vpack.c.b16 %v3355, %v3348
    %v4574 = vpack.c.b16 %v3356, %v3349
    %v4575 = vpack.c.b16 %v3357, %v3350
    %v4576 = vpack.c.b16 %v3358, %v3351
    %v4577 = vpack.c.b16 %v3359, %v3352
    %v4578 = vpack.c.b16 %v3367, %v3360
    %v4579 = vpack.c.b16 %v3368, %v3361
    %v4580 = vpack.c.b16 %v3369, %v3362
    %v4581 = vpack.c.b16 %v3370, %v3363
    %v4582 = vpack.c.b16 %v3371, %v3364
    %v4583 = vpack.c.b16 %v3372, %v3365
    %v4584 = vpack.c.b16 %v3373, %v3366
    %v4585 = vpack.c.b16 %v3381, %v3374
    %v4586 = vpack.c.b16 %v3382, %v3375
    %v4587 = vpack.c.b16 %v3383, %v3376
    %v4588 = vpack.c.b16 %v3384, %v3377
    %v4589 = vpack.c.b16 %v3385, %v3378
    %v4590 = vpack.c.b16 %v3386, %v3379
    %v4591 = vpack.c.b16 %v3387, %v3380
    %v4592 = vpack.c.b16 %v3395, %v3388
    %v4593 = vpack.c.b16 %v3396, %v3389
    %v4594 = vpack.c.b16 %v3397, %v3390
    %v4595 = vpack.c.b16 %v3398, %v3391
    %v4596 = vpack.c.b16 %v3399, %v3392
    %v4597 = vpack.c.b16 %v3400, %v3393
    %v4598 = vpack.c.b16 %v3401, %v3394
    %v4599 = vpack.c.b16 %v3409, %v3402
    %v4600 = vpack.c.b16 %v3410, %v3403
    %v4601 = vpack.c.b16 %v3411, %v3404
    %v4602 = vpack.c.b16 %v3412, %v3405
    %v4603 = vpack.c.b16 %v3413, %v3406
    %v4604 = vpack.c.b16 %v3414, %v3407
    %v4605 = vpack.c.b16 %v3415, %v3408
    %v4606 = vpack.c.b16 %v3423, %v3416
    %v4607 = vpack.c.b16 %v3424, %v3417
    %v4608 = vpack.c.b16 %v3425, %v3418
    %v4609 = vpack.c.b16 %v3426, %v3419
    %v4610 = vpack.c.b16 %v3427, %v3420
    %v4611 = vpack.c.b16 %v3428, %v3421
    %v4612 = vpack.c.b16 %v3429, %v3422
    %v4613 = vpack.c.b16 %v3437, %v3430
    %v4614 = vpack.c.b16 %v3438, %v3431
    %v4615 = vpack.c.b16 %v3439, %v3432
    %v4616 = vpack.c.b16 %v3440, %v3433
    %v4617 = vpack.c.b16 %v3441, %v3434
    %v4618 = vpack.c.b16 %v3442, %v3435
    %v4619 = vpack.c.b16 %v3443, %v3436
    %v4620 = vpack.c.b16 %v3451, %v3444
    %v4621 = vpack.c.b16 %v3452, %v3445
    %v4622 = vpack.c.b16 %v3453, %v3446
    %v4623 = vpack.c.b16 %v3454, %v3447
    %v4624 = vpack.c.b16 %v3455, %v3448
    %v4625 = vpack.c.b16 %v3456, %v3449
    %v4626 = vpack.c.b16 %v3457, %v3450
    %v4627 = vpack.c.b16 %v3465, %v3458
    %v4628 = vpack.c.b16 %v3466, %v3459
    %v4629 = vpack.c.b16 %v3467, %v3460
    %v4630 = vpack.c.b16 %v3468, %v3461
    %v4631 = vpack.c.b16 %v3469, %v3462
    %v4632 = vpack.c.b16 %v3470, %v3463
    %v4633 = vpack.c.b16 %v3471, %v3464
    %v4634 = vpack.c.b16 %v3479, %v3472
    %v4635 = vpack.c.b16 %v3480, %v3473
    %v4636 = vpack.c.b16 %v3481, %v3474
    %v4637 = vpack.c.b16 %v3482, %v3475
    %v4638 = vpack.c.b16 %v3483, %v3476
    %v4639 = vpack.c.b16 %v3484, %v3477
    %v4640 = vpack.c.b16 %v3485, %v3478
    %v4641 = vpack.c.b16 %v3493, %v3486
    %v4642 = vpack.c.b16 %v3494, %v3487
    %v4643 = vpack.c.b16 %v3495, %v3488
    %v4644 = vpack.c.b16 %v3496, %v3489
    %v4645 = vpack.c.b16 %v3497, %v3490
    %v4646 = vpack.c.b16 %v3498, %v3491
    %v4647 = vpack.c.b16 %v3499, %v3492
    %v4648 = vpack.c.b16 %v3507, %v3500
    %v4649 = vpack.c.b16 %v3508, %v3501
    %v4650 = vpack.c.b16 %v3509, %v3502
    %v4651 = vpack.c.b16 %v3510, %v3503
    %v4652 = vpack.c.b16 %v3511, %v3504
    %v4653 = vpack.c.b16 %v3512, %v3505
    %v4654 = vpack.c.b16 %v3513, %v3506
    %v4655 = vpack.c.b16 %v3521, %v3514
    %v4656 = vpack.c.b16 %v3522, %v3515
    %v4657 = vpack.c.b16 %v3523, %v3516
    %v4658 = vpack.c.b16 %v3524, %v3517
    %v4659 = vpack.c.b16 %v3525, %v3518
    %v4660 = vpack.c.b16 %v3526, %v3519
    %v4661 = vpack.c.b16 %v3527, %v3520
    %v4662 = vpack.c.b16 %v3535, %v3528
    %v4663 = vpack.c.b16 %v3536, %v3529
    %v4664 = vpack.c.b16 %v3537, %v3530
    %v4665 = vpack.c.b16 %v3538, %v3531
    %v4666 = vpack.c.b16 %v3539, %v3532
    %v4667 = vpack.c.b16 %v3540, %v3533
    %v4668 = vpack.c.b16 %v3541, %v3534
    %v4669 = vpack.c.b16 %v3549, %v3542
    %v4670 = vpack.c.b16 %v3550, %v3543
    %v4671 = vpack.c.b16 %v3551, %v3544
    %v4672 = vpack.c.b16 %v3552, %v3545
    %v4673 = vpack.c.b16 %v3553, %v3546
    %v4674 = vpack.c.b16 %v3554, %v3547
    %v4675 = vpack.c.b16 %v3555, %v3548
    %v4676 = vpack.c.b16 %v3563, %v3556
    %v4677 = vpack.c.b16 %v3564, %v3557
    %v4678 = vpack.c.b16 %v3565, %v3558
    %v4679 = vpack.c.b16 %v3566, %v3559
    %v4680 = vpack.c.b16 %v3567, %v3560
    %v4681 = vpack.c.b16 %v3568, %v3561
    %v4682 = vpack.c.b16 %v3569, %v3562
    %v4683 = vpack.c.b16 %v3577, %v3570
    %v4684 = vpack.c.b16 %v3578, %v3571
    %v4685 = vpack.c.b16 %v3579, %v3572
    %v4686 = vpack.c.b16 %v3580, %v3573
    %v4687 = vpack.c.b16 %v3581, %v3574
    %v4688 = vpack.c.b16 %v3582, %v3575
    %v4689 = vpack.c.b16 %v3583, %v3576
    %v4690 = vpack.c.b16 %v3591, %v3584
    %v4691 = vpack.c.b16 %v3592, %v3585
    %v4692 = vpack.c.b16 %v3593, %v3586
    %v4693 = vpack.c.b16 %v3594, %v3587
    %v4694 = vpack.c.b16 %v3595, %v3588
    %v4695 = vpack.c.b16 %v3596, %v3589
    %v4696 = vpack.c.b16 %v3597, %v3590
    %v4697 = vpack.c.b16 %v3605, %v3598
    %v4698 = vpack.c.b16 %v3606, %v3599
    %v4699 = vpack.c.b16 %v3607, %v3600
    %v4700 = vpack.c.b16 %v3608, %v3601
    %v4701 = vpack.c.b16 %v3609, %v3602
    %v4702 = vpack.c.b16 %v3610, %v3603
    %v4703 = vpack.c.b16 %v3611, %v3604
    %v4704 = vpack.c.b16 %v3619, %v3612
    %v4705 = vpack.c.b16 %v3620, %v3613
    %v4706 = vpack.c.b16 %v3621, %v3614
    %v4707 = vpack.c.b16 %v3622, %v3615
    %v4708 = vpack.c.b16 %v3623, %v3616
    %v4709 = vpack.c.b16 %v3624, %v3617
    %v4710 = vpack.c.b16 %v3625, %v3618
    %v4711 = vpack.c.b16 %v3633, %v3626
    %v4712 = vpack.c.b16 %v3634, %v3627
    %v4713 = vpack.c.b16 %v3635, %v3628
    %v4714 = vpack.c.b16 %v3636, %v3629
    %v4715 = vpack.c.b16 %v3637, %v3630
    %v4716 = vpack.c.b16 %v3638, %v3631
    %v4717 = vpack.c.b16 %v3639, %v3632
    %v4718 = vpack.c.b16 %v3647, %v3640
    %v4719 = vpack.c.b16 %v3648, %v3641
    %v4720 = vpack.c.b16 %v3649, %v3642
    %v4721 = vpack.c.b16 %v3650, %v3643
    %v4722 = vpack.c.b16 %v3651, %v3644
    %v4723 = vpack.c.b16 %v3652, %v3645
    %v4724 = vpack.c.b16 %v3653, %v3646
    %v4725 = vpack.c.b16 %v3661, %v3654
    %v4726 = vpack.c.b16 %v3662, %v3655
    %v4727 = vpack.c.b16 %v3663, %v3656
    %v4728 = vpack.c.b16 %v3664, %v3657
    %v4729 = vpack.c.b16 %v3665, %v3658
    %v4730 = vpack.c.b16 %v3666, %v3659
    %v4731 = vpack.c.b16 %v3667, %v3660
    %v4732 = vpack.c.b16 %v3675, %v3668
    %v4733 = vpack.c.b16 %v3676, %v3669
    %v4734 = vpack.c.b16 %v3677, %v3670
    %v4735 = vpack.c.b16 %v3678, %v3671
    %v4736 = vpack.c.b16 %v3679, %v3672
    %v4737 = vpack.c.b16 %v3680, %v3673
    %v4738 = vpack.c.b16 %v3681, %v3674
    %v4739 = vpack.c.b16 %v3689, %v3682
    %v4740 = vpack.c.b16 %v3690, %v3683
    %v4741 = vpack.c.b16 %v3691, %v3684
    %v4742 = vpack.c.b16 %v3692, %v3685
    %v4743 = vpack.c.b16 %v3693, %v3686
    %v4744 = vpack.c.b16 %v3694, %v3687
    %v4745 = vpack.c.b16 %v3695, %v3688
    %v4746 = vpack.c.b16 %v3703, %v3696
    %v4747 = vpack.c.b16 %v3704, %v3697
    %v4748 = vpack.c.b16 %v3705, %v3698
    %v4749 = vpack.c.b16 %v3706, %v3699
    %v4750 = vpack.c.b16 %v3707, %v3700
    %v4751 = vpack.c.b16 %v3708, %v3701
    %v4752 = vpack.c.b16 %v3709, %v3702
    %v4753 = vpack.c.b16 %v3717, %v3710
    %v4754 = vpack.c.b16 %v3718, %v3711
    %v4755 = vpack.c.b16 %v3719, %v3712
    %v4756 = vpack.c.b16 %v3720, %v3713
    %v4757 = vpack.c.b16 %v3721, %v3714
    %v4758 = vpack.c.b16 %v3722, %v3715
    %v4759 = vpack.c.b16 %v3723, %v3716
    %v4760 = vpack.c.b16 %v3731, %v3724
    %v4761 = vpack.c.b16 %v3732, %v3725
    %v4762 = vpack.c.b16 %v3733, %v3726
    %v4763 = vpack.c.b16 %v3734, %v3727
    %v4764 = vpack.c.b16 %v3735, %v3728
    %v4765 = vpack.c.b16 %v3736, %v3729
    %v4766 = vpack.c.b16 %v3737, %v3730
    %v4767 = vpack.c.b16 %v3745, %v3738
    %v4768 = vpack.c.b16 %v3746, %v3739
    %v4769 = vpack.c.b16 %v3747, %v3740
    %v4770 = vpack.c.b16 %v3748, %v3741
    %v4771 = vpack.c.b16 %v3749, %v3742
    %v4772 = vpack.c.b16 %v3750, %v3743
    %v4773 = vpack.c.b16 %v3751, %v3744
    %v4774 = vpack.c.b16 %v3759, %v3752
    %v4775 = vpack.c.b16 %v3760, %v3753
    %v4776 = vpack.c.b16 %v3761, %v3754
    %v4777 = vpack.c.b16 %v3762, %v3755
    %v4778 = vpack.c.b16 %v3763, %v3756
    %v4779 = vpack.c.b16 %v3764, %v3757
    %v4780 = vpack.c.b16 %v3765, %v3758
    %v4781 = vpack.c.b16 %v3773, %v3766
    %v4782 = vpack.c.b16 %v3774, %v3767
    %v4783 = vpack.c.b16 %v3775, %v3768
    %v4784 = vpack.c.b16 %v3776, %v3769
    %v4785 = vpack.c.b16 %v3777, %v3770
    %v4786 = vpack.c.b16 %v3778, %v3771
    %v4787 = vpack.c.b16 %v3779, %v3772
    %v4788 = vpack.c.b16 %v3787, %v3780
    %v4789 = vpack.c.b16 %v3788, %v3781
    %v4790 = vpack.c.b16 %v3789, %v3782
    %v4791 = vpack.c.b16 %v3790, %v3783
    %v4792 = vpack.c.b16 %v3791, %v3784
    %v4793 = vpack.c.b16 %v3792, %v3785
    %v4794 = vpack.c.b16 %v3793, %v3786
    %v4795 = vpack.c.b16 %v3801, %v3794
    %v4796 = vpack.c.b16 %v3802, %v3795
    %v4797 = vpack.c.b16 %v3803, %v3796
    %v4798 = vpack.c.b16 %v3804, %v3797
    %v4799 = vpack.c.b16 %v3805, %v3798
    %v4800 = vpack.c.b16 %v3806, %v3799
    %v4801 = vpack.c.b16 %v3807, %v3800
    %v4802 = vpack.c.b16 %v3815, %v3808
    %v4803 = vpack.c.b16 %v3816, %v3809
    %v4804 = vpack.c.b16 %v3817, %v3810
    %v4805 = vpack.c.b16 %v3818, %v3811
    %v4806 = vpack.c.b16 %v3819, %v3812
    %v4807 = vpack.c.b16 %v3820, %v3813
    %v4808 = vpack.c.b16 %v3821, %v3814
    %v4809 = vpack.c.b16 %v3829, %v3822
    %v4810 = vpack.c.b16 %v3830, %v3823
    %v4811 = vpack.c.b16 %v3831, %v3824
    %v4812 = vpack.c.b16 %v3832, %v3825
    %v4813 = vpack.c.b16 %v3833, %v3826
    %v4814 = vpack.c.b16 %v3834, %v3827
    %v4815 = vpack.c.b16 %v3835, %v3828
    %v4816 = vpack.c.b16 %v3843, %v3836
    %v4817 = vpack.c.b16 %v3844, %v3837
    %v4818 = vpack.c.b16 %v3845, %v3838
    %v4819 = vpack.c.b16 %v3846, %v3839
    %v4820 = vpack.c.b16 %v3847, %v3840
    %v4821 = vpack.c.b16 %v3848, %v3841
    %v4822 = vpack.c.b16 %v3849, %v3842
    %v4823 = vpack.c.b16 %v3857, %v3850
    %v4824 = vpack.c.b16 %v3858, %v3851
    %v4825 = vpack.c.b16 %v3859, %v3852
    %v4826 = vpack.c.b16 %v3860, %v3853
    %v4827 = vpack.c.b16 %v3861, %v3854
    %v4828 = vpack.c.b16 %v3862, %v3855
    %v4829 = vpack.c.b16 %v3863, %v3856
    %v4830 = vpack.c.b16 %v3871, %v3864
    %v4831 = vpack.c.b16 %v3872, %v3865
    %v4832 = vpack.c.b16 %v3873, %v3866
    %v4833 = vpack.c.b16 %v3874, %v3867
    %v4834 = vpack.c.b16 %v3875, %v3868
    %v4835 = vpack.c.b16 %v3876, %v3869
    %v4836 = vpack.c.b16 %v3877, %v3870
    %v4837 = vpack.c.b16 %v3885, %v3878
    %v4838 = vpack.c.b16 %v3886, %v3879
    %v4839 = vpack.c.b16 %v3887, %v3880
    %v4840 = vpack.c.b16 %v3888, %v3881
    %v4841 = vpack.c.b16 %v3889, %v3882
    %v4842 = vpack.c.b16 %v3890, %v3883
    %v4843 = vpack.c.b16 %v3891, %v3884
    %v4844 = vpack.c.b16 %v3899, %v3892
    %v4845 = vpack.c.b16 %v3900, %v3893
    %v4846 = vpack.c.b16 %v3901, %v3894
    %v4847 = vpack.c.b16 %v3902, %v3895
    %v4848 = vpack.c.b16 %v3903, %v3896
    %v4849 = vpack.c.b16 %v3904, %v3897
    %v4850 = vpack.c.b16 %v3905, %v3898
    %v4851 = vpack.c.b16 %v3913, %v3906
    %v4852 = vpack.c.b16 %v3914, %v3907
    %v4853 = vpack.c.b16 %v3915, %v3908
    %v4854 = vpack.c.b16 %v3916, %v3909
    %v4855 = vpack.c.b16 %v3917, %v3910
    %v4856 = vpack.c.b16 %v3918, %v3911
    %v4857 = vpack.c.b16 %v3919, %v3912
    %v4858 = vpack.c.b16 %v3927, %v3920
    %v4859 = vpack.c.b16 %v3928, %v3921
    %v4860 = vpack.c.b16 %v3929, %v3922
    %v4861 = vpack.c.b16 %v3930, %v3923
    %v4862 = vpack.c.b16 %v3931, %v3924
    %v4863 = vpack.c.b16 %v3932, %v3925
    %v4864 = vpack.c.b16 %v3933, %v3926
    %v4865 = vpack.c.b16 %v3941, %v3934
    %v4866 = vpack.c.b16 %v3942, %v3935
    %v4867 = vpack.c.b16 %v3943, %v3936
    %v4868 = vpack.c.b16 %v3944, %v3937
    %v4869 = vpack.c.b16 %v3945, %v3938
    %v4870 = vpack.c.b16 %v3946, %v3939
    %v4871 = vpack.c.b16 %v3947, %v3940
    %v4872 = vpack.c.b16 %v3955, %v3948
    %v4873 = vpack.c.b16 %v3956, %v3949
    %v4874 = vpack.c.b16 %v3957, %v3950
    %v4875 = vpack.c.b16 %v3958, %v3951
    %v4876 = vpack.c.b16 %v3959, %v3952
    %v4877 = vpack.c.b16 %v3960, %v3953
    %v4878 = vpack.c.b16 %v3961, %v3954
    %v4879 = vpack.c.b16 %v3969, %v3962
    %v4880 = vpack.c.b16 %v3970, %v3963
    %v4881 = vpack.c.b16 %v3971, %v3964
    %v4882 = vpack.c.b16 %v3972, %v3965
    %v4883 = vpack.c.b16 %v3973, %v3966
    %v4884 = vpack.c.b16 %v3974, %v3967
    %v4885 = vpack.c.b16 %v3975, %v3968
    %v4886 = vpack.c.b16 %v3983, %v3976
    %v4887 = vpack.c.b16 %v3984, %v3977
    %v4888 = vpack.c.b16 %v3985, %v3978
    %v4889 = vpack.c.b16 %v3986, %v3979
    %v4890 = vpack.c.b16 %v3987, %v3980
    %v4891 = vpack.c.b16 %v3988, %v3981
    %v4892 = vpack.c.b16 %v3989, %v3982
    %v4893 = vpack.c.b16 %v3997, %v3990
    %v4894 = vpack.c.b16 %v3998, %v3991
    %v4895 = vpack.c.b16 %v3999, %v3992
    %v4896 = vpack.c.b16 %v4000, %v3993
    %v4897 = vpack.c.b16 %v4001, %v3994
    %v4898 = vpack.c.b16 %v4002, %v3995
    %v4899 = vpack.c.b16 %v4003, %v3996
    %5796 = vmatprep.subr.bf16.mxu0 %v4005
    %5797 = vmatpush1.bf16.msra.mxu0 %v4004
    %5798 = vmatprep.subr.bf16.mxu0 %v4012
    %5799 = vmatpush1.bf16.msra.mxu0 %v4011
    %5800 = vmatprep.subr.bf16.mxu0 %v4019
    %5801 = vmatpush1.bf16.msra.mxu0 %v4018
    %5802 = vmatprep.subr.bf16.mxu0 %v4026
    %5803 = vmatpush1.bf16.msra.mxu0 %v4025
    %5804 = vmatprep.subr.bf16.mxu0 %v4033
    %5805 = vmatpush1.bf16.msra.mxu0 %v4032
    %5806 = vmatprep.subr.bf16.mxu0 %v4040
    %5807 = vmatpush1.bf16.msra.mxu0 %v4039
    %5808 = vmatprep.subr.bf16.mxu0 %v4047
    %5809 = vmatpush1.bf16.msra.mxu0 %v4046
    %5810 = vmatprep.subr.bf16.mxu0 %v4054
    %5811 = vmatpush1.bf16.msra.mxu0 %v4053
    %5812 = vmatprep.subr.bf16.mxu0 %v4061
    %5813 = vmatpush1.bf16.msra.mxu0 %v4060
    %5814 = vmatprep.subr.bf16.mxu0 %v4068
    %5815 = vmatpush1.bf16.msra.mxu0 %v4067
    %5816 = vmatprep.subr.bf16.mxu0 %v4075
    %5817 = vmatpush1.bf16.msra.mxu0 %v4074
    %5818 = vmatprep.subr.bf16.mxu0 %v4082
    %5819 = vmatpush1.bf16.msra.mxu0 %v4081
    %5820 = vmatprep.subr.bf16.mxu0 %v4089
    %5821 = vmatpush1.bf16.msra.mxu0 %v4088
    %5822 = vmatprep.subr.bf16.mxu0 %v4096
    %5823 = vmatpush1.bf16.msra.mxu0 %v4095
    %5824 = vmatprep.subr.bf16.mxu0 %v4103
    %5825 = vmatpush1.bf16.msra.mxu0 %v4102
    %5826 = vmatprep.subr.bf16.mxu0 %v4110
    %5827 = vmatpush1.bf16.msra.mxu0 %v4109
    %5828 = vmatprep.mubr.bf16.mxu0 %v1157
    %5829 = vmatmul.mubr.bf16.gmra.mrb[0].mxu0 %v1156
    %v5830 = vpop.f32.mrb[0].mxu0
    %v5831 = vadd.f32 %v1100, %v5830
    %v5832 = vpop.f32.mrb[0].mxu0
    %v5833 = vadd.f32 %v1104, %v5832
    %v5834 = vpop.f32.mrb[0].mxu0
    %v5835 = vpop.f32.mrb[0].mxu0
    %5836 = vdwg.mxu0
    %5837 = vmatprep.subr.bf16.mxu0 %v4117
    %5838 = vmatpush1.bf16.msra.mxu0 %v4116
    %5839 = vmatprep.subr.bf16.mxu0 %v4124
    %5840 = vmatpush1.bf16.msra.mxu0 %v4123
    %5841 = vmatprep.subr.bf16.mxu0 %v4131
    %5842 = vmatpush1.bf16.msra.mxu0 %v4130
    %5843 = vmatprep.subr.bf16.mxu0 %v4138
    %5844 = vmatpush1.bf16.msra.mxu0 %v4137
    %5845 = vmatprep.subr.bf16.mxu0 %v4145
    %5846 = vmatpush1.bf16.msra.mxu0 %v4144
    %5847 = vmatprep.subr.bf16.mxu0 %v4152
    %5848 = vmatpush1.bf16.msra.mxu0 %v4151
    %5849 = vmatprep.subr.bf16.mxu0 %v4159
    %5850 = vmatpush1.bf16.msra.mxu0 %v4158
    %5851 = vmatprep.subr.bf16.mxu0 %v4166
    %5852 = vmatpush1.bf16.msra.mxu0 %v4165
    %5853 = vmatprep.subr.bf16.mxu0 %v4173
    %5854 = vmatpush1.bf16.msra.mxu0 %v4172
    %5855 = vmatprep.subr.bf16.mxu0 %v4180
    %5856 = vmatpush1.bf16.msra.mxu0 %v4179
    %5857 = vmatprep.subr.bf16.mxu0 %v4187
    %5858 = vmatpush1.bf16.msra.mxu0 %v4186
    %5859 = vmatprep.subr.bf16.mxu0 %v4194
    %5860 = vmatpush1.bf16.msra.mxu0 %v4193
    %5861 = vmatprep.subr.bf16.mxu0 %v4201
    %5862 = vmatpush1.bf16.msra.mxu0 %v4200
    %5863 = vmatprep.subr.bf16.mxu0 %v4208
    %5864 = vmatpush1.bf16.msra.mxu0 %v4207
    %5865 = vmatprep.subr.bf16.mxu0 %v4215
    %5866 = vmatpush1.bf16.msra.mxu0 %v4214
    %5867 = vmatprep.subr.bf16.mxu0 %v4222
    %5868 = vmatpush1.bf16.msra.mxu0 %v4221
    %5869 = vmatprep.mubr.bf16.mxu0 %v1159
    %5870 = vmatmul.mubr.bf16.gmra.mrb[0].mxu0 %v1158
    %v5871 = vpop.f32.mrb[0].mxu0
    %v5872 = vadd.f32 %v5831, %v5871
    %v5873 = vpop.f32.mrb[0].mxu0
    %v5874 = vadd.f32 %v5833, %v5873
    %v5875 = vpop.f32.mrb[0].mxu0
    %v5876 = vpop.f32.mrb[0].mxu0
    %5877 = vdwg.mxu0
    %5878 = vmatprep.subr.bf16.mxu0 %v4229
    %5879 = vmatpush1.bf16.msra.mxu0 %v4228
    %5880 = vmatprep.subr.bf16.mxu0 %v4236
    %5881 = vmatpush1.bf16.msra.mxu0 %v4235
    %5882 = vmatprep.subr.bf16.mxu0 %v4243
    %5883 = vmatpush1.bf16.msra.mxu0 %v4242
    %5884 = vmatprep.subr.bf16.mxu0 %v4250
    %5885 = vmatpush1.bf16.msra.mxu0 %v4249
    %5886 = vmatprep.subr.bf16.mxu0 %v4257
    %5887 = vmatpush1.bf16.msra.mxu0 %v4256
    %5888 = vmatprep.subr.bf16.mxu0 %v4264
    %5889 = vmatpush1.bf16.msra.mxu0 %v4263
    %5890 = vmatprep.subr.bf16.mxu0 %v4271
    %5891 = vmatpush1.bf16.msra.mxu0 %v4270
    %5892 = vmatprep.subr.bf16.mxu0 %v4278
    %5893 = vmatpush1.bf16.msra.mxu0 %v4277
    %5894 = vmatprep.subr.bf16.mxu0 %v4285
    %5895 = vmatpush1.bf16.msra.mxu0 %v4284
    %5896 = vmatprep.subr.bf16.mxu0 %v4292
    %5897 = vmatpush1.bf16.msra.mxu0 %v4291
    %5898 = vmatprep.subr.bf16.mxu0 %v4299
    %5899 = vmatpush1.bf16.msra.mxu0 %v4298
    %5900 = vmatprep.subr.bf16.mxu0 %v4306
    %5901 = vmatpush1.bf16.msra.mxu0 %v4305
    %5902 = vmatprep.subr.bf16.mxu0 %v4313
    %5903 = vmatpush1.bf16.msra.mxu0 %v4312
    %5904 = vmatprep.subr.bf16.mxu0 %v4320
    %5905 = vmatpush1.bf16.msra.mxu0 %v4319
    %5906 = vmatprep.subr.bf16.mxu0 %v4327
    %5907 = vmatpush1.bf16.msra.mxu0 %v4326
    %5908 = vmatprep.subr.bf16.mxu0 %v4334
    %5909 = vmatpush1.bf16.msra.mxu0 %v4333
    %5910 = vmatprep.mubr.bf16.mxu0 %v1161
    %5911 = vmatmul.mubr.bf16.gmra.mrb[0].mxu0 %v1160
    %v5912 = vpop.f32.mrb[0].mxu0
    %v5913 = vadd.f32 %v5872, %v5912
    %v5914 = vpop.f32.mrb[0].mxu0
    %v5915 = vadd.f32 %v5874, %v5914
    %v5916 = vpop.f32.mrb[0].mxu0
    %v5917 = vpop.f32.mrb[0].mxu0
    %5918 = vdwg.mxu0
    %5919 = vmatprep.subr.bf16.mxu0 %v4341
    %5920 = vmatpush1.bf16.msra.mxu0 %v4340
    %5921 = vmatprep.subr.bf16.mxu0 %v4348
    %5922 = vmatpush1.bf16.msra.mxu0 %v4347
    %5923 = vmatprep.subr.bf16.mxu0 %v4355
    %5924 = vmatpush1.bf16.msra.mxu0 %v4354
    %5925 = vmatprep.subr.bf16.mxu0 %v4362
    %5926 = vmatpush1.bf16.msra.mxu0 %v4361
    %5927 = vmatprep.subr.bf16.mxu0 %v4369
    %5928 = vmatpush1.bf16.msra.mxu0 %v4368
    %5929 = vmatprep.subr.bf16.mxu0 %v4376
    %5930 = vmatpush1.bf16.msra.mxu0 %v4375
    %5931 = vmatprep.subr.bf16.mxu0 %v4383
    %5932 = vmatpush1.bf16.msra.mxu0 %v4382
    %5933 = vmatprep.subr.bf16.mxu0 %v4390
    %5934 = vmatpush1.bf16.msra.mxu0 %v4389
    %5935 = vmatprep.subr.bf16.mxu0 %v4397
    %5936 = vmatpush1.bf16.msra.mxu0 %v4396
    %5937 = vmatprep.subr.bf16.mxu0 %v4404
    %5938 = vmatpush1.bf16.msra.mxu0 %v4403
    %5939 = vmatprep.subr.bf16.mxu0 %v4411
    %5940 = vmatpush1.bf16.msra.mxu0 %v4410
    %5941 = vmatprep.subr.bf16.mxu0 %v4418
    %5942 = vmatpush1.bf16.msra.mxu0 %v4417
    %5943 = vmatprep.subr.bf16.mxu0 %v4425
    %5944 = vmatpush1.bf16.msra.mxu0 %v4424
    %5945 = vmatprep.subr.bf16.mxu0 %v4432
    %5946 = vmatpush1.bf16.msra.mxu0 %v4431
    %5947 = vmatprep.subr.bf16.mxu0 %v4439
    %5948 = vmatpush1.bf16.msra.mxu0 %v4438
    %5949 = vmatprep.subr.bf16.mxu0 %v4446
    %5950 = vmatpush1.bf16.msra.mxu0 %v4445
    %5951 = vmatprep.mubr.bf16.mxu0 %v1163
    %5952 = vmatmul.mubr.bf16.gmra.mrb[0].mxu0 %v1162
    %v5953 = vpop.f32.mrb[0].mxu0
    %v5954 = vadd.f32 %v5913, %v5953
    %v5955 = vpop.f32.mrb[0].mxu0
    %v5956 = vadd.f32 %v5915, %v5955
    %v5957 = vpop.f32.mrb[0].mxu0
    %v5958 = vpop.f32.mrb[0].mxu0
    %5959 = vdwg.mxu0
    %5960 = vmatprep.subr.bf16.mxu0 %v4453
    %5961 = vmatpush1.bf16.msra.mxu0 %v4452
    %5962 = vmatprep.subr.bf16.mxu0 %v4460
    %5963 = vmatpush1.bf16.msra.mxu0 %v4459
    %5964 = vmatprep.subr.bf16.mxu0 %v4467
    %5965 = vmatpush1.bf16.msra.mxu0 %v4466
    %5966 = vmatprep.subr.bf16.mxu0 %v4474
    %5967 = vmatpush1.bf16.msra.mxu0 %v4473
    %5968 = vmatprep.subr.bf16.mxu0 %v4481
    %5969 = vmatpush1.bf16.msra.mxu0 %v4480
    %5970 = vmatprep.subr.bf16.mxu0 %v4488
    %5971 = vmatpush1.bf16.msra.mxu0 %v4487
    %5972 = vmatprep.subr.bf16.mxu0 %v4495
    %5973 = vmatpush1.bf16.msra.mxu0 %v4494
    %5974 = vmatprep.subr.bf16.mxu0 %v4502
    %5975 = vmatpush1.bf16.msra.mxu0 %v4501
    %5976 = vmatprep.subr.bf16.mxu0 %v4509
    %5977 = vmatpush1.bf16.msra.mxu0 %v4508
    %5978 = vmatprep.subr.bf16.mxu0 %v4516
    %5979 = vmatpush1.bf16.msra.mxu0 %v4515
    %5980 = vmatprep.subr.bf16.mxu0 %v4523
    %5981 = vmatpush1.bf16.msra.mxu0 %v4522
    %5982 = vmatprep.subr.bf16.mxu0 %v4530
    %5983 = vmatpush1.bf16.msra.mxu0 %v4529
    %5984 = vmatprep.subr.bf16.mxu0 %v4537
    %5985 = vmatpush1.bf16.msra.mxu0 %v4536
    %5986 = vmatprep.subr.bf16.mxu0 %v4544
    %5987 = vmatpush1.bf16.msra.mxu0 %v4543
    %5988 = vmatprep.subr.bf16.mxu0 %v4551
    %5989 = vmatpush1.bf16.msra.mxu0 %v4550
    %5990 = vmatprep.subr.bf16.mxu0 %v4558
    %5991 = vmatpush1.bf16.msra.mxu0 %v4557
    %5992 = vmatprep.mubr.bf16.mxu0 %v1165
    %5993 = vmatmul.mubr.bf16.gmra.mrb[0].mxu0 %v1164
    %v5994 = vpop.f32.mrb[0].mxu0
    %v5995 = vadd.f32 %v5954, %v5994
    %v5996 = vpop.f32.mrb[0].mxu0
    %v5997 = vadd.f32 %v5956, %v5996
    %v5998 = vpop.f32.mrb[0].mxu0
    %v5999 = vpop.f32.mrb[0].mxu0
    %6000 = vdwg.mxu0
    %6001 = vmatprep.subr.bf16.mxu0 %v4565
    %6002 = vmatpush1.bf16.msra.mxu0 %v4564
    %6003 = vmatprep.subr.bf16.mxu0 %v4572
    %6004 = vmatpush1.bf16.msra.mxu0 %v4571
    %6005 = vmatprep.subr.bf16.mxu0 %v4579
    %6006 = vmatpush1.bf16.msra.mxu0 %v4578
    %6007 = vmatprep.subr.bf16.mxu0 %v4586
    %6008 = vmatpush1.bf16.msra.mxu0 %v4585
    %6009 = vmatprep.subr.bf16.mxu0 %v4593
    %6010 = vmatpush1.bf16.msra.mxu0 %v4592
    %6011 = vmatprep.subr.bf16.mxu0 %v4600
    %6012 = vmatpush1.bf16.msra.mxu0 %v4599
    %6013 = vmatprep.subr.bf16.mxu0 %v4607
    %6014 = vmatpush1.bf16.msra.mxu0 %v4606
    %6015 = vmatprep.subr.bf16.mxu0 %v4614
    %6016 = vmatpush1.bf16.msra.mxu0 %v4613
    %6017 = vmatprep.subr.bf16.mxu0 %v4621
    %6018 = vmatpush1.bf16.msra.mxu0 %v4620
    %6019 = vmatprep.subr.bf16.mxu0 %v4628
    %6020 = vmatpush1.bf16.msra.mxu0 %v4627
    %6021 = vmatprep.subr.bf16.mxu0 %v4635
    %6022 = vmatpush1.bf16.msra.mxu0 %v4634
    %6023 = vmatprep.subr.bf16.mxu0 %v4642
    %6024 = vmatpush1.bf16.msra.mxu0 %v4641
    %6025 = vmatprep.subr.bf16.mxu0 %v4649
    %6026 = vmatpush1.bf16.msra.mxu0 %v4648
    %6027 = vmatprep.subr.bf16.mxu0 %v4656
    %6028 = vmatpush1.bf16.msra.mxu0 %v4655
    %6029 = vmatprep.subr.bf16.mxu0 %v4663
    %6030 = vmatpush1.bf16.msra.mxu0 %v4662
    %6031 = vmatprep.subr.bf16.mxu0 %v4670
    %6032 = vmatpush1.bf16.msra.mxu0 %v4669
    %6033 = vmatprep.mubr.bf16.mxu0 %v1167
    %6034 = vmatmul.mubr.bf16.gmra.mrb[0].mxu0 %v1166
    %v6035 = vpop.f32.mrb[0].mxu0
    %v6036 = vadd.f32 %v5995, %v6035
    %v6037 = vpop.f32.mrb[0].mxu0
    %v6038 = vadd.f32 %v5997, %v6037
    %v6039 = vpop.f32.mrb[0].mxu0
    %v6040 = vpop.f32.mrb[0].mxu0
    %6041 = vdwg.mxu0
    %6042 = vmatprep.subr.bf16.mxu0 %v4677
    %6043 = vmatpush1.bf16.msra.mxu0 %v4676
    %6044 = vmatprep.subr.bf16.mxu0 %v4684
    %6045 = vmatpush1.bf16.msra.mxu0 %v4683
    %6046 = vmatprep.subr.bf16.mxu0 %v4691
    %6047 = vmatpush1.bf16.msra.mxu0 %v4690
    %6048 = vmatprep.subr.bf16.mxu0 %v4698
    %6049 = vmatpush1.bf16.msra.mxu0 %v4697
    %6050 = vmatprep.subr.bf16.mxu0 %v4705
    %6051 = vmatpush1.bf16.msra.mxu0 %v4704
    %6052 = vmatprep.subr.bf16.mxu0 %v4712
    %6053 = vmatpush1.bf16.msra.mxu0 %v4711
    %6054 = vmatprep.subr.bf16.mxu0 %v4719
    %6055 = vmatpush1.bf16.msra.mxu0 %v4718
    %6056 = vmatprep.subr.bf16.mxu0 %v4726
    %6057 = vmatpush1.bf16.msra.mxu0 %v4725
    %6058 = vmatprep.subr.bf16.mxu0 %v4733
    %6059 = vmatpush1.bf16.msra.mxu0 %v4732
    %6060 = vmatprep.subr.bf16.mxu0 %v4740
    %6061 = vmatpush1.bf16.msra.mxu0 %v4739
    %6062 = vmatprep.subr.bf16.mxu0 %v4747
    %6063 = vmatpush1.bf16.msra.mxu0 %v4746
    %6064 = vmatprep.subr.bf16.mxu0 %v4754
    %6065 = vmatpush1.bf16.msra.mxu0 %v4753
    %6066 = vmatprep.subr.bf16.mxu0 %v4761
    %6067 = vmatpush1.bf16.msra.mxu0 %v4760
    %6068 = vmatprep.subr.bf16.mxu0 %v4768
    %6069 = vmatpush1.bf16.msra.mxu0 %v4767
    %6070 = vmatprep.subr.bf16.mxu0 %v4775
    %6071 = vmatpush1.bf16.msra.mxu0 %v4774
    %6072 = vmatprep.subr.bf16.mxu0 %v4782
    %6073 = vmatpush1.bf16.msra.mxu0 %v4781
    %6074 = vmatprep.mubr.bf16.mxu0 %v1169
    %6075 = vmatmul.mubr.bf16.gmra.mrb[0].mxu0 %v1168
    %v6076 = vpop.f32.mrb[0].mxu0
    %v6077 = vadd.f32 %v6036, %v6076
    %v6078 = vpop.f32.mrb[0].mxu0
    %v6079 = vadd.f32 %v6038, %v6078
    %v6080 = vpop.f32.mrb[0].mxu0
    %v6081 = vpop.f32.mrb[0].mxu0
    %6082 = vdwg.mxu0
    %6083 = vmatprep.subr.bf16.mxu0 %v4789
    %6084 = vmatpush1.bf16.msra.mxu0 %v4788
    %6085 = vmatprep.subr.bf16.mxu0 %v4796
    %6086 = vmatpush1.bf16.msra.mxu0 %v4795
    %6087 = vmatprep.subr.bf16.mxu0 %v4803
    %6088 = vmatpush1.bf16.msra.mxu0 %v4802
    %6089 = vmatprep.subr.bf16.mxu0 %v4810
    %6090 = vmatpush1.bf16.msra.mxu0 %v4809
    %6091 = vmatprep.subr.bf16.mxu0 %v4817
    %6092 = vmatpush1.bf16.msra.mxu0 %v4816
    %6093 = vmatprep.subr.bf16.mxu0 %v4824
    %6094 = vmatpush1.bf16.msra.mxu0 %v4823
    %6095 = vmatprep.subr.bf16.mxu0 %v4831
    %6096 = vmatpush1.bf16.msra.mxu0 %v4830
    %6097 = vmatprep.subr.bf16.mxu0 %v4838
    %6098 = vmatpush1.bf16.msra.mxu0 %v4837
    %6099 = vmatprep.subr.bf16.mxu0 %v4845
    %6100 = vmatpush1.bf16.msra.mxu0 %v4844
    %6101 = vmatprep.subr.bf16.mxu0 %v4852
    %6102 = vmatpush1.bf16.msra.mxu0 %v4851
    %6103 = vmatprep.subr.bf16.mxu0 %v4859
    %6104 = vmatpush1.bf16.msra.mxu0 %v4858
    %6105 = vmatprep.subr.bf16.mxu0 %v4866
    %6106 = vmatpush1.bf16.msra.mxu0 %v4865
    %6107 = vmatprep.subr.bf16.mxu0 %v4873
    %6108 = vmatpush1.bf16.msra.mxu0 %v4872
    %6109 = vmatprep.subr.bf16.mxu0 %v4880
    %6110 = vmatpush1.bf16.msra.mxu0 %v4879
    %6111 = vmatprep.subr.bf16.mxu0 %v4887
    %6112 = vmatpush1.bf16.msra.mxu0 %v4886
    %6113 = vmatprep.subr.bf16.mxu0 %v4894
    %6114 = vmatpush1.bf16.msra.mxu0 %v4893
    %6115 = vmatprep.mubr.bf16.mxu0 %v1171
    %6116 = vmatmul.mubr.bf16.gmra.mrb[0].mxu0 %v1170
    %v6117 = vpop.f32.mrb[0].mxu0
    %v6118 = vadd.f32 %v6077, %v6117
    %v6119 = vpop.f32.mrb[0].mxu0
    %v6120 = vadd.f32 %v6079, %v6119
    %v6121 = vpop.f32.mrb[0].mxu0
    %v6122 = vpop.f32.mrb[0].mxu0
    %6123 = vdwg.mxu0
    %6124 = vmatprep.subr.bf16.mxu0 %v4007
    %6125 = vmatpush1.bf16.msra.mxu0 %v4006
    %6126 = vmatprep.subr.bf16.mxu0 %v4014
    %6127 = vmatpush1.bf16.msra.mxu0 %v4013
    %6128 = vmatprep.subr.bf16.mxu0 %v4021
    %6129 = vmatpush1.bf16.msra.mxu0 %v4020
    %6130 = vmatprep.subr.bf16.mxu0 %v4028
    %6131 = vmatpush1.bf16.msra.mxu0 %v4027
    %6132 = vmatprep.subr.bf16.mxu0 %v4035
    %6133 = vmatpush1.bf16.msra.mxu0 %v4034
    %6134 = vmatprep.subr.bf16.mxu0 %v4042
    %6135 = vmatpush1.bf16.msra.mxu0 %v4041
    %6136 = vmatprep.subr.bf16.mxu0 %v4049
    %6137 = vmatpush1.bf16.msra.mxu0 %v4048
    %6138 = vmatprep.subr.bf16.mxu0 %v4056
    %6139 = vmatpush1.bf16.msra.mxu0 %v4055
    %6140 = vmatprep.subr.bf16.mxu0 %v4063
    %6141 = vmatpush1.bf16.msra.mxu0 %v4062
    %6142 = vmatprep.subr.bf16.mxu0 %v4070
    %6143 = vmatpush1.bf16.msra.mxu0 %v4069
    %6144 = vmatprep.subr.bf16.mxu0 %v4077
    %6145 = vmatpush1.bf16.msra.mxu0 %v4076
    %6146 = vmatprep.subr.bf16.mxu0 %v4084
    %6147 = vmatpush1.bf16.msra.mxu0 %v4083
    %6148 = vmatprep.subr.bf16.mxu0 %v4091
    %6149 = vmatpush1.bf16.msra.mxu0 %v4090
    %6150 = vmatprep.subr.bf16.mxu0 %v4098
    %6151 = vmatpush1.bf16.msra.mxu0 %v4097
    %6152 = vmatprep.subr.bf16.mxu0 %v4105
    %6153 = vmatpush1.bf16.msra.mxu0 %v4104
    %6154 = vmatprep.subr.bf16.mxu0 %v4112
    %6155 = vmatpush1.bf16.msra.mxu0 %v4111
    %6156 = vmatprep.mubr.bf16.mxu0 %v1157
    %6157 = vmatmul.mubr.bf16.gmra.mrb[0].mxu0 %v1156
    %v6158 = vpop.f32.mrb[0].mxu0
    %v6159 = vadd.f32 %v1108, %v6158
    %v6160 = vpop.f32.mrb[0].mxu0
    %v6161 = vadd.f32 %v1112, %v6160
    %v6162 = vpop.f32.mrb[0].mxu0
    %v6163 = vpop.f32.mrb[0].mxu0
    %6164 = vdwg.mxu0
    %6165 = vmatprep.subr.bf16.mxu0 %v4119
    %6166 = vmatpush1.bf16.msra.mxu0 %v4118
    %6167 = vmatprep.subr.bf16.mxu0 %v4126
    %6168 = vmatpush1.bf16.msra.mxu0 %v4125
    %6169 = vmatprep.subr.bf16.mxu0 %v4133
    %6170 = vmatpush1.bf16.msra.mxu0 %v4132
    %6171 = vmatprep.subr.bf16.mxu0 %v4140
    %6172 = vmatpush1.bf16.msra.mxu0 %v4139
    %6173 = vmatprep.subr.bf16.mxu0 %v4147
    %6174 = vmatpush1.bf16.msra.mxu0 %v4146
    %6175 = vmatprep.subr.bf16.mxu0 %v4154
    %6176 = vmatpush1.bf16.msra.mxu0 %v4153
    %6177 = vmatprep.subr.bf16.mxu0 %v4161
    %6178 = vmatpush1.bf16.msra.mxu0 %v4160
    %6179 = vmatprep.subr.bf16.mxu0 %v4168
    %6180 = vmatpush1.bf16.msra.mxu0 %v4167
    %6181 = vmatprep.subr.bf16.mxu0 %v4175
    %6182 = vmatpush1.bf16.msra.mxu0 %v4174
    %6183 = vmatprep.subr.bf16.mxu0 %v4182
    %6184 = vmatpush1.bf16.msra.mxu0 %v4181
    %6185 = vmatprep.subr.bf16.mxu0 %v4189
    %6186 = vmatpush1.bf16.msra.mxu0 %v4188
    %6187 = vmatprep.subr.bf16.mxu0 %v4196
    %6188 = vmatpush1.bf16.msra.mxu0 %v4195
    %6189 = vmatprep.subr.bf16.mxu0 %v4203
    %6190 = vmatpush1.bf16.msra.mxu0 %v4202
    %6191 = vmatprep.subr.bf16.mxu0 %v4210
    %6192 = vmatpush1.bf16.msra.mxu0 %v4209
    %6193 = vmatprep.subr.bf16.mxu0 %v4217
    %6194 = vmatpush1.bf16.msra.mxu0 %v4216
    %6195 = vmatprep.subr.bf16.mxu0 %v4224
    %6196 = vmatpush1.bf16.msra.mxu0 %v4223
    %6197 = vmatprep.mubr.bf16.mxu0 %v1159
    %6198 = vmatmul.mubr.bf16.gmra.mrb[0].mxu0 %v1158
    %v6199 = vpop.f32.mrb[0].mxu0
    %v6200 = vadd.f32 %v6159, %v6199
    %v6201 = vpop.f32.mrb[0].mxu0
    %v6202 = vadd.f32 %v6161, %v6201
    %v6203 = vpop.f32.mrb[0].mxu0
    %v6204 = vpop.f32.mrb[0].mxu0
    %6205 = vdwg.mxu0
    %6206 = vmatprep.subr.bf16.mxu0 %v4231
    %6207 = vmatpush1.bf16.msra.mxu0 %v4230
    %6208 = vmatprep.subr.bf16.mxu0 %v4238
    %6209 = vmatpush1.bf16.msra.mxu0 %v4237
    %6210 = vmatprep.subr.bf16.mxu0 %v4245
    %6211 = vmatpush1.bf16.msra.mxu0 %v4244
    %6212 = vmatprep.subr.bf16.mxu0 %v4252
    %6213 = vmatpush1.bf16.msra.mxu0 %v4251
    %6214 = vmatprep.subr.bf16.mxu0 %v4259
    %6215 = vmatpush1.bf16.msra.mxu0 %v4258
    %6216 = vmatprep.subr.bf16.mxu0 %v4266
    %6217 = vmatpush1.bf16.msra.mxu0 %v4265
    %6218 = vmatprep.subr.bf16.mxu0 %v4273
    %6219 = vmatpush1.bf16.msra.mxu0 %v4272
    %6220 = vmatprep.subr.bf16.mxu0 %v4280
    %6221 = vmatpush1.bf16.msra.mxu0 %v4279
    %6222 = vmatprep.subr.bf16.mxu0 %v4287
    %6223 = vmatpush1.bf16.msra.mxu0 %v4286
    %6224 = vmatprep.subr.bf16.mxu0 %v4294
    %6225 = vmatpush1.bf16.msra.mxu0 %v4293
    %6226 = vmatprep.subr.bf16.mxu0 %v4301
    %6227 = vmatpush1.bf16.msra.mxu0 %v4300
    %6228 = vmatprep.subr.bf16.mxu0 %v4308
    %6229 = vmatpush1.bf16.msra.mxu0 %v4307
    %6230 = vmatprep.subr.bf16.mxu0 %v4315
    %6231 = vmatpush1.bf16.msra.mxu0 %v4314
    %6232 = vmatprep.subr.bf16.mxu0 %v4322
    %6233 = vmatpush1.bf16.msra.mxu0 %v4321
    %6234 = vmatprep.subr.bf16.mxu0 %v4329
    %6235 = vmatpush1.bf16.msra.mxu0 %v4328
    %6236 = vmatprep.subr.bf16.mxu0 %v4336
    %6237 = vmatpush1.bf16.msra.mxu0 %v4335
    %6238 = vmatprep.mubr.bf16.mxu0 %v1161
    %6239 = vmatmul.mubr.bf16.gmra.mrb[0].mxu0 %v1160
    %v6240 = vpop.f32.mrb[0].mxu0
    %v6241 = vadd.f32 %v6200, %v6240
    %v6242 = vpop.f32.mrb[0].mxu0
    %v6243 = vadd.f32 %v6202, %v6242
    %v6244 = vpop.f32.mrb[0].mxu0
    %v6245 = vpop.f32.mrb[0].mxu0
    %6246 = vdwg.mxu0
    %6247 = vmatprep.subr.bf16.mxu0 %v4343
    %6248 = vmatpush1.bf16.msra.mxu0 %v4342
    %6249 = vmatprep.subr.bf16.mxu0 %v4350
    %6250 = vmatpush1.bf16.msra.mxu0 %v4349
    %6251 = vmatprep.subr.bf16.mxu0 %v4357
    %6252 = vmatpush1.bf16.msra.mxu0 %v4356
    %6253 = vmatprep.subr.bf16.mxu0 %v4364
    %6254 = vmatpush1.bf16.msra.mxu0 %v4363
    %6255 = vmatprep.subr.bf16.mxu0 %v4371
    %6256 = vmatpush1.bf16.msra.mxu0 %v4370
    %6257 = vmatprep.subr.bf16.mxu0 %v4378
    %6258 = vmatpush1.bf16.msra.mxu0 %v4377
    %6259 = vmatprep.subr.bf16.mxu0 %v4385
    %6260 = vmatpush1.bf16.msra.mxu0 %v4384
    %6261 = vmatprep.subr.bf16.mxu0 %v4392
    %6262 = vmatpush1.bf16.msra.mxu0 %v4391
    %6263 = vmatprep.subr.bf16.mxu0 %v4399
    %6264 = vmatpush1.bf16.msra.mxu0 %v4398
    %6265 = vmatprep.subr.bf16.mxu0 %v4406
    %6266 = vmatpush1.bf16.msra.mxu0 %v4405
    %6267 = vmatprep.subr.bf16.mxu0 %v4413
    %6268 = vmatpush1.bf16.msra.mxu0 %v4412
    %6269 = vmatprep.subr.bf16.mxu0 %v4420
    %6270 = vmatpush1.bf16.msra.mxu0 %v4419
    %6271 = vmatprep.subr.bf16.mxu0 %v4427
    %6272 = vmatpush1.bf16.msra.mxu0 %v4426
    %6273 = vmatprep.subr.bf16.mxu0 %v4434
    %6274 = vmatpush1.bf16.msra.mxu0 %v4433
    %6275 = vmatprep.subr.bf16.mxu0 %v4441
    %6276 = vmatpush1.bf16.msra.mxu0 %v4440
    %6277 = vmatprep.subr.bf16.mxu0 %v4448
    %6278 = vmatpush1.bf16.msra.mxu0 %v4447
    %6279 = vmatprep.mubr.bf16.mxu0 %v1163
    %6280 = vmatmul.mubr.bf16.gmra.mrb[0].mxu0 %v1162
    %v6281 = vpop.f32.mrb[0].mxu0
    %v6282 = vadd.f32 %v6241, %v6281
    %v6283 = vpop.f32.mrb[0].mxu0
    %v6284 = vadd.f32 %v6243, %v6283
    %v6285 = vpop.f32.mrb[0].mxu0
    %v6286 = vpop.f32.mrb[0].mxu0
    %6287 = vdwg.mxu0
    %6288 = vmatprep.subr.bf16.mxu0 %v4455
    %6289 = vmatpush1.bf16.msra.mxu0 %v4454
    %6290 = vmatprep.subr.bf16.mxu0 %v4462
    %6291 = vmatpush1.bf16.msra.mxu0 %v4461
    %6292 = vmatprep.subr.bf16.mxu0 %v4469
    %6293 = vmatpush1.bf16.msra.mxu0 %v4468
    %6294 = vmatprep.subr.bf16.mxu0 %v4476
    %6295 = vmatpush1.bf16.msra.mxu0 %v4475
    %6296 = vmatprep.subr.bf16.mxu0 %v4483
    %6297 = vmatpush1.bf16.msra.mxu0 %v4482
    %6298 = vmatprep.subr.bf16.mxu0 %v4490
    %6299 = vmatpush1.bf16.msra.mxu0 %v4489
    %6300 = vmatprep.subr.bf16.mxu0 %v4497
    %6301 = vmatpush1.bf16.msra.mxu0 %v4496
    %6302 = vmatprep.subr.bf16.mxu0 %v4504
    %6303 = vmatpush1.bf16.msra.mxu0 %v4503
    %6304 = vmatprep.subr.bf16.mxu0 %v4511
    %6305 = vmatpush1.bf16.msra.mxu0 %v4510
    %6306 = vmatprep.subr.bf16.mxu0 %v4518
    %6307 = vmatpush1.bf16.msra.mxu0 %v4517
    %6308 = vmatprep.subr.bf16.mxu0 %v4525
    %6309 = vmatpush1.bf16.msra.mxu0 %v4524
    %6310 = vmatprep.subr.bf16.mxu0 %v4532
    %6311 = vmatpush1.bf16.msra.mxu0 %v4531
    %6312 = vmatprep.subr.bf16.mxu0 %v4539
    %6313 = vmatpush1.bf16.msra.mxu0 %v4538
    %6314 = vmatprep.subr.bf16.mxu0 %v4546
    %6315 = vmatpush1.bf16.msra.mxu0 %v4545
    %6316 = vmatprep.subr.bf16.mxu0 %v4553
    %6317 = vmatpush1.bf16.msra.mxu0 %v4552
    %6318 = vmatprep.subr.bf16.mxu0 %v4560
    %6319 = vmatpush1.bf16.msra.mxu0 %v4559
    %6320 = vmatprep.mubr.bf16.mxu0 %v1165
    %6321 = vmatmul.mubr.bf16.gmra.mrb[0].mxu0 %v1164
    %v6322 = vpop.f32.mrb[0].mxu0
    %v6323 = vadd.f32 %v6282, %v6322
    %v6324 = vpop.f32.mrb[0].mxu0
    %v6325 = vadd.f32 %v6284, %v6324
    %v6326 = vpop.f32.mrb[0].mxu0
    %v6327 = vpop.f32.mrb[0].mxu0
    %6328 = vdwg.mxu0
    %6329 = vmatprep.subr.bf16.mxu0 %v4567
    %6330 = vmatpush1.bf16.msra.mxu0 %v4566
    %6331 = vmatprep.subr.bf16.mxu0 %v4574
    %6332 = vmatpush1.bf16.msra.mxu0 %v4573
    %6333 = vmatprep.subr.bf16.mxu0 %v4581
    %6334 = vmatpush1.bf16.msra.mxu0 %v4580
    %6335 = vmatprep.subr.bf16.mxu0 %v4588
    %6336 = vmatpush1.bf16.msra.mxu0 %v4587
    %6337 = vmatprep.subr.bf16.mxu0 %v4595
    %6338 = vmatpush1.bf16.msra.mxu0 %v4594
    %6339 = vmatprep.subr.bf16.mxu0 %v4602
    %6340 = vmatpush1.bf16.msra.mxu0 %v4601
    %6341 = vmatprep.subr.bf16.mxu0 %v4609
    %6342 = vmatpush1.bf16.msra.mxu0 %v4608
    %6343 = vmatprep.subr.bf16.mxu0 %v4616
    %6344 = vmatpush1.bf16.msra.mxu0 %v4615
    %6345 = vmatprep.subr.bf16.mxu0 %v4623
    %6346 = vmatpush1.bf16.msra.mxu0 %v4622
    %6347 = vmatprep.subr.bf16.mxu0 %v4630
    %6348 = vmatpush1.bf16.msra.mxu0 %v4629
    %6349 = vmatprep.subr.bf16.mxu0 %v4637
    %6350 = vmatpush1.bf16.msra.mxu0 %v4636
    %6351 = vmatprep.subr.bf16.mxu0 %v4644
    %6352 = vmatpush1.bf16.msra.mxu0 %v4643
    %6353 = vmatprep.subr.bf16.mxu0 %v4651
    %6354 = vmatpush1.bf16.msra.mxu0 %v4650
    %6355 = vmatprep.subr.bf16.mxu0 %v4658
    %6356 = vmatpush1.bf16.msra.mxu0 %v4657
    %6357 = vmatprep.subr.bf16.mxu0 %v4665
    %6358 = vmatpush1.bf16.msra.mxu0 %v4664
    %6359 = vmatprep.subr.bf16.mxu0 %v4672
    %6360 = vmatpush1.bf16.msra.mxu0 %v4671
    %6361 = vmatprep.mubr.bf16.mxu0 %v1167
    %6362 = vmatmul.mubr.bf16.gmra.mrb[0].mxu0 %v1166
    %v6363 = vpop.f32.mrb[0].mxu0
    %v6364 = vadd.f32 %v6323, %v6363
    %v6365 = vpop.f32.mrb[0].mxu0
    %v6366 = vadd.f32 %v6325, %v6365
    %v6367 = vpop.f32.mrb[0].mxu0
    %v6368 = vpop.f32.mrb[0].mxu0
    %6369 = vdwg.mxu0
    %6370 = vmatprep.subr.bf16.mxu0 %v4679
    %6371 = vmatpush1.bf16.msra.mxu0 %v4678
    %6372 = vmatprep.subr.bf16.mxu0 %v4686
    %6373 = vmatpush1.bf16.msra.mxu0 %v4685
    %6374 = vmatprep.subr.bf16.mxu0 %v4693
    %6375 = vmatpush1.bf16.msra.mxu0 %v4692
    %6376 = vmatprep.subr.bf16.mxu0 %v4700
    %6377 = vmatpush1.bf16.msra.mxu0 %v4699
    %6378 = vmatprep.subr.bf16.mxu0 %v4707
    %6379 = vmatpush1.bf16.msra.mxu0 %v4706
    %6380 = vmatprep.subr.bf16.mxu0 %v4714
    %6381 = vmatpush1.bf16.msra.mxu0 %v4713
    %6382 = vmatprep.subr.bf16.mxu0 %v4721
    %6383 = vmatpush1.bf16.msra.mxu0 %v4720
    %6384 = vmatprep.subr.bf16.mxu0 %v4728
    %6385 = vmatpush1.bf16.msra.mxu0 %v4727
    %6386 = vmatprep.subr.bf16.mxu0 %v4735
    %6387 = vmatpush1.bf16.msra.mxu0 %v4734
    %6388 = vmatprep.subr.bf16.mxu0 %v4742
    %6389 = vmatpush1.bf16.msra.mxu0 %v4741
    %6390 = vmatprep.subr.bf16.mxu0 %v4749
    %6391 = vmatpush1.bf16.msra.mxu0 %v4748
    %6392 = vmatprep.subr.bf16.mxu0 %v4756
    %6393 = vmatpush1.bf16.msra.mxu0 %v4755
    %6394 = vmatprep.subr.bf16.mxu0 %v4763
    %6395 = vmatpush1.bf16.msra.mxu0 %v4762
    %6396 = vmatprep.subr.bf16.mxu0 %v4770
    %6397 = vmatpush1.bf16.msra.mxu0 %v4769
    %6398 = vmatprep.subr.bf16.mxu0 %v4777
    %6399 = vmatpush1.bf16.msra.mxu0 %v4776
    %6400 = vmatprep.subr.bf16.mxu0 %v4784
    %6401 = vmatpush1.bf16.msra.mxu0 %v4783
    %6402 = vmatprep.mubr.bf16.mxu0 %v1169
    %6403 = vmatmul.mubr.bf16.gmra.mrb[0].mxu0 %v1168
    %v6404 = vpop.f32.mrb[0].mxu0
    %v6405 = vadd.f32 %v6364, %v6404
    %v6406 = vpop.f32.mrb[0].mxu0
    %v6407 = vadd.f32 %v6366, %v6406
    %v6408 = vpop.f32.mrb[0].mxu0
    %v6409 = vpop.f32.mrb[0].mxu0
    %6410 = vdwg.mxu0
    %6411 = vmatprep.subr.bf16.mxu0 %v4791
    %6412 = vmatpush1.bf16.msra.mxu0 %v4790
    %6413 = vmatprep.subr.bf16.mxu0 %v4798
    %6414 = vmatpush1.bf16.msra.mxu0 %v4797
    %6415 = vmatprep.subr.bf16.mxu0 %v4805
    %6416 = vmatpush1.bf16.msra.mxu0 %v4804
    %6417 = vmatprep.subr.bf16.mxu0 %v4812
    %6418 = vmatpush1.bf16.msra.mxu0 %v4811
    %6419 = vmatprep.subr.bf16.mxu0 %v4819
    %6420 = vmatpush1.bf16.msra.mxu0 %v4818
    %6421 = vmatprep.subr.bf16.mxu0 %v4826
    %6422 = vmatpush1.bf16.msra.mxu0 %v4825
    %6423 = vmatprep.subr.bf16.mxu0 %v4833
    %6424 = vmatpush1.bf16.msra.mxu0 %v4832
    %6425 = vmatprep.subr.bf16.mxu0 %v4840
    %6426 = vmatpush1.bf16.msra.mxu0 %v4839
    %6427 = vmatprep.subr.bf16.mxu0 %v4847
    %6428 = vmatpush1.bf16.msra.mxu0 %v4846
    %6429 = vmatprep.subr.bf16.mxu0 %v4854
    %6430 = vmatpush1.bf16.msra.mxu0 %v4853
    %6431 = vmatprep.subr.bf16.mxu0 %v4861
    %6432 = vmatpush1.bf16.msra.mxu0 %v4860
    %6433 = vmatprep.subr.bf16.mxu0 %v4868
    %6434 = vmatpush1.bf16.msra.mxu0 %v4867
    %6435 = vmatprep.subr.bf16.mxu0 %v4875
    %6436 = vmatpush1.bf16.msra.mxu0 %v4874
    %6437 = vmatprep.subr.bf16.mxu0 %v4882
    %6438 = vmatpush1.bf16.msra.mxu0 %v4881
    %6439 = vmatprep.subr.bf16.mxu0 %v4889
    %6440 = vmatpush1.bf16.msra.mxu0 %v4888
    %6441 = vmatprep.subr.bf16.mxu0 %v4896
    %6442 = vmatpush1.bf16.msra.mxu0 %v4895
    %6443 = vmatprep.mubr.bf16.mxu0 %v1171
    %6444 = vmatmul.mubr.bf16.gmra.mrb[0].mxu0 %v1170
    %v6445 = vpop.f32.mrb[0].mxu0
    %v6446 = vadd.f32 %v6405, %v6445
    %v6447 = vpop.f32.mrb[0].mxu0
    %v6448 = vadd.f32 %v6407, %v6447
    %v6449 = vpop.f32.mrb[0].mxu0
    %v6450 = vpop.f32.mrb[0].mxu0
    %6451 = vdwg.mxu0
    %6452 = vmatprep.subr.bf16.mxu0 %v4009
    %6453 = vmatpush1.bf16.msra.mxu0 %v4008
    %6454 = vmatprep.subr.bf16.mxu0 %v4016
    %6455 = vmatpush1.bf16.msra.mxu0 %v4015
    %6456 = vmatprep.subr.bf16.mxu0 %v4023
    %6457 = vmatpush1.bf16.msra.mxu0 %v4022
    %6458 = vmatprep.subr.bf16.mxu0 %v4030
    %6459 = vmatpush1.bf16.msra.mxu0 %v4029
    %6460 = vmatprep.subr.bf16.mxu0 %v4037
    %6461 = vmatpush1.bf16.msra.mxu0 %v4036
    %6462 = vmatprep.subr.bf16.mxu0 %v4044
    %6463 = vmatpush1.bf16.msra.mxu0 %v4043
    %6464 = vmatprep.subr.bf16.mxu0 %v4051
    %6465 = vmatpush1.bf16.msra.mxu0 %v4050
    %6466 = vmatprep.subr.bf16.mxu0 %v4058
    %6467 = vmatpush1.bf16.msra.mxu0 %v4057
    %6468 = vmatprep.subr.bf16.mxu0 %v4065
    %6469 = vmatpush1.bf16.msra.mxu0 %v4064
    %6470 = vmatprep.subr.bf16.mxu0 %v4072
    %6471 = vmatpush1.bf16.msra.mxu0 %v4071
    %6472 = vmatprep.subr.bf16.mxu0 %v4079
    %6473 = vmatpush1.bf16.msra.mxu0 %v4078
    %6474 = vmatprep.subr.bf16.mxu0 %v4086
    %6475 = vmatpush1.bf16.msra.mxu0 %v4085
    %6476 = vmatprep.subr.bf16.mxu0 %v4093
    %6477 = vmatpush1.bf16.msra.mxu0 %v4092
    %6478 = vmatprep.subr.bf16.mxu0 %v4100
    %6479 = vmatpush1.bf16.msra.mxu0 %v4099
    %6480 = vmatprep.subr.bf16.mxu0 %v4107
    %6481 = vmatpush1.bf16.msra.mxu0 %v4106
    %6482 = vmatprep.subr.bf16.mxu0 %v4114
    %6483 = vmatpush1.bf16.msra.mxu0 %v4113
    %6484 = vmatprep.mubr.bf16.mxu0 %v1157
    %6485 = vmatmul.mubr.bf16.gmra.mrb[0].mxu0 %v1156
    %v6486 = vpop.f32.mrb[0].mxu0
    %v6487 = vadd.f32 %v1116, %v6486
    %v6488 = vpop.f32.mrb[0].mxu0
    %v6489 = vadd.f32 %v1120, %v6488
    %v6490 = vpop.f32.mrb[0].mxu0
    %v6491 = vpop.f32.mrb[0].mxu0
    %6492 = vdwg.mxu0
    %6493 = vmatprep.subr.bf16.mxu0 %v4121
    %6494 = vmatpush1.bf16.msra.mxu0 %v4120
    %6495 = vmatprep.subr.bf16.mxu0 %v4128
    %6496 = vmatpush1.bf16.msra.mxu0 %v4127
    %6497 = vmatprep.subr.bf16.mxu0 %v4135
    %6498 = vmatpush1.bf16.msra.mxu0 %v4134
    %6499 = vmatprep.subr.bf16.mxu0 %v4142
    %6500 = vmatpush1.bf16.msra.mxu0 %v4141
    %6501 = vmatprep.subr.bf16.mxu0 %v4149
    %6502 = vmatpush1.bf16.msra.mxu0 %v4148
    %6503 = vmatprep.subr.bf16.mxu0 %v4156
    %6504 = vmatpush1.bf16.msra.mxu0 %v4155
    %6505 = vmatprep.subr.bf16.mxu0 %v4163
    %6506 = vmatpush1.bf16.msra.mxu0 %v4162
    %6507 = vmatprep.subr.bf16.mxu0 %v4170
    %6508 = vmatpush1.bf16.msra.mxu0 %v4169
    %6509 = vmatprep.subr.bf16.mxu0 %v4177
    %6510 = vmatpush1.bf16.msra.mxu0 %v4176
    %6511 = vmatprep.subr.bf16.mxu0 %v4184
    %6512 = vmatpush1.bf16.msra.mxu0 %v4183
    %6513 = vmatprep.subr.bf16.mxu0 %v4191
    %6514 = vmatpush1.bf16.msra.mxu0 %v4190
    %6515 = vmatprep.subr.bf16.mxu0 %v4198
    %6516 = vmatpush1.bf16.msra.mxu0 %v4197
    %6517 = vmatprep.subr.bf16.mxu0 %v4205
    %6518 = vmatpush1.bf16.msra.mxu0 %v4204
    %6519 = vmatprep.subr.bf16.mxu0 %v4212
    %6520 = vmatpush1.bf16.msra.mxu0 %v4211
    %6521 = vmatprep.subr.bf16.mxu0 %v4219
    %6522 = vmatpush1.bf16.msra.mxu0 %v4218
    %6523 = vmatprep.subr.bf16.mxu0 %v4226
    %6524 = vmatpush1.bf16.msra.mxu0 %v4225
    %6525 = vmatprep.mubr.bf16.mxu0 %v1159
    %6526 = vmatmul.mubr.bf16.gmra.mrb[0].mxu0 %v1158
    %v6527 = vpop.f32.mrb[0].mxu0
    %v6528 = vadd.f32 %v6487, %v6527
    %v6529 = vpop.f32.mrb[0].mxu0
    %v6530 = vadd.f32 %v6489, %v6529
    %v6531 = vpop.f32.mrb[0].mxu0
    %v6532 = vpop.f32.mrb[0].mxu0
    %6533 = vdwg.mxu0
    %6534 = vmatprep.subr.bf16.mxu0 %v4233
    %6535 = vmatpush1.bf16.msra.mxu0 %v4232
    %6536 = vmatprep.subr.bf16.mxu0 %v4240
    %6537 = vmatpush1.bf16.msra.mxu0 %v4239
    %6538 = vmatprep.subr.bf16.mxu0 %v4247
    %6539 = vmatpush1.bf16.msra.mxu0 %v4246
    %6540 = vmatprep.subr.bf16.mxu0 %v4254
    %6541 = vmatpush1.bf16.msra.mxu0 %v4253
    %6542 = vmatprep.subr.bf16.mxu0 %v4261
    %6543 = vmatpush1.bf16.msra.mxu0 %v4260
    %6544 = vmatprep.subr.bf16.mxu0 %v4268
    %6545 = vmatpush1.bf16.msra.mxu0 %v4267
    %6546 = vmatprep.subr.bf16.mxu0 %v4275
    %6547 = vmatpush1.bf16.msra.mxu0 %v4274
    %6548 = vmatprep.subr.bf16.mxu0 %v4282
    %6549 = vmatpush1.bf16.msra.mxu0 %v4281
    %6550 = vmatprep.subr.bf16.mxu0 %v4289
    %6551 = vmatpush1.bf16.msra.mxu0 %v4288
    %6552 = vmatprep.subr.bf16.mxu0 %v4296
    %6553 = vmatpush1.bf16.msra.mxu0 %v4295
    %6554 = vmatprep.subr.bf16.mxu0 %v4303
    %6555 = vmatpush1.bf16.msra.mxu0 %v4302
    %6556 = vmatprep.subr.bf16.mxu0 %v4310
    %6557 = vmatpush1.bf16.msra.mxu0 %v4309
    %6558 = vmatprep.subr.bf16.mxu0 %v4317
    %6559 = vmatpush1.bf16.msra.mxu0 %v4316
    %6560 = vmatprep.subr.bf16.mxu0 %v4324
    %6561 = vmatpush1.bf16.msra.mxu0 %v4323
    %6562 = vmatprep.subr.bf16.mxu0 %v4331
    %6563 = vmatpush1.bf16.msra.mxu0 %v4330
    %6564 = vmatprep.subr.bf16.mxu0 %v4338
    %6565 = vmatpush1.bf16.msra.mxu0 %v4337
    %6566 = vmatprep.mubr.bf16.mxu0 %v1161
    %6567 = vmatmul.mubr.bf16.gmra.mrb[0].mxu0 %v1160
    %v6568 = vpop.f32.mrb[0].mxu0
    %v6569 = vadd.f32 %v6528, %v6568
    %v6570 = vpop.f32.mrb[0].mxu0
    %v6571 = vadd.f32 %v6530, %v6570
    %v6572 = vpop.f32.mrb[0].mxu0
    %v6573 = vpop.f32.mrb[0].mxu0
    %6574 = vdwg.mxu0
    %6575 = vmatprep.subr.bf16.mxu0 %v4345
    %6576 = vmatpush1.bf16.msra.mxu0 %v4344
    %6577 = vmatprep.subr.bf16.mxu0 %v4352
    %6578 = vmatpush1.bf16.msra.mxu0 %v4351
    %6579 = vmatprep.subr.bf16.mxu0 %v4359
    %6580 = vmatpush1.bf16.msra.mxu0 %v4358
    %6581 = vmatprep.subr.bf16.mxu0 %v4366
    %6582 = vmatpush1.bf16.msra.mxu0 %v4365
    %6583 = vmatprep.subr.bf16.mxu0 %v4373
    %6584 = vmatpush1.bf16.msra.mxu0 %v4372
    %6585 = vmatprep.subr.bf16.mxu0 %v4380
    %6586 = vmatpush1.bf16.msra.mxu0 %v4379
    %6587 = vmatprep.subr.bf16.mxu0 %v4387
    %6588 = vmatpush1.bf16.msra.mxu0 %v4386
    %6589 = vmatprep.subr.bf16.mxu0 %v4394
    %6590 = vmatpush1.bf16.msra.mxu0 %v4393
    %6591 = vmatprep.subr.bf16.mxu0 %v4401
    %6592 = vmatpush1.bf16.msra.mxu0 %v4400
    %6593 = vmatprep.subr.bf16.mxu0 %v4408
    %6594 = vmatpush1.bf16.msra.mxu0 %v4407
    %6595 = vmatprep.subr.bf16.mxu0 %v4415
    %6596 = vmatpush1.bf16.msra.mxu0 %v4414
    %6597 = vmatprep.subr.bf16.mxu0 %v4422
    %6598 = vmatpush1.bf16.msra.mxu0 %v4421
    %6599 = vmatprep.subr.bf16.mxu0 %v4429
    %6600 = vmatpush1.bf16.msra.mxu0 %v4428
    %6601 = vmatprep.subr.bf16.mxu0 %v4436
    %6602 = vmatpush1.bf16.msra.mxu0 %v4435
    %6603 = vmatprep.subr.bf16.mxu0 %v4443
    %6604 = vmatpush1.bf16.msra.mxu0 %v4442
    %6605 = vmatprep.subr.bf16.mxu0 %v4450
    %6606 = vmatpush1.bf16.msra.mxu0 %v4449
    %6607 = vmatprep.mubr.bf16.mxu0 %v1163
    %6608 = vmatmul.mubr.bf16.gmra.mrb[0].mxu0 %v1162
    %v6609 = vpop.f32.mrb[0].mxu0
    %v6610 = vadd.f32 %v6569, %v6609
    %v6611 = vpop.f32.mrb[0].mxu0
    %v6612 = vadd.f32 %v6571, %v6611
    %v6613 = vpop.f32.mrb[0].mxu0
    %v6614 = vpop.f32.mrb[0].mxu0
    %6615 = vdwg.mxu0
    %6616 = vmatprep.subr.bf16.mxu0 %v4457
    %6617 = vmatpush1.bf16.msra.mxu0 %v4456
    %6618 = vmatprep.subr.bf16.mxu0 %v4464
    %6619 = vmatpush1.bf16.msra.mxu0 %v4463
    %6620 = vmatprep.subr.bf16.mxu0 %v4471
    %6621 = vmatpush1.bf16.msra.mxu0 %v4470
    %6622 = vmatprep.subr.bf16.mxu0 %v4478
    %6623 = vmatpush1.bf16.msra.mxu0 %v4477
    %6624 = vmatprep.subr.bf16.mxu0 %v4485
    %6625 = vmatpush1.bf16.msra.mxu0 %v4484
    %6626 = vmatprep.subr.bf16.mxu0 %v4492
    %6627 = vmatpush1.bf16.msra.mxu0 %v4491
    %6628 = vmatprep.subr.bf16.mxu0 %v4499
    %6629 = vmatpush1.bf16.msra.mxu0 %v4498
    %6630 = vmatprep.subr.bf16.mxu0 %v4506
    %6631 = vmatpush1.bf16.msra.mxu0 %v4505
    %6632 = vmatprep.subr.bf16.mxu0 %v4513
    %6633 = vmatpush1.bf16.msra.mxu0 %v4512
    %6634 = vmatprep.subr.bf16.mxu0 %v4520
    %6635 = vmatpush1.bf16.msra.mxu0 %v4519
    %6636 = vmatprep.subr.bf16.mxu0 %v4527
    %6637 = vmatpush1.bf16.msra.mxu0 %v4526
    %6638 = vmatprep.subr.bf16.mxu0 %v4534
    %6639 = vmatpush1.bf16.msra.mxu0 %v4533
    %6640 = vmatprep.subr.bf16.mxu0 %v4541
    %6641 = vmatpush1.bf16.msra.mxu0 %v4540
    %6642 = vmatprep.subr.bf16.mxu0 %v4548
    %6643 = vmatpush1.bf16.msra.mxu0 %v4547
    %6644 = vmatprep.subr.bf16.mxu0 %v4555
    %6645 = vmatpush1.bf16.msra.mxu0 %v4554
    %6646 = vmatprep.subr.bf16.mxu0 %v4562
    %6647 = vmatpush1.bf16.msra.mxu0 %v4561
    %6648 = vmatprep.mubr.bf16.mxu0 %v1165
    %6649 = vmatmul.mubr.bf16.gmra.mrb[0].mxu0 %v1164
    %v6650 = vpop.f32.mrb[0].mxu0
    %v6651 = vadd.f32 %v6610, %v6650
    %v6652 = vpop.f32.mrb[0].mxu0
    %v6653 = vadd.f32 %v6612, %v6652
    %v6654 = vpop.f32.mrb[0].mxu0
    %v6655 = vpop.f32.mrb[0].mxu0
    %6656 = vdwg.mxu0
    %6657 = vmatprep.subr.bf16.mxu0 %v4569
    %6658 = vmatpush1.bf16.msra.mxu0 %v4568
    %6659 = vmatprep.subr.bf16.mxu0 %v4576
    %6660 = vmatpush1.bf16.msra.mxu0 %v4575
    %6661 = vmatprep.subr.bf16.mxu0 %v4583
    %6662 = vmatpush1.bf16.msra.mxu0 %v4582
    %6663 = vmatprep.subr.bf16.mxu0 %v4590
    %6664 = vmatpush1.bf16.msra.mxu0 %v4589
    %6665 = vmatprep.subr.bf16.mxu0 %v4597
    %6666 = vmatpush1.bf16.msra.mxu0 %v4596
    %6667 = vmatprep.subr.bf16.mxu0 %v4604
    %6668 = vmatpush1.bf16.msra.mxu0 %v4603
    %6669 = vmatprep.subr.bf16.mxu0 %v4611
    %6670 = vmatpush1.bf16.msra.mxu0 %v4610
    %6671 = vmatprep.subr.bf16.mxu0 %v4618
    %6672 = vmatpush1.bf16.msra.mxu0 %v4617
    %6673 = vmatprep.subr.bf16.mxu0 %v4625
    %6674 = vmatpush1.bf16.msra.mxu0 %v4624
    %6675 = vmatprep.subr.bf16.mxu0 %v4632
    %6676 = vmatpush1.bf16.msra.mxu0 %v4631
    %6677 = vmatprep.subr.bf16.mxu0 %v4639
    %6678 = vmatpush1.bf16.msra.mxu0 %v4638
    %6679 = vmatprep.subr.bf16.mxu0 %v4646
    %6680 = vmatpush1.bf16.msra.mxu0 %v4645
    %6681 = vmatprep.subr.bf16.mxu0 %v4653
    %6682 = vmatpush1.bf16.msra.mxu0 %v4652
    %6683 = vmatprep.subr.bf16.mxu0 %v4660
    %6684 = vmatpush1.bf16.msra.mxu0 %v4659
    %6685 = vmatprep.subr.bf16.mxu0 %v4667
    %6686 = vmatpush1.bf16.msra.mxu0 %v4666
    %6687 = vmatprep.subr.bf16.mxu0 %v4674
    %6688 = vmatpush1.bf16.msra.mxu0 %v4673
    %6689 = vmatprep.mubr.bf16.mxu0 %v1167
    %6690 = vmatmul.mubr.bf16.gmra.mrb[0].mxu0 %v1166
    %v6691 = vpop.f32.mrb[0].mxu0
    %v6692 = vadd.f32 %v6651, %v6691
    %v6693 = vpop.f32.mrb[0].mxu0
    %v6694 = vadd.f32 %v6653, %v6693
    %v6695 = vpop.f32.mrb[0].mxu0
    %v6696 = vpop.f32.mrb[0].mxu0
    %6697 = vdwg.mxu0
    %6698 = vmatprep.subr.bf16.mxu0 %v4681
    %6699 = vmatpush1.bf16.msra.mxu0 %v4680
    %6700 = vmatprep.subr.bf16.mxu0 %v4688
    %6701 = vmatpush1.bf16.msra.mxu0 %v4687
    %6702 = vmatprep.subr.bf16.mxu0 %v4695
    %6703 = vmatpush1.bf16.msra.mxu0 %v4694
    %6704 = vmatprep.subr.bf16.mxu0 %v4702
    %6705 = vmatpush1.bf16.msra.mxu0 %v4701
    %6706 = vmatprep.subr.bf16.mxu0 %v4709
    %6707 = vmatpush1.bf16.msra.mxu0 %v4708
    %6708 = vmatprep.subr.bf16.mxu0 %v4716
    %6709 = vmatpush1.bf16.msra.mxu0 %v4715
    %6710 = vmatprep.subr.bf16.mxu0 %v4723
    %6711 = vmatpush1.bf16.msra.mxu0 %v4722
    %6712 = vmatprep.subr.bf16.mxu0 %v4730
    %6713 = vmatpush1.bf16.msra.mxu0 %v4729
    %6714 = vmatprep.subr.bf16.mxu0 %v4737
    %6715 = vmatpush1.bf16.msra.mxu0 %v4736
    %6716 = vmatprep.subr.bf16.mxu0 %v4744
    %6717 = vmatpush1.bf16.msra.mxu0 %v4743
    %6718 = vmatprep.subr.bf16.mxu0 %v4751
    %6719 = vmatpush1.bf16.msra.mxu0 %v4750
    %6720 = vmatprep.subr.bf16.mxu0 %v4758
    %6721 = vmatpush1.bf16.msra.mxu0 %v4757
    %6722 = vmatprep.subr.bf16.mxu0 %v4765
    %6723 = vmatpush1.bf16.msra.mxu0 %v4764
    %6724 = vmatprep.subr.bf16.mxu0 %v4772
    %6725 = vmatpush1.bf16.msra.mxu0 %v4771
    %6726 = vmatprep.subr.bf16.mxu0 %v4779
    %6727 = vmatpush1.bf16.msra.mxu0 %v4778
    %6728 = vmatprep.subr.bf16.mxu0 %v4786
    %6729 = vmatpush1.bf16.msra.mxu0 %v4785
    %6730 = vmatprep.mubr.bf16.mxu0 %v1169
    %6731 = vmatmul.mubr.bf16.gmra.mrb[0].mxu0 %v1168
    %v6732 = vpop.f32.mrb[0].mxu0
    %v6733 = vadd.f32 %v6692, %v6732
    %v6734 = vpop.f32.mrb[0].mxu0
    %v6735 = vadd.f32 %v6694, %v6734
    %v6736 = vpop.f32.mrb[0].mxu0
    %v6737 = vpop.f32.mrb[0].mxu0
    %6738 = vdwg.mxu0
    %6739 = vmatprep.subr.bf16.mxu0 %v4793
    %6740 = vmatpush1.bf16.msra.mxu0 %v4792
    %6741 = vmatprep.subr.bf16.mxu0 %v4800
    %6742 = vmatpush1.bf16.msra.mxu0 %v4799
    %6743 = vmatprep.subr.bf16.mxu0 %v4807
    %6744 = vmatpush1.bf16.msra.mxu0 %v4806
    %6745 = vmatprep.subr.bf16.mxu0 %v4814
    %6746 = vmatpush1.bf16.msra.mxu0 %v4813
    %6747 = vmatprep.subr.bf16.mxu0 %v4821
    %6748 = vmatpush1.bf16.msra.mxu0 %v4820
    %6749 = vmatprep.subr.bf16.mxu0 %v4828
    %6750 = vmatpush1.bf16.msra.mxu0 %v4827
    %6751 = vmatprep.subr.bf16.mxu0 %v4835
    %6752 = vmatpush1.bf16.msra.mxu0 %v4834
    %6753 = vmatprep.subr.bf16.mxu0 %v4842
    %6754 = vmatpush1.bf16.msra.mxu0 %v4841
    %6755 = vmatprep.subr.bf16.mxu0 %v4849
    %6756 = vmatpush1.bf16.msra.mxu0 %v4848
    %6757 = vmatprep.subr.bf16.mxu0 %v4856
    %6758 = vmatpush1.bf16.msra.mxu0 %v4855
    %6759 = vmatprep.subr.bf16.mxu0 %v4863
    %6760 = vmatpush1.bf16.msra.mxu0 %v4862
    %6761 = vmatprep.subr.bf16.mxu0 %v4870
    %6762 = vmatpush1.bf16.msra.mxu0 %v4869
    %6763 = vmatprep.subr.bf16.mxu0 %v4877
    %6764 = vmatpush1.bf16.msra.mxu0 %v4876
    %6765 = vmatprep.subr.bf16.mxu0 %v4884
    %6766 = vmatpush1.bf16.msra.mxu0 %v4883
    %6767 = vmatprep.subr.bf16.mxu0 %v4891
    %6768 = vmatpush1.bf16.msra.mxu0 %v4890
    %6769 = vmatprep.subr.bf16.mxu0 %v4898
    %6770 = vmatpush1.bf16.msra.mxu0 %v4897
    %6771 = vmatprep.mubr.bf16.mxu0 %v1171
    %6772 = vmatmul.mubr.bf16.gmra.mrb[0].mxu0 %v1170
    %v6773 = vpop.f32.mrb[0].mxu0
    %v6774 = vadd.f32 %v6733, %v6773
    %v6775 = vpop.f32.mrb[0].mxu0
    %v6776 = vadd.f32 %v6735, %v6775
    %v6777 = vpop.f32.mrb[0].mxu0
    %v6778 = vpop.f32.mrb[0].mxu0
    %6779 = vdwg.mxu0
    %6780 = vmatprep.subr.bf16.mxu0 0
    %6781 = vmatpush1.bf16.msra.mxu0 %v4010
    %6782 = vmatprep.subr.bf16.mxu0 0
    %6783 = vmatpush1.bf16.msra.mxu0 %v4017
    %6784 = vmatprep.subr.bf16.mxu0 0
    %6785 = vmatpush1.bf16.msra.mxu0 %v4024
    %6786 = vmatprep.subr.bf16.mxu0 0
    %6787 = vmatpush1.bf16.msra.mxu0 %v4031
    %6788 = vmatprep.subr.bf16.mxu0 0
    %6789 = vmatpush1.bf16.msra.mxu0 %v4038
    %6790 = vmatprep.subr.bf16.mxu0 0
    %6791 = vmatpush1.bf16.msra.mxu0 %v4045
    %6792 = vmatprep.subr.bf16.mxu0 0
    %6793 = vmatpush1.bf16.msra.mxu0 %v4052
    %6794 = vmatprep.subr.bf16.mxu0 0
    %6795 = vmatpush1.bf16.msra.mxu0 %v4059
    %6796 = vmatprep.subr.bf16.mxu0 0
    %6797 = vmatpush1.bf16.msra.mxu0 %v4066
    %6798 = vmatprep.subr.bf16.mxu0 0
    %6799 = vmatpush1.bf16.msra.mxu0 %v4073
    %6800 = vmatprep.subr.bf16.mxu0 0
    %6801 = vmatpush1.bf16.msra.mxu0 %v4080
    %6802 = vmatprep.subr.bf16.mxu0 0
    %6803 = vmatpush1.bf16.msra.mxu0 %v4087
    %6804 = vmatprep.subr.bf16.mxu0 0
    %6805 = vmatpush1.bf16.msra.mxu0 %v4094
    %6806 = vmatprep.subr.bf16.mxu0 0
    %6807 = vmatpush1.bf16.msra.mxu0 %v4101
    %6808 = vmatprep.subr.bf16.mxu0 0
    %6809 = vmatpush1.bf16.msra.mxu0 %v4108
    %6810 = vmatprep.subr.bf16.mxu0 0
    %6811 = vmatpush1.bf16.msra.mxu0 %v4115
    %6812 = vmatprep.mubr.bf16.mxu0 %v1157
    %6813 = vmatmul.mubr.bf16.gmra.mrb[0].mxu0 %v1156
    %v6814 = vpop.f32.mrb[0].mxu0
    %v6815 = vadd.f32 %v1124, %v6814
    %v6816 = vpop.f32.mrb[0].mxu0
    %v6817 = vpop.f32.mrb[0].mxu0
    %v6818 = vpop.f32.mrb[0].mxu0
    %6819 = vdwg.mxu0
    %6820 = vmatprep.subr.bf16.mxu0 0
    %6821 = vmatpush1.bf16.msra.mxu0 %v4122
    %6822 = vmatprep.subr.bf16.mxu0 0
    %6823 = vmatpush1.bf16.msra.mxu0 %v4129
    %6824 = vmatprep.subr.bf16.mxu0 0
    %6825 = vmatpush1.bf16.msra.mxu0 %v4136
    %6826 = vmatprep.subr.bf16.mxu0 0
    %6827 = vmatpush1.bf16.msra.mxu0 %v4143
    %6828 = vmatprep.subr.bf16.mxu0 0
    %6829 = vmatpush1.bf16.msra.mxu0 %v4150
    %6830 = vmatprep.subr.bf16.mxu0 0
    %6831 = vmatpush1.bf16.msra.mxu0 %v4157
    %6832 = vmatprep.subr.bf16.mxu0 0
    %6833 = vmatpush1.bf16.msra.mxu0 %v4164
    %6834 = vmatprep.subr.bf16.mxu0 0
    %6835 = vmatpush1.bf16.msra.mxu0 %v4171
    %6836 = vmatprep.subr.bf16.mxu0 0
    %6837 = vmatpush1.bf16.msra.mxu0 %v4178
    %6838 = vmatprep.subr.bf16.mxu0 0
    %6839 = vmatpush1.bf16.msra.mxu0 %v4185
    %6840 = vmatprep.subr.bf16.mxu0 0
    %6841 = vmatpush1.bf16.msra.mxu0 %v4192
    %6842 = vmatprep.subr.bf16.mxu0 0
    %6843 = vmatpush1.bf16.msra.mxu0 %v4199
    %6844 = vmatprep.subr.bf16.mxu0 0
    %6845 = vmatpush1.bf16.msra.mxu0 %v4206
    %6846 = vmatprep.subr.bf16.mxu0 0
    %6847 = vmatpush1.bf16.msra.mxu0 %v4213
    %6848 = vmatprep.subr.bf16.mxu0 0
    %6849 = vmatpush1.bf16.msra.mxu0 %v4220
    %6850 = vmatprep.subr.bf16.mxu0 0
    %6851 = vmatpush1.bf16.msra.mxu0 %v4227
    %6852 = vmatprep.mubr.bf16.mxu0 %v1159
    %6853 = vmatmul.mubr.bf16.gmra.mrb[0].mxu0 %v1158
    %v6854 = vpop.f32.mrb[0].mxu0
    %v6855 = vadd.f32 %v6815, %v6854
    %v6856 = vpop.f32.mrb[0].mxu0
    %v6857 = vpop.f32.mrb[0].mxu0
    %v6858 = vpop.f32.mrb[0].mxu0
    %6859 = vdwg.mxu0
    %6860 = vmatprep.subr.bf16.mxu0 0
    %6861 = vmatpush1.bf16.msra.mxu0 %v4234
    %6862 = vmatprep.subr.bf16.mxu0 0
    %6863 = vmatpush1.bf16.msra.mxu0 %v4241
    %6864 = vmatprep.subr.bf16.mxu0 0
    %6865 = vmatpush1.bf16.msra.mxu0 %v4248
    %6866 = vmatprep.subr.bf16.mxu0 0
    %6867 = vmatpush1.bf16.msra.mxu0 %v4255
    %6868 = vmatprep.subr.bf16.mxu0 0
    %6869 = vmatpush1.bf16.msra.mxu0 %v4262
    %6870 = vmatprep.subr.bf16.mxu0 0
    %6871 = vmatpush1.bf16.msra.mxu0 %v4269
    %6872 = vmatprep.subr.bf16.mxu0 0
    %6873 = vmatpush1.bf16.msra.mxu0 %v4276
    %6874 = vmatprep.subr.bf16.mxu0 0
    %6875 = vmatpush1.bf16.msra.mxu0 %v4283
    %6876 = vmatprep.subr.bf16.mxu0 0
    %6877 = vmatpush1.bf16.msra.mxu0 %v4290
    %6878 = vmatprep.subr.bf16.mxu0 0
    %6879 = vmatpush1.bf16.msra.mxu0 %v4297
    %6880 = vmatprep.subr.bf16.mxu0 0
    %6881 = vmatpush1.bf16.msra.mxu0 %v4304
    %6882 = vmatprep.subr.bf16.mxu0 0
    %6883 = vmatpush1.bf16.msra.mxu0 %v4311
    %6884 = vmatprep.subr.bf16.mxu0 0
    %6885 = vmatpush1.bf16.msra.mxu0 %v4318
    %6886 = vmatprep.subr.bf16.mxu0 0
    %6887 = vmatpush1.bf16.msra.mxu0 %v4325
    %6888 = vmatprep.subr.bf16.mxu0 0
    %6889 = vmatpush1.bf16.msra.mxu0 %v4332
    %6890 = vmatprep.subr.bf16.mxu0 0
    %6891 = vmatpush1.bf16.msra.mxu0 %v4339
    %6892 = vmatprep.mubr.bf16.mxu0 %v1161
    %6893 = vmatmul.mubr.bf16.gmra.mrb[0].mxu0 %v1160
    %v6894 = vpop.f32.mrb[0].mxu0
    %v6895 = vadd.f32 %v6855, %v6894
    %v6896 = vpop.f32.mrb[0].mxu0
    %v6897 = vpop.f32.mrb[0].mxu0
    %v6898 = vpop.f32.mrb[0].mxu0
    %6899 = vdwg.mxu0
    %6900 = vmatprep.subr.bf16.mxu0 0
    %6901 = vmatpush1.bf16.msra.mxu0 %v4346
    %6902 = vmatprep.subr.bf16.mxu0 0
    %6903 = vmatpush1.bf16.msra.mxu0 %v4353
    %6904 = vmatprep.subr.bf16.mxu0 0
    %6905 = vmatpush1.bf16.msra.mxu0 %v4360
    %6906 = vmatprep.subr.bf16.mxu0 0
    %6907 = vmatpush1.bf16.msra.mxu0 %v4367
    %6908 = vmatprep.subr.bf16.mxu0 0
    %6909 = vmatpush1.bf16.msra.mxu0 %v4374
    %6910 = vmatprep.subr.bf16.mxu0 0
    %6911 = vmatpush1.bf16.msra.mxu0 %v4381
    %6912 = vmatprep.subr.bf16.mxu0 0
    %6913 = vmatpush1.bf16.msra.mxu0 %v4388
    %6914 = vmatprep.subr.bf16.mxu0 0
    %6915 = vmatpush1.bf16.msra.mxu0 %v4395
    %6916 = vmatprep.subr.bf16.mxu0 0
    %6917 = vmatpush1.bf16.msra.mxu0 %v4402
    %6918 = vmatprep.subr.bf16.mxu0 0
    %6919 = vmatpush1.bf16.msra.mxu0 %v4409
    %6920 = vmatprep.subr.bf16.mxu0 0
    %6921 = vmatpush1.bf16.msra.mxu0 %v4416
    %6922 = vmatprep.subr.bf16.mxu0 0
    %6923 = vmatpush1.bf16.msra.mxu0 %v4423
    %6924 = vmatprep.subr.bf16.mxu0 0
    %6925 = vmatpush1.bf16.msra.mxu0 %v4430
    %6926 = vmatprep.subr.bf16.mxu0 0
    %6927 = vmatpush1.bf16.msra.mxu0 %v4437
    %6928 = vmatprep.subr.bf16.mxu0 0
    %6929 = vmatpush1.bf16.msra.mxu0 %v4444
    %6930 = vmatprep.subr.bf16.mxu0 0
    %6931 = vmatpush1.bf16.msra.mxu0 %v4451
    %6932 = vmatprep.mubr.bf16.mxu0 %v1163
    %6933 = vmatmul.mubr.bf16.gmra.mrb[0].mxu0 %v1162
    %v6934 = vpop.f32.mrb[0].mxu0
    %v6935 = vadd.f32 %v6895, %v6934
    %v6936 = vpop.f32.mrb[0].mxu0
    %v6937 = vpop.f32.mrb[0].mxu0
    %v6938 = vpop.f32.mrb[0].mxu0
    %6939 = vdwg.mxu0
    %6940 = vmatprep.subr.bf16.mxu0 0
    %6941 = vmatpush1.bf16.msra.mxu0 %v4458
    %6942 = vmatprep.subr.bf16.mxu0 0
    %6943 = vmatpush1.bf16.msra.mxu0 %v4465
    %6944 = vmatprep.subr.bf16.mxu0 0
    %6945 = vmatpush1.bf16.msra.mxu0 %v4472
    %6946 = vmatprep.subr.bf16.mxu0 0
    %6947 = vmatpush1.bf16.msra.mxu0 %v4479
    %6948 = vmatprep.subr.bf16.mxu0 0
    %6949 = vmatpush1.bf16.msra.mxu0 %v4486
    %6950 = vmatprep.subr.bf16.mxu0 0
    %6951 = vmatpush1.bf16.msra.mxu0 %v4493
    %6952 = vmatprep.subr.bf16.mxu0 0
    %6953 = vmatpush1.bf16.msra.mxu0 %v4500
    %6954 = vmatprep.subr.bf16.mxu0 0
    %6955 = vmatpush1.bf16.msra.mxu0 %v4507
    %6956 = vmatprep.subr.bf16.mxu0 0
    %6957 = vmatpush1.bf16.msra.mxu0 %v4514
    %6958 = vmatprep.subr.bf16.mxu0 0
    %6959 = vmatpush1.bf16.msra.mxu0 %v4521
    %6960 = vmatprep.subr.bf16.mxu0 0
    %6961 = vmatpush1.bf16.msra.mxu0 %v4528
    %6962 = vmatprep.subr.bf16.mxu0 0
    %6963 = vmatpush1.bf16.msra.mxu0 %v4535
    %6964 = vmatprep.subr.bf16.mxu0 0
    %6965 = vmatpush1.bf16.msra.mxu0 %v4542
    %6966 = vmatprep.subr.bf16.mxu0 0
    %6967 = vmatpush1.bf16.msra.mxu0 %v4549
    %6968 = vmatprep.subr.bf16.mxu0 0
    %6969 = vmatpush1.bf16.msra.mxu0 %v4556
    %6970 = vmatprep.subr.bf16.mxu0 0
    %6971 = vmatpush1.bf16.msra.mxu0 %v4563
    %6972 = vmatprep.mubr.bf16.mxu0 %v1165
    %6973 = vmatmul.mubr.bf16.gmra.mrb[0].mxu0 %v1164
    %v6974 = vpop.f32.mrb[0].mxu0
    %v6975 = vadd.f32 %v6935, %v6974
    %v6976 = vpop.f32.mrb[0].mxu0
    %v6977 = vpop.f32.mrb[0].mxu0
    %v6978 = vpop.f32.mrb[0].mxu0
    %6979 = vdwg.mxu0
    %6980 = vmatprep.subr.bf16.mxu0 0
    %6981 = vmatpush1.bf16.msra.mxu0 %v4570
    %6982 = vmatprep.subr.bf16.mxu0 0
    %6983 = vmatpush1.bf16.msra.mxu0 %v4577
    %6984 = vmatprep.subr.bf16.mxu0 0
    %6985 = vmatpush1.bf16.msra.mxu0 %v4584
    %6986 = vmatprep.subr.bf16.mxu0 0
    %6987 = vmatpush1.bf16.msra.mxu0 %v4591
    %6988 = vmatprep.subr.bf16.mxu0 0
    %6989 = vmatpush1.bf16.msra.mxu0 %v4598
    %6990 = vmatprep.subr.bf16.mxu0 0
    %6991 = vmatpush1.bf16.msra.mxu0 %v4605
    %6992 = vmatprep.subr.bf16.mxu0 0
    %6993 = vmatpush1.bf16.msra.mxu0 %v4612
    %6994 = vmatprep.subr.bf16.mxu0 0
    %6995 = vmatpush1.bf16.msra.mxu0 %v4619
    %6996 = vmatprep.subr.bf16.mxu0 0
    %6997 = vmatpush1.bf16.msra.mxu0 %v4626
    %6998 = vmatprep.subr.bf16.mxu0 0
    %6999 = vmatpush1.bf16.msra.mxu0 %v4633
    %7000 = vmatprep.subr.bf16.mxu0 0
    %7001 = vmatpush1.bf16.msra.mxu0 %v4640
    %7002 = vmatprep.subr.bf16.mxu0 0
    %7003 = vmatpush1.bf16.msra.mxu0 %v4647
    %7004 = vmatprep.subr.bf16.mxu0 0
    %7005 = vmatpush1.bf16.msra.mxu0 %v4654
    %7006 = vmatprep.subr.bf16.mxu0 0
    %7007 = vmatpush1.bf16.msra.mxu0 %v4661
    %7008 = vmatprep.subr.bf16.mxu0 0
    %7009 = vmatpush1.bf16.msra.mxu0 %v4668
    %7010 = vmatprep.subr.bf16.mxu0 0
    %7011 = vmatpush1.bf16.msra.mxu0 %v4675
    %7012 = vmatprep.mubr.bf16.mxu0 %v1167
    %7013 = vmatmul.mubr.bf16.gmra.mrb[0].mxu0 %v1166
    %v7014 = vpop.f32.mrb[0].mxu0
    %v7015 = vadd.f32 %v6975, %v7014
    %v7016 = vpop.f32.mrb[0].mxu0
    %v7017 = vpop.f32.mrb[0].mxu0
    %v7018 = vpop.f32.mrb[0].mxu0
    %7019 = vdwg.mxu0
    %7020 = vmatprep.subr.bf16.mxu0 0
    %7021 = vmatpush1.bf16.msra.mxu0 %v4682
    %7022 = vmatprep.subr.bf16.mxu0 0
    %7023 = vmatpush1.bf16.msra.mxu0 %v4689
    %7024 = vmatprep.subr.bf16.mxu0 0
    %7025 = vmatpush1.bf16.msra.mxu0 %v4696
    %7026 = vmatprep.subr.bf16.mxu0 0
    %7027 = vmatpush1.bf16.msra.mxu0 %v4703
    %7028 = vmatprep.subr.bf16.mxu0 0
    %7029 = vmatpush1.bf16.msra.mxu0 %v4710
    %7030 = vmatprep.subr.bf16.mxu0 0
    %7031 = vmatpush1.bf16.msra.mxu0 %v4717
    %7032 = vmatprep.subr.bf16.mxu0 0
    %7033 = vmatpush1.bf16.msra.mxu0 %v4724
    %7034 = vmatprep.subr.bf16.mxu0 0
    %7035 = vmatpush1.bf16.msra.mxu0 %v4731
    %7036 = vmatprep.subr.bf16.mxu0 0
    %7037 = vmatpush1.bf16.msra.mxu0 %v4738
    %7038 = vmatprep.subr.bf16.mxu0 0
    %7039 = vmatpush1.bf16.msra.mxu0 %v4745
    %7040 = vmatprep.subr.bf16.mxu0 0
    %7041 = vmatpush1.bf16.msra.mxu0 %v4752
    %7042 = vmatprep.subr.bf16.mxu0 0
    %7043 = vmatpush1.bf16.msra.mxu0 %v4759
    %7044 = vmatprep.subr.bf16.mxu0 0
    %7045 = vmatpush1.bf16.msra.mxu0 %v4766
    %7046 = vmatprep.subr.bf16.mxu0 0
    %7047 = vmatpush1.bf16.msra.mxu0 %v4773
    %7048 = vmatprep.subr.bf16.mxu0 0
    %7049 = vmatpush1.bf16.msra.mxu0 %v4780
    %7050 = vmatprep.subr.bf16.mxu0 0
    %7051 = vmatpush1.bf16.msra.mxu0 %v4787
    %7052 = vmatprep.mubr.bf16.mxu0 %v1169
    %7053 = vmatmul.mubr.bf16.gmra.mrb[0].mxu0 %v1168
    %v7054 = vpop.f32.mrb[0].mxu0
    %v7055 = vadd.f32 %v7015, %v7054
    %v7056 = vpop.f32.mrb[0].mxu0
    %v7057 = vpop.f32.mrb[0].mxu0
    %v7058 = vpop.f32.mrb[0].mxu0
    %7059 = vdwg.mxu0
    %7060 = vmatprep.subr.bf16.mxu0 0
    %7061 = vmatpush1.bf16.msra.mxu0 %v4794
    %7062 = vmatprep.subr.bf16.mxu0 0
    %7063 = vmatpush1.bf16.msra.mxu0 %v4801
    %7064 = vmatprep.subr.bf16.mxu0 0
    %7065 = vmatpush1.bf16.msra.mxu0 %v4808
    %7066 = vmatprep.subr.bf16.mxu0 0
    %7067 = vmatpush1.bf16.msra.mxu0 %v4815
    %7068 = vmatprep.subr.bf16.mxu0 0
    %7069 = vmatpush1.bf16.msra.mxu0 %v4822
    %7070 = vmatprep.subr.bf16.mxu0 0
    %7071 = vmatpush1.bf16.msra.mxu0 %v4829
    %7072 = vmatprep.subr.bf16.mxu0 0
    %7073 = vmatpush1.bf16.msra.mxu0 %v4836
    %7074 = vmatprep.subr.bf16.mxu0 0
    %7075 = vmatpush1.bf16.msra.mxu0 %v4843
    %7076 = vmatprep.subr.bf16.mxu0 0
    %7077 = vmatpush1.bf16.msra.mxu0 %v4850
    %7078 = vmatprep.subr.bf16.mxu0 0
    %7079 = vmatpush1.bf16.msra.mxu0 %v4857
    %7080 = vmatprep.subr.bf16.mxu0 0
    %7081 = vmatpush1.bf16.msra.mxu0 %v4864
    %7082 = vmatprep.subr.bf16.mxu0 0
    %7083 = vmatpush1.bf16.msra.mxu0 %v4871
    %7084 = vmatprep.subr.bf16.mxu0 0
    %7085 = vmatpush1.bf16.msra.mxu0 %v4878
    %7086 = vmatprep.subr.bf16.mxu0 0
    %7087 = vmatpush1.bf16.msra.mxu0 %v4885
    %7088 = vmatprep.subr.bf16.mxu0 0
    %7089 = vmatpush1.bf16.msra.mxu0 %v4892
    %7090 = vmatprep.subr.bf16.mxu0 0
    %7091 = vmatpush1.bf16.msra.mxu0 %v4899
    %7092 = vmatprep.mubr.bf16.mxu0 %v1171
    %7093 = vmatmul.mubr.bf16.gmra.mrb[0].mxu0 %v1170
    %v7094 = vpop.f32.mrb[0].mxu0
    %v7095 = vadd.f32 %v7055, %v7094
    %v7096 = vpop.f32.mrb[0].mxu0
    %v7097 = vpop.f32.mrb[0].mxu0
    %v7098 = vpop.f32.mrb[0].mxu0
    %7099 = vdwg.mxu0
    %s7100 = sld [smem:[#allocation3]]
    %s7101 = sld [smem:[#allocation4]]
    %s7102 = sld [smem:[#allocation4 + $0x1]]
    %s7103 = sld [smem:[#allocation4 + $0x2]]
    %s7104 = sld [smem:[#allocation4 + $0x3]]
    %s7105 = sld [smem:[#allocation4 + $0x4]]
    %s7106 = sld [smem:[#allocation4 + $0x5]]
    %v7107 = vmax.f32 %v6118, 0.0
    %v7108 = vmax.f32 %v6120, 0.0
    %v7109 = vmax.f32 %v6446, 0.0
    %v7110 = vmax.f32 %v6448, 0.0
    %v7111 = vmax.f32 %v6774, 0.0
    %v7112 = vmax.f32 %v6776, 0.0
    %v7113 = vmax.f32 %v7095, 0.0
    %v7114 = vpack.c.bf16 %v7107, %v7107
    %v7115 = vpack.c.bf16 %v7108, %v7108
    %v7116 = vpack.c.bf16 %v7109, %v7109
    %v7117 = vpack.c.bf16 %v7110, %v7110
    %v7118 = vpack.c.bf16 %v7111, %v7111
    %v7119 = vpack.c.bf16 %v7112, %v7112
    %v7120 = vpack.c.bf16 %v7113, %v7113
    %v7121 = vld [vmem:[%s5] sm:$0xff]
    %v7122 = vld [vmem:[%s5 + $0x8] sm:$0xff]
    %v7123 = vld [vmem:[%s5 + $0x10] sm:$0xff]
    %v7124 = vld [vmem:[%s5 + $0x18] sm:$0xff]
    %v7125 = vld [vmem:[%s5 + $0x20] sm:$0xff]
    %v7126 = vld [vmem:[%s5 + $0x28] sm:$0xff]
    %v7127 = vld [vmem:[%s5 + $0x30] sm:$0xff]
    %v7128 = vld [vmem:[%s5 + $0x38] sm:$0xff]
    %v7129 = vld [vmem:[%s5 + $0x40] sm:$0xff]
    %v7130 = vld [vmem:[%s5 + $0x48] sm:$0xff]
    %v7131 = vld [vmem:[%s5 + $0x50] sm:$0xff]
    %v7132 = vld [vmem:[%s5 + $0x58] sm:$0xff]
    %v7133 = vld [vmem:[%s5 + $0x60] sm:$0xff]
    %v7134 = vld [vmem:[%s5 + $0x68] sm:$0xff]
    %v7135 = vld [vmem:[%s5 + $0x70] sm:$0xff]
    %v7136 = vld [vmem:[%s5 + $0x78] sm:$0xff]
    %v7137 = vld [vmem:[%s5 + $0x80] sm:$0xff]
    %v7138 = vld [vmem:[%s5 + $0x88] sm:$0xff]
    %v7139 = vld [vmem:[%s5 + $0x90] sm:$0xff]
    %v7140 = vld [vmem:[%s5 + $0x98] sm:$0xff]
    %v7141 = vld [vmem:[%s5 + $0xa0] sm:$0xff]
    %v7142 = vld [vmem:[%s5 + $0xa8] sm:$0xff]
    %v7143 = vld [vmem:[%s5 + $0xb0] sm:$0xff]
    %v7144 = vld [vmem:[%s5 + $0xb8] sm:$0xff]
    %v7145 = vld [vmem:[%s5 + $0xc0] sm:$0xff]
    %v7146 = vld [vmem:[%s5 + $0xc8] sm:$0xff]
    %v7147 = vld [vmem:[%s5 + $0xd0] sm:$0xff]
    %v7148 = vld [vmem:[%s5 + $0xd8] sm:$0xff]
    %v7149 = vld [vmem:[%s5 + $0xe0] sm:$0xff]
    %v7150 = vld [vmem:[%s5 + $0xe8] sm:$0xff]
    %v7151 = vld [vmem:[%s5 + $0xf0] sm:$0xff]
    %v7152 = vld [vmem:[%s5 + $0xf8] sm:$0xff]
    %v7153 = vld [vmem:[%s5 + $0x100] sm:$0xff]
    %v7154 = vld [vmem:[%s5 + $0x108] sm:$0xff]
    %v7155 = vld [vmem:[%s5 + $0x110] sm:$0xff]
    %v7156 = vld [vmem:[%s5 + $0x118] sm:$0xff]
    %v7157 = vld [vmem:[%s5 + $0x120] sm:$0xff]
    %v7158 = vld [vmem:[%s5 + $0x128] sm:$0xff]
    %v7159 = vld [vmem:[%s5 + $0x130] sm:$0xff]
    %v7160 = vld [vmem:[%s5 + $0x138] sm:$0xff]
    %v7161 = vld [vmem:[%s5 + $0x140] sm:$0xff]
    %v7162 = vld [vmem:[%s5 + $0x148] sm:$0xff]
    %v7163 = vld [vmem:[%s5 + $0x150] sm:$0xff]
    %v7164 = vld [vmem:[%s5 + $0x158] sm:$0xff]
    %v7165 = vld [vmem:[%s5 + $0x160] sm:$0xff]
    %v7166 = vld [vmem:[%s5 + $0x168] sm:$0xff]
    %v7167 = vld [vmem:[%s5 + $0x170] sm:$0xff]
    %v7168 = vld [vmem:[%s5 + $0x178] sm:$0xff]
    %v7169 = vld [vmem:[%s5 + $0x180] sm:$0xff]
    %v7170 = vld [vmem:[%s5 + $0x188] sm:$0xff]
    %v7171 = vld [vmem:[%s5 + $0x190] sm:$0xff]
    %v7172 = vld [vmem:[%s5 + $0x198] sm:$0xff]
    %v7173 = vld [vmem:[%s5 + $0x1a0] sm:$0xff]
    %v7174 = vld [vmem:[%s5 + $0x1a8] sm:$0xff]
    %v7175 = vld [vmem:[%s5 + $0x1b0] sm:$0xff]
    %v7176 = vld [vmem:[%s5 + $0x1b8] sm:$0xff]
    %v7177 = vld [vmem:[%s5 + $0x1c0] sm:$0xff]
    %v7178 = vld [vmem:[%s5 + $0x1c8] sm:$0xff]
    %v7179 = vld [vmem:[%s5 + $0x1d0] sm:$0xff]
    %v7180 = vld [vmem:[%s5 + $0x1d8] sm:$0xff]
    %v7181 = vld [vmem:[%s5 + $0x1e0] sm:$0xff]
    %v7182 = vld [vmem:[%s5 + $0x1e8] sm:$0xff]
    %v7183 = vld [vmem:[%s5 + $0x1f0] sm:$0xff]
    %v7184 = vld [vmem:[%s5 + $0x1f8] sm:$0xff]
    %v7185 = vld [vmem:[%s5 + $0x200] sm:$0xff]
    %v7186 = vld [vmem:[%s5 + $0x208] sm:$0xff]
    %v7187 = vld [vmem:[%s5 + $0x210] sm:$0xff]
    %v7188 = vld [vmem:[%s5 + $0x218] sm:$0xff]
    %v7189 = vld [vmem:[%s5 + $0x220] sm:$0xff]
    %v7190 = vld [vmem:[%s5 + $0x228] sm:$0xff]
    %v7191 = vld [vmem:[%s5 + $0x230] sm:$0xff]
    %v7192 = vld [vmem:[%s5 + $0x238] sm:$0xff]
    %v7193 = vld [vmem:[%s5 + $0x240] sm:$0xff]
    %v7194 = vld [vmem:[%s5 + $0x248] sm:$0xff]
    %v7195 = vld [vmem:[%s5 + $0x250] sm:$0xff]
    %v7196 = vld [vmem:[%s5 + $0x258] sm:$0xff]
    %v7197 = vld [vmem:[%s5 + $0x260] sm:$0xff]
    %v7198 = vld [vmem:[%s5 + $0x268] sm:$0xff]
    %v7199 = vld [vmem:[%s5 + $0x270] sm:$0xff]
    %v7200 = vld [vmem:[%s5 + $0x278] sm:$0xff]
    %v7201 = vld [vmem:[%s5 + $0x280] sm:$0xff]
    %v7202 = vld [vmem:[%s5 + $0x288] sm:$0xff]
    %v7203 = vld [vmem:[%s5 + $0x290] sm:$0xff]
    %v7204 = vld [vmem:[%s5 + $0x298] sm:$0xff]
    %v7205 = vld [vmem:[%s5 + $0x2a0] sm:$0xff]
    %v7206 = vld [vmem:[%s5 + $0x2a8] sm:$0xff]
    %v7207 = vld [vmem:[%s5 + $0x2b0] sm:$0xff]
    %v7208 = vld [vmem:[%s5 + $0x2b8] sm:$0xff]
    %v7209 = vld [vmem:[%s5 + $0x2c0] sm:$0xff]
    %v7210 = vld [vmem:[%s5 + $0x2c8] sm:$0xff]
    %v7211 = vld [vmem:[%s5 + $0x2d0] sm:$0xff]
    %v7212 = vld [vmem:[%s5 + $0x2d8] sm:$0xff]
    %v7213 = vld [vmem:[%s5 + $0x2e0] sm:$0xff]
    %v7214 = vld [vmem:[%s5 + $0x2e8] sm:$0xff]
    %v7215 = vld [vmem:[%s5 + $0x2f0] sm:$0xff]
    %v7216 = vld [vmem:[%s5 + $0x2f8] sm:$0xff]
    %v7217 = vld [vmem:[%s5 + $0x300] sm:$0xff]
    %v7218 = vld [vmem:[%s5 + $0x308] sm:$0xff]
    %v7219 = vld [vmem:[%s5 + $0x310] sm:$0xff]
    %v7220 = vld [vmem:[%s5 + $0x318] sm:$0xff]
    %v7221 = vld [vmem:[%s5 + $0x320] sm:$0xff]
    %v7222 = vld [vmem:[%s5 + $0x328] sm:$0xff]
    %v7223 = vld [vmem:[%s5 + $0x330] sm:$0xff]
    %v7224 = vld [vmem:[%s5 + $0x338] sm:$0xff]
    %v7225 = vld [vmem:[%s5 + $0x340] sm:$0xff]
    %v7226 = vld [vmem:[%s5 + $0x348] sm:$0xff]
    %v7227 = vld [vmem:[%s5 + $0x350] sm:$0xff]
    %v7228 = vld [vmem:[%s5 + $0x358] sm:$0xff]
    %v7229 = vld [vmem:[%s5 + $0x360] sm:$0xff]
    %v7230 = vld [vmem:[%s5 + $0x368] sm:$0xff]
    %v7231 = vld [vmem:[%s5 + $0x370] sm:$0xff]
    %v7232 = vld [vmem:[%s5 + $0x378] sm:$0xff]
    %v7233 = vld [vmem:[%s5 + $0x380] sm:$0xff]
    %v7234 = vld [vmem:[%s5 + $0x388] sm:$0xff]
    %v7235 = vld [vmem:[%s5 + $0x390] sm:$0xff]
    %v7236 = vld [vmem:[%s5 + $0x398] sm:$0xff]
    %v7237 = vld [vmem:[%s5 + $0x3a0] sm:$0xff]
    %v7238 = vld [vmem:[%s5 + $0x3a8] sm:$0xff]
    %v7239 = vld [vmem:[%s5 + $0x3b0] sm:$0xff]
    %v7240 = vld [vmem:[%s5 + $0x3b8] sm:$0xff]
    %v7241 = vld [vmem:[%s5 + $0x3c0] sm:$0xff]
    %v7242 = vld [vmem:[%s5 + $0x3c8] sm:$0xff]
    %v7243 = vld [vmem:[%s5 + $0x3d0] sm:$0xff]
    %v7244 = vld [vmem:[%s5 + $0x3d8] sm:$0xff]
    %v7245 = vld [vmem:[%s5 + $0x3e0] sm:$0xff]
    %v7246 = vld [vmem:[%s5 + $0x3e8] sm:$0xff]
    %v7247 = vld [vmem:[%s5 + $0x3f0] sm:$0xff]
    %v7248 = vld [vmem:[%s5 + $0x3f8] sm:$0xff]
    %v7249 = vld [vmem:[%s5 + $0x400] sm:$0xff]
    %v7250 = vld [vmem:[%s5 + $0x408] sm:$0xff]
    %v7251 = vld [vmem:[%s5 + $0x410] sm:$0xff]
    %v7252 = vld [vmem:[%s5 + $0x418] sm:$0xff]
    %v7253 = vld [vmem:[%s5 + $0x420] sm:$0xff]
    %v7254 = vld [vmem:[%s5 + $0x428] sm:$0xff]
    %v7255 = vld [vmem:[%s5 + $0x430] sm:$0xff]
    %v7256 = vld [vmem:[%s5 + $0x438] sm:$0xff]
    %v7257 = vld [vmem:[%s5 + $0x440] sm:$0xff]
    %v7258 = vld [vmem:[%s5 + $0x448] sm:$0xff]
    %v7259 = vld [vmem:[%s5 + $0x450] sm:$0xff]
    %v7260 = vld [vmem:[%s5 + $0x458] sm:$0xff]
    %v7261 = vld [vmem:[%s5 + $0x460] sm:$0xff]
    %v7262 = vld [vmem:[%s5 + $0x468] sm:$0xff]
    %v7263 = vld [vmem:[%s5 + $0x470] sm:$0xff]
    %v7264 = vld [vmem:[%s5 + $0x478] sm:$0xff]
    %v7265 = vld [vmem:[%s5 + $0x480] sm:$0xff]
    %v7266 = vld [vmem:[%s5 + $0x488] sm:$0xff]
    %v7267 = vld [vmem:[%s5 + $0x490] sm:$0xff]
    %v7268 = vld [vmem:[%s5 + $0x498] sm:$0xff]
    %v7269 = vld [vmem:[%s5 + $0x4a0] sm:$0xff]
    %v7270 = vld [vmem:[%s5 + $0x4a8] sm:$0xff]
    %v7271 = vld [vmem:[%s5 + $0x4b0] sm:$0xff]
    %v7272 = vld [vmem:[%s5 + $0x4b8] sm:$0xff]
    %v7273 = vld [vmem:[%s5 + $0x4c0] sm:$0xff]
    %v7274 = vld [vmem:[%s5 + $0x4c8] sm:$0xff]
    %v7275 = vld [vmem:[%s5 + $0x4d0] sm:$0xff]
    %v7276 = vld [vmem:[%s5 + $0x4d8] sm:$0xff]
    %v7277 = vld [vmem:[%s5 + $0x4e0] sm:$0xff]
    %v7278 = vld [vmem:[%s5 + $0x4e8] sm:$0xff]
    %v7279 = vld [vmem:[%s5 + $0x4f0] sm:$0xff]
    %v7280 = vld [vmem:[%s5 + $0x4f8] sm:$0xff]
    %v7281 = vld [vmem:[%s5 + $0x500] sm:$0xff]
    %v7282 = vld [vmem:[%s5 + $0x508] sm:$0xff]
    %v7283 = vld [vmem:[%s5 + $0x510] sm:$0xff]
    %v7284 = vld [vmem:[%s5 + $0x518] sm:$0xff]
    %v7285 = vld [vmem:[%s5 + $0x520] sm:$0xff]
    %v7286 = vld [vmem:[%s5 + $0x528] sm:$0xff]
    %v7287 = vld [vmem:[%s5 + $0x530] sm:$0xff]
    %v7288 = vld [vmem:[%s5 + $0x538] sm:$0xff]
    %v7289 = vld [vmem:[%s5 + $0x540] sm:$0xff]
    %v7290 = vld [vmem:[%s5 + $0x548] sm:$0xff]
    %v7291 = vld [vmem:[%s5 + $0x550] sm:$0xff]
    %v7292 = vld [vmem:[%s5 + $0x558] sm:$0xff]
    %v7293 = vld [vmem:[%s5 + $0x560] sm:$0xff]
    %v7294 = vld [vmem:[%s5 + $0x568] sm:$0xff]
    %v7295 = vld [vmem:[%s5 + $0x570] sm:$0xff]
    %v7296 = vld [vmem:[%s5 + $0x578] sm:$0xff]
    %v7297 = vld [vmem:[%s5 + $0x580] sm:$0xff]
    %v7298 = vld [vmem:[%s5 + $0x588] sm:$0xff]
    %v7299 = vld [vmem:[%s5 + $0x590] sm:$0xff]
    %v7300 = vld [vmem:[%s5 + $0x598] sm:$0xff]
    %v7301 = vld [vmem:[%s5 + $0x5a0] sm:$0xff]
    %v7302 = vld [vmem:[%s5 + $0x5a8] sm:$0xff]
    %v7303 = vld [vmem:[%s5 + $0x5b0] sm:$0xff]
    %v7304 = vld [vmem:[%s5 + $0x5b8] sm:$0xff]
    %v7305 = vld [vmem:[%s5 + $0x5c0] sm:$0xff]
    %v7306 = vld [vmem:[%s5 + $0x5c8] sm:$0xff]
    %v7307 = vld [vmem:[%s5 + $0x5d0] sm:$0xff]
    %v7308 = vld [vmem:[%s5 + $0x5d8] sm:$0xff]
    %v7309 = vld [vmem:[%s5 + $0x5e0] sm:$0xff]
    %v7310 = vld [vmem:[%s5 + $0x5e8] sm:$0xff]
    %v7311 = vld [vmem:[%s5 + $0x5f0] sm:$0xff]
    %v7312 = vld [vmem:[%s5 + $0x5f8] sm:$0xff]
    %v7313 = vld [vmem:[%s5 + $0x600] sm:$0xff]
    %v7314 = vld [vmem:[%s5 + $0x608] sm:$0xff]
    %v7315 = vld [vmem:[%s5 + $0x610] sm:$0xff]
    %v7316 = vld [vmem:[%s5 + $0x618] sm:$0xff]
    %v7317 = vld [vmem:[%s5 + $0x620] sm:$0xff]
    %v7318 = vld [vmem:[%s5 + $0x628] sm:$0xff]
    %v7319 = vld [vmem:[%s5 + $0x630] sm:$0xff]
    %v7320 = vld [vmem:[%s5 + $0x638] sm:$0xff]
    %v7321 = vld [vmem:[%s5 + $0x640] sm:$0xff]
    %v7322 = vld [vmem:[%s5 + $0x648] sm:$0xff]
    %v7323 = vld [vmem:[%s5 + $0x650] sm:$0xff]
    %v7324 = vld [vmem:[%s5 + $0x658] sm:$0xff]
    %v7325 = vld [vmem:[%s5 + $0x660] sm:$0xff]
    %v7326 = vld [vmem:[%s5 + $0x668] sm:$0xff]
    %v7327 = vld [vmem:[%s5 + $0x670] sm:$0xff]
    %v7328 = vld [vmem:[%s5 + $0x678] sm:$0xff]
    %v7329 = vld [vmem:[%s5 + $0x680] sm:$0xff]
    %v7330 = vld [vmem:[%s5 + $0x688] sm:$0xff]
    %v7331 = vld [vmem:[%s5 + $0x690] sm:$0xff]
    %v7332 = vld [vmem:[%s5 + $0x698] sm:$0xff]
    %v7333 = vld [vmem:[%s5 + $0x6a0] sm:$0xff]
    %v7334 = vld [vmem:[%s5 + $0x6a8] sm:$0xff]
    %v7335 = vld [vmem:[%s5 + $0x6b0] sm:$0xff]
    %v7336 = vld [vmem:[%s5 + $0x6b8] sm:$0xff]
    %v7337 = vld [vmem:[%s5 + $0x6c0] sm:$0xff]
    %v7338 = vld [vmem:[%s5 + $0x6c8] sm:$0xff]
    %v7339 = vld [vmem:[%s5 + $0x6d0] sm:$0xff]
    %v7340 = vld [vmem:[%s5 + $0x6d8] sm:$0xff]
    %v7341 = vld [vmem:[%s5 + $0x6e0] sm:$0xff]
    %v7342 = vld [vmem:[%s5 + $0x6e8] sm:$0xff]
    %v7343 = vld [vmem:[%s5 + $0x6f0] sm:$0xff]
    %v7344 = vld [vmem:[%s5 + $0x6f8] sm:$0xff]
    %v7345 = vld [vmem:[%s6] sm:$0xf]
    %v7347 = vlaneseq
    %v7348 = vshrl.u32 %v7347, 7
    %v7349 = vsub.s32 0, %v7348
    %v7350 = vrot.slane %v7345, %v7349
    %v7351 = vlaneseq
    %v7352 = vshrl.u32 %v7351, 7
    %v7353 = vsub.s32 1, %v7352
    %v7354 = vrot.slane %v7345, %v7353
    %v7355 = vlaneseq
    %v7356 = vshrl.u32 %v7355, 7
    %v7357 = vsub.s32 2, %v7356
    %v7358 = vrot.slane %v7345, %v7357
    %v7359 = vlaneseq
    %v7360 = vshrl.u32 %v7359, 7
    %v7361 = vsub.s32 3, %v7360
    %v7362 = vrot.slane %v7345, %v7361
    %v7591 = vunpack.c.l.b16 %v7121
    %v7592 = vunpack.c.h.b16 %v7121
    %v7593 = vunpack.c.l.b16 %v7122
    %v7594 = vunpack.c.h.b16 %v7122
    %v7595 = vunpack.c.l.b16 %v7123
    %v7596 = vunpack.c.h.b16 %v7123
    %v7597 = vunpack.c.l.b16 %v7124
    %v7598 = vunpack.c.h.b16 %v7124
    %v7599 = vunpack.c.l.b16 %v7125
    %v7600 = vunpack.c.h.b16 %v7125
    %v7601 = vunpack.c.l.b16 %v7126
    %v7602 = vunpack.c.h.b16 %v7126
    %v7603 = vunpack.c.l.b16 %v7127
    %v7604 = vunpack.c.h.b16 %v7127
    %v7605 = vunpack.c.l.b16 %v7128
    %v7606 = vunpack.c.h.b16 %v7128
    %v7607 = vunpack.c.l.b16 %v7129
    %v7608 = vunpack.c.h.b16 %v7129
    %v7609 = vunpack.c.l.b16 %v7130
    %v7610 = vunpack.c.h.b16 %v7130
    %v7611 = vunpack.c.l.b16 %v7131
    %v7612 = vunpack.c.h.b16 %v7131
    %v7613 = vunpack.c.l.b16 %v7132
    %v7614 = vunpack.c.h.b16 %v7132
    %v7615 = vunpack.c.l.b16 %v7133
    %v7616 = vunpack.c.h.b16 %v7133
    %v7617 = vunpack.c.l.b16 %v7134
    %v7618 = vunpack.c.h.b16 %v7134
    %v7619 = vunpack.c.l.b16 %v7135
    %v7620 = vunpack.c.h.b16 %v7135
    %v7621 = vunpack.c.l.b16 %v7136
    %v7622 = vunpack.c.h.b16 %v7136
    %v7623 = vunpack.c.l.b16 %v7137
    %v7624 = vunpack.c.h.b16 %v7137
    %v7625 = vunpack.c.l.b16 %v7138
    %v7626 = vunpack.c.h.b16 %v7138
    %v7627 = vunpack.c.l.b16 %v7139
    %v7628 = vunpack.c.h.b16 %v7139
    %v7629 = vunpack.c.l.b16 %v7140
    %v7630 = vunpack.c.h.b16 %v7140
    %v7631 = vunpack.c.l.b16 %v7141
    %v7632 = vunpack.c.h.b16 %v7141
    %v7633 = vunpack.c.l.b16 %v7142
    %v7634 = vunpack.c.h.b16 %v7142
    %v7635 = vunpack.c.l.b16 %v7143
    %v7636 = vunpack.c.h.b16 %v7143
    %v7637 = vunpack.c.l.b16 %v7144
    %v7638 = vunpack.c.h.b16 %v7144
    %v7639 = vunpack.c.l.b16 %v7145
    %v7640 = vunpack.c.h.b16 %v7145
    %v7641 = vunpack.c.l.b16 %v7146
    %v7642 = vunpack.c.h.b16 %v7146
    %v7643 = vunpack.c.l.b16 %v7147
    %v7644 = vunpack.c.h.b16 %v7147
    %v7645 = vunpack.c.l.b16 %v7148
    %v7646 = vunpack.c.h.b16 %v7148
    %v7647 = vunpack.c.l.b16 %v7149
    %v7648 = vunpack.c.h.b16 %v7149
    %v7649 = vunpack.c.l.b16 %v7150
    %v7650 = vunpack.c.h.b16 %v7150
    %v7651 = vunpack.c.l.b16 %v7151
    %v7652 = vunpack.c.h.b16 %v7151
    %v7653 = vunpack.c.l.b16 %v7152
    %v7654 = vunpack.c.h.b16 %v7152
    %v7655 = vunpack.c.l.b16 %v7153
    %v7656 = vunpack.c.h.b16 %v7153
    %v7657 = vunpack.c.l.b16 %v7154
    %v7658 = vunpack.c.h.b16 %v7154
    %v7659 = vunpack.c.l.b16 %v7155
    %v7660 = vunpack.c.h.b16 %v7155
    %v7661 = vunpack.c.l.b16 %v7156
    %v7662 = vunpack.c.h.b16 %v7156
    %v7663 = vunpack.c.l.b16 %v7157
    %v7664 = vunpack.c.h.b16 %v7157
    %v7665 = vunpack.c.l.b16 %v7158
    %v7666 = vunpack.c.h.b16 %v7158
    %v7667 = vunpack.c.l.b16 %v7159
    %v7668 = vunpack.c.h.b16 %v7159
    %v7669 = vunpack.c.l.b16 %v7160
    %v7670 = vunpack.c.h.b16 %v7160
    %v7671 = vunpack.c.l.b16 %v7161
    %v7672 = vunpack.c.h.b16 %v7161
    %v7673 = vunpack.c.l.b16 %v7162
    %v7674 = vunpack.c.h.b16 %v7162
    %v7675 = vunpack.c.l.b16 %v7163
    %v7676 = vunpack.c.h.b16 %v7163
    %v7677 = vunpack.c.l.b16 %v7164
    %v7678 = vunpack.c.h.b16 %v7164
    %v7679 = vunpack.c.l.b16 %v7165
    %v7680 = vunpack.c.h.b16 %v7165
    %v7681 = vunpack.c.l.b16 %v7166
    %v7682 = vunpack.c.h.b16 %v7166
    %v7683 = vunpack.c.l.b16 %v7167
    %v7684 = vunpack.c.h.b16 %v7167
    %v7685 = vunpack.c.l.b16 %v7168
    %v7686 = vunpack.c.h.b16 %v7168
    %v7687 = vunpack.c.l.b16 %v7169
    %v7688 = vunpack.c.h.b16 %v7169
    %v7689 = vunpack.c.l.b16 %v7170
    %v7690 = vunpack.c.h.b16 %v7170
    %v7691 = vunpack.c.l.b16 %v7171
    %v7692 = vunpack.c.h.b16 %v7171
    %v7693 = vunpack.c.l.b16 %v7172
    %v7694 = vunpack.c.h.b16 %v7172
    %v7695 = vunpack.c.l.b16 %v7173
    %v7696 = vunpack.c.h.b16 %v7173
    %v7697 = vunpack.c.l.b16 %v7174
    %v7698 = vunpack.c.h.b16 %v7174
    %v7699 = vunpack.c.l.b16 %v7175
    %v7700 = vunpack.c.h.b16 %v7175
    %v7701 = vunpack.c.l.b16 %v7176
    %v7702 = vunpack.c.h.b16 %v7176
    %v7703 = vunpack.c.l.b16 %v7177
    %v7704 = vunpack.c.h.b16 %v7177
    %v7705 = vunpack.c.l.b16 %v7178
    %v7706 = vunpack.c.h.b16 %v7178
    %v7707 = vunpack.c.l.b16 %v7179
    %v7708 = vunpack.c.h.b16 %v7179
    %v7709 = vunpack.c.l.b16 %v7180
    %v7710 = vunpack.c.h.b16 %v7180
    %v7711 = vunpack.c.l.b16 %v7181
    %v7712 = vunpack.c.h.b16 %v7181
    %v7713 = vunpack.c.l.b16 %v7182
    %v7714 = vunpack.c.h.b16 %v7182
    %v7715 = vunpack.c.l.b16 %v7183
    %v7716 = vunpack.c.h.b16 %v7183
    %v7717 = vunpack.c.l.b16 %v7184
    %v7718 = vunpack.c.h.b16 %v7184
    %v7719 = vunpack.c.l.b16 %v7185
    %v7720 = vunpack.c.h.b16 %v7185
    %v7721 = vunpack.c.l.b16 %v7186
    %v7722 = vunpack.c.h.b16 %v7186
    %v7723 = vunpack.c.l.b16 %v7187
    %v7724 = vunpack.c.h.b16 %v7187
    %v7725 = vunpack.c.l.b16 %v7188
    %v7726 = vunpack.c.h.b16 %v7188
    %v7727 = vunpack.c.l.b16 %v7189
    %v7728 = vunpack.c.h.b16 %v7189
    %v7729 = vunpack.c.l.b16 %v7190
    %v7730 = vunpack.c.h.b16 %v7190
    %v7731 = vunpack.c.l.b16 %v7191
    %v7732 = vunpack.c.h.b16 %v7191
    %v7733 = vunpack.c.l.b16 %v7192
    %v7734 = vunpack.c.h.b16 %v7192
    %v7735 = vunpack.c.l.b16 %v7193
    %v7736 = vunpack.c.h.b16 %v7193
    %v7737 = vunpack.c.l.b16 %v7194
    %v7738 = vunpack.c.h.b16 %v7194
    %v7739 = vunpack.c.l.b16 %v7195
    %v7740 = vunpack.c.h.b16 %v7195
    %v7741 = vunpack.c.l.b16 %v7196
    %v7742 = vunpack.c.h.b16 %v7196
    %v7743 = vunpack.c.l.b16 %v7197
    %v7744 = vunpack.c.h.b16 %v7197
    %v7745 = vunpack.c.l.b16 %v7198
    %v7746 = vunpack.c.h.b16 %v7198
    %v7747 = vunpack.c.l.b16 %v7199
    %v7748 = vunpack.c.h.b16 %v7199
    %v7749 = vunpack.c.l.b16 %v7200
    %v7750 = vunpack.c.h.b16 %v7200
    %v7751 = vunpack.c.l.b16 %v7201
    %v7752 = vunpack.c.h.b16 %v7201
    %v7753 = vunpack.c.l.b16 %v7202
    %v7754 = vunpack.c.h.b16 %v7202
    %v7755 = vunpack.c.l.b16 %v7203
    %v7756 = vunpack.c.h.b16 %v7203
    %v7757 = vunpack.c.l.b16 %v7204
    %v7758 = vunpack.c.h.b16 %v7204
    %v7759 = vunpack.c.l.b16 %v7205
    %v7760 = vunpack.c.h.b16 %v7205
    %v7761 = vunpack.c.l.b16 %v7206
    %v7762 = vunpack.c.h.b16 %v7206
    %v7763 = vunpack.c.l.b16 %v7207
    %v7764 = vunpack.c.h.b16 %v7207
    %v7765 = vunpack.c.l.b16 %v7208
    %v7766 = vunpack.c.h.b16 %v7208
    %v7767 = vunpack.c.l.b16 %v7209
    %v7768 = vunpack.c.h.b16 %v7209
    %v7769 = vunpack.c.l.b16 %v7210
    %v7770 = vunpack.c.h.b16 %v7210
    %v7771 = vunpack.c.l.b16 %v7211
    %v7772 = vunpack.c.h.b16 %v7211
    %v7773 = vunpack.c.l.b16 %v7212
    %v7774 = vunpack.c.h.b16 %v7212
    %v7775 = vunpack.c.l.b16 %v7213
    %v7776 = vunpack.c.h.b16 %v7213
    %v7777 = vunpack.c.l.b16 %v7214
    %v7778 = vunpack.c.h.b16 %v7214
    %v7779 = vunpack.c.l.b16 %v7215
    %v7780 = vunpack.c.h.b16 %v7215
    %v7781 = vunpack.c.l.b16 %v7216
    %v7782 = vunpack.c.h.b16 %v7216
    %v7783 = vunpack.c.l.b16 %v7217
    %v7784 = vunpack.c.h.b16 %v7217
    %v7785 = vunpack.c.l.b16 %v7218
    %v7786 = vunpack.c.h.b16 %v7218
    %v7787 = vunpack.c.l.b16 %v7219
    %v7788 = vunpack.c.h.b16 %v7219
    %v7789 = vunpack.c.l.b16 %v7220
    %v7790 = vunpack.c.h.b16 %v7220
    %v7791 = vunpack.c.l.b16 %v7221
    %v7792 = vunpack.c.h.b16 %v7221
    %v7793 = vunpack.c.l.b16 %v7222
    %v7794 = vunpack.c.h.b16 %v7222
    %v7795 = vunpack.c.l.b16 %v7223
    %v7796 = vunpack.c.h.b16 %v7223
    %v7797 = vunpack.c.l.b16 %v7224
    %v7798 = vunpack.c.h.b16 %v7224
    %v7799 = vunpack.c.l.b16 %v7225
    %v7800 = vunpack.c.h.b16 %v7225
    %v7801 = vunpack.c.l.b16 %v7226
    %v7802 = vunpack.c.h.b16 %v7226
    %v7803 = vunpack.c.l.b16 %v7227
    %v7804 = vunpack.c.h.b16 %v7227
    %v7805 = vunpack.c.l.b16 %v7228
    %v7806 = vunpack.c.h.b16 %v7228
    %v7807 = vunpack.c.l.b16 %v7229
    %v7808 = vunpack.c.h.b16 %v7229
    %v7809 = vunpack.c.l.b16 %v7230
    %v7810 = vunpack.c.h.b16 %v7230
    %v7811 = vunpack.c.l.b16 %v7231
    %v7812 = vunpack.c.h.b16 %v7231
    %v7813 = vunpack.c.l.b16 %v7232
    %v7814 = vunpack.c.h.b16 %v7232
    %v7815 = vunpack.c.l.b16 %v7233
    %v7816 = vunpack.c.h.b16 %v7233
    %v7817 = vunpack.c.l.b16 %v7234
    %v7818 = vunpack.c.h.b16 %v7234
    %v7819 = vunpack.c.l.b16 %v7235
    %v7820 = vunpack.c.h.b16 %v7235
    %v7821 = vunpack.c.l.b16 %v7236
    %v7822 = vunpack.c.h.b16 %v7236
    %v7823 = vunpack.c.l.b16 %v7237
    %v7824 = vunpack.c.h.b16 %v7237
    %v7825 = vunpack.c.l.b16 %v7238
    %v7826 = vunpack.c.h.b16 %v7238
    %v7827 = vunpack.c.l.b16 %v7239
    %v7828 = vunpack.c.h.b16 %v7239
    %v7829 = vunpack.c.l.b16 %v7240
    %v7830 = vunpack.c.h.b16 %v7240
    %v7831 = vunpack.c.l.b16 %v7241
    %v7832 = vunpack.c.h.b16 %v7241
    %v7833 = vunpack.c.l.b16 %v7242
    %v7834 = vunpack.c.h.b16 %v7242
    %v7835 = vunpack.c.l.b16 %v7243
    %v7836 = vunpack.c.h.b16 %v7243
    %v7837 = vunpack.c.l.b16 %v7244
    %v7838 = vunpack.c.h.b16 %v7244
    %v7839 = vunpack.c.l.b16 %v7245
    %v7840 = vunpack.c.h.b16 %v7245
    %v7841 = vunpack.c.l.b16 %v7246
    %v7842 = vunpack.c.h.b16 %v7246
    %v7843 = vunpack.c.l.b16 %v7247
    %v7844 = vunpack.c.h.b16 %v7247
    %v7845 = vunpack.c.l.b16 %v7248
    %v7846 = vunpack.c.h.b16 %v7248
    %v7847 = vunpack.c.l.b16 %v7249
    %v7848 = vunpack.c.h.b16 %v7249
    %v7849 = vunpack.c.l.b16 %v7250
    %v7850 = vunpack.c.h.b16 %v7250
    %v7851 = vunpack.c.l.b16 %v7251
    %v7852 = vunpack.c.h.b16 %v7251
    %v7853 = vunpack.c.l.b16 %v7252
    %v7854 = vunpack.c.h.b16 %v7252
    %v7855 = vunpack.c.l.b16 %v7253
    %v7856 = vunpack.c.h.b16 %v7253
    %v7857 = vunpack.c.l.b16 %v7254
    %v7858 = vunpack.c.h.b16 %v7254
    %v7859 = vunpack.c.l.b16 %v7255
    %v7860 = vunpack.c.h.b16 %v7255
    %v7861 = vunpack.c.l.b16 %v7256
    %v7862 = vunpack.c.h.b16 %v7256
    %v7863 = vunpack.c.l.b16 %v7257
    %v7864 = vunpack.c.h.b16 %v7257
    %v7865 = vunpack.c.l.b16 %v7258
    %v7866 = vunpack.c.h.b16 %v7258
    %v7867 = vunpack.c.l.b16 %v7259
    %v7868 = vunpack.c.h.b16 %v7259
    %v7869 = vunpack.c.l.b16 %v7260
    %v7870 = vunpack.c.h.b16 %v7260
    %v7871 = vunpack.c.l.b16 %v7261
    %v7872 = vunpack.c.h.b16 %v7261
    %v7873 = vunpack.c.l.b16 %v7262
    %v7874 = vunpack.c.h.b16 %v7262
    %v7875 = vunpack.c.l.b16 %v7263
    %v7876 = vunpack.c.h.b16 %v7263
    %v7877 = vunpack.c.l.b16 %v7264
    %v7878 = vunpack.c.h.b16 %v7264
    %v7879 = vunpack.c.l.b16 %v7265
    %v7880 = vunpack.c.h.b16 %v7265
    %v7881 = vunpack.c.l.b16 %v7266
    %v7882 = vunpack.c.h.b16 %v7266
    %v7883 = vunpack.c.l.b16 %v7267
    %v7884 = vunpack.c.h.b16 %v7267
    %v7885 = vunpack.c.l.b16 %v7268
    %v7886 = vunpack.c.h.b16 %v7268
    %v7887 = vunpack.c.l.b16 %v7269
    %v7888 = vunpack.c.h.b16 %v7269
    %v7889 = vunpack.c.l.b16 %v7270
    %v7890 = vunpack.c.h.b16 %v7270
    %v7891 = vunpack.c.l.b16 %v7271
    %v7892 = vunpack.c.h.b16 %v7271
    %v7893 = vunpack.c.l.b16 %v7272
    %v7894 = vunpack.c.h.b16 %v7272
    %v7895 = vunpack.c.l.b16 %v7273
    %v7896 = vunpack.c.h.b16 %v7273
    %v7897 = vunpack.c.l.b16 %v7274
    %v7898 = vunpack.c.h.b16 %v7274
    %v7899 = vunpack.c.l.b16 %v7275
    %v7900 = vunpack.c.h.b16 %v7275
    %v7901 = vunpack.c.l.b16 %v7276
    %v7902 = vunpack.c.h.b16 %v7276
    %v7903 = vunpack.c.l.b16 %v7277
    %v7904 = vunpack.c.h.b16 %v7277
    %v7905 = vunpack.c.l.b16 %v7278
    %v7906 = vunpack.c.h.b16 %v7278
    %v7907 = vunpack.c.l.b16 %v7279
    %v7908 = vunpack.c.h.b16 %v7279
    %v7909 = vunpack.c.l.b16 %v7280
    %v7910 = vunpack.c.h.b16 %v7280
    %v7911 = vunpack.c.l.b16 %v7281
    %v7912 = vunpack.c.h.b16 %v7281
    %v7913 = vunpack.c.l.b16 %v7282
    %v7914 = vunpack.c.h.b16 %v7282
    %v7915 = vunpack.c.l.b16 %v7283
    %v7916 = vunpack.c.h.b16 %v7283
    %v7917 = vunpack.c.l.b16 %v7284
    %v7918 = vunpack.c.h.b16 %v7284
    %v7919 = vunpack.c.l.b16 %v7285
    %v7920 = vunpack.c.h.b16 %v7285
    %v7921 = vunpack.c.l.b16 %v7286
    %v7922 = vunpack.c.h.b16 %v7286
    %v7923 = vunpack.c.l.b16 %v7287
    %v7924 = vunpack.c.h.b16 %v7287
    %v7925 = vunpack.c.l.b16 %v7288
    %v7926 = vunpack.c.h.b16 %v7288
    %v7927 = vunpack.c.l.b16 %v7289
    %v7928 = vunpack.c.h.b16 %v7289
    %v7929 = vunpack.c.l.b16 %v7290
    %v7930 = vunpack.c.h.b16 %v7290
    %v7931 = vunpack.c.l.b16 %v7291
    %v7932 = vunpack.c.h.b16 %v7291
    %v7933 = vunpack.c.l.b16 %v7292
    %v7934 = vunpack.c.h.b16 %v7292
    %v7935 = vunpack.c.l.b16 %v7293
    %v7936 = vunpack.c.h.b16 %v7293
    %v7937 = vunpack.c.l.b16 %v7294
    %v7938 = vunpack.c.h.b16 %v7294
    %v7939 = vunpack.c.l.b16 %v7295
    %v7940 = vunpack.c.h.b16 %v7295
    %v7941 = vunpack.c.l.b16 %v7296
    %v7942 = vunpack.c.h.b16 %v7296
    %v7943 = vunpack.c.l.b16 %v7297
    %v7944 = vunpack.c.h.b16 %v7297
    %v7945 = vunpack.c.l.b16 %v7298
    %v7946 = vunpack.c.h.b16 %v7298
    %v7947 = vunpack.c.l.b16 %v7299
    %v7948 = vunpack.c.h.b16 %v7299
    %v7949 = vunpack.c.l.b16 %v7300
    %v7950 = vunpack.c.h.b16 %v7300
    %v7951 = vunpack.c.l.b16 %v7301
    %v7952 = vunpack.c.h.b16 %v7301
    %v7953 = vunpack.c.l.b16 %v7302
    %v7954 = vunpack.c.h.b16 %v7302
    %v7955 = vunpack.c.l.b16 %v7303
    %v7956 = vunpack.c.h.b16 %v7303
    %v7957 = vunpack.c.l.b16 %v7304
    %v7958 = vunpack.c.h.b16 %v7304
    %v7959 = vunpack.c.l.b16 %v7305
    %v7960 = vunpack.c.h.b16 %v7305
    %v7961 = vunpack.c.l.b16 %v7306
    %v7962 = vunpack.c.h.b16 %v7306
    %v7963 = vunpack.c.l.b16 %v7307
    %v7964 = vunpack.c.h.b16 %v7307
    %v7965 = vunpack.c.l.b16 %v7308
    %v7966 = vunpack.c.h.b16 %v7308
    %v7967 = vunpack.c.l.b16 %v7309
    %v7968 = vunpack.c.h.b16 %v7309
    %v7969 = vunpack.c.l.b16 %v7310
    %v7970 = vunpack.c.h.b16 %v7310
    %v7971 = vunpack.c.l.b16 %v7311
    %v7972 = vunpack.c.h.b16 %v7311
    %v7973 = vunpack.c.l.b16 %v7312
    %v7974 = vunpack.c.h.b16 %v7312
    %v7975 = vunpack.c.l.b16 %v7313
    %v7976 = vunpack.c.h.b16 %v7313
    %v7977 = vunpack.c.l.b16 %v7314
    %v7978 = vunpack.c.h.b16 %v7314
    %v7979 = vunpack.c.l.b16 %v7315
    %v7980 = vunpack.c.h.b16 %v7315
    %v7981 = vunpack.c.l.b16 %v7316
    %v7982 = vunpack.c.h.b16 %v7316
    %v7983 = vunpack.c.l.b16 %v7317
    %v7984 = vunpack.c.h.b16 %v7317
    %v7985 = vunpack.c.l.b16 %v7318
    %v7986 = vunpack.c.h.b16 %v7318
    %v7987 = vunpack.c.l.b16 %v7319
    %v7988 = vunpack.c.h.b16 %v7319
    %v7989 = vunpack.c.l.b16 %v7320
    %v7990 = vunpack.c.h.b16 %v7320
    %v7991 = vunpack.c.l.b16 %v7321
    %v7992 = vunpack.c.h.b16 %v7321
    %v7993 = vunpack.c.l.b16 %v7322
    %v7994 = vunpack.c.h.b16 %v7322
    %v7995 = vunpack.c.l.b16 %v7323
    %v7996 = vunpack.c.h.b16 %v7323
    %v7997 = vunpack.c.l.b16 %v7324
    %v7998 = vunpack.c.h.b16 %v7324
    %v7999 = vunpack.c.l.b16 %v7325
    %v8000 = vunpack.c.h.b16 %v7325
    %v8001 = vunpack.c.l.b16 %v7326
    %v8002 = vunpack.c.h.b16 %v7326
    %v8003 = vunpack.c.l.b16 %v7327
    %v8004 = vunpack.c.h.b16 %v7327
    %v8005 = vunpack.c.l.b16 %v7328
    %v8006 = vunpack.c.h.b16 %v7328
    %v8007 = vunpack.c.l.b16 %v7329
    %v8008 = vunpack.c.h.b16 %v7329
    %v8009 = vunpack.c.l.b16 %v7330
    %v8010 = vunpack.c.h.b16 %v7330
    %v8011 = vunpack.c.l.b16 %v7331
    %v8012 = vunpack.c.h.b16 %v7331
    %v8013 = vunpack.c.l.b16 %v7332
    %v8014 = vunpack.c.h.b16 %v7332
    %v8015 = vunpack.c.l.b16 %v7333
    %v8016 = vunpack.c.h.b16 %v7333
    %v8017 = vunpack.c.l.b16 %v7334
    %v8018 = vunpack.c.h.b16 %v7334
    %v8019 = vunpack.c.l.b16 %v7335
    %v8020 = vunpack.c.h.b16 %v7335
    %v8021 = vunpack.c.l.b16 %v7336
    %v8022 = vunpack.c.h.b16 %v7336
    %v8023 = vunpack.c.l.b16 %v7337
    %v8024 = vunpack.c.h.b16 %v7337
    %v8025 = vunpack.c.l.b16 %v7338
    %v8026 = vunpack.c.h.b16 %v7338
    %v8027 = vunpack.c.l.b16 %v7339
    %v8028 = vunpack.c.h.b16 %v7339
    %v8029 = vunpack.c.l.b16 %v7340
    %v8030 = vunpack.c.h.b16 %v7340
    %v8031 = vunpack.c.l.b16 %v7341
    %v8032 = vunpack.c.h.b16 %v7341
    %v8033 = vunpack.c.l.b16 %v7342
    %v8034 = vunpack.c.h.b16 %v7342
    %v8035 = vunpack.c.l.b16 %v7343
    %v8036 = vunpack.c.h.b16 %v7343
    %v8037 = vunpack.c.l.b16 %v7344
    %v8038 = vunpack.c.h.b16 %v7344
    %v8039 = vpack.c.b16 %v7595, %v7591
    %v8040 = vpack.c.b16 %v7596, %v7592
    %v8041 = vpack.c.b16 %v7597, %v7593
    %v8042 = vpack.c.b16 %v7598, %v7594
    %v8043 = vpack.c.b16 %v7603, %v7599
    %v8044 = vpack.c.b16 %v7604, %v7600
    %v8045 = vpack.c.b16 %v7605, %v7601
    %v8046 = vpack.c.b16 %v7606, %v7602
    %v8047 = vpack.c.b16 %v7611, %v7607
    %v8048 = vpack.c.b16 %v7612, %v7608
    %v8049 = vpack.c.b16 %v7613, %v7609
    %v8050 = vpack.c.b16 %v7614, %v7610
    %v8051 = vpack.c.b16 %v7619, %v7615
    %v8052 = vpack.c.b16 %v7620, %v7616
    %v8053 = vpack.c.b16 %v7621, %v7617
    %v8054 = vpack.c.b16 %v7622, %v7618
    %v8055 = vpack.c.b16 %v7627, %v7623
    %v8056 = vpack.c.b16 %v7628, %v7624
    %v8057 = vpack.c.b16 %v7629, %v7625
    %v8058 = vpack.c.b16 %v7630, %v7626
    %v8059 = vpack.c.b16 %v7635, %v7631
    %v8060 = vpack.c.b16 %v7636, %v7632
    %v8061 = vpack.c.b16 %v7637, %v7633
    %v8062 = vpack.c.b16 %v7638, %v7634
    %v8063 = vpack.c.b16 %v7643, %v7639
    %v8064 = vpack.c.b16 %v7644, %v7640
    %v8065 = vpack.c.b16 %v7645, %v7641
    %v8066 = vpack.c.b16 %v7646, %v7642
    %v8067 = vpack.c.b16 %v7651, %v7647
    %v8068 = vpack.c.b16 %v7652, %v7648
    %v8069 = vpack.c.b16 %v7653, %v7649
    %v8070 = vpack.c.b16 %v7654, %v7650
    %v8071 = vpack.c.b16 %v7659, %v7655
    %v8072 = vpack.c.b16 %v7660, %v7656
    %v8073 = vpack.c.b16 %v7661, %v7657
    %v8074 = vpack.c.b16 %v7662, %v7658
    %v8075 = vpack.c.b16 %v7667, %v7663
    %v8076 = vpack.c.b16 %v7668, %v7664
    %v8077 = vpack.c.b16 %v7669, %v7665
    %v8078 = vpack.c.b16 %v7670, %v7666
    %v8079 = vpack.c.b16 %v7675, %v7671
    %v8080 = vpack.c.b16 %v7676, %v7672
    %v8081 = vpack.c.b16 %v7677, %v7673
    %v8082 = vpack.c.b16 %v7678, %v7674
    %v8083 = vpack.c.b16 %v7683, %v7679
    %v8084 = vpack.c.b16 %v7684, %v7680
    %v8085 = vpack.c.b16 %v7685, %v7681
    %v8086 = vpack.c.b16 %v7686, %v7682
    %v8087 = vpack.c.b16 %v7691, %v7687
    %v8088 = vpack.c.b16 %v7692, %v7688
    %v8089 = vpack.c.b16 %v7693, %v7689
    %v8090 = vpack.c.b16 %v7694, %v7690
    %v8091 = vpack.c.b16 %v7699, %v7695
    %v8092 = vpack.c.b16 %v7700, %v7696
    %v8093 = vpack.c.b16 %v7701, %v7697
    %v8094 = vpack.c.b16 %v7702, %v7698
    %v8095 = vpack.c.b16 %v7707, %v7703
    %v8096 = vpack.c.b16 %v7708, %v7704
    %v8097 = vpack.c.b16 %v7709, %v7705
    %v8098 = vpack.c.b16 %v7710, %v7706
    %v8099 = vpack.c.b16 %v7715, %v7711
    %v8100 = vpack.c.b16 %v7716, %v7712
    %v8101 = vpack.c.b16 %v7717, %v7713
    %v8102 = vpack.c.b16 %v7718, %v7714
    %v8103 = vpack.c.b16 %v7723, %v7719
    %v8104 = vpack.c.b16 %v7724, %v7720
    %v8105 = vpack.c.b16 %v7725, %v7721
    %v8106 = vpack.c.b16 %v7726, %v7722
    %v8107 = vpack.c.b16 %v7731, %v7727
    %v8108 = vpack.c.b16 %v7732, %v7728
    %v8109 = vpack.c.b16 %v7733, %v7729
    %v8110 = vpack.c.b16 %v7734, %v7730
    %v8111 = vpack.c.b16 %v7739, %v7735
    %v8112 = vpack.c.b16 %v7740, %v7736
    %v8113 = vpack.c.b16 %v7741, %v7737
    %v8114 = vpack.c.b16 %v7742, %v7738
    %v8115 = vpack.c.b16 %v7747, %v7743
    %v8116 = vpack.c.b16 %v7748, %v7744
    %v8117 = vpack.c.b16 %v7749, %v7745
    %v8118 = vpack.c.b16 %v7750, %v7746
    %v8119 = vpack.c.b16 %v7755, %v7751
    %v8120 = vpack.c.b16 %v7756, %v7752
    %v8121 = vpack.c.b16 %v7757, %v7753
    %v8122 = vpack.c.b16 %v7758, %v7754
    %v8123 = vpack.c.b16 %v7763, %v7759
    %v8124 = vpack.c.b16 %v7764, %v7760
    %v8125 = vpack.c.b16 %v7765, %v7761
    %v8126 = vpack.c.b16 %v7766, %v7762
    %v8127 = vpack.c.b16 %v7771, %v7767
    %v8128 = vpack.c.b16 %v7772, %v7768
    %v8129 = vpack.c.b16 %v7773, %v7769
    %v8130 = vpack.c.b16 %v7774, %v7770
    %v8131 = vpack.c.b16 %v7779, %v7775
    %v8132 = vpack.c.b16 %v7780, %v7776
    %v8133 = vpack.c.b16 %v7781, %v7777
    %v8134 = vpack.c.b16 %v7782, %v7778
    %v8135 = vpack.c.b16 %v7787, %v7783
    %v8136 = vpack.c.b16 %v7788, %v7784
    %v8137 = vpack.c.b16 %v7789, %v7785
    %v8138 = vpack.c.b16 %v7790, %v7786
    %v8139 = vpack.c.b16 %v7795, %v7791
    %v8140 = vpack.c.b16 %v7796, %v7792
    %v8141 = vpack.c.b16 %v7797, %v7793
    %v8142 = vpack.c.b16 %v7798, %v7794
    %v8143 = vpack.c.b16 %v7803, %v7799
    %v8144 = vpack.c.b16 %v7804, %v7800
    %v8145 = vpack.c.b16 %v7805, %v7801
    %v8146 = vpack.c.b16 %v7806, %v7802
    %v8147 = vpack.c.b16 %v7811, %v7807
    %v8148 = vpack.c.b16 %v7812, %v7808
    %v8149 = vpack.c.b16 %v7813, %v7809
    %v8150 = vpack.c.b16 %v7814, %v7810
    %v8151 = vpack.c.b16 %v7819, %v7815
    %v8152 = vpack.c.b16 %v7820, %v7816
    %v8153 = vpack.c.b16 %v7821, %v7817
    %v8154 = vpack.c.b16 %v7822, %v7818
    %v8155 = vpack.c.b16 %v7827, %v7823
    %v8156 = vpack.c.b16 %v7828, %v7824
    %v8157 = vpack.c.b16 %v7829, %v7825
    %v8158 = vpack.c.b16 %v7830, %v7826
    %v8159 = vpack.c.b16 %v7835, %v7831
    %v8160 = vpack.c.b16 %v7836, %v7832
    %v8161 = vpack.c.b16 %v7837, %v7833
    %v8162 = vpack.c.b16 %v7838, %v7834
    %v8163 = vpack.c.b16 %v7843, %v7839
    %v8164 = vpack.c.b16 %v7844, %v7840
    %v8165 = vpack.c.b16 %v7845, %v7841
    %v8166 = vpack.c.b16 %v7846, %v7842
    %v8167 = vpack.c.b16 %v7851, %v7847
    %v8168 = vpack.c.b16 %v7852, %v7848
    %v8169 = vpack.c.b16 %v7853, %v7849
    %v8170 = vpack.c.b16 %v7854, %v7850
    %v8171 = vpack.c.b16 %v7859, %v7855
    %v8172 = vpack.c.b16 %v7860, %v7856
    %v8173 = vpack.c.b16 %v7861, %v7857
    %v8174 = vpack.c.b16 %v7862, %v7858
    %v8175 = vpack.c.b16 %v7867, %v7863
    %v8176 = vpack.c.b16 %v7868, %v7864
    %v8177 = vpack.c.b16 %v7869, %v7865
    %v8178 = vpack.c.b16 %v7870, %v7866
    %v8179 = vpack.c.b16 %v7875, %v7871
    %v8180 = vpack.c.b16 %v7876, %v7872
    %v8181 = vpack.c.b16 %v7877, %v7873
    %v8182 = vpack.c.b16 %v7878, %v7874
    %v8183 = vpack.c.b16 %v7883, %v7879
    %v8184 = vpack.c.b16 %v7884, %v7880
    %v8185 = vpack.c.b16 %v7885, %v7881
    %v8186 = vpack.c.b16 %v7886, %v7882
    %v8187 = vpack.c.b16 %v7891, %v7887
    %v8188 = vpack.c.b16 %v7892, %v7888
    %v8189 = vpack.c.b16 %v7893, %v7889
    %v8190 = vpack.c.b16 %v7894, %v7890
    %v8191 = vpack.c.b16 %v7899, %v7895
    %v8192 = vpack.c.b16 %v7900, %v7896
    %v8193 = vpack.c.b16 %v7901, %v7897
    %v8194 = vpack.c.b16 %v7902, %v7898
    %v8195 = vpack.c.b16 %v7907, %v7903
    %v8196 = vpack.c.b16 %v7908, %v7904
    %v8197 = vpack.c.b16 %v7909, %v7905
    %v8198 = vpack.c.b16 %v7910, %v7906
    %v8199 = vpack.c.b16 %v7915, %v7911
    %v8200 = vpack.c.b16 %v7916, %v7912
    %v8201 = vpack.c.b16 %v7917, %v7913
    %v8202 = vpack.c.b16 %v7918, %v7914
    %v8203 = vpack.c.b16 %v7923, %v7919
    %v8204 = vpack.c.b16 %v7924, %v7920
    %v8205 = vpack.c.b16 %v7925, %v7921
    %v8206 = vpack.c.b16 %v7926, %v7922
    %v8207 = vpack.c.b16 %v7931, %v7927
    %v8208 = vpack.c.b16 %v7932, %v7928
    %v8209 = vpack.c.b16 %v7933, %v7929
    %v8210 = vpack.c.b16 %v7934, %v7930
    %v8211 = vpack.c.b16 %v7939, %v7935
    %v8212 = vpack.c.b16 %v7940, %v7936
    %v8213 = vpack.c.b16 %v7941, %v7937
    %v8214 = vpack.c.b16 %v7942, %v7938
    %v8215 = vpack.c.b16 %v7947, %v7943
    %v8216 = vpack.c.b16 %v7948, %v7944
    %v8217 = vpack.c.b16 %v7949, %v7945
    %v8218 = vpack.c.b16 %v7950, %v7946
    %v8219 = vpack.c.b16 %v7955, %v7951
    %v8220 = vpack.c.b16 %v7956, %v7952
    %v8221 = vpack.c.b16 %v7957, %v7953
    %v8222 = vpack.c.b16 %v7958, %v7954
    %v8223 = vpack.c.b16 %v7963, %v7959
    %v8224 = vpack.c.b16 %v7964, %v7960
    %v8225 = vpack.c.b16 %v7965, %v7961
    %v8226 = vpack.c.b16 %v7966, %v7962
    %v8227 = vpack.c.b16 %v7971, %v7967
    %v8228 = vpack.c.b16 %v7972, %v7968
    %v8229 = vpack.c.b16 %v7973, %v7969
    %v8230 = vpack.c.b16 %v7974, %v7970
    %v8231 = vpack.c.b16 %v7979, %v7975
    %v8232 = vpack.c.b16 %v7980, %v7976
    %v8233 = vpack.c.b16 %v7981, %v7977
    %v8234 = vpack.c.b16 %v7982, %v7978
    %v8235 = vpack.c.b16 %v7987, %v7983
    %v8236 = vpack.c.b16 %v7988, %v7984
    %v8237 = vpack.c.b16 %v7989, %v7985
    %v8238 = vpack.c.b16 %v7990, %v7986
    %v8239 = vpack.c.b16 %v7995, %v7991
    %v8240 = vpack.c.b16 %v7996, %v7992
    %v8241 = vpack.c.b16 %v7997, %v7993
    %v8242 = vpack.c.b16 %v7998, %v7994
    %v8243 = vpack.c.b16 %v8003, %v7999
    %v8244 = vpack.c.b16 %v8004, %v8000
    %v8245 = vpack.c.b16 %v8005, %v8001
    %v8246 = vpack.c.b16 %v8006, %v8002
    %v8247 = vpack.c.b16 %v8011, %v8007
    %v8248 = vpack.c.b16 %v8012, %v8008
    %v8249 = vpack.c.b16 %v8013, %v8009
    %v8250 = vpack.c.b16 %v8014, %v8010
    %v8251 = vpack.c.b16 %v8019, %v8015
    %v8252 = vpack.c.b16 %v8020, %v8016
    %v8253 = vpack.c.b16 %v8021, %v8017
    %v8254 = vpack.c.b16 %v8022, %v8018
    %v8255 = vpack.c.b16 %v8027, %v8023
    %v8256 = vpack.c.b16 %v8028, %v8024
    %v8257 = vpack.c.b16 %v8029, %v8025
    %v8258 = vpack.c.b16 %v8030, %v8026
    %v8259 = vpack.c.b16 %v8035, %v8031
    %v8260 = vpack.c.b16 %v8036, %v8032
    %v8261 = vpack.c.b16 %v8037, %v8033
    %v8262 = vpack.c.b16 %v8038, %v8034
    %8487 = vmatprep.subr.bf16.mxu0 %v8040
    %8488 = vmatpush1.bf16.msra.mxu0 %v8039
    %8489 = vmatprep.subr.bf16.mxu0 %v8044
    %8490 = vmatpush1.bf16.msra.mxu0 %v8043
    %8491 = vmatprep.subr.bf16.mxu0 %v8048
    %8492 = vmatpush1.bf16.msra.mxu0 %v8047
    %8493 = vmatprep.subr.bf16.mxu0 %v8052
    %8494 = vmatpush1.bf16.msra.mxu0 %v8051
    %8495 = vmatprep.subr.bf16.mxu0 %v8056
    %8496 = vmatpush1.bf16.msra.mxu0 %v8055
    %8497 = vmatprep.subr.bf16.mxu0 %v8060
    %8498 = vmatpush1.bf16.msra.mxu0 %v8059
    %8499 = vmatprep.subr.bf16.mxu0 %v8064
    %8500 = vmatpush1.bf16.msra.mxu0 %v8063
    %8501 = vmatprep.subr.bf16.mxu0 %v8068
    %8502 = vmatpush1.bf16.msra.mxu0 %v8067
    %8503 = vmatprep.subr.bf16.mxu0 %v8072
    %8504 = vmatpush1.bf16.msra.mxu0 %v8071
    %8505 = vmatprep.subr.bf16.mxu0 %v8076
    %8506 = vmatpush1.bf16.msra.mxu0 %v8075
    %8507 = vmatprep.subr.bf16.mxu0 %v8080
    %8508 = vmatpush1.bf16.msra.mxu0 %v8079
    %8509 = vmatprep.subr.bf16.mxu0 %v8084
    %8510 = vmatpush1.bf16.msra.mxu0 %v8083
    %8511 = vmatprep.subr.bf16.mxu0 %v8088
    %8512 = vmatpush1.bf16.msra.mxu0 %v8087
    %8513 = vmatprep.subr.bf16.mxu0 %v8092
    %8514 = vmatpush1.bf16.msra.mxu0 %v8091
    %8515 = vmatprep.subr.bf16.mxu0 %v8096
    %8516 = vmatpush1.bf16.msra.mxu0 %v8095
    %8517 = vmatprep.subr.bf16.mxu0 %v8100
    %8518 = vmatpush1.bf16.msra.mxu0 %v8099
    %8519 = vmatprep.mubr.bf16.mxu0 %v7115
    %8520 = vmatmul.mubr.bf16.gmra.mrb[0].mxu0 %v7114
    %v8521 = vpop.f32.mrb[0].mxu0
    %v8522 = vadd.f32 %v7350, %v8521
    %v8523 = vpop.f32.mrb[0].mxu0
    %v8524 = vadd.f32 %v7354, %v8523
    %v8525 = vpop.f32.mrb[0].mxu0
    %v8526 = vpop.f32.mrb[0].mxu0
    %8527 = vdwg.mxu0
    %8528 = vmatprep.subr.bf16.mxu0 %v8104
    %8529 = vmatpush1.bf16.msra.mxu0 %v8103
    %8530 = vmatprep.subr.bf16.mxu0 %v8108
    %8531 = vmatpush1.bf16.msra.mxu0 %v8107
    %8532 = vmatprep.subr.bf16.mxu0 %v8112
    %8533 = vmatpush1.bf16.msra.mxu0 %v8111
    %8534 = vmatprep.subr.bf16.mxu0 %v8116
    %8535 = vmatpush1.bf16.msra.mxu0 %v8115
    %8536 = vmatprep.subr.bf16.mxu0 %v8120
    %8537 = vmatpush1.bf16.msra.mxu0 %v8119
    %8538 = vmatprep.subr.bf16.mxu0 %v8124
    %8539 = vmatpush1.bf16.msra.mxu0 %v8123
    %8540 = vmatprep.subr.bf16.mxu0 %v8128
    %8541 = vmatpush1.bf16.msra.mxu0 %v8127
    %8542 = vmatprep.subr.bf16.mxu0 %v8132
    %8543 = vmatpush1.bf16.msra.mxu0 %v8131
    %8544 = vmatprep.subr.bf16.mxu0 %v8136
    %8545 = vmatpush1.bf16.msra.mxu0 %v8135
    %8546 = vmatprep.subr.bf16.mxu0 %v8140
    %8547 = vmatpush1.bf16.msra.mxu0 %v8139
    %8548 = vmatprep.subr.bf16.mxu0 %v8144
    %8549 = vmatpush1.bf16.msra.mxu0 %v8143
    %8550 = vmatprep.subr.bf16.mxu0 %v8148
    %8551 = vmatpush1.bf16.msra.mxu0 %v8147
    %8552 = vmatprep.subr.bf16.mxu0 %v8152
    %8553 = vmatpush1.bf16.msra.mxu0 %v8151
    %8554 = vmatprep.subr.bf16.mxu0 %v8156
    %8555 = vmatpush1.bf16.msra.mxu0 %v8155
    %8556 = vmatprep.subr.bf16.mxu0 %v8160
    %8557 = vmatpush1.bf16.msra.mxu0 %v8159
    %8558 = vmatprep.subr.bf16.mxu0 %v8164
    %8559 = vmatpush1.bf16.msra.mxu0 %v8163
    %8560 = vmatprep.mubr.bf16.mxu0 %v7117
    %8561 = vmatmul.mubr.bf16.gmra.mrb[0].mxu0 %v7116
    %v8562 = vpop.f32.mrb[0].mxu0
    %v8563 = vadd.f32 %v8522, %v8562
    %v8564 = vpop.f32.mrb[0].mxu0
    %v8565 = vadd.f32 %v8524, %v8564
    %v8566 = vpop.f32.mrb[0].mxu0
    %v8567 = vpop.f32.mrb[0].mxu0
    %8568 = vdwg.mxu0
    %8569 = vmatprep.subr.bf16.mxu0 %v8168
    %8570 = vmatpush1.bf16.msra.mxu0 %v8167
    %8571 = vmatprep.subr.bf16.mxu0 %v8172
    %8572 = vmatpush1.bf16.msra.mxu0 %v8171
    %8573 = vmatprep.subr.bf16.mxu0 %v8176
    %8574 = vmatpush1.bf16.msra.mxu0 %v8175
    %8575 = vmatprep.subr.bf16.mxu0 %v8180
    %8576 = vmatpush1.bf16.msra.mxu0 %v8179
    %8577 = vmatprep.subr.bf16.mxu0 %v8184
    %8578 = vmatpush1.bf16.msra.mxu0 %v8183
    %8579 = vmatprep.subr.bf16.mxu0 %v8188
    %8580 = vmatpush1.bf16.msra.mxu0 %v8187
    %8581 = vmatprep.subr.bf16.mxu0 %v8192
    %8582 = vmatpush1.bf16.msra.mxu0 %v8191
    %8583 = vmatprep.subr.bf16.mxu0 %v8196
    %8584 = vmatpush1.bf16.msra.mxu0 %v8195
    %8585 = vmatprep.subr.bf16.mxu0 %v8200
    %8586 = vmatpush1.bf16.msra.mxu0 %v8199
    %8587 = vmatprep.subr.bf16.mxu0 %v8204
    %8588 = vmatpush1.bf16.msra.mxu0 %v8203
    %8589 = vmatprep.subr.bf16.mxu0 %v8208
    %8590 = vmatpush1.bf16.msra.mxu0 %v8207
    %8591 = vmatprep.subr.bf16.mxu0 %v8212
    %8592 = vmatpush1.bf16.msra.mxu0 %v8211
    %8593 = vmatprep.subr.bf16.mxu0 %v8216
    %8594 = vmatpush1.bf16.msra.mxu0 %v8215
    %8595 = vmatprep.subr.bf16.mxu0 %v8220
    %8596 = vmatpush1.bf16.msra.mxu0 %v8219
    %8597 = vmatprep.subr.bf16.mxu0 %v8224
    %8598 = vmatpush1.bf16.msra.mxu0 %v8223
    %8599 = vmatprep.subr.bf16.mxu0 %v8228
    %8600 = vmatpush1.bf16.msra.mxu0 %v8227
    %8601 = vmatprep.mubr.bf16.mxu0 %v7119
    %8602 = vmatmul.mubr.bf16.gmra.mrb[0].mxu0 %v7118
    %v8603 = vpop.f32.mrb[0].mxu0
    %v8604 = vadd.f32 %v8563, %v8603
    %v8605 = vpop.f32.mrb[0].mxu0
    %v8606 = vadd.f32 %v8565, %v8605
    %v8607 = vpop.f32.mrb[0].mxu0
    %v8608 = vpop.f32.mrb[0].mxu0
    %8609 = vdwg.mxu0
    %8610 = vmatprep.subr.bf16.mxu0 %v8232
    %8611 = vmatpush1.bf16.msra.mxu0 %v8231
    %8612 = vmatprep.subr.bf16.mxu0 %v8236
    %8613 = vmatpush1.bf16.msra.mxu0 %v8235
    %8614 = vmatprep.subr.bf16.mxu0 %v8240
    %8615 = vmatpush1.bf16.msra.mxu0 %v8239
    %8616 = vmatprep.subr.bf16.mxu0 %v8244
    %8617 = vmatpush1.bf16.msra.mxu0 %v8243
    %8618 = vmatprep.subr.bf16.mxu0 %v8248
    %8619 = vmatpush1.bf16.msra.mxu0 %v8247
    %8620 = vmatprep.subr.bf16.mxu0 %v8252
    %8621 = vmatpush1.bf16.msra.mxu0 %v8251
    %8622 = vmatprep.subr.bf16.mxu0 %v8256
    %8623 = vmatpush1.bf16.msra.mxu0 %v8255
    %8624 = vmatprep.subr.bf16.mxu0 %v8260
    %8625 = vmatpush1.bf16.msra.mxu0 %v8259
    %8626 = vmatprep.subr.bf16.mxu0 0
    %8627 = vmatpush1.bf16.msra.mxu0 0
    %8628 = vmatprep.subr.bf16.mxu0 0
    %8629 = vmatpush1.bf16.msra.mxu0 0
    %8630 = vmatprep.subr.bf16.mxu0 0
    %8631 = vmatpush1.bf16.msra.mxu0 0
    %8632 = vmatprep.subr.bf16.mxu0 0
    %8633 = vmatpush1.bf16.msra.mxu0 0
    %8634 = vmatprep.subr.bf16.mxu0 0
    %8635 = vmatpush1.bf16.msra.mxu0 0
    %8636 = vmatprep.subr.bf16.mxu0 0
    %8637 = vmatpush1.bf16.msra.mxu0 0
    %8638 = vmatprep.subr.bf16.mxu0 0
    %8639 = vmatpush1.bf16.msra.mxu0 0
    %8640 = vmatprep.subr.bf16.mxu0 0
    %8641 = vmatpush1.bf16.msra.mxu0 0
    %8642 = vmatprep.mubr.bf16.mxu0 0
    %8643 = vmatmul.mubr.bf16.gmra.mrb[0].mxu0 %v7120
    %v8644 = vpop.f32.mrb[0].mxu0
    %v8645 = vadd.f32 %v8604, %v8644
    %v8646 = vpop.f32.mrb[0].mxu0
    %v8647 = vadd.f32 %v8606, %v8646
    %v8648 = vpop.f32.mrb[0].mxu0
    %v8649 = vpop.f32.mrb[0].mxu0
    %8650 = vdwg.mxu0
    %8651 = vmatprep.subr.bf16.mxu0 %v8042
    %8652 = vmatpush1.bf16.msra.mxu0 %v8041
    %8653 = vmatprep.subr.bf16.mxu0 %v8046
    %8654 = vmatpush1.bf16.msra.mxu0 %v8045
    %8655 = vmatprep.subr.bf16.mxu0 %v8050
    %8656 = vmatpush1.bf16.msra.mxu0 %v8049
    %8657 = vmatprep.subr.bf16.mxu0 %v8054
    %8658 = vmatpush1.bf16.msra.mxu0 %v8053
    %8659 = vmatprep.subr.bf16.mxu0 %v8058
    %8660 = vmatpush1.bf16.msra.mxu0 %v8057
    %8661 = vmatprep.subr.bf16.mxu0 %v8062
    %8662 = vmatpush1.bf16.msra.mxu0 %v8061
    %8663 = vmatprep.subr.bf16.mxu0 %v8066
    %8664 = vmatpush1.bf16.msra.mxu0 %v8065
    %8665 = vmatprep.subr.bf16.mxu0 %v8070
    %8666 = vmatpush1.bf16.msra.mxu0 %v8069
    %8667 = vmatprep.subr.bf16.mxu0 %v8074
    %8668 = vmatpush1.bf16.msra.mxu0 %v8073
    %8669 = vmatprep.subr.bf16.mxu0 %v8078
    %8670 = vmatpush1.bf16.msra.mxu0 %v8077
    %8671 = vmatprep.subr.bf16.mxu0 %v8082
    %8672 = vmatpush1.bf16.msra.mxu0 %v8081
    %8673 = vmatprep.subr.bf16.mxu0 %v8086
    %8674 = vmatpush1.bf16.msra.mxu0 %v8085
    %8675 = vmatprep.subr.bf16.mxu0 %v8090
    %8676 = vmatpush1.bf16.msra.mxu0 %v8089
    %8677 = vmatprep.subr.bf16.mxu0 %v8094
    %8678 = vmatpush1.bf16.msra.mxu0 %v8093
    %8679 = vmatprep.subr.bf16.mxu0 %v8098
    %8680 = vmatpush1.bf16.msra.mxu0 %v8097
    %8681 = vmatprep.subr.bf16.mxu0 %v8102
    %8682 = vmatpush1.bf16.msra.mxu0 %v8101
    %8683 = vmatprep.mubr.bf16.mxu0 %v7115
    %8684 = vmatmul.mubr.bf16.gmra.mrb[0].mxu0 %v7114
    %v8685 = vpop.f32.mrb[0].mxu0
    %v8686 = vadd.f32 %v7358, %v8685
    %v8687 = vpop.f32.mrb[0].mxu0
    %v8688 = vadd.f32 %v7362, %v8687
    %v8689 = vpop.f32.mrb[0].mxu0
    %v8690 = vpop.f32.mrb[0].mxu0
    %8691 = vdwg.mxu0
    %8692 = vmatprep.subr.bf16.mxu0 %v8106
    %8693 = vmatpush1.bf16.msra.mxu0 %v8105
    %8694 = vmatprep.subr.bf16.mxu0 %v8110
    %8695 = vmatpush1.bf16.msra.mxu0 %v8109
    %8696 = vmatprep.subr.bf16.mxu0 %v8114
    %8697 = vmatpush1.bf16.msra.mxu0 %v8113
    %8698 = vmatprep.subr.bf16.mxu0 %v8118
    %8699 = vmatpush1.bf16.msra.mxu0 %v8117
    %8700 = vmatprep.subr.bf16.mxu0 %v8122
    %8701 = vmatpush1.bf16.msra.mxu0 %v8121
    %8702 = vmatprep.subr.bf16.mxu0 %v8126
    %8703 = vmatpush1.bf16.msra.mxu0 %v8125
    %8704 = vmatprep.subr.bf16.mxu0 %v8130
    %8705 = vmatpush1.bf16.msra.mxu0 %v8129
    %8706 = vmatprep.subr.bf16.mxu0 %v8134
    %8707 = vmatpush1.bf16.msra.mxu0 %v8133
    %8708 = vmatprep.subr.bf16.mxu0 %v8138
    %8709 = vmatpush1.bf16.msra.mxu0 %v8137
    %8710 = vmatprep.subr.bf16.mxu0 %v8142
    %8711 = vmatpush1.bf16.msra.mxu0 %v8141
    %8712 = vmatprep.subr.bf16.mxu0 %v8146
    %8713 = vmatpush1.bf16.msra.mxu0 %v8145
    %8714 = vmatprep.subr.bf16.mxu0 %v8150
    %8715 = vmatpush1.bf16.msra.mxu0 %v8149
    %8716 = vmatprep.subr.bf16.mxu0 %v8154
    %8717 = vmatpush1.bf16.msra.mxu0 %v8153
    %8718 = vmatprep.subr.bf16.mxu0 %v8158
    %8719 = vmatpush1.bf16.msra.mxu0 %v8157
    %8720 = vmatprep.subr.bf16.mxu0 %v8162
    %8721 = vmatpush1.bf16.msra.mxu0 %v8161
    %8722 = vmatprep.subr.bf16.mxu0 %v8166
    %8723 = vmatpush1.bf16.msra.mxu0 %v8165
    %8724 = vmatprep.mubr.bf16.mxu0 %v7117
    %8725 = vmatmul.mubr.bf16.gmra.mrb[0].mxu0 %v7116
    %v8726 = vpop.f32.mrb[0].mxu0
    %v8727 = vadd.f32 %v8686, %v8726
    %v8728 = vpop.f32.mrb[0].mxu0
    %v8729 = vadd.f32 %v8688, %v8728
    %v8730 = vpop.f32.mrb[0].mxu0
    %v8731 = vpop.f32.mrb[0].mxu0
    %8732 = vdwg.mxu0
    %8733 = vmatprep.subr.bf16.mxu0 %v8170
    %8734 = vmatpush1.bf16.msra.mxu0 %v8169
    %8735 = vmatprep.subr.bf16.mxu0 %v8174
    %8736 = vmatpush1.bf16.msra.mxu0 %v8173
    %8737 = vmatprep.subr.bf16.mxu0 %v8178
    %8738 = vmatpush1.bf16.msra.mxu0 %v8177
    %8739 = vmatprep.subr.bf16.mxu0 %v8182
    %8740 = vmatpush1.bf16.msra.mxu0 %v8181
    %8741 = vmatprep.subr.bf16.mxu0 %v8186
    %8742 = vmatpush1.bf16.msra.mxu0 %v8185
    %8743 = vmatprep.subr.bf16.mxu0 %v8190
    %8744 = vmatpush1.bf16.msra.mxu0 %v8189
    %8745 = vmatprep.subr.bf16.mxu0 %v8194
    %8746 = vmatpush1.bf16.msra.mxu0 %v8193
    %8747 = vmatprep.subr.bf16.mxu0 %v8198
    %8748 = vmatpush1.bf16.msra.mxu0 %v8197
    %8749 = vmatprep.subr.bf16.mxu0 %v8202
    %8750 = vmatpush1.bf16.msra.mxu0 %v8201
    %8751 = vmatprep.subr.bf16.mxu0 %v8206
    %8752 = vmatpush1.bf16.msra.mxu0 %v8205
    %8753 = vmatprep.subr.bf16.mxu0 %v8210
    %8754 = vmatpush1.bf16.msra.mxu0 %v8209
    %8755 = vmatprep.subr.bf16.mxu0 %v8214
    %8756 = vmatpush1.bf16.msra.mxu0 %v8213
    %8757 = vmatprep.subr.bf16.mxu0 %v8218
    %8758 = vmatpush1.bf16.msra.mxu0 %v8217
    %8759 = vmatprep.subr.bf16.mxu0 %v8222
    %8760 = vmatpush1.bf16.msra.mxu0 %v8221
    %8761 = vmatprep.subr.bf16.mxu0 %v8226
    %8762 = vmatpush1.bf16.msra.mxu0 %v8225
    %8763 = vmatprep.subr.bf16.mxu0 %v8230
    %8764 = vmatpush1.bf16.msra.mxu0 %v8229
    %8765 = vmatprep.mubr.bf16.mxu0 %v7119
    %8766 = vmatmul.mubr.bf16.gmra.mrb[0].mxu0 %v7118
    %v8767 = vpop.f32.mrb[0].mxu0
    %v8768 = vadd.f32 %v8727, %v8767
    %v8769 = vpop.f32.mrb[0].mxu0
    %v8770 = vadd.f32 %v8729, %v8769
    %v8771 = vpop.f32.mrb[0].mxu0
    %v8772 = vpop.f32.mrb[0].mxu0
    %8773 = vdwg.mxu0
    %8774 = vmatprep.subr.bf16.mxu0 %v8234
    %8775 = vmatpush1.bf16.msra.mxu0 %v8233
    %8776 = vmatprep.subr.bf16.mxu0 %v8238
    %8777 = vmatpush1.bf16.msra.mxu0 %v8237
    %8778 = vmatprep.subr.bf16.mxu0 %v8242
    %8779 = vmatpush1.bf16.msra.mxu0 %v8241
    %8780 = vmatprep.subr.bf16.mxu0 %v8246
    %8781 = vmatpush1.bf16.msra.mxu0 %v8245
    %8782 = vmatprep.subr.bf16.mxu0 %v8250
    %8783 = vmatpush1.bf16.msra.mxu0 %v8249
    %8784 = vmatprep.subr.bf16.mxu0 %v8254
    %8785 = vmatpush1.bf16.msra.mxu0 %v8253
    %8786 = vmatprep.subr.bf16.mxu0 %v8258
    %8787 = vmatpush1.bf16.msra.mxu0 %v8257
    %8788 = vmatprep.subr.bf16.mxu0 %v8262
    %8789 = vmatpush1.bf16.msra.mxu0 %v8261
    %8790 = vmatprep.subr.bf16.mxu0 0
    %8791 = vmatpush1.bf16.msra.mxu0 0
    %8792 = vmatprep.subr.bf16.mxu0 0
    %8793 = vmatpush1.bf16.msra.mxu0 0
    %8794 = vmatprep.subr.bf16.mxu0 0
    %8795 = vmatpush1.bf16.msra.mxu0 0
    %8796 = vmatprep.subr.bf16.mxu0 0
    %8797 = vmatpush1.bf16.msra.mxu0 0
    %8798 = vmatprep.subr.bf16.mxu0 0
    %8799 = vmatpush1.bf16.msra.mxu0 0
    %8800 = vmatprep.subr.bf16.mxu0 0
    %8801 = vmatpush1.bf16.msra.mxu0 0
    %8802 = vmatprep.subr.bf16.mxu0 0
    %8803 = vmatpush1.bf16.msra.mxu0 0
    %8804 = vmatprep.subr.bf16.mxu0 0
    %8805 = vmatpush1.bf16.msra.mxu0 0
    %8806 = vmatprep.mubr.bf16.mxu0 0
    %8807 = vmatmul.mubr.bf16.gmra.mrb[0].mxu0 %v7120
    %v8808 = vpop.f32.mrb[0].mxu0
    %v8809 = vadd.f32 %v8768, %v8808
    %v8810 = vpop.f32.mrb[0].mxu0
    %v8811 = vadd.f32 %v8770, %v8810
    %v8812 = vpop.f32.mrb[0].mxu0
    %v8813 = vpop.f32.mrb[0].mxu0
    %8814 = vdwg.mxu0
    %v8815 = vmax.f32 %v8645, 0.0
    %v8816 = vmax.f32 %v8647, 0.0
    %v8817 = vmax.f32 %v8809, 0.0
    %v8818 = vmax.f32 %v8811, 0.0
    %v8819 = vpack.c.bf16 %v8815, %v8815
    %v8820 = vpack.c.bf16 %v8816, %v8816
    %v8821 = vpack.c.bf16 %v8817, %v8817
    %v8822 = vpack.c.bf16 %v8818, %v8818
    %s8823 = scalar_lea.vmem %s5, 1792
    %v8824 = vld [vmem:[%s8823] sm:$0xff]
    %v8825 = vld [vmem:[%s8823 + $0x8] sm:$0xff]
    %v8826 = vld [vmem:[%s8823 + $0x10] sm:$0xff]
    %v8827 = vld [vmem:[%s8823 + $0x18] sm:$0xff]
    %v8828 = vld [vmem:[%s8823 + $0x20] sm:$0xff]
    %v8829 = vld [vmem:[%s8823 + $0x28] sm:$0xff]
    %v8830 = vld [vmem:[%s8823 + $0x30] sm:$0xff]
    %v8831 = vld [vmem:[%s8823 + $0x38] sm:$0xff]
    %v8832 = vld [vmem:[%s8823 + $0x40] sm:$0xff]
    %v8833 = vld [vmem:[%s8823 + $0x48] sm:$0xff]
    %v8834 = vld [vmem:[%s8823 + $0x50] sm:$0xff]
    %v8835 = vld [vmem:[%s8823 + $0x58] sm:$0xff]
    %v8836 = vld [vmem:[%s8823 + $0x60] sm:$0xff]
    %v8837 = vld [vmem:[%s8823 + $0x68] sm:$0xff]
    %v8838 = vld [vmem:[%s8823 + $0x70] sm:$0xff]
    %v8839 = vld [vmem:[%s8823 + $0x78] sm:$0xff]
    %v8840 = vld [vmem:[%s8823 + $0x80] sm:$0xff]
    %v8841 = vld [vmem:[%s8823 + $0x88] sm:$0xff]
    %v8842 = vld [vmem:[%s8823 + $0x90] sm:$0xff]
    %v8843 = vld [vmem:[%s8823 + $0x98] sm:$0xff]
    %v8844 = vld [vmem:[%s8823 + $0xa0] sm:$0xff]
    %v8845 = vld [vmem:[%s8823 + $0xa8] sm:$0xff]
    %v8846 = vld [vmem:[%s8823 + $0xb0] sm:$0xff]
    %v8847 = vld [vmem:[%s8823 + $0xb8] sm:$0xff]
    %v8848 = vld [vmem:[%s8823 + $0xc0] sm:$0xff]
    %v8849 = vld [vmem:[%s8823 + $0xc8] sm:$0xff]
    %v8850 = vld [vmem:[%s8823 + $0xd0] sm:$0xff]
    %v8851 = vld [vmem:[%s8823 + $0xd8] sm:$0xff]
    %v8852 = vld [vmem:[%s8823 + $0xe0] sm:$0xff]
    %v8853 = vld [vmem:[%s8823 + $0xe8] sm:$0xff]
    %v8854 = vld [vmem:[%s8823 + $0xf0] sm:$0xff]
    %v8855 = vld [vmem:[%s8823 + $0xf8] sm:$0xff]
    %v8856 = vld [vmem:[%s8823 + $0x100] sm:$0xff]
    %v8857 = vld [vmem:[%s8823 + $0x108] sm:$0xff]
    %v8858 = vld [vmem:[%s8823 + $0x110] sm:$0xff]
    %v8859 = vld [vmem:[%s8823 + $0x118] sm:$0xff]
    %v8860 = vld [vmem:[%s8823 + $0x120] sm:$0xff]
    %v8861 = vld [vmem:[%s8823 + $0x128] sm:$0xff]
    %v8862 = vld [vmem:[%s8823 + $0x130] sm:$0xff]
    %v8863 = vld [vmem:[%s8823 + $0x138] sm:$0xff]
    %v8864 = vld [vmem:[%s8823 + $0x140] sm:$0xff]
    %v8865 = vld [vmem:[%s8823 + $0x148] sm:$0xff]
    %v8866 = vld [vmem:[%s8823 + $0x150] sm:$0xff]
    %v8867 = vld [vmem:[%s8823 + $0x158] sm:$0xff]
    %v8868 = vld [vmem:[%s8823 + $0x160] sm:$0xff]
    %v8869 = vld [vmem:[%s8823 + $0x168] sm:$0xff]
    %v8870 = vld [vmem:[%s8823 + $0x170] sm:$0xff]
    %v8871 = vld [vmem:[%s8823 + $0x178] sm:$0xff]
    %v8872 = vld [vmem:[%s8823 + $0x180] sm:$0xff]
    %v8873 = vld [vmem:[%s8823 + $0x188] sm:$0xff]
    %v8874 = vld [vmem:[%s8823 + $0x190] sm:$0xff]
    %v8875 = vld [vmem:[%s8823 + $0x198] sm:$0xff]
    %v8876 = vld [vmem:[%s8823 + $0x1a0] sm:$0xff]
    %v8877 = vld [vmem:[%s8823 + $0x1a8] sm:$0xff]
    %v8878 = vld [vmem:[%s8823 + $0x1b0] sm:$0xff]
    %v8879 = vld [vmem:[%s8823 + $0x1b8] sm:$0xff]
    %v8880 = vld [vmem:[%s8823 + $0x1c0] sm:$0xff]
    %v8881 = vld [vmem:[%s8823 + $0x1c8] sm:$0xff]
    %v8882 = vld [vmem:[%s8823 + $0x1d0] sm:$0xff]
    %v8883 = vld [vmem:[%s8823 + $0x1d8] sm:$0xff]
    %v8884 = vld [vmem:[%s8823 + $0x1e0] sm:$0xff]
    %v8885 = vld [vmem:[%s8823 + $0x1e8] sm:$0xff]
    %v8886 = vld [vmem:[%s8823 + $0x1f0] sm:$0xff]
    %v8887 = vld [vmem:[%s8823 + $0x1f8] sm:$0xff]
    %v8888 = vld [vmem:[%s8823 + $0x200] sm:$0xff]
    %v8889 = vld [vmem:[%s8823 + $0x208] sm:$0xff]
    %v8890 = vld [vmem:[%s8823 + $0x210] sm:$0xff]
    %v8891 = vld [vmem:[%s8823 + $0x218] sm:$0xff]
    %v8892 = vld [vmem:[%s8823 + $0x220] sm:$0xff]
    %v8893 = vld [vmem:[%s8823 + $0x228] sm:$0xff]
    %v8894 = vld [vmem:[%s8823 + $0x230] sm:$0xff]
    %v8895 = vld [vmem:[%s8823 + $0x238] sm:$0xff]
    %v8896 = vld [vmem:[%s8823 + $0x240] sm:$0xff]
    %v8897 = vld [vmem:[%s8823 + $0x248] sm:$0xff]
    %v8898 = vld [vmem:[%s8823 + $0x250] sm:$0xff]
    %v8899 = vld [vmem:[%s8823 + $0x258] sm:$0xff]
    %v8900 = vld [vmem:[%s8823 + $0x260] sm:$0xff]
    %v8901 = vld [vmem:[%s8823 + $0x268] sm:$0xff]
    %v8902 = vld [vmem:[%s8823 + $0x270] sm:$0xff]
    %v8903 = vld [vmem:[%s8823 + $0x278] sm:$0xff]
    %v8904 = vld [vmem:[%s8823 + $0x280] sm:$0xff]
    %v8905 = vld [vmem:[%s8823 + $0x288] sm:$0xff]
    %v8906 = vld [vmem:[%s8823 + $0x290] sm:$0xff]
    %v8907 = vld [vmem:[%s8823 + $0x298] sm:$0xff]
    %v8908 = vld [vmem:[%s8823 + $0x2a0] sm:$0xff]
    %v8909 = vld [vmem:[%s8823 + $0x2a8] sm:$0xff]
    %v8910 = vld [vmem:[%s8823 + $0x2b0] sm:$0xff]
    %v8911 = vld [vmem:[%s8823 + $0x2b8] sm:$0xff]
    %v8912 = vld [vmem:[%s8823 + $0x2c0] sm:$0xff]
    %v8913 = vld [vmem:[%s8823 + $0x2c8] sm:$0xff]
    %v8914 = vld [vmem:[%s8823 + $0x2d0] sm:$0xff]
    %v8915 = vld [vmem:[%s8823 + $0x2d8] sm:$0xff]
    %v8916 = vld [vmem:[%s8823 + $0x2e0] sm:$0xff]
    %v8917 = vld [vmem:[%s8823 + $0x2e8] sm:$0xff]
    %v8918 = vld [vmem:[%s8823 + $0x2f0] sm:$0xff]
    %v8919 = vld [vmem:[%s8823 + $0x2f8] sm:$0xff]
    %v8920 = vld [vmem:[%s8823 + $0x300] sm:$0xff]
    %v8921 = vld [vmem:[%s8823 + $0x308] sm:$0xff]
    %v8922 = vld [vmem:[%s8823 + $0x310] sm:$0xff]
    %v8923 = vld [vmem:[%s8823 + $0x318] sm:$0xff]
    %v8924 = vld [vmem:[%s8823 + $0x320] sm:$0xff]
    %v8925 = vld [vmem:[%s8823 + $0x328] sm:$0xff]
    %v8926 = vld [vmem:[%s8823 + $0x330] sm:$0xff]
    %v8927 = vld [vmem:[%s8823 + $0x338] sm:$0xff]
    %v8928 = vld [vmem:[%s8823 + $0x340] sm:$0xff]
    %v8929 = vld [vmem:[%s8823 + $0x348] sm:$0xff]
    %v8930 = vld [vmem:[%s8823 + $0x350] sm:$0xff]
    %v8931 = vld [vmem:[%s8823 + $0x358] sm:$0xff]
    %v8932 = vld [vmem:[%s8823 + $0x360] sm:$0xff]
    %v8933 = vld [vmem:[%s8823 + $0x368] sm:$0xff]
    %v8934 = vld [vmem:[%s8823 + $0x370] sm:$0xff]
    %v8935 = vld [vmem:[%s8823 + $0x378] sm:$0xff]
    %v8936 = vld [vmem:[%s8823 + $0x380] sm:$0xff]
    %v8937 = vld [vmem:[%s8823 + $0x388] sm:$0xff]
    %v8938 = vld [vmem:[%s8823 + $0x390] sm:$0xff]
    %v8939 = vld [vmem:[%s8823 + $0x398] sm:$0xff]
    %v8940 = vld [vmem:[%s8823 + $0x3a0] sm:$0xff]
    %v8941 = vld [vmem:[%s8823 + $0x3a8] sm:$0xff]
    %v8942 = vld [vmem:[%s8823 + $0x3b0] sm:$0xff]
    %v8943 = vld [vmem:[%s8823 + $0x3b8] sm:$0xff]
    %v8944 = vld [vmem:[%s8823 + $0x3c0] sm:$0xff]
    %v8945 = vld [vmem:[%s8823 + $0x3c8] sm:$0xff]
    %v8946 = vld [vmem:[%s8823 + $0x3d0] sm:$0xff]
    %v8947 = vld [vmem:[%s8823 + $0x3d8] sm:$0xff]
    %v8948 = vld [vmem:[%s8823 + $0x3e0] sm:$0xff]
    %v8949 = vld [vmem:[%s8823 + $0x3e8] sm:$0xff]
    %v8950 = vld [vmem:[%s8823 + $0x3f0] sm:$0xff]
    %v8951 = vld [vmem:[%s8823 + $0x3f8] sm:$0xff]
    %v8952 = vld [vmem:[%s8823 + $0x400] sm:$0xff]
    %v8953 = vld [vmem:[%s8823 + $0x408] sm:$0xff]
    %v8954 = vld [vmem:[%s8823 + $0x410] sm:$0xff]
    %v8955 = vld [vmem:[%s8823 + $0x418] sm:$0xff]
    %v8956 = vld [vmem:[%s8823 + $0x420] sm:$0xff]
    %v8957 = vld [vmem:[%s8823 + $0x428] sm:$0xff]
    %v8958 = vld [vmem:[%s8823 + $0x430] sm:$0xff]
    %v8959 = vld [vmem:[%s8823 + $0x438] sm:$0xff]
    %v8960 = vld [vmem:[%s8823 + $0x440] sm:$0xff]
    %v8961 = vld [vmem:[%s8823 + $0x448] sm:$0xff]
    %v8962 = vld [vmem:[%s8823 + $0x450] sm:$0xff]
    %v8963 = vld [vmem:[%s8823 + $0x458] sm:$0xff]
    %v8964 = vld [vmem:[%s8823 + $0x460] sm:$0xff]
    %v8965 = vld [vmem:[%s8823 + $0x468] sm:$0xff]
    %v8966 = vld [vmem:[%s8823 + $0x470] sm:$0xff]
    %v8967 = vld [vmem:[%s8823 + $0x478] sm:$0xff]
    %v8968 = vld [vmem:[%s8823 + $0x480] sm:$0xff]
    %v8969 = vld [vmem:[%s8823 + $0x488] sm:$0xff]
    %v8970 = vld [vmem:[%s8823 + $0x490] sm:$0xff]
    %v8971 = vld [vmem:[%s8823 + $0x498] sm:$0xff]
    %v8972 = vld [vmem:[%s8823 + $0x4a0] sm:$0xff]
    %v8973 = vld [vmem:[%s8823 + $0x4a8] sm:$0xff]
    %v8974 = vld [vmem:[%s8823 + $0x4b0] sm:$0xff]
    %v8975 = vld [vmem:[%s8823 + $0x4b8] sm:$0xff]
    %v8976 = vld [vmem:[%s8823 + $0x4c0] sm:$0xff]
    %v8977 = vld [vmem:[%s8823 + $0x4c8] sm:$0xff]
    %v8978 = vld [vmem:[%s8823 + $0x4d0] sm:$0xff]
    %v8979 = vld [vmem:[%s8823 + $0x4d8] sm:$0xff]
    %v8980 = vld [vmem:[%s8823 + $0x4e0] sm:$0xff]
    %v8981 = vld [vmem:[%s8823 + $0x4e8] sm:$0xff]
    %v8982 = vld [vmem:[%s8823 + $0x4f0] sm:$0xff]
    %v8983 = vld [vmem:[%s8823 + $0x4f8] sm:$0xff]
    %v8984 = vld [vmem:[%s8823 + $0x500] sm:$0xff]
    %v8985 = vld [vmem:[%s8823 + $0x508] sm:$0xff]
    %v8986 = vld [vmem:[%s8823 + $0x510] sm:$0xff]
    %v8987 = vld [vmem:[%s8823 + $0x518] sm:$0xff]
    %v8988 = vld [vmem:[%s8823 + $0x520] sm:$0xff]
    %v8989 = vld [vmem:[%s8823 + $0x528] sm:$0xff]
    %v8990 = vld [vmem:[%s8823 + $0x530] sm:$0xff]
    %v8991 = vld [vmem:[%s8823 + $0x538] sm:$0xff]
    %v8992 = vld [vmem:[%s8823 + $0x540] sm:$0xff]
    %v8993 = vld [vmem:[%s8823 + $0x548] sm:$0xff]
    %v8994 = vld [vmem:[%s8823 + $0x550] sm:$0xff]
    %v8995 = vld [vmem:[%s8823 + $0x558] sm:$0xff]
    %v8996 = vld [vmem:[%s8823 + $0x560] sm:$0xff]
    %v8997 = vld [vmem:[%s8823 + $0x568] sm:$0xff]
    %v8998 = vld [vmem:[%s8823 + $0x570] sm:$0xff]
    %v8999 = vld [vmem:[%s8823 + $0x578] sm:$0xff]
    %v9000 = vld [vmem:[%s8823 + $0x580] sm:$0xff]
    %v9001 = vld [vmem:[%s8823 + $0x588] sm:$0xff]
    %v9002 = vld [vmem:[%s8823 + $0x590] sm:$0xff]
    %v9003 = vld [vmem:[%s8823 + $0x598] sm:$0xff]
    %v9004 = vld [vmem:[%s8823 + $0x5a0] sm:$0xff]
    %v9005 = vld [vmem:[%s8823 + $0x5a8] sm:$0xff]
    %v9006 = vld [vmem:[%s8823 + $0x5b0] sm:$0xff]
    %v9007 = vld [vmem:[%s8823 + $0x5b8] sm:$0xff]
    %v9008 = vld [vmem:[%s8823 + $0x5c0] sm:$0xff]
    %v9009 = vld [vmem:[%s8823 + $0x5c8] sm:$0xff]
    %v9010 = vld [vmem:[%s8823 + $0x5d0] sm:$0xff]
    %v9011 = vld [vmem:[%s8823 + $0x5d8] sm:$0xff]
    %v9012 = vld [vmem:[%s8823 + $0x5e0] sm:$0xff]
    %v9013 = vld [vmem:[%s8823 + $0x5e8] sm:$0xff]
    %v9014 = vld [vmem:[%s8823 + $0x5f0] sm:$0xff]
    %v9015 = vld [vmem:[%s8823 + $0x5f8] sm:$0xff]
    %v9016 = vld [vmem:[%s8823 + $0x600] sm:$0xff]
    %v9017 = vld [vmem:[%s8823 + $0x608] sm:$0xff]
    %v9018 = vld [vmem:[%s8823 + $0x610] sm:$0xff]
    %v9019 = vld [vmem:[%s8823 + $0x618] sm:$0xff]
    %v9020 = vld [vmem:[%s8823 + $0x620] sm:$0xff]
    %v9021 = vld [vmem:[%s8823 + $0x628] sm:$0xff]
    %v9022 = vld [vmem:[%s8823 + $0x630] sm:$0xff]
    %v9023 = vld [vmem:[%s8823 + $0x638] sm:$0xff]
    %v9024 = vld [vmem:[%s8823 + $0x640] sm:$0xff]
    %v9025 = vld [vmem:[%s8823 + $0x648] sm:$0xff]
    %v9026 = vld [vmem:[%s8823 + $0x650] sm:$0xff]
    %v9027 = vld [vmem:[%s8823 + $0x658] sm:$0xff]
    %v9028 = vld [vmem:[%s8823 + $0x660] sm:$0xff]
    %v9029 = vld [vmem:[%s8823 + $0x668] sm:$0xff]
    %v9030 = vld [vmem:[%s8823 + $0x670] sm:$0xff]
    %v9031 = vld [vmem:[%s8823 + $0x678] sm:$0xff]
    %v9032 = vld [vmem:[%s8823 + $0x680] sm:$0xff]
    %v9033 = vld [vmem:[%s8823 + $0x688] sm:$0xff]
    %v9034 = vld [vmem:[%s8823 + $0x690] sm:$0xff]
    %v9035 = vld [vmem:[%s8823 + $0x698] sm:$0xff]
    %v9036 = vld [vmem:[%s8823 + $0x6a0] sm:$0xff]
    %v9037 = vld [vmem:[%s8823 + $0x6a8] sm:$0xff]
    %v9038 = vld [vmem:[%s8823 + $0x6b0] sm:$0xff]
    %v9039 = vld [vmem:[%s8823 + $0x6b8] sm:$0xff]
    %v9040 = vld [vmem:[%s8823 + $0x6c0] sm:$0xff]
    %v9041 = vld [vmem:[%s8823 + $0x6c8] sm:$0xff]
    %v9042 = vld [vmem:[%s8823 + $0x6d0] sm:$0xff]
    %v9043 = vld [vmem:[%s8823 + $0x6d8] sm:$0xff]
    %v9044 = vld [vmem:[%s8823 + $0x6e0] sm:$0xff]
    %v9045 = vld [vmem:[%s8823 + $0x6e8] sm:$0xff]
    %v9046 = vld [vmem:[%s8823 + $0x6f0] sm:$0xff]
    %v9047 = vld [vmem:[%s8823 + $0x6f8] sm:$0xff]
    %s9048 = scalar_lea.vmem %s6, 4
    %v9049 = vld [vmem:[%s9048] sm:$0xf]
    %v9051 = vlaneseq
    %v9052 = vshrl.u32 %v9051, 7
    %v9053 = vsub.s32 0, %v9052
    %v9054 = vrot.slane %v9049, %v9053
    %v9055 = vlaneseq
    %v9056 = vshrl.u32 %v9055, 7
    %v9057 = vsub.s32 1, %v9056
    %v9058 = vrot.slane %v9049, %v9057
    %v9059 = vlaneseq
    %v9060 = vshrl.u32 %v9059, 7
    %v9061 = vsub.s32 2, %v9060
    %v9062 = vrot.slane %v9049, %v9061
    %v9063 = vlaneseq
    %v9064 = vshrl.u32 %v9063, 7
    %v9065 = vsub.s32 3, %v9064
    %v9066 = vrot.slane %v9049, %v9065
    %v9295 = vunpack.c.l.b16 %v8824
    %v9296 = vunpack.c.h.b16 %v8824
    %v9297 = vunpack.c.l.b16 %v8825
    %v9298 = vunpack.c.h.b16 %v8825
    %v9299 = vunpack.c.l.b16 %v8826
    %v9300 = vunpack.c.h.b16 %v8826
    %v9301 = vunpack.c.l.b16 %v8827
    %v9302 = vunpack.c.h.b16 %v8827
    %v9303 = vunpack.c.l.b16 %v8828
    %v9304 = vunpack.c.h.b16 %v8828
    %v9305 = vunpack.c.l.b16 %v8829
    %v9306 = vunpack.c.h.b16 %v8829
    %v9307 = vunpack.c.l.b16 %v8830
    %v9308 = vunpack.c.h.b16 %v8830
    %v9309 = vunpack.c.l.b16 %v8831
    %v9310 = vunpack.c.h.b16 %v8831
    %v9311 = vunpack.c.l.b16 %v8832
    %v9312 = vunpack.c.h.b16 %v8832
    %v9313 = vunpack.c.l.b16 %v8833
    %v9314 = vunpack.c.h.b16 %v8833
    %v9315 = vunpack.c.l.b16 %v8834
    %v9316 = vunpack.c.h.b16 %v8834
    %v9317 = vunpack.c.l.b16 %v8835
    %v9318 = vunpack.c.h.b16 %v8835
    %v9319 = vunpack.c.l.b16 %v8836
    %v9320 = vunpack.c.h.b16 %v8836
    %v9321 = vunpack.c.l.b16 %v8837
    %v9322 = vunpack.c.h.b16 %v8837
    %v9323 = vunpack.c.l.b16 %v8838
    %v9324 = vunpack.c.h.b16 %v8838
    %v9325 = vunpack.c.l.b16 %v8839
    %v9326 = vunpack.c.h.b16 %v8839
    %v9327 = vunpack.c.l.b16 %v8840
    %v9328 = vunpack.c.h.b16 %v8840
    %v9329 = vunpack.c.l.b16 %v8841
    %v9330 = vunpack.c.h.b16 %v8841
    %v9331 = vunpack.c.l.b16 %v8842
    %v9332 = vunpack.c.h.b16 %v8842
    %v9333 = vunpack.c.l.b16 %v8843
    %v9334 = vunpack.c.h.b16 %v8843
    %v9335 = vunpack.c.l.b16 %v8844
    %v9336 = vunpack.c.h.b16 %v8844
    %v9337 = vunpack.c.l.b16 %v8845
    %v9338 = vunpack.c.h.b16 %v8845
    %v9339 = vunpack.c.l.b16 %v8846
    %v9340 = vunpack.c.h.b16 %v8846
    %v9341 = vunpack.c.l.b16 %v8847
    %v9342 = vunpack.c.h.b16 %v8847
    %v9343 = vunpack.c.l.b16 %v8848
    %v9344 = vunpack.c.h.b16 %v8848
    %v9345 = vunpack.c.l.b16 %v8849
    %v9346 = vunpack.c.h.b16 %v8849
    %v9347 = vunpack.c.l.b16 %v8850
    %v9348 = vunpack.c.h.b16 %v8850
    %v9349 = vunpack.c.l.b16 %v8851
    %v9350 = vunpack.c.h.b16 %v8851
    %v9351 = vunpack.c.l.b16 %v8852
    %v9352 = vunpack.c.h.b16 %v8852
    %v9353 = vunpack.c.l.b16 %v8853
    %v9354 = vunpack.c.h.b16 %v8853
    %v9355 = vunpack.c.l.b16 %v8854
    %v9356 = vunpack.c.h.b16 %v8854
    %v9357 = vunpack.c.l.b16 %v8855
    %v9358 = vunpack.c.h.b16 %v8855
    %v9359 = vunpack.c.l.b16 %v8856
    %v9360 = vunpack.c.h.b16 %v8856
    %v9361 = vunpack.c.l.b16 %v8857
    %v9362 = vunpack.c.h.b16 %v8857
    %v9363 = vunpack.c.l.b16 %v8858
    %v9364 = vunpack.c.h.b16 %v8858
    %v9365 = vunpack.c.l.b16 %v8859
    %v9366 = vunpack.c.h.b16 %v8859
    %v9367 = vunpack.c.l.b16 %v8860
    %v9368 = vunpack.c.h.b16 %v8860
    %v9369 = vunpack.c.l.b16 %v8861
    %v9370 = vunpack.c.h.b16 %v8861
    %v9371 = vunpack.c.l.b16 %v8862
    %v9372 = vunpack.c.h.b16 %v8862
    %v9373 = vunpack.c.l.b16 %v8863
    %v9374 = vunpack.c.h.b16 %v8863
    %v9375 = vunpack.c.l.b16 %v8864
    %v9376 = vunpack.c.h.b16 %v8864
    %v9377 = vunpack.c.l.b16 %v8865
    %v9378 = vunpack.c.h.b16 %v8865
    %v9379 = vunpack.c.l.b16 %v8866
    %v9380 = vunpack.c.h.b16 %v8866
    %v9381 = vunpack.c.l.b16 %v8867
    %v9382 = vunpack.c.h.b16 %v8867
    %v9383 = vunpack.c.l.b16 %v8868
    %v9384 = vunpack.c.h.b16 %v8868
    %v9385 = vunpack.c.l.b16 %v8869
    %v9386 = vunpack.c.h.b16 %v8869
    %v9387 = vunpack.c.l.b16 %v8870
    %v9388 = vunpack.c.h.b16 %v8870
    %v9389 = vunpack.c.l.b16 %v8871
    %v9390 = vunpack.c.h.b16 %v8871
    %v9391 = vunpack.c.l.b16 %v8872
    %v9392 = vunpack.c.h.b16 %v8872
    %v9393 = vunpack.c.l.b16 %v8873
    %v9394 = vunpack.c.h.b16 %v8873
    %v9395 = vunpack.c.l.b16 %v8874
    %v9396 = vunpack.c.h.b16 %v8874
    %v9397 = vunpack.c.l.b16 %v8875
    %v9398 = vunpack.c.h.b16 %v8875
    %v9399 = vunpack.c.l.b16 %v8876
    %v9400 = vunpack.c.h.b16 %v8876
    %v9401 = vunpack.c.l.b16 %v8877
    %v9402 = vunpack.c.h.b16 %v8877
    %v9403 = vunpack.c.l.b16 %v8878
    %v9404 = vunpack.c.h.b16 %v8878
    %v9405 = vunpack.c.l.b16 %v8879
    %v9406 = vunpack.c.h.b16 %v8879
    %v9407 = vunpack.c.l.b16 %v8880
    %v9408 = vunpack.c.h.b16 %v8880
    %v9409 = vunpack.c.l.b16 %v8881
    %v9410 = vunpack.c.h.b16 %v8881
    %v9411 = vunpack.c.l.b16 %v8882
    %v9412 = vunpack.c.h.b16 %v8882
    %v9413 = vunpack.c.l.b16 %v8883
    %v9414 = vunpack.c.h.b16 %v8883
    %v9415 = vunpack.c.l.b16 %v8884
    %v9416 = vunpack.c.h.b16 %v8884
    %v9417 = vunpack.c.l.b16 %v8885
    %v9418 = vunpack.c.h.b16 %v8885
    %v9419 = vunpack.c.l.b16 %v8886
    %v9420 = vunpack.c.h.b16 %v8886
    %v9421 = vunpack.c.l.b16 %v8887
    %v9422 = vunpack.c.h.b16 %v8887
    %v9423 = vunpack.c.l.b16 %v8888
    %v9424 = vunpack.c.h.b16 %v8888
    %v9425 = vunpack.c.l.b16 %v8889
    %v9426 = vunpack.c.h.b16 %v8889
    %v9427 = vunpack.c.l.b16 %v8890
    %v9428 = vunpack.c.h.b16 %v8890
    %v9429 = vunpack.c.l.b16 %v8891
    %v9430 = vunpack.c.h.b16 %v8891
    %v9431 = vunpack.c.l.b16 %v8892
    %v9432 = vunpack.c.h.b16 %v8892
    %v9433 = vunpack.c.l.b16 %v8893
    %v9434 = vunpack.c.h.b16 %v8893
    %v9435 = vunpack.c.l.b16 %v8894
    %v9436 = vunpack.c.h.b16 %v8894
    %v9437 = vunpack.c.l.b16 %v8895
    %v9438 = vunpack.c.h.b16 %v8895
    %v9439 = vunpack.c.l.b16 %v8896
    %v9440 = vunpack.c.h.b16 %v8896
    %v9441 = vunpack.c.l.b16 %v8897
    %v9442 = vunpack.c.h.b16 %v8897
    %v9443 = vunpack.c.l.b16 %v8898
    %v9444 = vunpack.c.h.b16 %v8898
    %v9445 = vunpack.c.l.b16 %v8899
    %v9446 = vunpack.c.h.b16 %v8899
    %v9447 = vunpack.c.l.b16 %v8900
    %v9448 = vunpack.c.h.b16 %v8900
    %v9449 = vunpack.c.l.b16 %v8901
    %v9450 = vunpack.c.h.b16 %v8901
    %v9451 = vunpack.c.l.b16 %v8902
    %v9452 = vunpack.c.h.b16 %v8902
    %v9453 = vunpack.c.l.b16 %v8903
    %v9454 = vunpack.c.h.b16 %v8903
    %v9455 = vunpack.c.l.b16 %v8904
    %v9456 = vunpack.c.h.b16 %v8904
    %v9457 = vunpack.c.l.b16 %v8905
    %v9458 = vunpack.c.h.b16 %v8905
    %v9459 = vunpack.c.l.b16 %v8906
    %v9460 = vunpack.c.h.b16 %v8906
    %v9461 = vunpack.c.l.b16 %v8907
    %v9462 = vunpack.c.h.b16 %v8907
    %v9463 = vunpack.c.l.b16 %v8908
    %v9464 = vunpack.c.h.b16 %v8908
    %v9465 = vunpack.c.l.b16 %v8909
    %v9466 = vunpack.c.h.b16 %v8909
    %v9467 = vunpack.c.l.b16 %v8910
    %v9468 = vunpack.c.h.b16 %v8910
    %v9469 = vunpack.c.l.b16 %v8911
    %v9470 = vunpack.c.h.b16 %v8911
    %v9471 = vunpack.c.l.b16 %v8912
    %v9472 = vunpack.c.h.b16 %v8912
    %v9473 = vunpack.c.l.b16 %v8913
    %v9474 = vunpack.c.h.b16 %v8913
    %v9475 = vunpack.c.l.b16 %v8914
    %v9476 = vunpack.c.h.b16 %v8914
    %v9477 = vunpack.c.l.b16 %v8915
    %v9478 = vunpack.c.h.b16 %v8915
    %v9479 = vunpack.c.l.b16 %v8916
    %v9480 = vunpack.c.h.b16 %v8916
    %v9481 = vunpack.c.l.b16 %v8917
    %v9482 = vunpack.c.h.b16 %v8917
    %v9483 = vunpack.c.l.b16 %v8918
    %v9484 = vunpack.c.h.b16 %v8918
    %v9485 = vunpack.c.l.b16 %v8919
    %v9486 = vunpack.c.h.b16 %v8919
    %v9487 = vunpack.c.l.b16 %v8920
    %v9488 = vunpack.c.h.b16 %v8920
    %v9489 = vunpack.c.l.b16 %v8921
    %v9490 = vunpack.c.h.b16 %v8921
    %v9491 = vunpack.c.l.b16 %v8922
    %v9492 = vunpack.c.h.b16 %v8922
    %v9493 = vunpack.c.l.b16 %v8923
    %v9494 = vunpack.c.h.b16 %v8923
    %v9495 = vunpack.c.l.b16 %v8924
    %v9496 = vunpack.c.h.b16 %v8924
    %v9497 = vunpack.c.l.b16 %v8925
    %v9498 = vunpack.c.h.b16 %v8925
    %v9499 = vunpack.c.l.b16 %v8926
    %v9500 = vunpack.c.h.b16 %v8926
    %v9501 = vunpack.c.l.b16 %v8927
    %v9502 = vunpack.c.h.b16 %v8927
    %v9503 = vunpack.c.l.b16 %v8928
    %v9504 = vunpack.c.h.b16 %v8928
    %v9505 = vunpack.c.l.b16 %v8929
    %v9506 = vunpack.c.h.b16 %v8929
    %v9507 = vunpack.c.l.b16 %v8930
    %v9508 = vunpack.c.h.b16 %v8930
    %v9509 = vunpack.c.l.b16 %v8931
    %v9510 = vunpack.c.h.b16 %v8931
    %v9511 = vunpack.c.l.b16 %v8932
    %v9512 = vunpack.c.h.b16 %v8932
    %v9513 = vunpack.c.l.b16 %v8933
    %v9514 = vunpack.c.h.b16 %v8933
    %v9515 = vunpack.c.l.b16 %v8934
    %v9516 = vunpack.c.h.b16 %v8934
    %v9517 = vunpack.c.l.b16 %v8935
    %v9518 = vunpack.c.h.b16 %v8935
    %v9519 = vunpack.c.l.b16 %v8936
    %v9520 = vunpack.c.h.b16 %v8936
    %v9521 = vunpack.c.l.b16 %v8937
    %v9522 = vunpack.c.h.b16 %v8937
    %v9523 = vunpack.c.l.b16 %v8938
    %v9524 = vunpack.c.h.b16 %v8938
    %v9525 = vunpack.c.l.b16 %v8939
    %v9526 = vunpack.c.h.b16 %v8939
    %v9527 = vunpack.c.l.b16 %v8940
    %v9528 = vunpack.c.h.b16 %v8940
    %v9529 = vunpack.c.l.b16 %v8941
    %v9530 = vunpack.c.h.b16 %v8941
    %v9531 = vunpack.c.l.b16 %v8942
    %v9532 = vunpack.c.h.b16 %v8942
    %v9533 = vunpack.c.l.b16 %v8943
    %v9534 = vunpack.c.h.b16 %v8943
    %v9535 = vunpack.c.l.b16 %v8944
    %v9536 = vunpack.c.h.b16 %v8944
    %v9537 = vunpack.c.l.b16 %v8945
    %v9538 = vunpack.c.h.b16 %v8945
    %v9539 = vunpack.c.l.b16 %v8946
    %v9540 = vunpack.c.h.b16 %v8946
    %v9541 = vunpack.c.l.b16 %v8947
    %v9542 = vunpack.c.h.b16 %v8947
    %v9543 = vunpack.c.l.b16 %v8948
    %v9544 = vunpack.c.h.b16 %v8948
    %v9545 = vunpack.c.l.b16 %v8949
    %v9546 = vunpack.c.h.b16 %v8949
    %v9547 = vunpack.c.l.b16 %v8950
    %v9548 = vunpack.c.h.b16 %v8950
    %v9549 = vunpack.c.l.b16 %v8951
    %v9550 = vunpack.c.h.b16 %v8951
    %v9551 = vunpack.c.l.b16 %v8952
    %v9552 = vunpack.c.h.b16 %v8952
    %v9553 = vunpack.c.l.b16 %v8953
    %v9554 = vunpack.c.h.b16 %v8953
    %v9555 = vunpack.c.l.b16 %v8954
    %v9556 = vunpack.c.h.b16 %v8954
    %v9557 = vunpack.c.l.b16 %v8955
    %v9558 = vunpack.c.h.b16 %v8955
    %v9559 = vunpack.c.l.b16 %v8956
    %v9560 = vunpack.c.h.b16 %v8956
    %v9561 = vunpack.c.l.b16 %v8957
    %v9562 = vunpack.c.h.b16 %v8957
    %v9563 = vunpack.c.l.b16 %v8958
    %v9564 = vunpack.c.h.b16 %v8958
    %v9565 = vunpack.c.l.b16 %v8959
    %v9566 = vunpack.c.h.b16 %v8959
    %v9567 = vunpack.c.l.b16 %v8960
    %v9568 = vunpack.c.h.b16 %v8960
    %v9569 = vunpack.c.l.b16 %v8961
    %v9570 = vunpack.c.h.b16 %v8961
    %v9571 = vunpack.c.l.b16 %v8962
    %v9572 = vunpack.c.h.b16 %v8962
    %v9573 = vunpack.c.l.b16 %v8963
    %v9574 = vunpack.c.h.b16 %v8963
    %v9575 = vunpack.c.l.b16 %v8964
    %v9576 = vunpack.c.h.b16 %v8964
    %v9577 = vunpack.c.l.b16 %v8965
    %v9578 = vunpack.c.h.b16 %v8965
    %v9579 = vunpack.c.l.b16 %v8966
    %v9580 = vunpack.c.h.b16 %v8966
    %v9581 = vunpack.c.l.b16 %v8967
    %v9582 = vunpack.c.h.b16 %v8967
    %v9583 = vunpack.c.l.b16 %v8968
    %v9584 = vunpack.c.h.b16 %v8968
    %v9585 = vunpack.c.l.b16 %v8969
    %v9586 = vunpack.c.h.b16 %v8969
    %v9587 = vunpack.c.l.b16 %v8970
    %v9588 = vunpack.c.h.b16 %v8970
    %v9589 = vunpack.c.l.b16 %v8971
    %v9590 = vunpack.c.h.b16 %v8971
    %v9591 = vunpack.c.l.b16 %v8972
    %v9592 = vunpack.c.h.b16 %v8972
    %v9593 = vunpack.c.l.b16 %v8973
    %v9594 = vunpack.c.h.b16 %v8973
    %v9595 = vunpack.c.l.b16 %v8974
    %v9596 = vunpack.c.h.b16 %v8974
    %v9597 = vunpack.c.l.b16 %v8975
    %v9598 = vunpack.c.h.b16 %v8975
    %v9599 = vunpack.c.l.b16 %v8976
    %v9600 = vunpack.c.h.b16 %v8976
    %v9601 = vunpack.c.l.b16 %v8977
    %v9602 = vunpack.c.h.b16 %v8977
    %v9603 = vunpack.c.l.b16 %v8978
    %v9604 = vunpack.c.h.b16 %v8978
    %v9605 = vunpack.c.l.b16 %v8979
    %v9606 = vunpack.c.h.b16 %v8979
    %v9607 = vunpack.c.l.b16 %v8980
    %v9608 = vunpack.c.h.b16 %v8980
    %v9609 = vunpack.c.l.b16 %v8981
    %v9610 = vunpack.c.h.b16 %v8981
    %v9611 = vunpack.c.l.b16 %v8982
    %v9612 = vunpack.c.h.b16 %v8982
    %v9613 = vunpack.c.l.b16 %v8983
    %v9614 = vunpack.c.h.b16 %v8983
    %v9615 = vunpack.c.l.b16 %v8984
    %v9616 = vunpack.c.h.b16 %v8984
    %v9617 = vunpack.c.l.b16 %v8985
    %v9618 = vunpack.c.h.b16 %v8985
    %v9619 = vunpack.c.l.b16 %v8986
    %v9620 = vunpack.c.h.b16 %v8986
    %v9621 = vunpack.c.l.b16 %v8987
    %v9622 = vunpack.c.h.b16 %v8987
    %v9623 = vunpack.c.l.b16 %v8988
    %v9624 = vunpack.c.h.b16 %v8988
    %v9625 = vunpack.c.l.b16 %v8989
    %v9626 = vunpack.c.h.b16 %v8989
    %v9627 = vunpack.c.l.b16 %v8990
    %v9628 = vunpack.c.h.b16 %v8990
    %v9629 = vunpack.c.l.b16 %v8991
    %v9630 = vunpack.c.h.b16 %v8991
    %v9631 = vunpack.c.l.b16 %v8992
    %v9632 = vunpack.c.h.b16 %v8992
    %v9633 = vunpack.c.l.b16 %v8993
    %v9634 = vunpack.c.h.b16 %v8993
    %v9635 = vunpack.c.l.b16 %v8994
    %v9636 = vunpack.c.h.b16 %v8994
    %v9637 = vunpack.c.l.b16 %v8995
    %v9638 = vunpack.c.h.b16 %v8995
    %v9639 = vunpack.c.l.b16 %v8996
    %v9640 = vunpack.c.h.b16 %v8996
    %v9641 = vunpack.c.l.b16 %v8997
    %v9642 = vunpack.c.h.b16 %v8997
    %v9643 = vunpack.c.l.b16 %v8998
    %v9644 = vunpack.c.h.b16 %v8998
    %v9645 = vunpack.c.l.b16 %v8999
    %v9646 = vunpack.c.h.b16 %v8999
    %v9647 = vunpack.c.l.b16 %v9000
    %v9648 = vunpack.c.h.b16 %v9000
    %v9649 = vunpack.c.l.b16 %v9001
    %v9650 = vunpack.c.h.b16 %v9001
    %v9651 = vunpack.c.l.b16 %v9002
    %v9652 = vunpack.c.h.b16 %v9002
    %v9653 = vunpack.c.l.b16 %v9003
    %v9654 = vunpack.c.h.b16 %v9003
    %v9655 = vunpack.c.l.b16 %v9004
    %v9656 = vunpack.c.h.b16 %v9004
    %v9657 = vunpack.c.l.b16 %v9005
    %v9658 = vunpack.c.h.b16 %v9005
    %v9659 = vunpack.c.l.b16 %v9006
    %v9660 = vunpack.c.h.b16 %v9006
    %v9661 = vunpack.c.l.b16 %v9007
    %v9662 = vunpack.c.h.b16 %v9007
    %v9663 = vunpack.c.l.b16 %v9008
    %v9664 = vunpack.c.h.b16 %v9008
    %v9665 = vunpack.c.l.b16 %v9009
    %v9666 = vunpack.c.h.b16 %v9009
    %v9667 = vunpack.c.l.b16 %v9010
    %v9668 = vunpack.c.h.b16 %v9010
    %v9669 = vunpack.c.l.b16 %v9011
    %v9670 = vunpack.c.h.b16 %v9011
    %v9671 = vunpack.c.l.b16 %v9012
    %v9672 = vunpack.c.h.b16 %v9012
    %v9673 = vunpack.c.l.b16 %v9013
    %v9674 = vunpack.c.h.b16 %v9013
    %v9675 = vunpack.c.l.b16 %v9014
    %v9676 = vunpack.c.h.b16 %v9014
    %v9677 = vunpack.c.l.b16 %v9015
    %v9678 = vunpack.c.h.b16 %v9015
    %v9679 = vunpack.c.l.b16 %v9016
    %v9680 = vunpack.c.h.b16 %v9016
    %v9681 = vunpack.c.l.b16 %v9017
    %v9682 = vunpack.c.h.b16 %v9017
    %v9683 = vunpack.c.l.b16 %v9018
    %v9684 = vunpack.c.h.b16 %v9018
    %v9685 = vunpack.c.l.b16 %v9019
    %v9686 = vunpack.c.h.b16 %v9019
    %v9687 = vunpack.c.l.b16 %v9020
    %v9688 = vunpack.c.h.b16 %v9020
    %v9689 = vunpack.c.l.b16 %v9021
    %v9690 = vunpack.c.h.b16 %v9021
    %v9691 = vunpack.c.l.b16 %v9022
    %v9692 = vunpack.c.h.b16 %v9022
    %v9693 = vunpack.c.l.b16 %v9023
    %v9694 = vunpack.c.h.b16 %v9023
    %v9695 = vunpack.c.l.b16 %v9024
    %v9696 = vunpack.c.h.b16 %v9024
    %v9697 = vunpack.c.l.b16 %v9025
    %v9698 = vunpack.c.h.b16 %v9025
    %v9699 = vunpack.c.l.b16 %v9026
    %v9700 = vunpack.c.h.b16 %v9026
    %v9701 = vunpack.c.l.b16 %v9027
    %v9702 = vunpack.c.h.b16 %v9027
    %v9703 = vunpack.c.l.b16 %v9028
    %v9704 = vunpack.c.h.b16 %v9028
    %v9705 = vunpack.c.l.b16 %v9029
    %v9706 = vunpack.c.h.b16 %v9029
    %v9707 = vunpack.c.l.b16 %v9030
    %v9708 = vunpack.c.h.b16 %v9030
    %v9709 = vunpack.c.l.b16 %v9031
    %v9710 = vunpack.c.h.b16 %v9031
    %v9711 = vunpack.c.l.b16 %v9032
    %v9712 = vunpack.c.h.b16 %v9032
    %v9713 = vunpack.c.l.b16 %v9033
    %v9714 = vunpack.c.h.b16 %v9033
    %v9715 = vunpack.c.l.b16 %v9034
    %v9716 = vunpack.c.h.b16 %v9034
    %v9717 = vunpack.c.l.b16 %v9035
    %v9718 = vunpack.c.h.b16 %v9035
    %v9719 = vunpack.c.l.b16 %v9036
    %v9720 = vunpack.c.h.b16 %v9036
    %v9721 = vunpack.c.l.b16 %v9037
    %v9722 = vunpack.c.h.b16 %v9037
    %v9723 = vunpack.c.l.b16 %v9038
    %v9724 = vunpack.c.h.b16 %v9038
    %v9725 = vunpack.c.l.b16 %v9039
    %v9726 = vunpack.c.h.b16 %v9039
    %v9727 = vunpack.c.l.b16 %v9040
    %v9728 = vunpack.c.h.b16 %v9040
    %v9729 = vunpack.c.l.b16 %v9041
    %v9730 = vunpack.c.h.b16 %v9041
    %v9731 = vunpack.c.l.b16 %v9042
    %v9732 = vunpack.c.h.b16 %v9042
    %v9733 = vunpack.c.l.b16 %v9043
    %v9734 = vunpack.c.h.b16 %v9043
    %v9735 = vunpack.c.l.b16 %v9044
    %v9736 = vunpack.c.h.b16 %v9044
    %v9737 = vunpack.c.l.b16 %v9045
    %v9738 = vunpack.c.h.b16 %v9045
    %v9739 = vunpack.c.l.b16 %v9046
    %v9740 = vunpack.c.h.b16 %v9046
    %v9741 = vunpack.c.l.b16 %v9047
    %v9742 = vunpack.c.h.b16 %v9047
    %v9743 = vpack.c.b16 %v9299, %v9295
    %v9744 = vpack.c.b16 %v9300, %v9296
    %v9745 = vpack.c.b16 %v9301, %v9297
    %v9746 = vpack.c.b16 %v9302, %v9298
    %v9747 = vpack.c.b16 %v9307, %v9303
    %v9748 = vpack.c.b16 %v9308, %v9304
    %v9749 = vpack.c.b16 %v9309, %v9305
    %v9750 = vpack.c.b16 %v9310, %v9306
    %v9751 = vpack.c.b16 %v9315, %v9311
    %v9752 = vpack.c.b16 %v9316, %v9312
    %v9753 = vpack.c.b16 %v9317, %v9313
    %v9754 = vpack.c.b16 %v9318, %v9314
    %v9755 = vpack.c.b16 %v9323, %v9319
    %v9756 = vpack.c.b16 %v9324, %v9320
    %v9757 = vpack.c.b16 %v9325, %v9321
    %v9758 = vpack.c.b16 %v9326, %v9322
    %v9759 = vpack.c.b16 %v9331, %v9327
    %v9760 = vpack.c.b16 %v9332, %v9328
    %v9761 = vpack.c.b16 %v9333, %v9329
    %v9762 = vpack.c.b16 %v9334, %v9330
    %v9763 = vpack.c.b16 %v9339, %v9335
    %v9764 = vpack.c.b16 %v9340, %v9336
    %v9765 = vpack.c.b16 %v9341, %v9337
    %v9766 = vpack.c.b16 %v9342, %v9338
    %v9767 = vpack.c.b16 %v9347, %v9343
    %v9768 = vpack.c.b16 %v9348, %v9344
    %v9769 = vpack.c.b16 %v9349, %v9345
    %v9770 = vpack.c.b16 %v9350, %v9346
    %v9771 = vpack.c.b16 %v9355, %v9351
    %v9772 = vpack.c.b16 %v9356, %v9352
    %v9773 = vpack.c.b16 %v9357, %v9353
    %v9774 = vpack.c.b16 %v9358, %v9354
    %v9775 = vpack.c.b16 %v9363, %v9359
    %v9776 = vpack.c.b16 %v9364, %v9360
    %v9777 = vpack.c.b16 %v9365, %v9361
    %v9778 = vpack.c.b16 %v9366, %v9362
    %v9779 = vpack.c.b16 %v9371, %v9367
    %v9780 = vpack.c.b16 %v9372, %v9368
    %v9781 = vpack.c.b16 %v9373, %v9369
    %v9782 = vpack.c.b16 %v9374, %v9370
    %v9783 = vpack.c.b16 %v9379, %v9375
    %v9784 = vpack.c.b16 %v9380, %v9376
    %v9785 = vpack.c.b16 %v9381, %v9377
    %v9786 = vpack.c.b16 %v9382, %v9378
    %v9787 = vpack.c.b16 %v9387, %v9383
    %v9788 = vpack.c.b16 %v9388, %v9384
    %v9789 = vpack.c.b16 %v9389, %v9385
    %v9790 = vpack.c.b16 %v9390, %v9386
    %v9791 = vpack.c.b16 %v9395, %v9391
    %v9792 = vpack.c.b16 %v9396, %v9392
    %v9793 = vpack.c.b16 %v9397, %v9393
    %v9794 = vpack.c.b16 %v9398, %v9394
    %v9795 = vpack.c.b16 %v9403, %v9399
    %v9796 = vpack.c.b16 %v9404, %v9400
    %v9797 = vpack.c.b16 %v9405, %v9401
    %v9798 = vpack.c.b16 %v9406, %v9402
    %v9799 = vpack.c.b16 %v9411, %v9407
    %v9800 = vpack.c.b16 %v9412, %v9408
    %v9801 = vpack.c.b16 %v9413, %v9409
    %v9802 = vpack.c.b16 %v9414, %v9410
    %v9803 = vpack.c.b16 %v9419, %v9415
    %v9804 = vpack.c.b16 %v9420, %v9416
    %v9805 = vpack.c.b16 %v9421, %v9417
    %v9806 = vpack.c.b16 %v9422, %v9418
    %v9807 = vpack.c.b16 %v9427, %v9423
    %v9808 = vpack.c.b16 %v9428, %v9424
    %v9809 = vpack.c.b16 %v9429, %v9425
    %v9810 = vpack.c.b16 %v9430, %v9426
    %v9811 = vpack.c.b16 %v9435, %v9431
    %v9812 = vpack.c.b16 %v9436, %v9432
    %v9813 = vpack.c.b16 %v9437, %v9433
    %v9814 = vpack.c.b16 %v9438, %v9434
    %v9815 = vpack.c.b16 %v9443, %v9439
    %v9816 = vpack.c.b16 %v9444, %v9440
    %v9817 = vpack.c.b16 %v9445, %v9441
    %v9818 = vpack.c.b16 %v9446, %v9442
    %v9819 = vpack.c.b16 %v9451, %v9447
    %v9820 = vpack.c.b16 %v9452, %v9448
    %v9821 = vpack.c.b16 %v9453, %v9449
    %v9822 = vpack.c.b16 %v9454, %v9450
    %v9823 = vpack.c.b16 %v9459, %v9455
    %v9824 = vpack.c.b16 %v9460, %v9456
    %v9825 = vpack.c.b16 %v9461, %v9457
    %v9826 = vpack.c.b16 %v9462, %v9458
    %v9827 = vpack.c.b16 %v9467, %v9463
    %v9828 = vpack.c.b16 %v9468, %v9464
    %v9829 = vpack.c.b16 %v9469, %v9465
    %v9830 = vpack.c.b16 %v9470, %v9466
    %v9831 = vpack.c.b16 %v9475, %v9471
    %v9832 = vpack.c.b16 %v9476, %v9472
    %v9833 = vpack.c.b16 %v9477, %v9473
    %v9834 = vpack.c.b16 %v9478, %v9474
    %v9835 = vpack.c.b16 %v9483, %v9479
    %v9836 = vpack.c.b16 %v9484, %v9480
    %v9837 = vpack.c.b16 %v9485, %v9481
    %v9838 = vpack.c.b16 %v9486, %v9482
    %v9839 = vpack.c.b16 %v9491, %v9487
    %v9840 = vpack.c.b16 %v9492, %v9488
    %v9841 = vpack.c.b16 %v9493, %v9489
    %v9842 = vpack.c.b16 %v9494, %v9490
    %v9843 = vpack.c.b16 %v9499, %v9495
    %v9844 = vpack.c.b16 %v9500, %v9496
    %v9845 = vpack.c.b16 %v9501, %v9497
    %v9846 = vpack.c.b16 %v9502, %v9498
    %v9847 = vpack.c.b16 %v9507, %v9503
    %v9848 = vpack.c.b16 %v9508, %v9504
    %v9849 = vpack.c.b16 %v9509, %v9505
    %v9850 = vpack.c.b16 %v9510, %v9506
    %v9851 = vpack.c.b16 %v9515, %v9511
    %v9852 = vpack.c.b16 %v9516, %v9512
    %v9853 = vpack.c.b16 %v9517, %v9513
    %v9854 = vpack.c.b16 %v9518, %v9514
    %v9855 = vpack.c.b16 %v9523, %v9519
    %v9856 = vpack.c.b16 %v9524, %v9520
    %v9857 = vpack.c.b16 %v9525, %v9521
    %v9858 = vpack.c.b16 %v9526, %v9522
    %v9859 = vpack.c.b16 %v9531, %v9527
    %v9860 = vpack.c.b16 %v9532, %v9528
    %v9861 = vpack.c.b16 %v9533, %v9529
    %v9862 = vpack.c.b16 %v9534, %v9530
    %v9863 = vpack.c.b16 %v9539, %v9535
    %v9864 = vpack.c.b16 %v9540, %v9536
    %v9865 = vpack.c.b16 %v9541, %v9537
    %v9866 = vpack.c.b16 %v9542, %v9538
    %v9867 = vpack.c.b16 %v9547, %v9543
    %v9868 = vpack.c.b16 %v9548, %v9544
    %v9869 = vpack.c.b16 %v9549, %v9545
    %v9870 = vpack.c.b16 %v9550, %v9546
    %v9871 = vpack.c.b16 %v9555, %v9551
    %v9872 = vpack.c.b16 %v9556, %v9552
    %v9873 = vpack.c.b16 %v9557, %v9553
    %v9874 = vpack.c.b16 %v9558, %v9554
    %v9875 = vpack.c.b16 %v9563, %v9559
    %v9876 = vpack.c.b16 %v9564, %v9560
    %v9877 = vpack.c.b16 %v9565, %v9561
    %v9878 = vpack.c.b16 %v9566, %v9562
    %v9879 = vpack.c.b16 %v9571, %v9567
    %v9880 = vpack.c.b16 %v9572, %v9568
    %v9881 = vpack.c.b16 %v9573, %v9569
    %v9882 = vpack.c.b16 %v9574, %v9570
    %v9883 = vpack.c.b16 %v9579, %v9575
    %v9884 = vpack.c.b16 %v9580, %v9576
    %v9885 = vpack.c.b16 %v9581, %v9577
    %v9886 = vpack.c.b16 %v9582, %v9578
    %v9887 = vpack.c.b16 %v9587, %v9583
    %v9888 = vpack.c.b16 %v9588, %v9584
    %v9889 = vpack.c.b16 %v9589, %v9585
    %v9890 = vpack.c.b16 %v9590, %v9586
    %v9891 = vpack.c.b16 %v9595, %v9591
    %v9892 = vpack.c.b16 %v9596, %v9592
    %v9893 = vpack.c.b16 %v9597, %v9593
    %v9894 = vpack.c.b16 %v9598, %v9594
    %v9895 = vpack.c.b16 %v9603, %v9599
    %v9896 = vpack.c.b16 %v9604, %v9600
    %v9897 = vpack.c.b16 %v9605, %v9601
    %v9898 = vpack.c.b16 %v9606, %v9602
    %v9899 = vpack.c.b16 %v9611, %v9607
    %v9900 = vpack.c.b16 %v9612, %v9608
    %v9901 = vpack.c.b16 %v9613, %v9609
    %v9902 = vpack.c.b16 %v9614, %v9610
    %v9903 = vpack.c.b16 %v9619, %v9615
    %v9904 = vpack.c.b16 %v9620, %v9616
    %v9905 = vpack.c.b16 %v9621, %v9617
    %v9906 = vpack.c.b16 %v9622, %v9618
    %v9907 = vpack.c.b16 %v9627, %v9623
    %v9908 = vpack.c.b16 %v9628, %v9624
    %v9909 = vpack.c.b16 %v9629, %v9625
    %v9910 = vpack.c.b16 %v9630, %v9626
    %v9911 = vpack.c.b16 %v9635, %v9631
    %v9912 = vpack.c.b16 %v9636, %v9632
    %v9913 = vpack.c.b16 %v9637, %v9633
    %v9914 = vpack.c.b16 %v9638, %v9634
    %v9915 = vpack.c.b16 %v9643, %v9639
    %v9916 = vpack.c.b16 %v9644, %v9640
    %v9917 = vpack.c.b16 %v9645, %v9641
    %v9918 = vpack.c.b16 %v9646, %v9642
    %v9919 = vpack.c.b16 %v9651, %v9647
    %v9920 = vpack.c.b16 %v9652, %v9648
    %v9921 = vpack.c.b16 %v9653, %v9649
    %v9922 = vpack.c.b16 %v9654, %v9650
    %v9923 = vpack.c.b16 %v9659, %v9655
    %v9924 = vpack.c.b16 %v9660, %v9656
    %v9925 = vpack.c.b16 %v9661, %v9657
    %v9926 = vpack.c.b16 %v9662, %v9658
    %v9927 = vpack.c.b16 %v9667, %v9663
    %v9928 = vpack.c.b16 %v9668, %v9664
    %v9929 = vpack.c.b16 %v9669, %v9665
    %v9930 = vpack.c.b16 %v9670, %v9666
    %v9931 = vpack.c.b16 %v9675, %v9671
    %v9932 = vpack.c.b16 %v9676, %v9672
    %v9933 = vpack.c.b16 %v9677, %v9673
    %v9934 = vpack.c.b16 %v9678, %v9674
    %v9935 = vpack.c.b16 %v9683, %v9679
    %v9936 = vpack.c.b16 %v9684, %v9680
    %v9937 = vpack.c.b16 %v9685, %v9681
    %v9938 = vpack.c.b16 %v9686, %v9682
    %v9939 = vpack.c.b16 %v9691, %v9687
    %v9940 = vpack.c.b16 %v9692, %v9688
    %v9941 = vpack.c.b16 %v9693, %v9689
    %v9942 = vpack.c.b16 %v9694, %v9690
    %v9943 = vpack.c.b16 %v9699, %v9695
    %v9944 = vpack.c.b16 %v9700, %v9696
    %v9945 = vpack.c.b16 %v9701, %v9697
    %v9946 = vpack.c.b16 %v9702, %v9698
    %v9947 = vpack.c.b16 %v9707, %v9703
    %v9948 = vpack.c.b16 %v9708, %v9704
    %v9949 = vpack.c.b16 %v9709, %v9705
    %v9950 = vpack.c.b16 %v9710, %v9706
    %v9951 = vpack.c.b16 %v9715, %v9711
    %v9952 = vpack.c.b16 %v9716, %v9712
    %v9953 = vpack.c.b16 %v9717, %v9713
    %v9954 = vpack.c.b16 %v9718, %v9714
    %v9955 = vpack.c.b16 %v9723, %v9719
    %v9956 = vpack.c.b16 %v9724, %v9720
    %v9957 = vpack.c.b16 %v9725, %v9721
    %v9958 = vpack.c.b16 %v9726, %v9722
    %v9959 = vpack.c.b16 %v9731, %v9727
    %v9960 = vpack.c.b16 %v9732, %v9728
    %v9961 = vpack.c.b16 %v9733, %v9729
    %v9962 = vpack.c.b16 %v9734, %v9730
    %v9963 = vpack.c.b16 %v9739, %v9735
    %v9964 = vpack.c.b16 %v9740, %v9736
    %v9965 = vpack.c.b16 %v9741, %v9737
    %v9966 = vpack.c.b16 %v9742, %v9738
    %10191 = vmatprep.subr.bf16.mxu0 %v9744
    %10192 = vmatpush1.bf16.msra.mxu0 %v9743
    %10193 = vmatprep.subr.bf16.mxu0 %v9748
    %10194 = vmatpush1.bf16.msra.mxu0 %v9747
    %10195 = vmatprep.subr.bf16.mxu0 %v9752
    %10196 = vmatpush1.bf16.msra.mxu0 %v9751
    %10197 = vmatprep.subr.bf16.mxu0 %v9756
    %10198 = vmatpush1.bf16.msra.mxu0 %v9755
    %10199 = vmatprep.subr.bf16.mxu0 %v9760
    %10200 = vmatpush1.bf16.msra.mxu0 %v9759
    %10201 = vmatprep.subr.bf16.mxu0 %v9764
    %10202 = vmatpush1.bf16.msra.mxu0 %v9763
    %10203 = vmatprep.subr.bf16.mxu0 %v9768
    %10204 = vmatpush1.bf16.msra.mxu0 %v9767
    %10205 = vmatprep.subr.bf16.mxu0 %v9772
    %10206 = vmatpush1.bf16.msra.mxu0 %v9771
    %10207 = vmatprep.subr.bf16.mxu0 %v9776
    %10208 = vmatpush1.bf16.msra.mxu0 %v9775
    %10209 = vmatprep.subr.bf16.mxu0 %v9780
    %10210 = vmatpush1.bf16.msra.mxu0 %v9779
    %10211 = vmatprep.subr.bf16.mxu0 %v9784
    %10212 = vmatpush1.bf16.msra.mxu0 %v9783
    %10213 = vmatprep.subr.bf16.mxu0 %v9788
    %10214 = vmatpush1.bf16.msra.mxu0 %v9787
    %10215 = vmatprep.subr.bf16.mxu0 %v9792
    %10216 = vmatpush1.bf16.msra.mxu0 %v9791
    %10217 = vmatprep.subr.bf16.mxu0 %v9796
    %10218 = vmatpush1.bf16.msra.mxu0 %v9795
    %10219 = vmatprep.subr.bf16.mxu0 %v9800
    %10220 = vmatpush1.bf16.msra.mxu0 %v9799
    %10221 = vmatprep.subr.bf16.mxu0 %v9804
    %10222 = vmatpush1.bf16.msra.mxu0 %v9803
    %10223 = vmatprep.mubr.bf16.mxu0 %v7115
    %10224 = vmatmul.mubr.bf16.gmra.mrb[0].mxu0 %v7114
    %v10225 = vpop.f32.mrb[0].mxu0
    %v10226 = vadd.f32 %v9054, %v10225
    %v10227 = vpop.f32.mrb[0].mxu0
    %v10228 = vadd.f32 %v9058, %v10227
    %v10229 = vpop.f32.mrb[0].mxu0
    %v10230 = vpop.f32.mrb[0].mxu0
    %10231 = vdwg.mxu0
    %10232 = vmatprep.subr.bf16.mxu0 %v9808
    %10233 = vmatpush1.bf16.msra.mxu0 %v9807
    %10234 = vmatprep.subr.bf16.mxu0 %v9812
    %10235 = vmatpush1.bf16.msra.mxu0 %v9811
    %10236 = vmatprep.subr.bf16.mxu0 %v9816
    %10237 = vmatpush1.bf16.msra.mxu0 %v9815
    %10238 = vmatprep.subr.bf16.mxu0 %v9820
    %10239 = vmatpush1.bf16.msra.mxu0 %v9819
    %10240 = vmatprep.subr.bf16.mxu0 %v9824
    %10241 = vmatpush1.bf16.msra.mxu0 %v9823
    %10242 = vmatprep.subr.bf16.mxu0 %v9828
    %10243 = vmatpush1.bf16.msra.mxu0 %v9827
    %10244 = vmatprep.subr.bf16.mxu0 %v9832
    %10245 = vmatpush1.bf16.msra.mxu0 %v9831
    %10246 = vmatprep.subr.bf16.mxu0 %v9836
    %10247 = vmatpush1.bf16.msra.mxu0 %v9835
    %10248 = vmatprep.subr.bf16.mxu0 %v9840
    %10249 = vmatpush1.bf16.msra.mxu0 %v9839
    %10250 = vmatprep.subr.bf16.mxu0 %v9844
    %10251 = vmatpush1.bf16.msra.mxu0 %v9843
    %10252 = vmatprep.subr.bf16.mxu0 %v9848
    %10253 = vmatpush1.bf16.msra.mxu0 %v9847
    %10254 = vmatprep.subr.bf16.mxu0 %v9852
    %10255 = vmatpush1.bf16.msra.mxu0 %v9851
    %10256 = vmatprep.subr.bf16.mxu0 %v9856
    %10257 = vmatpush1.bf16.msra.mxu0 %v9855
    %10258 = vmatprep.subr.bf16.mxu0 %v9860
    %10259 = vmatpush1.bf16.msra.mxu0 %v9859
    %10260 = vmatprep.subr.bf16.mxu0 %v9864
    %10261 = vmatpush1.bf16.msra.mxu0 %v9863
    %10262 = vmatprep.subr.bf16.mxu0 %v9868
    %10263 = vmatpush1.bf16.msra.mxu0 %v9867
    %10264 = vmatprep.mubr.bf16.mxu0 %v7117
    %10265 = vmatmul.mubr.bf16.gmra.mrb[0].mxu0 %v7116
    %v10266 = vpop.f32.mrb[0].mxu0
    %v10267 = vadd.f32 %v10226, %v10266
    %v10268 = vpop.f32.mrb[0].mxu0
    %v10269 = vadd.f32 %v10228, %v10268
    %v10270 = vpop.f32.mrb[0].mxu0
    %v10271 = vpop.f32.mrb[0].mxu0
    %10272 = vdwg.mxu0
    %10273 = vmatprep.subr.bf16.mxu0 %v9872
    %10274 = vmatpush1.bf16.msra.mxu0 %v9871
    %10275 = vmatprep.subr.bf16.mxu0 %v9876
    %10276 = vmatpush1.bf16.msra.mxu0 %v9875
    %10277 = vmatprep.subr.bf16.mxu0 %v9880
    %10278 = vmatpush1.bf16.msra.mxu0 %v9879
    %10279 = vmatprep.subr.bf16.mxu0 %v9884
    %10280 = vmatpush1.bf16.msra.mxu0 %v9883
    %10281 = vmatprep.subr.bf16.mxu0 %v9888
    %10282 = vmatpush1.bf16.msra.mxu0 %v9887
    %10283 = vmatprep.subr.bf16.mxu0 %v9892
    %10284 = vmatpush1.bf16.msra.mxu0 %v9891
    %10285 = vmatprep.subr.bf16.mxu0 %v9896
    %10286 = vmatpush1.bf16.msra.mxu0 %v9895
    %10287 = vmatprep.subr.bf16.mxu0 %v9900
    %10288 = vmatpush1.bf16.msra.mxu0 %v9899
    %10289 = vmatprep.subr.bf16.mxu0 %v9904
    %10290 = vmatpush1.bf16.msra.mxu0 %v9903
    %10291 = vmatprep.subr.bf16.mxu0 %v9908
    %10292 = vmatpush1.bf16.msra.mxu0 %v9907
    %10293 = vmatprep.subr.bf16.mxu0 %v9912
    %10294 = vmatpush1.bf16.msra.mxu0 %v9911
    %10295 = vmatprep.subr.bf16.mxu0 %v9916
    %10296 = vmatpush1.bf16.msra.mxu0 %v9915
    %10297 = vmatprep.subr.bf16.mxu0 %v9920
    %10298 = vmatpush1.bf16.msra.mxu0 %v9919
    %10299 = vmatprep.subr.bf16.mxu0 %v9924
    %10300 = vmatpush1.bf16.msra.mxu0 %v9923
    %10301 = vmatprep.subr.bf16.mxu0 %v9928
    %10302 = vmatpush1.bf16.msra.mxu0 %v9927
    %10303 = vmatprep.subr.bf16.mxu0 %v9932
    %10304 = vmatpush1.bf16.msra.mxu0 %v9931
    %10305 = vmatprep.mubr.bf16.mxu0 %v7119
    %10306 = vmatmul.mubr.bf16.gmra.mrb[0].mxu0 %v7118
    %v10307 = vpop.f32.mrb[0].mxu0
    %v10308 = vadd.f32 %v10267, %v10307
    %v10309 = vpop.f32.mrb[0].mxu0
    %v10310 = vadd.f32 %v10269, %v10309
    %v10311 = vpop.f32.mrb[0].mxu0
    %v10312 = vpop.f32.mrb[0].mxu0
    %10313 = vdwg.mxu0
    %10314 = vmatprep.subr.bf16.mxu0 %v9936
    %10315 = vmatpush1.bf16.msra.mxu0 %v9935
    %10316 = vmatprep.subr.bf16.mxu0 %v9940
    %10317 = vmatpush1.bf16.msra.mxu0 %v9939
    %10318 = vmatprep.subr.bf16.mxu0 %v9944
    %10319 = vmatpush1.bf16.msra.mxu0 %v9943
    %10320 = vmatprep.subr.bf16.mxu0 %v9948
    %10321 = vmatpush1.bf16.msra.mxu0 %v9947
    %10322 = vmatprep.subr.bf16.mxu0 %v9952
    %10323 = vmatpush1.bf16.msra.mxu0 %v9951
    %10324 = vmatprep.subr.bf16.mxu0 %v9956
    %10325 = vmatpush1.bf16.msra.mxu0 %v9955
    %10326 = vmatprep.subr.bf16.mxu0 %v9960
    %10327 = vmatpush1.bf16.msra.mxu0 %v9959
    %10328 = vmatprep.subr.bf16.mxu0 %v9964
    %10329 = vmatpush1.bf16.msra.mxu0 %v9963
    %10330 = vmatprep.subr.bf16.mxu0 0
    %10331 = vmatpush1.bf16.msra.mxu0 0
    %10332 = vmatprep.subr.bf16.mxu0 0
    %10333 = vmatpush1.bf16.msra.mxu0 0
    %10334 = vmatprep.subr.bf16.mxu0 0
    %10335 = vmatpush1.bf16.msra.mxu0 0
    %10336 = vmatprep.subr.bf16.mxu0 0
    %10337 = vmatpush1.bf16.msra.mxu0 0
    %10338 = vmatprep.subr.bf16.mxu0 0
    %10339 = vmatpush1.bf16.msra.mxu0 0
    %10340 = vmatprep.subr.bf16.mxu0 0
    %10341 = vmatpush1.bf16.msra.mxu0 0
    %10342 = vmatprep.subr.bf16.mxu0 0
    %10343 = vmatpush1.bf16.msra.mxu0 0
    %10344 = vmatprep.subr.bf16.mxu0 0
    %10345 = vmatpush1.bf16.msra.mxu0 0
    %10346 = vmatprep.mubr.bf16.mxu0 0
    %10347 = vmatmul.mubr.bf16.gmra.mrb[0].mxu0 %v7120
    %v10348 = vpop.f32.mrb[0].mxu0
    %v10349 = vadd.f32 %v10308, %v10348
    %v10350 = vpop.f32.mrb[0].mxu0
    %v10351 = vadd.f32 %v10310, %v10350
    %v10352 = vpop.f32.mrb[0].mxu0
    %v10353 = vpop.f32.mrb[0].mxu0
    %10354 = vdwg.mxu0
    %10355 = vmatprep.subr.bf16.mxu0 %v9746
    %10356 = vmatpush1.bf16.msra.mxu0 %v9745
    %10357 = vmatprep.subr.bf16.mxu0 %v9750
    %10358 = vmatpush1.bf16.msra.mxu0 %v9749
    %10359 = vmatprep.subr.bf16.mxu0 %v9754
    %10360 = vmatpush1.bf16.msra.mxu0 %v9753
    %10361 = vmatprep.subr.bf16.mxu0 %v9758
    %10362 = vmatpush1.bf16.msra.mxu0 %v9757
    %10363 = vmatprep.subr.bf16.mxu0 %v9762
    %10364 = vmatpush1.bf16.msra.mxu0 %v9761
    %10365 = vmatprep.subr.bf16.mxu0 %v9766
    %10366 = vmatpush1.bf16.msra.mxu0 %v9765
    %10367 = vmatprep.subr.bf16.mxu0 %v9770
    %10368 = vmatpush1.bf16.msra.mxu0 %v9769
    %10369 = vmatprep.subr.bf16.mxu0 %v9774
    %10370 = vmatpush1.bf16.msra.mxu0 %v9773
    %10371 = vmatprep.subr.bf16.mxu0 %v9778
    %10372 = vmatpush1.bf16.msra.mxu0 %v9777
    %10373 = vmatprep.subr.bf16.mxu0 %v9782
    %10374 = vmatpush1.bf16.msra.mxu0 %v9781
    %10375 = vmatprep.subr.bf16.mxu0 %v9786
    %10376 = vmatpush1.bf16.msra.mxu0 %v9785
    %10377 = vmatprep.subr.bf16.mxu0 %v9790
    %10378 = vmatpush1.bf16.msra.mxu0 %v9789
    %10379 = vmatprep.subr.bf16.mxu0 %v9794
    %10380 = vmatpush1.bf16.msra.mxu0 %v9793
    %10381 = vmatprep.subr.bf16.mxu0 %v9798
    %10382 = vmatpush1.bf16.msra.mxu0 %v9797
    %10383 = vmatprep.subr.bf16.mxu0 %v9802
    %10384 = vmatpush1.bf16.msra.mxu0 %v9801
    %10385 = vmatprep.subr.bf16.mxu0 %v9806
    %10386 = vmatpush1.bf16.msra.mxu0 %v9805
    %10387 = vmatprep.mubr.bf16.mxu0 %v7115
    %10388 = vmatmul.mubr.bf16.gmra.mrb[0].mxu0 %v7114
    %v10389 = vpop.f32.mrb[0].mxu0
    %v10390 = vadd.f32 %v9062, %v10389
    %v10391 = vpop.f32.mrb[0].mxu0
    %v10392 = vadd.f32 %v9066, %v10391
    %v10393 = vpop.f32.mrb[0].mxu0
    %v10394 = vpop.f32.mrb[0].mxu0
    %10395 = vdwg.mxu0
    %10396 = vmatprep.subr.bf16.mxu0 %v9810
    %10397 = vmatpush1.bf16.msra.mxu0 %v9809
    %10398 = vmatprep.subr.bf16.mxu0 %v9814
    %10399 = vmatpush1.bf16.msra.mxu0 %v9813
    %10400 = vmatprep.subr.bf16.mxu0 %v9818
    %10401 = vmatpush1.bf16.msra.mxu0 %v9817
    %10402 = vmatprep.subr.bf16.mxu0 %v9822
    %10403 = vmatpush1.bf16.msra.mxu0 %v9821
    %10404 = vmatprep.subr.bf16.mxu0 %v9826
    %10405 = vmatpush1.bf16.msra.mxu0 %v9825
    %10406 = vmatprep.subr.bf16.mxu0 %v9830
    %10407 = vmatpush1.bf16.msra.mxu0 %v9829
    %10408 = vmatprep.subr.bf16.mxu0 %v9834
    %10409 = vmatpush1.bf16.msra.mxu0 %v9833
    %10410 = vmatprep.subr.bf16.mxu0 %v9838
    %10411 = vmatpush1.bf16.msra.mxu0 %v9837
    %10412 = vmatprep.subr.bf16.mxu0 %v9842
    %10413 = vmatpush1.bf16.msra.mxu0 %v9841
    %10414 = vmatprep.subr.bf16.mxu0 %v9846
    %10415 = vmatpush1.bf16.msra.mxu0 %v9845
    %10416 = vmatprep.subr.bf16.mxu0 %v9850
    %10417 = vmatpush1.bf16.msra.mxu0 %v9849
    %10418 = vmatprep.subr.bf16.mxu0 %v9854
    %10419 = vmatpush1.bf16.msra.mxu0 %v9853
    %10420 = vmatprep.subr.bf16.mxu0 %v9858
    %10421 = vmatpush1.bf16.msra.mxu0 %v9857
    %10422 = vmatprep.subr.bf16.mxu0 %v9862
    %10423 = vmatpush1.bf16.msra.mxu0 %v9861
    %10424 = vmatprep.subr.bf16.mxu0 %v9866
    %10425 = vmatpush1.bf16.msra.mxu0 %v9865
    %10426 = vmatprep.subr.bf16.mxu0 %v9870
    %10427 = vmatpush1.bf16.msra.mxu0 %v9869
    %10428 = vmatprep.mubr.bf16.mxu0 %v7117
    %10429 = vmatmul.mubr.bf16.gmra.mrb[0].mxu0 %v7116
    %v10430 = vpop.f32.mrb[0].mxu0
    %v10431 = vadd.f32 %v10390, %v10430
    %v10432 = vpop.f32.mrb[0].mxu0
    %v10433 = vadd.f32 %v10392, %v10432
    %v10434 = vpop.f32.mrb[0].mxu0
    %v10435 = vpop.f32.mrb[0].mxu0
    %10436 = vdwg.mxu0
    %10437 = vmatprep.subr.bf16.mxu0 %v9874
    %10438 = vmatpush1.bf16.msra.mxu0 %v9873
    %10439 = vmatprep.subr.bf16.mxu0 %v9878
    %10440 = vmatpush1.bf16.msra.mxu0 %v9877
    %10441 = vmatprep.subr.bf16.mxu0 %v9882
    %10442 = vmatpush1.bf16.msra.mxu0 %v9881
    %10443 = vmatprep.subr.bf16.mxu0 %v9886
    %10444 = vmatpush1.bf16.msra.mxu0 %v9885
    %10445 = vmatprep.subr.bf16.mxu0 %v9890
    %10446 = vmatpush1.bf16.msra.mxu0 %v9889
    %10447 = vmatprep.subr.bf16.mxu0 %v9894
    %10448 = vmatpush1.bf16.msra.mxu0 %v9893
    %10449 = vmatprep.subr.bf16.mxu0 %v9898
    %10450 = vmatpush1.bf16.msra.mxu0 %v9897
    %10451 = vmatprep.subr.bf16.mxu0 %v9902
    %10452 = vmatpush1.bf16.msra.mxu0 %v9901
    %10453 = vmatprep.subr.bf16.mxu0 %v9906
    %10454 = vmatpush1.bf16.msra.mxu0 %v9905
    %10455 = vmatprep.subr.bf16.mxu0 %v9910
    %10456 = vmatpush1.bf16.msra.mxu0 %v9909
    %10457 = vmatprep.subr.bf16.mxu0 %v9914
    %10458 = vmatpush1.bf16.msra.mxu0 %v9913
    %10459 = vmatprep.subr.bf16.mxu0 %v9918
    %10460 = vmatpush1.bf16.msra.mxu0 %v9917
    %10461 = vmatprep.subr.bf16.mxu0 %v9922
    %10462 = vmatpush1.bf16.msra.mxu0 %v9921
    %10463 = vmatprep.subr.bf16.mxu0 %v9926
    %10464 = vmatpush1.bf16.msra.mxu0 %v9925
    %10465 = vmatprep.subr.bf16.mxu0 %v9930
    %10466 = vmatpush1.bf16.msra.mxu0 %v9929
    %10467 = vmatprep.subr.bf16.mxu0 %v9934
    %10468 = vmatpush1.bf16.msra.mxu0 %v9933
    %10469 = vmatprep.mubr.bf16.mxu0 %v7119
    %10470 = vmatmul.mubr.bf16.gmra.mrb[0].mxu0 %v7118
    %v10471 = vpop.f32.mrb[0].mxu0
    %v10472 = vadd.f32 %v10431, %v10471
    %v10473 = vpop.f32.mrb[0].mxu0
    %v10474 = vadd.f32 %v10433, %v10473
    %v10475 = vpop.f32.mrb[0].mxu0
    %v10476 = vpop.f32.mrb[0].mxu0
    %10477 = vdwg.mxu0
    %10478 = vmatprep.subr.bf16.mxu0 %v9938
    %10479 = vmatpush1.bf16.msra.mxu0 %v9937
    %10480 = vmatprep.subr.bf16.mxu0 %v9942
    %10481 = vmatpush1.bf16.msra.mxu0 %v9941
    %10482 = vmatprep.subr.bf16.mxu0 %v9946
    %10483 = vmatpush1.bf16.msra.mxu0 %v9945
    %10484 = vmatprep.subr.bf16.mxu0 %v9950
    %10485 = vmatpush1.bf16.msra.mxu0 %v9949
    %10486 = vmatprep.subr.bf16.mxu0 %v9954
    %10487 = vmatpush1.bf16.msra.mxu0 %v9953
    %10488 = vmatprep.subr.bf16.mxu0 %v9958
    %10489 = vmatpush1.bf16.msra.mxu0 %v9957
    %10490 = vmatprep.subr.bf16.mxu0 %v9962
    %10491 = vmatpush1.bf16.msra.mxu0 %v9961
    %10492 = vmatprep.subr.bf16.mxu0 %v9966
    %10493 = vmatpush1.bf16.msra.mxu0 %v9965
    %10494 = vmatprep.subr.bf16.mxu0 0
    %10495 = vmatpush1.bf16.msra.mxu0 0
    %10496 = vmatprep.subr.bf16.mxu0 0
    %10497 = vmatpush1.bf16.msra.mxu0 0
    %10498 = vmatprep.subr.bf16.mxu0 0
    %10499 = vmatpush1.bf16.msra.mxu0 0
    %10500 = vmatprep.subr.bf16.mxu0 0
    %10501 = vmatpush1.bf16.msra.mxu0 0
    %10502 = vmatprep.subr.bf16.mxu0 0
    %10503 = vmatpush1.bf16.msra.mxu0 0
    %10504 = vmatprep.subr.bf16.mxu0 0
    %10505 = vmatpush1.bf16.msra.mxu0 0
    %10506 = vmatprep.subr.bf16.mxu0 0
    %10507 = vmatpush1.bf16.msra.mxu0 0
    %10508 = vmatprep.subr.bf16.mxu0 0
    %10509 = vmatpush1.bf16.msra.mxu0 0
    %10510 = vmatprep.mubr.bf16.mxu0 0
    %10511 = vmatmul.mubr.bf16.gmra.mrb[0].mxu0 %v7120
    %v10512 = vpop.f32.mrb[0].mxu0
    %v10513 = vadd.f32 %v10472, %v10512
    %v10514 = vpop.f32.mrb[0].mxu0
    %v10515 = vadd.f32 %v10474, %v10514
    %v10516 = vpop.f32.mrb[0].mxu0
    %v10517 = vpop.f32.mrb[0].mxu0
    %10518 = vdwg.mxu0
    %v10519 = vmax.f32 %v10349, 0.0
    %v10520 = vmax.f32 %v10351, 0.0
    %v10521 = vmax.f32 %v10513, 0.0
    %v10522 = vmax.f32 %v10515, 0.0
    %v10523 = vpack.c.bf16 %v10519, %v10519
    %v10524 = vpack.c.bf16 %v10520, %v10520
    %v10525 = vpack.c.bf16 %v10521, %v10521
    %v10526 = vpack.c.bf16 %v10522, %v10522
    %v10527 = vld [vmem:[%s7] sm:$0xff]
    %v10528 = vld [vmem:[%s7 + $0x8] sm:$0xff]
    %v10529 = vld [vmem:[%s7 + $0x10] sm:$0xff]
    %v10530 = vld [vmem:[%s7 + $0x18] sm:$0xff]
    %v10531 = vld [vmem:[%s7 + $0x20] sm:$0xff]
    %v10532 = vld [vmem:[%s7 + $0x28] sm:$0xff]
    %v10533 = vld [vmem:[%s7 + $0x30] sm:$0xff]
    %v10534 = vld [vmem:[%s7 + $0x38] sm:$0xff]
    %v10535 = vld [vmem:[%s7 + $0x40] sm:$0xff]
    %v10536 = vld [vmem:[%s7 + $0x48] sm:$0xff]
    %v10537 = vld [vmem:[%s7 + $0x50] sm:$0xff]
    %v10538 = vld [vmem:[%s7 + $0x58] sm:$0xff]
    %v10539 = vld [vmem:[%s7 + $0x60] sm:$0xff]
    %v10540 = vld [vmem:[%s7 + $0x68] sm:$0xff]
    %v10541 = vld [vmem:[%s7 + $0x70] sm:$0xff]
    %v10542 = vld [vmem:[%s7 + $0x78] sm:$0xff]
    %v10543 = vld [vmem:[%s7 + $0x80] sm:$0xff]
    %v10544 = vld [vmem:[%s7 + $0x88] sm:$0xff]
    %v10545 = vld [vmem:[%s7 + $0x90] sm:$0xff]
    %v10546 = vld [vmem:[%s7 + $0x98] sm:$0xff]
    %v10547 = vld [vmem:[%s7 + $0xa0] sm:$0xff]
    %v10548 = vld [vmem:[%s7 + $0xa8] sm:$0xff]
    %v10549 = vld [vmem:[%s7 + $0xb0] sm:$0xff]
    %v10550 = vld [vmem:[%s7 + $0xb8] sm:$0xff]
    %v10551 = vld [vmem:[%s7 + $0xc0] sm:$0xff]
    %v10552 = vld [vmem:[%s7 + $0xc8] sm:$0xff]
    %v10553 = vld [vmem:[%s7 + $0xd0] sm:$0xff]
    %v10554 = vld [vmem:[%s7 + $0xd8] sm:$0xff]
    %v10555 = vld [vmem:[%s7 + $0xe0] sm:$0xff]
    %v10556 = vld [vmem:[%s7 + $0xe8] sm:$0xff]
    %v10557 = vld [vmem:[%s7 + $0xf0] sm:$0xff]
    %v10558 = vld [vmem:[%s7 + $0xf8] sm:$0xff]
    %v10559 = vld [vmem:[%s7 + $0x100] sm:$0xff]
    %v10560 = vld [vmem:[%s7 + $0x108] sm:$0xff]
    %v10561 = vld [vmem:[%s7 + $0x110] sm:$0xff]
    %v10562 = vld [vmem:[%s7 + $0x118] sm:$0xff]
    %v10563 = vld [vmem:[%s7 + $0x120] sm:$0xff]
    %v10564 = vld [vmem:[%s7 + $0x128] sm:$0xff]
    %v10565 = vld [vmem:[%s7 + $0x130] sm:$0xff]
    %v10566 = vld [vmem:[%s7 + $0x138] sm:$0xff]
    %v10567 = vld [vmem:[%s7 + $0x140] sm:$0xff]
    %v10568 = vld [vmem:[%s7 + $0x148] sm:$0xff]
    %v10569 = vld [vmem:[%s7 + $0x150] sm:$0xff]
    %v10570 = vld [vmem:[%s7 + $0x158] sm:$0xff]
    %v10571 = vld [vmem:[%s7 + $0x160] sm:$0xff]
    %v10572 = vld [vmem:[%s7 + $0x168] sm:$0xff]
    %v10573 = vld [vmem:[%s7 + $0x170] sm:$0xff]
    %v10574 = vld [vmem:[%s7 + $0x178] sm:$0xff]
    %v10575 = vld [vmem:[%s7 + $0x180] sm:$0xff]
    %v10576 = vld [vmem:[%s7 + $0x188] sm:$0xff]
    %v10577 = vld [vmem:[%s7 + $0x190] sm:$0xff]
    %v10578 = vld [vmem:[%s7 + $0x198] sm:$0xff]
    %v10579 = vld [vmem:[%s7 + $0x1a0] sm:$0xff]
    %v10580 = vld [vmem:[%s7 + $0x1a8] sm:$0xff]
    %v10581 = vld [vmem:[%s7 + $0x1b0] sm:$0xff]
    %v10582 = vld [vmem:[%s7 + $0x1b8] sm:$0xff]
    %v10583 = vld [vmem:[%s8] sm:$0x3]
    %v10585 = vlaneseq
    %v10586 = vshrl.u32 %v10585, 7
    %v10587 = vsub.s32 0, %v10586
    %v10588 = vrot.slane %v10583, %v10587
    %v10589 = vlaneseq
    %v10590 = vshrl.u32 %v10589, 7
    %v10591 = vsub.s32 1, %v10590
    %v10592 = vrot.slane %v10583, %v10591
    %v10651 = vunpack.c.l.b16 %v10527
    %v10652 = vunpack.c.h.b16 %v10527
    %v10653 = vunpack.c.l.b16 %v10528
    %v10654 = vunpack.c.h.b16 %v10528
    %v10655 = vunpack.c.l.b16 %v10529
    %v10656 = vunpack.c.h.b16 %v10529
    %v10657 = vunpack.c.l.b16 %v10530
    %v10658 = vunpack.c.h.b16 %v10530
    %v10659 = vunpack.c.l.b16 %v10531
    %v10660 = vunpack.c.h.b16 %v10531
    %v10661 = vunpack.c.l.b16 %v10532
    %v10662 = vunpack.c.h.b16 %v10532
    %v10663 = vunpack.c.l.b16 %v10533
    %v10664 = vunpack.c.h.b16 %v10533
    %v10665 = vunpack.c.l.b16 %v10534
    %v10666 = vunpack.c.h.b16 %v10534
    %v10667 = vunpack.c.l.b16 %v10535
    %v10668 = vunpack.c.h.b16 %v10535
    %v10669 = vunpack.c.l.b16 %v10536
    %v10670 = vunpack.c.h.b16 %v10536
    %v10671 = vunpack.c.l.b16 %v10537
    %v10672 = vunpack.c.h.b16 %v10537
    %v10673 = vunpack.c.l.b16 %v10538
    %v10674 = vunpack.c.h.b16 %v10538
    %v10675 = vunpack.c.l.b16 %v10539
    %v10676 = vunpack.c.h.b16 %v10539
    %v10677 = vunpack.c.l.b16 %v10540
    %v10678 = vunpack.c.h.b16 %v10540
    %v10679 = vunpack.c.l.b16 %v10541
    %v10680 = vunpack.c.h.b16 %v10541
    %v10681 = vunpack.c.l.b16 %v10542
    %v10682 = vunpack.c.h.b16 %v10542
    %v10683 = vunpack.c.l.b16 %v10543
    %v10684 = vunpack.c.h.b16 %v10543
    %v10685 = vunpack.c.l.b16 %v10544
    %v10686 = vunpack.c.h.b16 %v10544
    %v10687 = vunpack.c.l.b16 %v10545
    %v10688 = vunpack.c.h.b16 %v10545
    %v10689 = vunpack.c.l.b16 %v10546
    %v10690 = vunpack.c.h.b16 %v10546
    %v10691 = vunpack.c.l.b16 %v10547
    %v10692 = vunpack.c.h.b16 %v10547
    %v10693 = vunpack.c.l.b16 %v10548
    %v10694 = vunpack.c.h.b16 %v10548
    %v10695 = vunpack.c.l.b16 %v10549
    %v10696 = vunpack.c.h.b16 %v10549
    %v10697 = vunpack.c.l.b16 %v10550
    %v10698 = vunpack.c.h.b16 %v10550
    %v10699 = vunpack.c.l.b16 %v10551
    %v10700 = vunpack.c.h.b16 %v10551
    %v10701 = vunpack.c.l.b16 %v10552
    %v10702 = vunpack.c.h.b16 %v10552
    %v10703 = vunpack.c.l.b16 %v10553
    %v10704 = vunpack.c.h.b16 %v10553
    %v10705 = vunpack.c.l.b16 %v10554
    %v10706 = vunpack.c.h.b16 %v10554
    %v10707 = vunpack.c.l.b16 %v10555
    %v10708 = vunpack.c.h.b16 %v10555
    %v10709 = vunpack.c.l.b16 %v10556
    %v10710 = vunpack.c.h.b16 %v10556
    %v10711 = vunpack.c.l.b16 %v10557
    %v10712 = vunpack.c.h.b16 %v10557
    %v10713 = vunpack.c.l.b16 %v10558
    %v10714 = vunpack.c.h.b16 %v10558
    %v10715 = vunpack.c.l.b16 %v10559
    %v10716 = vunpack.c.h.b16 %v10559
    %v10717 = vunpack.c.l.b16 %v10560
    %v10718 = vunpack.c.h.b16 %v10560
    %v10719 = vunpack.c.l.b16 %v10561
    %v10720 = vunpack.c.h.b16 %v10561
    %v10721 = vunpack.c.l.b16 %v10562
    %v10722 = vunpack.c.h.b16 %v10562
    %v10723 = vunpack.c.l.b16 %v10563
    %v10724 = vunpack.c.h.b16 %v10563
    %v10725 = vunpack.c.l.b16 %v10564
    %v10726 = vunpack.c.h.b16 %v10564
    %v10727 = vunpack.c.l.b16 %v10565
    %v10728 = vunpack.c.h.b16 %v10565
    %v10729 = vunpack.c.l.b16 %v10566
    %v10730 = vunpack.c.h.b16 %v10566
    %v10731 = vunpack.c.l.b16 %v10567
    %v10732 = vunpack.c.h.b16 %v10567
    %v10733 = vunpack.c.l.b16 %v10568
    %v10734 = vunpack.c.h.b16 %v10568
    %v10735 = vunpack.c.l.b16 %v10569
    %v10736 = vunpack.c.h.b16 %v10569
    %v10737 = vunpack.c.l.b16 %v10570
    %v10738 = vunpack.c.h.b16 %v10570
    %v10739 = vunpack.c.l.b16 %v10571
    %v10740 = vunpack.c.h.b16 %v10571
    %v10741 = vunpack.c.l.b16 %v10572
    %v10742 = vunpack.c.h.b16 %v10572
    %v10743 = vunpack.c.l.b16 %v10573
    %v10744 = vunpack.c.h.b16 %v10573
    %v10745 = vunpack.c.l.b16 %v10574
    %v10746 = vunpack.c.h.b16 %v10574
    %v10747 = vunpack.c.l.b16 %v10575
    %v10748 = vunpack.c.h.b16 %v10575
    %v10749 = vunpack.c.l.b16 %v10576
    %v10750 = vunpack.c.h.b16 %v10576
    %v10751 = vunpack.c.l.b16 %v10577
    %v10752 = vunpack.c.h.b16 %v10577
    %v10753 = vunpack.c.l.b16 %v10578
    %v10754 = vunpack.c.h.b16 %v10578
    %v10755 = vunpack.c.l.b16 %v10579
    %v10756 = vunpack.c.h.b16 %v10579
    %v10757 = vunpack.c.l.b16 %v10580
    %v10758 = vunpack.c.h.b16 %v10580
    %v10759 = vunpack.c.l.b16 %v10581
    %v10760 = vunpack.c.h.b16 %v10581
    %v10761 = vunpack.c.l.b16 %v10582
    %v10762 = vunpack.c.h.b16 %v10582
    %v10763 = vpack.c.b16 %v10653, %v10651
    %v10764 = vpack.c.b16 %v10654, %v10652
    %v10765 = vpack.c.b16 %v10657, %v10655
    %v10766 = vpack.c.b16 %v10658, %v10656
    %v10767 = vpack.c.b16 %v10661, %v10659
    %v10768 = vpack.c.b16 %v10662, %v10660
    %v10769 = vpack.c.b16 %v10665, %v10663
    %v10770 = vpack.c.b16 %v10666, %v10664
    %v10771 = vpack.c.b16 %v10669, %v10667
    %v10772 = vpack.c.b16 %v10670, %v10668
    %v10773 = vpack.c.b16 %v10673, %v10671
    %v10774 = vpack.c.b16 %v10674, %v10672
    %v10775 = vpack.c.b16 %v10677, %v10675
    %v10776 = vpack.c.b16 %v10678, %v10676
    %v10777 = vpack.c.b16 %v10681, %v10679
    %v10778 = vpack.c.b16 %v10682, %v10680
    %v10779 = vpack.c.b16 %v10685, %v10683
    %v10780 = vpack.c.b16 %v10686, %v10684
    %v10781 = vpack.c.b16 %v10689, %v10687
    %v10782 = vpack.c.b16 %v10690, %v10688
    %v10783 = vpack.c.b16 %v10693, %v10691
    %v10784 = vpack.c.b16 %v10694, %v10692
    %v10785 = vpack.c.b16 %v10697, %v10695
    %v10786 = vpack.c.b16 %v10698, %v10696
    %v10787 = vpack.c.b16 %v10701, %v10699
    %v10788 = vpack.c.b16 %v10702, %v10700
    %v10789 = vpack.c.b16 %v10705, %v10703
    %v10790 = vpack.c.b16 %v10706, %v10704
    %v10791 = vpack.c.b16 %v10709, %v10707
    %v10792 = vpack.c.b16 %v10710, %v10708
    %v10793 = vpack.c.b16 %v10713, %v10711
    %v10794 = vpack.c.b16 %v10714, %v10712
    %v10795 = vpack.c.b16 %v10717, %v10715
    %v10796 = vpack.c.b16 %v10718, %v10716
    %v10797 = vpack.c.b16 %v10721, %v10719
    %v10798 = vpack.c.b16 %v10722, %v10720
    %v10799 = vpack.c.b16 %v10725, %v10723
    %v10800 = vpack.c.b16 %v10726, %v10724
    %v10801 = vpack.c.b16 %v10729, %v10727
    %v10802 = vpack.c.b16 %v10730, %v10728
    %v10803 = vpack.c.b16 %v10733, %v10731
    %v10804 = vpack.c.b16 %v10734, %v10732
    %v10805 = vpack.c.b16 %v10737, %v10735
    %v10806 = vpack.c.b16 %v10738, %v10736
    %v10807 = vpack.c.b16 %v10741, %v10739
    %v10808 = vpack.c.b16 %v10742, %v10740
    %v10809 = vpack.c.b16 %v10745, %v10743
    %v10810 = vpack.c.b16 %v10746, %v10744
    %v10811 = vpack.c.b16 %v10749, %v10747
    %v10812 = vpack.c.b16 %v10750, %v10748
    %v10813 = vpack.c.b16 %v10753, %v10751
    %v10814 = vpack.c.b16 %v10754, %v10752
    %v10815 = vpack.c.b16 %v10757, %v10755
    %v10816 = vpack.c.b16 %v10758, %v10756
    %v10817 = vpack.c.b16 %v10761, %v10759
    %v10818 = vpack.c.b16 %v10762, %v10760
    %vm10875 = vcmask 523264
    %v10877 = vsel %vm10875, %v8822, 0
    %10879 = vmatprep.subr.bf16.mxu0 %v10764
    %10880 = vmatpush1.bf16.msra.mxu0 %v10763
    %10881 = vmatprep.subr.bf16.mxu0 %v10766
    %10882 = vmatpush1.bf16.msra.mxu0 %v10765
    %10883 = vmatprep.subr.bf16.mxu0 %v10768
    %10884 = vmatpush1.bf16.msra.mxu0 %v10767
    %10885 = vmatprep.subr.bf16.mxu0 %v10770
    %10886 = vmatpush1.bf16.msra.mxu0 %v10769
    %10887 = vmatprep.subr.bf16.mxu0 %v10772
    %10888 = vmatpush1.bf16.msra.mxu0 %v10771
    %10889 = vmatprep.subr.bf16.mxu0 %v10774
    %10890 = vmatpush1.bf16.msra.mxu0 %v10773
    %10891 = vmatprep.subr.bf16.mxu0 %v10776
    %10892 = vmatpush1.bf16.msra.mxu0 %v10775
    %10893 = vmatprep.subr.bf16.mxu0 %v10778
    %10894 = vmatpush1.bf16.msra.mxu0 %v10777
    %10895 = vmatprep.subr.bf16.mxu0 %v10780
    %10896 = vmatpush1.bf16.msra.mxu0 %v10779
    %10897 = vmatprep.subr.bf16.mxu0 %v10782
    %10898 = vmatpush1.bf16.msra.mxu0 %v10781
    %10899 = vmatprep.subr.bf16.mxu0 %v10784
    %10900 = vmatpush1.bf16.msra.mxu0 %v10783
    %10901 = vmatprep.subr.bf16.mxu0 %v10786
    %10902 = vmatpush1.bf16.msra.mxu0 %v10785
    %10903 = vmatprep.subr.bf16.mxu0 %v10788
    %10904 = vmatpush1.bf16.msra.mxu0 %v10787
    %10905 = vmatprep.subr.bf16.mxu0 %v10790
    %10906 = vmatpush1.bf16.msra.mxu0 %v10789
    %10907 = vmatprep.subr.bf16.mxu0 %v10792
    %10908 = vmatpush1.bf16.msra.mxu0 %v10791
    %10909 = vmatprep.subr.bf16.mxu0 %v10794
    %10910 = vmatpush1.bf16.msra.mxu0 %v10793
    %10911 = vmatprep.mubr.bf16.mxu0 %v8820
    %10912 = vmatmul.mubr.bf16.gmra.mrb[0].mxu0 %v8819
    %v10913 = vpop.f32.mrb[0].mxu0
    %v10914 = vadd.f32 %v10588, %v10913
    %v10915 = vpop.f32.mrb[0].mxu0
    %v10916 = vadd.f32 %v10592, %v10915
    %v10917 = vpop.f32.mrb[0].mxu0
    %v10918 = vpop.f32.mrb[0].mxu0
    %10919 = vdwg.mxu0
    %10920 = vmatprep.subr.bf16.mxu0 %v10796
    %10921 = vmatpush1.bf16.msra.mxu0 %v10795
    %10922 = vmatprep.subr.bf16.mxu0 %v10798
    %10923 = vmatpush1.bf16.msra.mxu0 %v10797
    %10924 = vmatprep.subr.bf16.mxu0 %v10800
    %10925 = vmatpush1.bf16.msra.mxu0 %v10799
    %10926 = vmatprep.subr.bf16.mxu0 %v10802
    %10927 = vmatpush1.bf16.msra.mxu0 %v10801
    %10928 = vmatprep.subr.bf16.mxu0 %v10804
    %10929 = vmatpush1.bf16.msra.mxu0 %v10803
    %10930 = vmatprep.subr.bf16.mxu0 %v10806
    %10931 = vmatpush1.bf16.msra.mxu0 %v10805
    %10932 = vmatprep.subr.bf16.mxu0 %v10808
    %10933 = vmatpush1.bf16.msra.mxu0 %v10807
    %10934 = vmatprep.subr.bf16.mxu0 %v10810
    %10935 = vmatpush1.bf16.msra.mxu0 %v10809
    %10936 = vmatprep.subr.bf16.mxu0 %v10812
    %10937 = vmatpush1.bf16.msra.mxu0 %v10811
    %10938 = vmatprep.subr.bf16.mxu0 %v10814
    %10939 = vmatpush1.bf16.msra.mxu0 %v10813
    %10940 = vmatprep.subr.bf16.mxu0 %v10816
    %10941 = vmatpush1.bf16.msra.mxu0 %v10815
    %10942 = vmatprep.subr.bf16.mxu0 %v10818
    %10943 = vmatpush1.bf16.msra.mxu0 %v10817
    %10944 = vmatprep.subr.bf16.mxu0 0
    %10945 = vmatpush1.bf16.msra.mxu0 0
    %10946 = vmatprep.subr.bf16.mxu0 0
    %10947 = vmatpush1.bf16.msra.mxu0 0
    %10948 = vmatprep.subr.bf16.mxu0 0
    %10949 = vmatpush1.bf16.msra.mxu0 0
    %10950 = vmatprep.subr.bf16.mxu0 0
    %10951 = vmatpush1.bf16.msra.mxu0 0
    %10952 = vmatprep.mubr.bf16.mxu0 %v10877
    %10953 = vmatmul.mubr.bf16.gmra.mrb[0].mxu0 %v8821
    %v10954 = vpop.f32.mrb[0].mxu0
    %v10955 = vadd.f32 %v10914, %v10954
    %v10956 = vpop.f32.mrb[0].mxu0
    %v10957 = vadd.f32 %v10916, %v10956
    %v10958 = vpop.f32.mrb[0].mxu0
    %v10959 = vpop.f32.mrb[0].mxu0
    %10960 = vdwg.mxu0
    %v10961 = vmax.f32 %v10955, 0.0
    %v10962 = vmax.f32 %v10957, 0.0
    %v10963 = vpack.c.bf16 %v10961, %v10961
    %v10964 = vpack.c.bf16 %v10962, %v10962
    %s10965 = scalar_lea.vmem %s7, 448
    %v10966 = vld [vmem:[%s10965] sm:$0xff]
    %v10967 = vld [vmem:[%s10965 + $0x8] sm:$0xff]
    %v10968 = vld [vmem:[%s10965 + $0x10] sm:$0xff]
    %v10969 = vld [vmem:[%s10965 + $0x18] sm:$0xff]
    %v10970 = vld [vmem:[%s10965 + $0x20] sm:$0xff]
    %v10971 = vld [vmem:[%s10965 + $0x28] sm:$0xff]
    %v10972 = vld [vmem:[%s10965 + $0x30] sm:$0xff]
    %v10973 = vld [vmem:[%s10965 + $0x38] sm:$0xff]
    %v10974 = vld [vmem:[%s10965 + $0x40] sm:$0xff]
    %v10975 = vld [vmem:[%s10965 + $0x48] sm:$0xff]
    %v10976 = vld [vmem:[%s10965 + $0x50] sm:$0xff]
    %v10977 = vld [vmem:[%s10965 + $0x58] sm:$0xff]
    %v10978 = vld [vmem:[%s10965 + $0x60] sm:$0xff]
    %v10979 = vld [vmem:[%s10965 + $0x68] sm:$0xff]
    %v10980 = vld [vmem:[%s10965 + $0x70] sm:$0xff]
    %v10981 = vld [vmem:[%s10965 + $0x78] sm:$0xff]
    %v10982 = vld [vmem:[%s10965 + $0x80] sm:$0xff]
    %v10983 = vld [vmem:[%s10965 + $0x88] sm:$0xff]
    %v10984 = vld [vmem:[%s10965 + $0x90] sm:$0xff]
    %v10985 = vld [vmem:[%s10965 + $0x98] sm:$0xff]
    %v10986 = vld [vmem:[%s10965 + $0xa0] sm:$0xff]
    %v10987 = vld [vmem:[%s10965 + $0xa8] sm:$0xff]
    %v10988 = vld [vmem:[%s10965 + $0xb0] sm:$0xff]
    %v10989 = vld [vmem:[%s10965 + $0xb8] sm:$0xff]
    %v10990 = vld [vmem:[%s10965 + $0xc0] sm:$0xff]
    %v10991 = vld [vmem:[%s10965 + $0xc8] sm:$0xff]
    %v10992 = vld [vmem:[%s10965 + $0xd0] sm:$0xff]
    %v10993 = vld [vmem:[%s10965 + $0xd8] sm:$0xff]
    %v10994 = vld [vmem:[%s10965 + $0xe0] sm:$0xff]
    %v10995 = vld [vmem:[%s10965 + $0xe8] sm:$0xff]
    %v10996 = vld [vmem:[%s10965 + $0xf0] sm:$0xff]
    %v10997 = vld [vmem:[%s10965 + $0xf8] sm:$0xff]
    %v10998 = vld [vmem:[%s10965 + $0x100] sm:$0xff]
    %v10999 = vld [vmem:[%s10965 + $0x108] sm:$0xff]
    %v11000 = vld [vmem:[%s10965 + $0x110] sm:$0xff]
    %v11001 = vld [vmem:[%s10965 + $0x118] sm:$0xff]
    %v11002 = vld [vmem:[%s10965 + $0x120] sm:$0xff]
    %v11003 = vld [vmem:[%s10965 + $0x128] sm:$0xff]
    %v11004 = vld [vmem:[%s10965 + $0x130] sm:$0xff]
    %v11005 = vld [vmem:[%s10965 + $0x138] sm:$0xff]
    %v11006 = vld [vmem:[%s10965 + $0x140] sm:$0xff]
    %v11007 = vld [vmem:[%s10965 + $0x148] sm:$0xff]
    %v11008 = vld [vmem:[%s10965 + $0x150] sm:$0xff]
    %v11009 = vld [vmem:[%s10965 + $0x158] sm:$0xff]
    %v11010 = vld [vmem:[%s10965 + $0x160] sm:$0xff]
    %v11011 = vld [vmem:[%s10965 + $0x168] sm:$0xff]
    %v11012 = vld [vmem:[%s10965 + $0x170] sm:$0xff]
    %v11013 = vld [vmem:[%s10965 + $0x178] sm:$0xff]
    %v11014 = vld [vmem:[%s10965 + $0x180] sm:$0xff]
    %v11015 = vld [vmem:[%s10965 + $0x188] sm:$0xff]
    %v11016 = vld [vmem:[%s10965 + $0x190] sm:$0xff]
    %v11017 = vld [vmem:[%s10965 + $0x198] sm:$0xff]
    %v11018 = vld [vmem:[%s10965 + $0x1a0] sm:$0xff]
    %v11019 = vld [vmem:[%s10965 + $0x1a8] sm:$0xff]
    %v11020 = vld [vmem:[%s10965 + $0x1b0] sm:$0xff]
    %v11021 = vld [vmem:[%s10965 + $0x1b8] sm:$0xff]
    %s11022 = scalar_lea.vmem %s8, 2
    %v11023 = vld [vmem:[%s11022] sm:$0x3]
    %v11025 = vlaneseq
    %v11026 = vshrl.u32 %v11025, 7
    %v11027 = vsub.s32 0, %v11026
    %v11028 = vrot.slane %v11023, %v11027
    %v11029 = vlaneseq
    %v11030 = vshrl.u32 %v11029, 7
    %v11031 = vsub.s32 1, %v11030
    %v11032 = vrot.slane %v11023, %v11031
    %v11091 = vunpack.c.l.b16 %v10966
    %v11092 = vunpack.c.h.b16 %v10966
    %v11093 = vunpack.c.l.b16 %v10967
    %v11094 = vunpack.c.h.b16 %v10967
    %v11095 = vunpack.c.l.b16 %v10968
    %v11096 = vunpack.c.h.b16 %v10968
    %v11097 = vunpack.c.l.b16 %v10969
    %v11098 = vunpack.c.h.b16 %v10969
    %v11099 = vunpack.c.l.b16 %v10970
    %v11100 = vunpack.c.h.b16 %v10970
    %v11101 = vunpack.c.l.b16 %v10971
    %v11102 = vunpack.c.h.b16 %v10971
    %v11103 = vunpack.c.l.b16 %v10972
    %v11104 = vunpack.c.h.b16 %v10972
    %v11105 = vunpack.c.l.b16 %v10973
    %v11106 = vunpack.c.h.b16 %v10973
    %v11107 = vunpack.c.l.b16 %v10974
    %v11108 = vunpack.c.h.b16 %v10974
    %v11109 = vunpack.c.l.b16 %v10975
    %v11110 = vunpack.c.h.b16 %v10975
    %v11111 = vunpack.c.l.b16 %v10976
    %v11112 = vunpack.c.h.b16 %v10976
    %v11113 = vunpack.c.l.b16 %v10977
    %v11114 = vunpack.c.h.b16 %v10977
    %v11115 = vunpack.c.l.b16 %v10978
    %v11116 = vunpack.c.h.b16 %v10978
    %v11117 = vunpack.c.l.b16 %v10979
    %v11118 = vunpack.c.h.b16 %v10979
    %v11119 = vunpack.c.l.b16 %v10980
    %v11120 = vunpack.c.h.b16 %v10980
    %v11121 = vunpack.c.l.b16 %v10981
    %v11122 = vunpack.c.h.b16 %v10981
    %v11123 = vunpack.c.l.b16 %v10982
    %v11124 = vunpack.c.h.b16 %v10982
    %v11125 = vunpack.c.l.b16 %v10983
    %v11126 = vunpack.c.h.b16 %v10983
    %v11127 = vunpack.c.l.b16 %v10984
    %v11128 = vunpack.c.h.b16 %v10984
    %v11129 = vunpack.c.l.b16 %v10985
    %v11130 = vunpack.c.h.b16 %v10985
    %v11131 = vunpack.c.l.b16 %v10986
    %v11132 = vunpack.c.h.b16 %v10986
    %v11133 = vunpack.c.l.b16 %v10987
    %v11134 = vunpack.c.h.b16 %v10987
    %v11135 = vunpack.c.l.b16 %v10988
    %v11136 = vunpack.c.h.b16 %v10988
    %v11137 = vunpack.c.l.b16 %v10989
    %v11138 = vunpack.c.h.b16 %v10989
    %v11139 = vunpack.c.l.b16 %v10990
    %v11140 = vunpack.c.h.b16 %v10990
    %v11141 = vunpack.c.l.b16 %v10991
    %v11142 = vunpack.c.h.b16 %v10991
    %v11143 = vunpack.c.l.b16 %v10992
    %v11144 = vunpack.c.h.b16 %v10992
    %v11145 = vunpack.c.l.b16 %v10993
    %v11146 = vunpack.c.h.b16 %v10993
    %v11147 = vunpack.c.l.b16 %v10994
    %v11148 = vunpack.c.h.b16 %v10994
    %v11149 = vunpack.c.l.b16 %v10995
    %v11150 = vunpack.c.h.b16 %v10995
    %v11151 = vunpack.c.l.b16 %v10996
    %v11152 = vunpack.c.h.b16 %v10996
    %v11153 = vunpack.c.l.b16 %v10997
    %v11154 = vunpack.c.h.b16 %v10997
    %v11155 = vunpack.c.l.b16 %v10998
    %v11156 = vunpack.c.h.b16 %v10998
    %v11157 = vunpack.c.l.b16 %v10999
    %v11158 = vunpack.c.h.b16 %v10999
    %v11159 = vunpack.c.l.b16 %v11000
    %v11160 = vunpack.c.h.b16 %v11000
    %v11161 = vunpack.c.l.b16 %v11001
    %v11162 = vunpack.c.h.b16 %v11001
    %v11163 = vunpack.c.l.b16 %v11002
    %v11164 = vunpack.c.h.b16 %v11002
    %v11165 = vunpack.c.l.b16 %v11003
    %v11166 = vunpack.c.h.b16 %v11003
    %v11167 = vunpack.c.l.b16 %v11004
    %v11168 = vunpack.c.h.b16 %v11004
    %v11169 = vunpack.c.l.b16 %v11005
    %v11170 = vunpack.c.h.b16 %v11005
    %v11171 = vunpack.c.l.b16 %v11006
    %v11172 = vunpack.c.h.b16 %v11006
    %v11173 = vunpack.c.l.b16 %v11007
    %v11174 = vunpack.c.h.b16 %v11007
    %v11175 = vunpack.c.l.b16 %v11008
    %v11176 = vunpack.c.h.b16 %v11008
    %v11177 = vunpack.c.l.b16 %v11009
    %v11178 = vunpack.c.h.b16 %v11009
    %v11179 = vunpack.c.l.b16 %v11010
    %v11180 = vunpack.c.h.b16 %v11010
    %v11181 = vunpack.c.l.b16 %v11011
    %v11182 = vunpack.c.h.b16 %v11011
    %v11183 = vunpack.c.l.b16 %v11012
    %v11184 = vunpack.c.h.b16 %v11012
    %v11185 = vunpack.c.l.b16 %v11013
    %v11186 = vunpack.c.h.b16 %v11013
    %v11187 = vunpack.c.l.b16 %v11014
    %v11188 = vunpack.c.h.b16 %v11014
    %v11189 = vunpack.c.l.b16 %v11015
    %v11190 = vunpack.c.h.b16 %v11015
    %v11191 = vunpack.c.l.b16 %v11016
    %v11192 = vunpack.c.h.b16 %v11016
    %v11193 = vunpack.c.l.b16 %v11017
    %v11194 = vunpack.c.h.b16 %v11017
    %v11195 = vunpack.c.l.b16 %v11018
    %v11196 = vunpack.c.h.b16 %v11018
    %v11197 = vunpack.c.l.b16 %v11019
    %v11198 = vunpack.c.h.b16 %v11019
    %v11199 = vunpack.c.l.b16 %v11020
    %v11200 = vunpack.c.h.b16 %v11020
    %v11201 = vunpack.c.l.b16 %v11021
    %v11202 = vunpack.c.h.b16 %v11021
    %v11203 = vpack.c.b16 %v11093, %v11091
    %v11204 = vpack.c.b16 %v11094, %v11092
    %v11205 = vpack.c.b16 %v11097, %v11095
    %v11206 = vpack.c.b16 %v11098, %v11096
    %v11207 = vpack.c.b16 %v11101, %v11099
    %v11208 = vpack.c.b16 %v11102, %v11100
    %v11209 = vpack.c.b16 %v11105, %v11103
    %v11210 = vpack.c.b16 %v11106, %v11104
    %v11211 = vpack.c.b16 %v11109, %v11107
    %v11212 = vpack.c.b16 %v11110, %v11108
    %v11213 = vpack.c.b16 %v11113, %v11111
    %v11214 = vpack.c.b16 %v11114, %v11112
    %v11215 = vpack.c.b16 %v11117, %v11115
    %v11216 = vpack.c.b16 %v11118, %v11116
    %v11217 = vpack.c.b16 %v11121, %v11119
    %v11218 = vpack.c.b16 %v11122, %v11120
    %v11219 = vpack.c.b16 %v11125, %v11123
    %v11220 = vpack.c.b16 %v11126, %v11124
    %v11221 = vpack.c.b16 %v11129, %v11127
    %v11222 = vpack.c.b16 %v11130, %v11128
    %v11223 = vpack.c.b16 %v11133, %v11131
    %v11224 = vpack.c.b16 %v11134, %v11132
    %v11225 = vpack.c.b16 %v11137, %v11135
    %v11226 = vpack.c.b16 %v11138, %v11136
    %v11227 = vpack.c.b16 %v11141, %v11139
    %v11228 = vpack.c.b16 %v11142, %v11140
    %v11229 = vpack.c.b16 %v11145, %v11143
    %v11230 = vpack.c.b16 %v11146, %v11144
    %v11231 = vpack.c.b16 %v11149, %v11147
    %v11232 = vpack.c.b16 %v11150, %v11148
    %v11233 = vpack.c.b16 %v11153, %v11151
    %v11234 = vpack.c.b16 %v11154, %v11152
    %v11235 = vpack.c.b16 %v11157, %v11155
    %v11236 = vpack.c.b16 %v11158, %v11156
    %v11237 = vpack.c.b16 %v11161, %v11159
    %v11238 = vpack.c.b16 %v11162, %v11160
    %v11239 = vpack.c.b16 %v11165, %v11163
    %v11240 = vpack.c.b16 %v11166, %v11164
    %v11241 = vpack.c.b16 %v11169, %v11167
    %v11242 = vpack.c.b16 %v11170, %v11168
    %v11243 = vpack.c.b16 %v11173, %v11171
    %v11244 = vpack.c.b16 %v11174, %v11172
    %v11245 = vpack.c.b16 %v11177, %v11175
    %v11246 = vpack.c.b16 %v11178, %v11176
    %v11247 = vpack.c.b16 %v11181, %v11179
    %v11248 = vpack.c.b16 %v11182, %v11180
    %v11249 = vpack.c.b16 %v11185, %v11183
    %v11250 = vpack.c.b16 %v11186, %v11184
    %v11251 = vpack.c.b16 %v11189, %v11187
    %v11252 = vpack.c.b16 %v11190, %v11188
    %v11253 = vpack.c.b16 %v11193, %v11191
    %v11254 = vpack.c.b16 %v11194, %v11192
    %v11255 = vpack.c.b16 %v11197, %v11195
    %v11256 = vpack.c.b16 %v11198, %v11196
    %v11257 = vpack.c.b16 %v11201, %v11199
    %v11258 = vpack.c.b16 %v11202, %v11200
    %v11316 = vsel %vm10875, %v10526, 0
    %11318 = vmatprep.subr.bf16.mxu0 %v11204
    %11319 = vmatpush1.bf16.msra.mxu0 %v11203
    %11320 = vmatprep.subr.bf16.mxu0 %v11206
    %11321 = vmatpush1.bf16.msra.mxu0 %v11205
    %11322 = vmatprep.subr.bf16.mxu0 %v11208
    %11323 = vmatpush1.bf16.msra.mxu0 %v11207
    %11324 = vmatprep.subr.bf16.mxu0 %v11210
    %11325 = vmatpush1.bf16.msra.mxu0 %v11209
    %11326 = vmatprep.subr.bf16.mxu0 %v11212
    %11327 = vmatpush1.bf16.msra.mxu0 %v11211
    %11328 = vmatprep.subr.bf16.mxu0 %v11214
    %11329 = vmatpush1.bf16.msra.mxu0 %v11213
    %11330 = vmatprep.subr.bf16.mxu0 %v11216
    %11331 = vmatpush1.bf16.msra.mxu0 %v11215
    %11332 = vmatprep.subr.bf16.mxu0 %v11218
    %11333 = vmatpush1.bf16.msra.mxu0 %v11217
    %11334 = vmatprep.subr.bf16.mxu0 %v11220
    %11335 = vmatpush1.bf16.msra.mxu0 %v11219
    %11336 = vmatprep.subr.bf16.mxu0 %v11222
    %11337 = vmatpush1.bf16.msra.mxu0 %v11221
    %11338 = vmatprep.subr.bf16.mxu0 %v11224
    %11339 = vmatpush1.bf16.msra.mxu0 %v11223
    %11340 = vmatprep.subr.bf16.mxu0 %v11226
    %11341 = vmatpush1.bf16.msra.mxu0 %v11225
    %11342 = vmatprep.subr.bf16.mxu0 %v11228
    %11343 = vmatpush1.bf16.msra.mxu0 %v11227
    %11344 = vmatprep.subr.bf16.mxu0 %v11230
    %11345 = vmatpush1.bf16.msra.mxu0 %v11229
    %11346 = vmatprep.subr.bf16.mxu0 %v11232
    %11347 = vmatpush1.bf16.msra.mxu0 %v11231
    %11348 = vmatprep.subr.bf16.mxu0 %v11234
    %11349 = vmatpush1.bf16.msra.mxu0 %v11233
    %11350 = vmatprep.mubr.bf16.mxu0 %v10524
    %11351 = vmatmul.mubr.bf16.gmra.mrb[0].mxu0 %v10523
    %v11352 = vpop.f32.mrb[0].mxu0
    %v11353 = vadd.f32 %v11028, %v11352
    %v11354 = vpop.f32.mrb[0].mxu0
    %v11355 = vadd.f32 %v11032, %v11354
    %v11356 = vpop.f32.mrb[0].mxu0
    %v11357 = vpop.f32.mrb[0].mxu0
    %11358 = vdwg.mxu0
    %11359 = vmatprep.subr.bf16.mxu0 %v11236
    %11360 = vmatpush1.bf16.msra.mxu0 %v11235
    %11361 = vmatprep.subr.bf16.mxu0 %v11238
    %11362 = vmatpush1.bf16.msra.mxu0 %v11237
    %11363 = vmatprep.subr.bf16.mxu0 %v11240
    %11364 = vmatpush1.bf16.msra.mxu0 %v11239
    %11365 = vmatprep.subr.bf16.mxu0 %v11242
    %11366 = vmatpush1.bf16.msra.mxu0 %v11241
    %11367 = vmatprep.subr.bf16.mxu0 %v11244
    %11368 = vmatpush1.bf16.msra.mxu0 %v11243
    %11369 = vmatprep.subr.bf16.mxu0 %v11246
    %11370 = vmatpush1.bf16.msra.mxu0 %v11245
    %11371 = vmatprep.subr.bf16.mxu0 %v11248
    %11372 = vmatpush1.bf16.msra.mxu0 %v11247
    %11373 = vmatprep.subr.bf16.mxu0 %v11250
    %11374 = vmatpush1.bf16.msra.mxu0 %v11249
    %11375 = vmatprep.subr.bf16.mxu0 %v11252
    %11376 = vmatpush1.bf16.msra.mxu0 %v11251
    %11377 = vmatprep.subr.bf16.mxu0 %v11254
    %11378 = vmatpush1.bf16.msra.mxu0 %v11253
    %11379 = vmatprep.subr.bf16.mxu0 %v11256
    %11380 = vmatpush1.bf16.msra.mxu0 %v11255
    %11381 = vmatprep.subr.bf16.mxu0 %v11258
    %11382 = vmatpush1.bf16.msra.mxu0 %v11257
    %11383 = vmatprep.subr.bf16.mxu0 0
    %11384 = vmatpush1.bf16.msra.mxu0 0
    %11385 = vmatprep.subr.bf16.mxu0 0
    %11386 = vmatpush1.bf16.msra.mxu0 0
    %11387 = vmatprep.subr.bf16.mxu0 0
    %11388 = vmatpush1.bf16.msra.mxu0 0
    %11389 = vmatprep.subr.bf16.mxu0 0
    %11390 = vmatpush1.bf16.msra.mxu0 0
    %11391 = vmatprep.mubr.bf16.mxu0 %v11316
    %11392 = vmatmul.mubr.bf16.gmra.mrb[0].mxu0 %v10525
    %v11393 = vpop.f32.mrb[0].mxu0
    %v11394 = vadd.f32 %v11353, %v11393
    %v11395 = vpop.f32.mrb[0].mxu0
    %v11396 = vadd.f32 %v11355, %v11395
    %v11397 = vpop.f32.mrb[0].mxu0
    %v11398 = vpop.f32.mrb[0].mxu0
    %11399 = vdwg.mxu0
    %v11400 = vmax.f32 %v11394, 0.0
    %v11401 = vmax.f32 %v11396, 0.0
    %v11402 = vpack.c.bf16 %v11400, %v11400
    %v11403 = vpack.c.bf16 %v11401, %v11401
    %v11404 = vld [vmem:[%s9] sm:$0xf]
    %v11405 = vld [vmem:[%s9 + $0x4] sm:$0xf]
    %v11406 = vld [vmem:[%s9 + $0x8] sm:$0xf]
    %v11407 = vld [vmem:[%s9 + $0xc] sm:$0xf]
    %v11408 = vld [vmem:[%s9 + $0x10] sm:$0xf]
    %v11409 = vld [vmem:[%s9 + $0x14] sm:$0xf]
    %v11410 = vld [vmem:[%s9 + $0x18] sm:$0xf]
    %v11411 = vld [vmem:[%s9 + $0x1c] sm:$0xf]
    %v11412 = vld [vmem:[%s9 + $0x20] sm:$0xf]
    %v11413 = vld [vmem:[%s9 + $0x24] sm:$0xf]
    %v11414 = vld [vmem:[%s9 + $0x28] sm:$0xf]
    %v11415 = vld [vmem:[%s9 + $0x2c] sm:$0xf]
    %v11416 = vld [vmem:[%s9 + $0x30] sm:$0xf]
    %v11417 = vld [vmem:[%s9 + $0x34] sm:$0xf]
    %v11418 = vld [vmem:[%s9 + $0x38] sm:$0xf]
    %v11419 = vld [vmem:[%s9 + $0x3c] sm:$0xf]
    %v11420 = vld [vmem:[%s9 + $0x40] sm:$0xf]
    %v11421 = vld [vmem:[%s9 + $0x44] sm:$0xf]
    %v11422 = vld [vmem:[%s9 + $0x48] sm:$0xf]
    %v11423 = vld [vmem:[%s9 + $0x4c] sm:$0xf]
    %v11424 = vld [vmem:[%s9 + $0x50] sm:$0xf]
    %v11425 = vld [vmem:[%s9 + $0x54] sm:$0xf]
    %v11426 = vld [vmem:[%s9 + $0x58] sm:$0xf]
    %v11427 = vld [vmem:[%s9 + $0x5c] sm:$0xf]
    %v11428 = vld [vmem:[%s9 + $0x60] sm:$0xf]
    %v11429 = vld [vmem:[%s9 + $0x64] sm:$0xf]
    %v11430 = vld [vmem:[%s9 + $0x68] sm:$0xf]
    %v11431 = vld [vmem:[%s9 + $0x6c] sm:$0xf]
    %v11432 = vld [vmem:[%s9 + $0x70] sm:$0xf]
    %v11433 = vld [vmem:[%s9 + $0x74] sm:$0xf]
    %v11434 = vld [vmem:[%s9 + $0x78] sm:$0xf]
    %v11435 = vld [vmem:[%s9 + $0x7c] sm:$0xf]
    %s11436 = scalar_lea.vmem %s9, 128
    %v11437 = vld [vmem:[%s11436] sm:$0xf]
    %v11438 = vld [vmem:[%s11436 + $0x4] sm:$0xf]
    %v11439 = vld [vmem:[%s11436 + $0x8] sm:$0xf]
    %v11440 = vld [vmem:[%s11436 + $0xc] sm:$0xf]
    %v11441 = vld [vmem:[%s11436 + $0x10] sm:$0xf]
    %v11442 = vld [vmem:[%s11436 + $0x14] sm:$0xf]
    %v11443 = vld [vmem:[%s11436 + $0x18] sm:$0xf]
    %v11444 = vld [vmem:[%s11436 + $0x1c] sm:$0xf]
    %v11445 = vld [vmem:[%s11436 + $0x20] sm:$0xf]
    %v11446 = vld [vmem:[%s11436 + $0x24] sm:$0xf]
    %v11447 = vld [vmem:[%s11436 + $0x28] sm:$0xf]
    %v11448 = vld [vmem:[%s11436 + $0x2c] sm:$0xf]
    %v11449 = vld [vmem:[%s11436 + $0x30] sm:$0xf]
    %v11450 = vld [vmem:[%s11436 + $0x34] sm:$0xf]
    %v11451 = vld [vmem:[%s11436 + $0x38] sm:$0xf]
    %v11452 = vld [vmem:[%s11436 + $0x3c] sm:$0xf]
    %v11453 = vld [vmem:[%s11436 + $0x40] sm:$0xf]
    %v11454 = vld [vmem:[%s11436 + $0x44] sm:$0xf]
    %v11455 = vld [vmem:[%s11436 + $0x48] sm:$0xf]
    %v11456 = vld [vmem:[%s11436 + $0x4c] sm:$0xf]
    %v11457 = vld [vmem:[%s11436 + $0x50] sm:$0xf]
    %v11458 = vld [vmem:[%s11436 + $0x54] sm:$0xf]
    %v11459 = vld [vmem:[%s11436 + $0x58] sm:$0xf]
    %v11460 = vld [vmem:[%s11436 + $0x5c] sm:$0xf]
    %v11461 = vld [vmem:[%s11436 + $0x60] sm:$0xf]
    %v11462 = vld [vmem:[%s11436 + $0x64] sm:$0xf]
    %v11463 = vld [vmem:[%s11436 + $0x68] sm:$0xf]
    %v11464 = vld [vmem:[%s11436 + $0x6c] sm:$0xf]
    %v11465 = vld [vmem:[%s11436 + $0x70] sm:$0xf]
    %v11466 = vld [vmem:[%s11436 + $0x74] sm:$0xf]
    %v11467 = vld [vmem:[%s11436 + $0x78] sm:$0xf]
    %v11468 = vld [vmem:[%s11436 + $0x7c] sm:$0xf]
    %v11501 = vunpack.c.l.b16 %v11437
    %v11502 = vunpack.c.l.b16 %v11438
    %v11503 = vunpack.c.l.b16 %v11439
    %v11504 = vunpack.c.l.b16 %v11440
    %v11505 = vunpack.c.l.b16 %v11441
    %v11506 = vunpack.c.l.b16 %v11442
    %v11507 = vunpack.c.l.b16 %v11443
    %v11508 = vunpack.c.l.b16 %v11444
    %v11509 = vunpack.c.l.b16 %v11445
    %v11510 = vunpack.c.l.b16 %v11446
    %v11511 = vunpack.c.l.b16 %v11447
    %v11512 = vunpack.c.l.b16 %v11448
    %v11513 = vunpack.c.l.b16 %v11449
    %v11514 = vunpack.c.l.b16 %v11450
    %v11515 = vunpack.c.l.b16 %v11451
    %v11516 = vunpack.c.l.b16 %v11452
    %v11517 = vunpack.c.l.b16 %v11453
    %v11518 = vunpack.c.l.b16 %v11454
    %v11519 = vunpack.c.l.b16 %v11455
    %v11520 = vunpack.c.l.b16 %v11456
    %v11521 = vunpack.c.l.b16 %v11457
    %v11522 = vunpack.c.l.b16 %v11458
    %v11523 = vunpack.c.l.b16 %v11459
    %v11524 = vunpack.c.l.b16 %v11460
    %v11525 = vunpack.c.l.b16 %v11461
    %v11526 = vunpack.c.l.b16 %v11462
    %v11527 = vunpack.c.l.b16 %v11463
    %v11528 = vunpack.c.l.b16 %v11464
    %v11529 = vunpack.c.l.b16 %v11465
    %v11530 = vunpack.c.l.b16 %v11466
    %v11531 = vunpack.c.l.b16 %v11467
    %v11532 = vunpack.c.l.b16 %v11468
    %v11533 = vpack.c.b16 %v11502, %v11501
    %v11534 = vpack.c.b16 %v11504, %v11503
    %v11535 = vpack.c.b16 %v11506, %v11505
    %v11536 = vpack.c.b16 %v11508, %v11507
    %v11537 = vpack.c.b16 %v11510, %v11509
    %v11538 = vpack.c.b16 %v11512, %v11511
    %v11539 = vpack.c.b16 %v11514, %v11513
    %v11540 = vpack.c.b16 %v11516, %v11515
    %v11541 = vpack.c.b16 %v11518, %v11517
    %v11542 = vpack.c.b16 %v11520, %v11519
    %v11543 = vpack.c.b16 %v11522, %v11521
    %v11544 = vpack.c.b16 %v11524, %v11523
    %v11545 = vpack.c.b16 %v11526, %v11525
    %v11546 = vpack.c.b16 %v11528, %v11527
    %v11547 = vpack.c.b16 %v11530, %v11529
    %v11548 = vpack.c.b16 %v11532, %v11531
    %11565 = vmatprep.subr.bf16.mxu0 0
    %11566 = vmatpush1.bf16.msra.mxu0 %v11533
    %11567 = vmatprep.subr.bf16.mxu0 0
    %11568 = vmatpush1.bf16.msra.mxu0 %v11534
    %11569 = vmatprep.subr.bf16.mxu0 0
    %11570 = vmatpush1.bf16.msra.mxu0 %v11535
    %11571 = vmatprep.subr.bf16.mxu0 0
    %11572 = vmatpush1.bf16.msra.mxu0 %v11536
    %11573 = vmatprep.subr.bf16.mxu0 0
    %11574 = vmatpush1.bf16.msra.mxu0 %v11537
    %11575 = vmatprep.subr.bf16.mxu0 0
    %11576 = vmatpush1.bf16.msra.mxu0 %v11538
    %11577 = vmatprep.subr.bf16.mxu0 0
    %11578 = vmatpush1.bf16.msra.mxu0 %v11539
    %11579 = vmatprep.subr.bf16.mxu0 0
    %11580 = vmatpush1.bf16.msra.mxu0 %v11540
    %11581 = vmatprep.subr.bf16.mxu0 0
    %11582 = vmatpush1.bf16.msra.mxu0 %v11541
    %11583 = vmatprep.subr.bf16.mxu0 0
    %11584 = vmatpush1.bf16.msra.mxu0 %v11542
    %11585 = vmatprep.subr.bf16.mxu0 0
    %11586 = vmatpush1.bf16.msra.mxu0 %v11543
    %11587 = vmatprep.subr.bf16.mxu0 0
    %11588 = vmatpush1.bf16.msra.mxu0 %v11544
    %11589 = vmatprep.subr.bf16.mxu0 0
    %11590 = vmatpush1.bf16.msra.mxu0 %v11545
    %11591 = vmatprep.subr.bf16.mxu0 0
    %11592 = vmatpush1.bf16.msra.mxu0 %v11546
    %11593 = vmatprep.subr.bf16.mxu0 0
    %11594 = vmatpush1.bf16.msra.mxu0 %v11547
    %11595 = vmatprep.subr.bf16.mxu0 0
    %11596 = vmatpush1.bf16.msra.mxu0 %v11548
    %11597 = vmatprep.mubr.bf16.mxu0 %v11403
    %11598 = vmatmul.mubr.bf16.gmra.mrb[0].mxu0 %v11402
    %v11599 = vpop.f32.mrb[0].mxu0
    %v11600 = vadd.f32 0.0, %v11599
    %v11601 = vpop.f32.mrb[0].mxu0
    %v11602 = vpop.f32.mrb[0].mxu0
    %v11603 = vpop.f32.mrb[0].mxu0
    %11604 = vdwg.mxu0
    %v11637 = vunpack.c.l.b16 %v11404
    %v11638 = vunpack.c.l.b16 %v11405
    %v11639 = vunpack.c.l.b16 %v11406
    %v11640 = vunpack.c.l.b16 %v11407
    %v11641 = vunpack.c.l.b16 %v11408
    %v11642 = vunpack.c.l.b16 %v11409
    %v11643 = vunpack.c.l.b16 %v11410
    %v11644 = vunpack.c.l.b16 %v11411
    %v11645 = vunpack.c.l.b16 %v11412
    %v11646 = vunpack.c.l.b16 %v11413
    %v11647 = vunpack.c.l.b16 %v11414
    %v11648 = vunpack.c.l.b16 %v11415
    %v11649 = vunpack.c.l.b16 %v11416
    %v11650 = vunpack.c.l.b16 %v11417
    %v11651 = vunpack.c.l.b16 %v11418
    %v11652 = vunpack.c.l.b16 %v11419
    %v11653 = vunpack.c.l.b16 %v11420
    %v11654 = vunpack.c.l.b16 %v11421
    %v11655 = vunpack.c.l.b16 %v11422
    %v11656 = vunpack.c.l.b16 %v11423
    %v11657 = vunpack.c.l.b16 %v11424
    %v11658 = vunpack.c.l.b16 %v11425
    %v11659 = vunpack.c.l.b16 %v11426
    %v11660 = vunpack.c.l.b16 %v11427
    %v11661 = vunpack.c.l.b16 %v11428
    %v11662 = vunpack.c.l.b16 %v11429
    %v11663 = vunpack.c.l.b16 %v11430
    %v11664 = vunpack.c.l.b16 %v11431
    %v11665 = vunpack.c.l.b16 %v11432
    %v11666 = vunpack.c.l.b16 %v11433
    %v11667 = vunpack.c.l.b16 %v11434
    %v11668 = vunpack.c.l.b16 %v11435
    %v11669 = vpack.c.b16 %v11638, %v11637
    %v11670 = vpack.c.b16 %v11640, %v11639
    %v11671 = vpack.c.b16 %v11642, %v11641
    %v11672 = vpack.c.b16 %v11644, %v11643
    %v11673 = vpack.c.b16 %v11646, %v11645
    %v11674 = vpack.c.b16 %v11648, %v11647
    %v11675 = vpack.c.b16 %v11650, %v11649
    %v11676 = vpack.c.b16 %v11652, %v11651
    %v11677 = vpack.c.b16 %v11654, %v11653
    %v11678 = vpack.c.b16 %v11656, %v11655
    %v11679 = vpack.c.b16 %v11658, %v11657
    %v11680 = vpack.c.b16 %v11660, %v11659
    %v11681 = vpack.c.b16 %v11662, %v11661
    %v11682 = vpack.c.b16 %v11664, %v11663
    %v11683 = vpack.c.b16 %v11666, %v11665
    %v11684 = vpack.c.b16 %v11668, %v11667
    %11701 = vmatprep.subr.bf16.mxu0 0
    %11702 = vmatpush1.bf16.msra.mxu0 %v11669
    %11703 = vmatprep.subr.bf16.mxu0 0
    %11704 = vmatpush1.bf16.msra.mxu0 %v11670
    %11705 = vmatprep.subr.bf16.mxu0 0
    %11706 = vmatpush1.bf16.msra.mxu0 %v11671
    %11707 = vmatprep.subr.bf16.mxu0 0
    %11708 = vmatpush1.bf16.msra.mxu0 %v11672
    %11709 = vmatprep.subr.bf16.mxu0 0
    %11710 = vmatpush1.bf16.msra.mxu0 %v11673
    %11711 = vmatprep.subr.bf16.mxu0 0
    %11712 = vmatpush1.bf16.msra.mxu0 %v11674
    %11713 = vmatprep.subr.bf16.mxu0 0
    %11714 = vmatpush1.bf16.msra.mxu0 %v11675
    %11715 = vmatprep.subr.bf16.mxu0 0
    %11716 = vmatpush1.bf16.msra.mxu0 %v11676
    %11717 = vmatprep.subr.bf16.mxu0 0
    %11718 = vmatpush1.bf16.msra.mxu0 %v11677
    %11719 = vmatprep.subr.bf16.mxu0 0
    %11720 = vmatpush1.bf16.msra.mxu0 %v11678
    %11721 = vmatprep.subr.bf16.mxu0 0
    %11722 = vmatpush1.bf16.msra.mxu0 %v11679
    %11723 = vmatprep.subr.bf16.mxu0 0
    %11724 = vmatpush1.bf16.msra.mxu0 %v11680
    %11725 = vmatprep.subr.bf16.mxu0 0
    %11726 = vmatpush1.bf16.msra.mxu0 %v11681
    %11727 = vmatprep.subr.bf16.mxu0 0
    %11728 = vmatpush1.bf16.msra.mxu0 %v11682
    %11729 = vmatprep.subr.bf16.mxu0 0
    %11730 = vmatpush1.bf16.msra.mxu0 %v11683
    %11731 = vmatprep.subr.bf16.mxu0 0
    %11732 = vmatpush1.bf16.msra.mxu0 %v11684
    %11733 = vmatprep.mubr.bf16.mxu0 %v10964
    %11734 = vmatmul.mubr.bf16.gmra.mrb[0].mxu0 %v10963
    %v11735 = vpop.f32.mrb[0].mxu0
    %v11736 = vadd.f32 %v11600, %v11735
    %v11737 = vpop.f32.mrb[0].mxu0
    %v11738 = vpop.f32.mrb[0].mxu0
    %v11739 = vpop.f32.mrb[0].mxu0
    %11740 = vdwg.mxu0
    %v11741 = vld [vmem:[%s10] sm:$0x1]
    %v11743 = vlaneseq
    %v11744 = vshrl.u32 %v11743, 7
    %v11745 = vsub.s32 0, %v11744
    %v11746 = vrot.slane %v11741, %v11745
    %v11748 = vadd.f32 %v11736, %v11746
    %v11749 = vlaneseq
    %v11750 = vand.u32 %v11749, 127
    %v11751 = vlaneseq
    %v11752 = vshrl.u32 %v11751, 7
    %v11753 = vstv %s7100
    %vm11754 = vcmp.lt.s32.totalorder %v11752, %v11753
    %vm11755 = vcmp.lt.s32.totalorder %v11750, 3
    %vm11756 = vcmp.ge.s32.totalorder %v11750, 3
    %vm11757 = vcmp.lt.s32.totalorder %v11750, 7
    %vm11758 = vmand %vm11756, %vm11757
    %vm11759 = vmand %vm11758, %vm11754
    %v11760 = vmul.f32 %v11748, %v11748
    %v11761 = vsel %vm11759, %v11760, 0.0
    %11762 = vadd.xlane.f32.xlu0 %v11761
    %v11763 = vpop.xlane.xlu0 %11762
    %v11764 = vrot.slane %v11763, 4
    %v11765 = vadd.f32 %v11763, %v11764
    %v11766 = vrot.slane %v11765, 2
    %v11767 = vadd.f32 %v11765, %v11766
    %v11768 = vrot.slane %v11767, 1
    %v11769 = vadd.f32 %v11767, %v11768
    %s11770 = vtos %v11769
    %v11771 = vstv %s11770
    %v11772 = vrsqrt.pop %v11771
    %v11773 = vmul.f32 %v11748, %v11772
    %v11774 = vsel %vm11758, %v11773, %v11748
    %11775 = vst [vmem:[#allocation8] sm:$0xff] %v11774
    %v11776 = vld [vmem:[%s11] sm:$0xff]
    %v11777 = vsub.f32 %v11776, %v11774
    %vm11778 = vmand %vm11755, %vm11754
    %v11779 = vand.u32 2147483647, %v11777
    %v11780 = vsel %vm11778, %v11779, 0.0
    %11781 = vadd.xlane.f32.xlu0 %v11780
    %v11782 = vpop.xlane.xlu0 %11781
    %v11783 = vrot.slane %v11782, 4
    %v11784 = vadd.f32 %v11782, %v11783
    %v11785 = vrot.slane %v11784, 2
    %v11786 = vadd.f32 %v11784, %v11785
    %v11787 = vrot.slane %v11786, 1
    %v11788 = vadd.f32 %v11786, %v11787
    %s11789 = vtos %v11788
    %v11790 = vstv %s11789
    %v11791 = vstv %s7101
    %v11792 = vmul.f32 %v11790, %v11791
    %v11793 = vmul.f32 %v11777, %v11777
    %v11794 = vsel %vm11759, %v11793, 0.0
    %11795 = vadd.xlane.f32.xlu0 %v11794
    %v11796 = vpop.xlane.xlu0 %11795
    %v11797 = vrot.slane %v11796, 4
    %v11798 = vadd.f32 %v11796, %v11797
    %v11799 = vrot.slane %v11798, 2
    %v11800 = vadd.f32 %v11798, %v11799
    %v11801 = vrot.slane %v11800, 1
    %v11802 = vadd.f32 %v11800, %v11801
    %s11803 = vtos %v11802
    %v11804 = vstv %s11803
    %v11805 = vstv %s7102
    %v11806 = vmul.f32 %v11804, %v11805
    %v11807 = vstv %s7105
    %v11808 = vmul.f32 %v11807, %v11792
    %v11809 = vstv %s7103
    %v11810 = vadd.f32 %v11808, %v11809
    %v11811 = vstv %s7106
    %v11812 = vmul.f32 %v11811, %v11806
    %v11813 = vadd.f32 %v11810, %v11812
    %v11814 = vstv %s7104
    %v11815 = vadd.f32 %v11813, %v11814
    %vm11816 = vcmp.eq.s32.totalorder %v11750, 0
    %vm11817 = vcmp.eq.s32.totalorder %v11750, 1
    %vm11818 = vcmp.eq.s32.totalorder %v11750, 2
    %v11819 = vsel %vm11818, %v11815, 0.0
    %v11820 = vsel %vm11817, %v11806, %v11819
    %v11821 = vsel %vm11816, %v11792, %v11820
    %11822 = vst [vmem:[#allocation9] sm:$0x1] %v11821
    // Predicated region
    $region46: #{tpu_custom_call.1} parent=1 // pred_check
      _
    $region47: #{tpu_custom_call.1} parent=1 // pred_check_branch
      %11824 = sbr.rel (0) target = $region49
    $region48: #{tpu_custom_call.1} parent=1 // pred_region
      %s11826 = ssub.s32 128, 128
      %11827 = vsyncadd [#allocation7], %s11826
      %s11829 = sshll.u32 [#allocation8], 4
      %s11830 = int_to_ptr.vmem [resolvable:$true] %s11829
      %11832 = dma.vmem_to_hbm [thread:$0]  %s11830, 128, %s12, [#allocation7]
    $region49: #{tpu_custom_call.1} parent=1 // pred_fallthru
      _
    // Predicated region
    $region50: #{tpu_custom_call.1} parent=1 // pred_check
      _
    $region51: #{tpu_custom_call.1} parent=1 // pred_check_branch
      %11834 = sbr.rel (0) target = $region53
    $region52: #{tpu_custom_call.1} parent=1 // pred_region
      %s11836 = ssub.s32 16, 16
      %11837 = vsyncadd [#allocation10], %s11836
      %s11839 = sshll.u32 [#allocation9], 4
      %s11840 = int_to_ptr.vmem [resolvable:$true] %s11839
      %11842 = dma.vmem_to_hbm [thread:$0]  %s11840, 16, %s13, [#allocation10]
    $region53: #{tpu_custom_call.1} parent=1 // pred_fallthru
      _
    // Predicated region
    $region54: #{tpu_custom_call.1} parent=1 // pred_check
      _
    $region55: #{tpu_custom_call.1} parent=1 // pred_check_branch
      %11844 = sbr.rel (0) target = $region57
    $region56: #{tpu_custom_call.1} parent=1 // pred_region
      %11845 = dma.done [#allocation7], 128
    $region57: #{tpu_custom_call.1} parent=1 // pred_fallthru
      _
    // Predicated region
    $region58: #{tpu_custom_call.1} parent=1 // pred_check
      _
    $region59: #{tpu_custom_call.1} parent=1 // pred_check_branch
      %11847 = sbr.rel (0) target = $region61
    $region60: #{tpu_custom_call.1} parent=1 // pred_region
      %11848 = dma.done [#allocation10], 16
    $region61: #{tpu_custom_call.1} parent=1 // pred_fallthru
      _
    %11849 = vsyncpa [#allocation6], 1
    %11850 = vsyncpa [#allocation7], 1
    %11851 = vsyncpa [#allocation10], 1

</llo_original>
